<compile_context>
chip_gen: v5e
topology: v5e:2x2
jax: 0.10.0
libtpu: 0.0.40
codegen_flags: <defaults>
</compile_context>

<pallas_src>
import jax
import jax.numpy as jnp
from jax.experimental import pallas as pl
from jax.experimental.pallas import tpu as pltpu

# ----------------------- synthetic "args" / scheme -----------------------
N_AGENTS      = 4
N_ACTIONS     = 6
OBS_DIM       = 22
INPUT_SIZE    = OBS_DIM + N_ACTIONS + N_AGENTS   # obs + last_action_onehot + agent_id = 32
EMBED_DIM     = 16
ED_HIDDEN_DIM = 16
HIDDEN_DIM    = 64                               # hidden_dim == hidden_dim_out
SAMPLE_SIZE   = 4
P_SUBGRAPH    = 0.5
BS            = 2
T_STEPS       = 8
LN_EPS        = 1e-5
NEG_INF       = -1e9
G_TILE        = 8                                # graphs per Graphormer grid step


# ----------------------------- helpers -----------------------------------
def _ln(x, gamma, beta):
    mu = jnp.mean(x, axis=-1, keepdims=True)
    var = jnp.mean(jnp.square(x - mu), axis=-1, keepdims=True)
    return (x - mu) * jax.lax.rsqrt(var + LN_EPS) * gamma + beta


def _const_spec(shape):
    nd = len(shape)
    return pl.BlockSpec(shape, lambda i, _nd=nd: (0,) * _nd)


def _mm(a, w):
    # bf16 operands feed the MXU at full rate; accumulate in f32.
    return jnp.dot(a.astype(jnp.bfloat16), w.astype(jnp.bfloat16),
                   preferred_element_type=jnp.float32)


# ----------------- fused encoder + MLP stack (row kernel) ------------------
def encoder_mlp_kernel(inp_ref, he_ref,
                       w_ie_ref, w_he_ref, w_eo_ref, cbenc_ref,
                       lnin_e_ref, lnin_x_ref, w1e_ref, w1x_ref, w2_ref, wr_ref,
                       cb64_ref,
                       h_ref, he_out_ref):
    inp = inp_ref[...]                                   # (tile, INPUT_SIZE)
    he = he_ref[...]                                     # (tile, ED_HIDDEN_DIM)
    cbe = cbenc_ref[...]                                 # rows: [b_e, b_eo]

    # ---- encoder: tanh RNN cell + linear head (external in the reference) ----
    obs = inp[:, 0:OBS_DIM]                              # encoder input = per-agent obs
    he_new = jnp.tanh(_mm(obs, w_ie_ref[...]) + _mm(he, w_he_ref[...]) + cbe[0:1])
    emb = _mm(he_new, w_eo_ref[...]) + cbe[1:2]          # (tile, EMBED_DIM)

    # ---- MLPBase feature-LayerNorm over the (virtual) concat [emb, inputs] ----
    # (done on the two pieces so no lane-axis concat is required in VMEM)
    lne = lnin_e_ref[...]                                # (2, EMBED_DIM)
    lnx = lnin_x_ref[...]                                # (2, INPUT_SIZE)
    d_tot = float(EMBED_DIM + INPUT_SIZE)
    mu = (jnp.sum(emb, -1, keepdims=True) + jnp.sum(inp, -1, keepdims=True)) / d_tot
    de = emb - mu
    dx = inp - mu
    var = (jnp.sum(de * de, -1, keepdims=True)
           + jnp.sum(dx * dx, -1, keepdims=True)) / d_tot
    r = jax.lax.rsqrt(var + LN_EPS)
    emb_n = de * r * lne[0:1] + lne[1:2]
    inp_n = dx * r * lnx[0:1] + lnx[1:2]

    cb = cb64_ref[...]   # rows: b1, ln1g, ln1b, b2, ln2g, ln2b, lnring, lnrinb, br, lnrg, lnrb
    # MLPBase(input_size + embed_dim, hidden_dim, n_hidden_layers=1)
    h = jnp.maximum(_mm(emb_n, w1e_ref[...]) + _mm(inp_n, w1x_ref[...]) + cb[0:1], 0.0)
    h = _ln(h, cb[1:2], cb[2:3])
    h = jnp.maximum(_mm(h, w2_ref[...]) + cb[3:4], 0.0)
    h = _ln(h, cb[4:5], cb[5:6])
    # self.rnn = MLPBase(hidden_dim, hidden_dim_out, n_hidden_layers=0)  (use_rnn=False)
    h = _ln(h, cb[6:7], cb[7:8])
    h = jnp.maximum(_mm(h, wr_ref[...]) + cb[8:9], 0.0)
    h = _ln(h, cb[9:10], cb[10:11])

    h_ref[...] = h
    he_out_ref[...] = he_new


def run_encoder_mlp(inputs2, h_e2, enc_p, mlp_p, tile=None):
    n, din = inputs2.shape
    if tile is None:
        tile = n                                     # 64 rows -> single grid step
    assert n % tile == 0
    w = [enc_p['w_ie'], enc_p['w_he'], enc_p['w_eo'], enc_p['cbenc'],
         mlp_p['lnin_e'], mlp_p['lnin_x'], mlp_p['w1e'], mlp_p['w1x'],
         mlp_p['w2'], mlp_p['wr'], mlp_p['cb64']]
    in_specs = ([pl.BlockSpec((tile, din), lambda i: (i, 0)),
                 pl.BlockSpec((tile, ED_HIDDEN_DIM), lambda i: (i, 0))]
                + [_const_spec(t.shape) for t in w])
    out_specs = [pl.BlockSpec((tile, HIDDEN_DIM), lambda i: (i, 0)),
                 pl.BlockSpec((tile, ED_HIDDEN_DIM), lambda i: (i, 0))]
    out_shape = [jax.ShapeDtypeStruct((n, HIDDEN_DIM), jnp.float32),
                 jax.ShapeDtypeStruct((n, ED_HIDDEN_DIM), jnp.float32)]
    return pl.pallas_call(
        encoder_mlp_kernel, grid=(n // tile,),
        in_specs=in_specs, out_specs=out_specs, out_shape=out_shape,
        compiler_params=pltpu.CompilerParams(dimension_semantics=("parallel",)),
    )(inputs2, h_e2, *w)


# ------------- fused Graphormer (incl + excl + grand) + v_out --------------
def graphormer_kernel(x_ref, mask_ref,
                      wqkv_i_ref, wo_i_ref, wf1_i_ref, wf2_i_ref, cb_i_ref,
                      wqkv_e_ref, wo_e_ref, wf1_e_ref, wf2_e_ref, cb_e_ref,
                      vo_ref, shap_ref, grand_ref):
    bf16 = jnp.bfloat16
    x = x_ref[...]                                   # (gA, D)  — g_tile graphs * A agents
    gA, D = x.shape
    masks = mask_ref[...]                            # (S+1, gA, gA); replica S = block-diag
    S = masks.shape[0] - 1
    blockdiag = masks[S]                             # grand graph = all within-graph edges
    # within-graph masked edge -> -1e9 ; cross-graph edge -> -2e9 so a fully
    # masked row still softmaxes uniformly over its own graph (matches the
    # per-graph softmax of the reference).
    neg = jnp.where(blockdiag > 0.0, NEG_INF, 2.0 * NEG_INF)
    scale = D ** -0.5
    vo = vo_ref[...]
    vo_w = vo[0:1, :]
    vo_b = vo[1:2, 0:1]

    def gnn_values(wqkv_ref, wo_ref, wf1_ref, wf2_ref, cb_ref, n_rep):
        cb = cb_ref[...]   # rows: bq, bk, bv, bo, ln1g, ln1b, bf1, bf2, ln2g, ln2b
        # fused QKV on the *unreplicated* feats (identical for every sample)
        qkv = _mm(x, wqkv_ref[...])                          # (gA, 3D)
        q = (qkv[:, 0:D] + cb[0:1]) * scale
        k = qkv[:, D:2 * D] + cb[1:2]
        v = (qkv[:, 2 * D:3 * D] + cb[2:3]).astype(bf16)
        scores = jnp.einsum('ad,bd->ab', q.astype(bf16), k.astype(bf16),
                            preferred_element_type=jnp.float32)   # (gA, gA), shared
        s = jnp.where(masks[:n_rep] > 0.0, scores[None], neg[None])
        s = s - jnp.max(s, axis=-1, keepdims=True)
        p = jnp.exp(s)
        p = p * pl.reciprocal(jnp.sum(p, axis=-1, keepdims=True), approx=True)
        attn = jnp.concatenate(
            [jnp.dot(p[r].astype(bf16), v, preferred_element_type=jnp.float32)
             for r in range(n_rep)], axis=0)                      # (n_rep*gA, D)
        x_rep = jnp.concatenate([x] * n_rep, axis=0)              # (n_rep*gA, D)
        h = _ln(x_rep + _mm(attn, wo_ref[...]) + cb[3:4], cb[4:5], cb[5:6])
        f = jnp.maximum(_mm(h, wf1_ref[...]) + cb[6:7], 0.0)
        f = _mm(f, wf2_ref[...]) + cb[7:8]
        h = _ln(h + f, cb[8:9], cb[9:10])
        # v_out: Linear(hidden_dim, 1)
        return jnp.sum(h * vo_w, axis=-1, keepdims=True) + vo_b   # (n_rep*gA, 1)

    vals_incl = gnn_values(wqkv_i_ref, wo_i_ref, wf1_i_ref, wf2_i_ref, cb_i_ref, S + 1)
    vals_excl = gnn_values(wqkv_e_ref, wo_e_ref, wf1_e_ref, wf2_e_ref, cb_e_ref, S)

    # last incl replica (block-diag mask, gnn_incl weights) == grand coalition value
    grand_ref[...] = vals_incl[S * gA:(S + 1) * gA]
    diff = vals_incl[0:S * gA] - vals_excl                        # (S*gA, 1)
    shap = diff[0:gA]
    for s_i in range(1, S):
        shap = shap + diff[s_i * gA:(s_i + 1) * gA]
    shap_ref[...] = shap * (1.0 / S)


def run_graphormer(x, mask_stack, gp_i, gp_e, vp, *, g_tile, n_agents):
    n, d = x.shape                                   # n = bs*t*n_agents
    gA = g_tile * n_agents
    assert n % gA == 0
    nb = n // gA
    assert mask_stack.shape[0] % nb == 0
    s1 = mask_stack.shape[0] // nb                   # SAMPLE_SIZE + 1
    w = [gp_i['wqkv'], gp_i['wo'], gp_i['wf1'], gp_i['wf2'], gp_i['cb'],
         gp_e['wqkv'], gp_e['wo'], gp_e['wf1'], gp_e['wf2'], gp_e['cb'],
         vp['vo']]
    in_specs = ([pl.BlockSpec((gA, d), lambda i: (i, 0)),
                 pl.BlockSpec((s1, gA, gA), lambda i: (i, 0, 0))]
                + [_const_spec(t.shape) for t in w])
    out_specs = [pl.BlockSpec((gA, 1), lambda i: (i, 0)),
                 pl.BlockSpec((gA, 1), lambda i: (i, 0))]
    out_shape = [jax.ShapeDtypeStruct((n, 1), jnp.float32),
                 jax.ShapeDtypeStruct((n, 1), jnp.float32)]
    return pl.pallas_call(
        graphormer_kernel, grid=(nb,),
        in_specs=in_specs, out_specs=out_specs, out_shape=out_shape,
        compiler_params=pltpu.CompilerParams(dimension_semantics=("parallel",)),
    )(x, mask_stack, *w)


# ---------------------------- parameters ----------------------------------
def init_params(key):
    ks = iter(jax.random.split(key, 32))

    def dense(fi, fo):
        return jax.random.normal(next(ks), (fi, fo), jnp.float32) / jnp.sqrt(float(fi))

    def ones(d):
        return jnp.ones((1, d), jnp.float32)

    def zeros(d):
        return jnp.zeros((1, d), jnp.float32)

    H = HIDDEN_DIM
    enc = dict(
        w_ie=dense(OBS_DIM, ED_HIDDEN_DIM),
        w_he=dense(ED_HIDDEN_DIM, ED_HIDDEN_DIM),
        w_eo=dense(ED_HIDDEN_DIM, EMBED_DIM),
        cbenc=jnp.concatenate([zeros(ED_HIDDEN_DIM), zeros(EMBED_DIM)], axis=0),  # [b_e, b_eo]
    )

    w1 = dense(EMBED_DIM + INPUT_SIZE, H)             # one fc1, split by input piece
    mlp = dict(
        lnin_e=jnp.concatenate([ones(EMBED_DIM), zeros(EMBED_DIM)], axis=0),
        lnin_x=jnp.concatenate([ones(INPUT_SIZE), zeros(INPUT_SIZE)], axis=0),
        w1e=w1[:EMBED_DIM],
        w1x=w1[EMBED_DIM:],
        w2=dense(H, H),
        wr=dense(H, H),
        cb64=jnp.concatenate([
            zeros(H),            # b1
            ones(H), zeros(H),   # ln1 gamma, beta
            zeros(H),            # b2
            ones(H), zeros(H),   # ln2
            ones(H), zeros(H),   # lnr_in
            zeros(H),            # br
            ones(H), zeros(H),   # lnr
        ], axis=0),
    )

    def gnn():
        return dict(
            wqkv=jnp.concatenate([dense(H, H), dense(H, H), dense(H, H)], axis=1),  # (H, 3H)
            wo=dense(H, H), wf1=dense(H, H), wf2=dense(H, H),
            cb=jnp.concatenate([
                zeros(H), zeros(H), zeros(H),   # bq, bk, bv
                zeros(H),                        # bo
                ones(H), zeros(H),               # ln1
                zeros(H), zeros(H),              # bf1, bf2
                ones(H), zeros(H),               # ln2
            ], axis=0),
        )

    v_out = dict(vo=jnp.concatenate(
        [jax.random.normal(next(ks), (1, H), jnp.float32) / jnp.sqrt(float(H)),
         zeros(H)], axis=0))                      # row0 = weight, row1 = bias (broadcast)
    return dict(enc=enc, mlp=mlp, gnn_incl=gnn(), gnn_excl=gnn(), v_out=v_out)


# ------------------------------ forward ------------------------------------
def shapley_critic2_forward(obs, actions_onehot, hidden_state, params, graph_key):
    bs, t, a, _ = obs.shape
    # _build_inputs (glue): [obs, last_actions_onehot, agent_id]
    last_act = jnp.concatenate([jnp.zeros_like(actions_onehot[:, :1]),
                                actions_onehot[:, :-1]], axis=1)
    agent_id = jnp.broadcast_to(jnp.eye(a, dtype=obs.dtype)[None, None], (bs, t, a, a))
    inputs = jnp.concatenate([obs, last_act, agent_id], axis=-1)        # (bs, t, A, INPUT_SIZE)
    orig_batch_dims = inputs.shape[:-1]
    n = bs * t * a
    inputs2 = inputs.reshape(n, INPUT_SIZE)

    h_e, h_in = hidden_state                 # h_in unused on the use_rnn=False path
    h_e2 = h_e.reshape(n, ED_HIDDEN_DIM)

    # fused encoder + MLPBase + "rnn"-MLP; the [embeddings, inputs] concat is done in VMEM
    h_norm, h_e_new = run_encoder_mlp(inputs2, h_e2, params['enc'], params['mlp'])
    h_out = h_norm                                                       # use_rnn=False path

    # _construct_graphs (adj_graph undefined in reference -> full graph = ones)
    bt = bs * t
    g_tile = min(G_TILE, bt)
    assert bt % g_tile == 0
    nb = bt // g_tile
    gA = g_tile * a
    S = SAMPLE_SIZE

    sub = jax.random.bernoulli(graph_key, P_SUBGRAPH,
                               (nb, S, g_tile, a, a)).astype(jnp.float32)
    eye_g = jnp.eye(g_tile, dtype=jnp.float32)
    # expand each per-graph (a,a) mask onto the block-diagonal of a (gA,gA) mask
    sub_full = (sub[:, :, :, :, None, :]
                * eye_g[None, None, :, None, :, None]).reshape(nb, S, gA, gA)
    blockdiag = jnp.kron(eye_g, jnp.ones((a, a), jnp.float32))           # grand-graph mask
    blockdiag = jnp.broadcast_to(blockdiag[None, None], (nb, 1, gA, gA))
    mask_stack = jnp.concatenate([sub_full, blockdiag], axis=1).reshape(
        nb * (S + 1), gA, gA)

    # _calculate_shapley_value: one fused kernel gives mean_s(v_incl - v_excl) and v_grand
    shap, grand = run_graphormer(h_norm, mask_stack,
                                 params['gnn_incl'], params['gnn_excl'],
                                 params['v_out'], g_tile=g_tile, n_agents=a)

    q_shapley = shap.reshape(*orig_batch_dims, 1)
    q_grand = grand.reshape(*orig_batch_dims, 1)
    return (q_shapley, q_grand,
            h_e_new.reshape(*orig_batch_dims, ED_HIDDEN_DIM),
            h_out.reshape(*orig_batch_dims, HIDDEN_DIM))


# -------------------------------- main --------------------------------------
if __name__ == "__main__":
    key = jax.random.PRNGKey(0)
    k_obs, k_act, k_par, k_graph = jax.random.split(key, 4)
    obs = jax.random.normal(k_obs, (BS, T_STEPS, N_AGENTS, OBS_DIM), jnp.float32)
    act_idx = jax.random.randint(k_act, (BS, T_STEPS, N_AGENTS), 0, N_ACTIONS)
    actions_onehot = jax.nn.one_hot(act_idx, N_ACTIONS, dtype=jnp.float32)
    params = init_params(k_par)
    # hidden state broadcast over time so flattened rows match (reference passes per-step hidden)
    h_e0 = jnp.zeros((BS, T_STEPS, N_AGENTS, ED_HIDDEN_DIM), jnp.float32)
    h_in0 = jnp.zeros((BS, T_STEPS, N_AGENTS, HIDDEN_DIM), jnp.float32)

    fwd = jax.jit(shapley_critic2_forward)
    q_shapley, q_grand, h_e, h_out = fwd(obs, actions_onehot, (h_e0, h_in0), params, k_graph)
    jax.block_until_ready((q_shapley, q_grand, h_e, h_out))

    assert q_shapley.shape == (BS, T_STEPS, N_AGENTS, 1)
    assert q_grand.shape == (BS, T_STEPS, N_AGENTS, 1)
    assert h_e.shape == (BS, T_STEPS, N_AGENTS, ED_HIDDEN_DIM)
    assert h_out.shape == (BS, T_STEPS, N_AGENTS, HIDDEN_DIM)
    assert bool(jnp.all(jnp.isfinite(q_shapley))) and bool(jnp.all(jnp.isfinite(q_grand)))
    print("KERNEL_OK")
</pallas_src>

<mosaic_0001>
module attributes {stable_mosaic.version = 11 : i64} {
  func.func @encoder_mlp_kernel(%arg0: i32, %arg1: memref<64x32xf32, #tpu.memory_space<vmem>>, %arg2: memref<64x16xf32, #tpu.memory_space<vmem>>, %arg3: memref<22x16xf32, #tpu.memory_space<vmem>>, %arg4: memref<16x16xf32, #tpu.memory_space<vmem>>, %arg5: memref<16x16xf32, #tpu.memory_space<vmem>>, %arg6: memref<2x16xf32, #tpu.memory_space<vmem>>, %arg7: memref<2x16xf32, #tpu.memory_space<vmem>>, %arg8: memref<2x32xf32, #tpu.memory_space<vmem>>, %arg9: memref<16x64xf32, #tpu.memory_space<vmem>>, %arg10: memref<32x64xf32, #tpu.memory_space<vmem>>, %arg11: memref<64x64xf32, #tpu.memory_space<vmem>>, %arg12: memref<64x64xf32, #tpu.memory_space<vmem>>, %arg13: memref<11x64xf32, #tpu.memory_space<vmem>>, %arg14: memref<64x64xf32, #tpu.memory_space<vmem>>, %arg15: memref<64x16xf32, #tpu.memory_space<vmem>>) attributes {dimension_semantics = [#tpu.dimension_semantics<parallel>], iteration_bounds = array<i64: 1>, scalar_prefetch = 0 : i64, scratch_operands = 0 : i64, tpu.core_type = #tpu.core_type<tc>, window_params = [{transform_indices = @transform_0, window_bounds = array<i64: 64, 32>}, {transform_indices = @transform_1, window_bounds = array<i64: 64, 16>}, {pipeline_mode = #tpu.pipeline_mode<synchronous>, transform_indices = @transform_2, window_bounds = array<i64: 22, 16>}, {pipeline_mode = #tpu.pipeline_mode<synchronous>, transform_indices = @transform_3, window_bounds = array<i64: 16, 16>}, {pipeline_mode = #tpu.pipeline_mode<synchronous>, transform_indices = @transform_4, window_bounds = array<i64: 16, 16>}, {pipeline_mode = #tpu.pipeline_mode<synchronous>, transform_indices = @transform_5, window_bounds = array<i64: 2, 16>}, {pipeline_mode = #tpu.pipeline_mode<synchronous>, transform_indices = @transform_6, window_bounds = array<i64: 2, 16>}, {pipeline_mode = #tpu.pipeline_mode<synchronous>, transform_indices = @transform_7, window_bounds = array<i64: 2, 32>}, {pipeline_mode = #tpu.pipeline_mode<synchronous>, transform_indices = @transform_8, window_bounds = array<i64: 16, 64>}, {pipeline_mode = #tpu.pipeline_mode<synchronous>, transform_indices = @transform_9, window_bounds = array<i64: 32, 64>}, {pipeline_mode = #tpu.pipeline_mode<synchronous>, transform_indices = @transform_10, window_bounds = array<i64: 64, 64>}, {pipeline_mode = #tpu.pipeline_mode<synchronous>, transform_indices = @transform_11, window_bounds = array<i64: 64, 64>}, {pipeline_mode = #tpu.pipeline_mode<synchronous>, transform_indices = @transform_12, window_bounds = array<i64: 11, 64>}, {transform_indices = @transform_13, window_bounds = array<i64: 64, 64>}, {transform_indices = @transform_14, window_bounds = array<i64: 64, 16>}]} {
    %c0 = arith.constant 0 : index
    %c0_0 = arith.constant 0 : index
    %0 = vector.load %arg1[%c0, %c0_0] : memref<64x32xf32, #tpu.memory_space<vmem>>, vector<64x32xf32>
    %c0_1 = arith.constant 0 : index
    %c0_2 = arith.constant 0 : index
    %1 = vector.load %arg2[%c0_1, %c0_2] : memref<64x16xf32, #tpu.memory_space<vmem>>, vector<64x16xf32>
    %c0_3 = arith.constant 0 : index
    %c0_4 = arith.constant 0 : index
    %2 = vector.load %arg6[%c0_3, %c0_4] : memref<2x16xf32, #tpu.memory_space<vmem>>, vector<2x16xf32>
    %3 = vector.extract_strided_slice %0 {offsets = [0, 0], sizes = [64, 22], strides = [1, 1]} : vector<64x32xf32> to vector<64x22xf32>
    %c0_5 = arith.constant 0 : index
    %c0_6 = arith.constant 0 : index
    %4 = vector.load %arg3[%c0_5, %c0_6] : memref<22x16xf32, #tpu.memory_space<vmem>>, vector<22x16xf32>
    %5 = arith.truncf %3 : vector<64x22xf32> to vector<64x22xbf16>
    %6 = arith.truncf %4 : vector<22x16xf32> to vector<22x16xbf16>
    %cst = arith.constant dense<0.000000e+00> : vector<64x16xf32>
    %7 = tpu.matmul %5, %6, %cst {dimension_numbers = #tpu.dot_dimension_numbers<[1], [0], [0], [1], [0, 0, 1, 1], [], []>} : vector<64x22xbf16>, vector<22x16xbf16>, vector<64x16xf32> -> vector<64x16xf32>
    %c0_7 = arith.constant 0 : index
    %c0_8 = arith.constant 0 : index
    %8 = vector.load %arg4[%c0_7, %c0_8] : memref<16x16xf32, #tpu.memory_space<vmem>>, vector<16x16xf32>
    %9 = arith.truncf %1 : vector<64x16xf32> to vector<64x16xbf16>
    %10 = arith.truncf %8 : vector<16x16xf32> to vector<16x16xbf16>
    %cst_9 = arith.constant dense<0.000000e+00> : vector<64x16xf32>
    %11 = tpu.matmul %9, %10, %cst_9 {dimension_numbers = #tpu.dot_dimension_numbers<[1], [0], [0], [1], [0, 0, 1, 1], [], []>} : vector<64x16xbf16>, vector<16x16xbf16>, vector<64x16xf32> -> vector<64x16xf32>
    %12 = arith.addf %7, %11 : vector<64x16xf32>
    %13 = vector.extract_strided_slice %2 {offsets = [0, 0], sizes = [1, 16], strides = [1, 1]} : vector<2x16xf32> to vector<1x16xf32>
    %14 = vector.broadcast %13 : vector<1x16xf32> to vector<64x16xf32>
    %15 = arith.addf %12, %14 : vector<64x16xf32>
    %16 = math.tanh %15 : vector<64x16xf32>
    %c0_10 = arith.constant 0 : index
    %c0_11 = arith.constant 0 : index
    %17 = vector.load %arg5[%c0_10, %c0_11] : memref<16x16xf32, #tpu.memory_space<vmem>>, vector<16x16xf32>
    %18 = arith.truncf %16 : vector<64x16xf32> to vector<64x16xbf16>
    %19 = arith.truncf %17 : vector<16x16xf32> to vector<16x16xbf16>
    %cst_12 = arith.constant dense<0.000000e+00> : vector<64x16xf32>
    %20 = tpu.matmul %18, %19, %cst_12 {dimension_numbers = #tpu.dot_dimension_numbers<[1], [0], [0], [1], [0, 0, 1, 1], [], []>} : vector<64x16xbf16>, vector<16x16xbf16>, vector<64x16xf32> -> vector<64x16xf32>
    %21 = vector.extract_strided_slice %2 {offsets = [1, 0], sizes = [1, 16], strides = [1, 1]} : vector<2x16xf32> to vector<1x16xf32>
    %22 = vector.broadcast %21 : vector<1x16xf32> to vector<64x16xf32>
    %23 = arith.addf %20, %22 : vector<64x16xf32>
    %c0_13 = arith.constant 0 : index
    %c0_14 = arith.constant 0 : index
    %24 = vector.load %arg7[%c0_13, %c0_14] : memref<2x16xf32, #tpu.memory_space<vmem>>, vector<2x16xf32>
    %c0_15 = arith.constant 0 : index
    %c0_16 = arith.constant 0 : index
    %25 = vector.load %arg8[%c0_15, %c0_16] : memref<2x32xf32, #tpu.memory_space<vmem>>, vector<2x32xf32>
    %cst_17 = arith.constant dense<0.000000e+00> : vector<64xf32>
    %26 = vector.multi_reduction <add>, %23, %cst_17 [1] : vector<64x16xf32> to vector<64xf32>
    %27 = vector.shape_cast %26 : vector<64xf32> to vector<64x1xf32>
    %cst_18 = arith.constant dense<0.000000e+00> : vector<64xf32>
    %28 = vector.multi_reduction <add>, %0, %cst_18 [1] : vector<64x32xf32> to vector<64xf32>
    %29 = vector.shape_cast %28 : vector<64xf32> to vector<64x1xf32>
    %30 = arith.addf %27, %29 : vector<64x1xf32>
    %cst_19 = arith.constant 4.800000e+01 : f32
    %31 = vector.broadcast %cst_19 : f32 to vector<64x1xf32>
    %32 = arith.divf %30, %31 : vector<64x1xf32>
    %33 = vector.broadcast %32 : vector<64x1xf32> to vector<64x16xf32>
    %34 = arith.subf %23, %33 : vector<64x16xf32>
    %35 = vector.broadcast %32 : vector<64x1xf32> to vector<64x32xf32>
    %36 = arith.subf %0, %35 : vector<64x32xf32>
    %37 = arith.mulf %34, %34 : vector<64x16xf32>
    %cst_20 = arith.constant dense<0.000000e+00> : vector<64xf32>
    %38 = vector.multi_reduction <add>, %37, %cst_20 [1] : vector<64x16xf32> to vector<64xf32>
    %39 = vector.shape_cast %38 : vector<64xf32> to vector<64x1xf32>
    %40 = arith.mulf %36, %36 : vector<64x32xf32>
    %cst_21 = arith.constant dense<0.000000e+00> : vector<64xf32>
    %41 = vector.multi_reduction <add>, %40, %cst_21 [1] : vector<64x32xf32> to vector<64xf32>
    %42 = vector.shape_cast %41 : vector<64xf32> to vector<64x1xf32>
    %43 = arith.addf %39, %42 : vector<64x1xf32>
    %cst_22 = arith.constant 4.800000e+01 : f32
    %44 = vector.broadcast %cst_22 : f32 to vector<64x1xf32>
    %45 = arith.divf %43, %44 : vector<64x1xf32>
    %cst_23 = arith.constant 9.99999974E-6 : f32
    %46 = vector.broadcast %cst_23 : f32 to vector<64x1xf32>
    %47 = arith.addf %45, %46 : vector<64x1xf32>
    %48 = math.rsqrt %47 : vector<64x1xf32>
    %49 = vector.broadcast %48 : vector<64x1xf32> to vector<64x16xf32>
    %50 = arith.mulf %34, %49 : vector<64x16xf32>
    %51 = vector.extract_strided_slice %24 {offsets = [0, 0], sizes = [1, 16], strides = [1, 1]} : vector<2x16xf32> to vector<1x16xf32>
    %52 = vector.broadcast %51 : vector<1x16xf32> to vector<64x16xf32>
    %53 = arith.mulf %50, %52 : vector<64x16xf32>
    %54 = vector.extract_strided_slice %24 {offsets = [1, 0], sizes = [1, 16], strides = [1, 1]} : vector<2x16xf32> to vector<1x16xf32>
    %55 = vector.broadcast %54 : vector<1x16xf32> to vector<64x16xf32>
    %56 = arith.addf %53, %55 : vector<64x16xf32>
    %57 = vector.broadcast %48 : vector<64x1xf32> to vector<64x32xf32>
    %58 = arith.mulf %36, %57 : vector<64x32xf32>
    %59 = vector.extract_strided_slice %25 {offsets = [0, 0], sizes = [1, 32], strides = [1, 1]} : vector<2x32xf32> to vector<1x32xf32>
    %60 = vector.broadcast %59 : vector<1x32xf32> to vector<64x32xf32>
    %61 = arith.mulf %58, %60 : vector<64x32xf32>
    %62 = vector.extract_strided_slice %25 {offsets = [1, 0], sizes = [1, 32], strides = [1, 1]} : vector<2x32xf32> to vector<1x32xf32>
    %63 = vector.broadcast %62 : vector<1x32xf32> to vector<64x32xf32>
    %64 = arith.addf %61, %63 : vector<64x32xf32>
    %c0_24 = arith.constant 0 : index
    %c0_25 = arith.constant 0 : index
    %65 = vector.load %arg13[%c0_24, %c0_25] : memref<11x64xf32, #tpu.memory_space<vmem>>, vector<11x64xf32>
    %c0_26 = arith.constant 0 : index
    %c0_27 = arith.constant 0 : index
    %66 = vector.load %arg9[%c0_26, %c0_27] : memref<16x64xf32, #tpu.memory_space<vmem>>, vector<16x64xf32>
    %67 = arith.truncf %56 : vector<64x16xf32> to vector<64x16xbf16>
    %68 = arith.truncf %66 : vector<16x64xf32> to vector<16x64xbf16>
    %cst_28 = arith.constant dense<0.000000e+00> : vector<64x64xf32>
    %69 = tpu.matmul %67, %68, %cst_28 {dimension_numbers = #tpu.dot_dimension_numbers<[1], [0], [0], [1], [0, 0, 1, 1], [], []>} : vector<64x16xbf16>, vector<16x64xbf16>, vector<64x64xf32> -> vector<64x64xf32>
    %c0_29 = arith.constant 0 : index
    %c0_30 = arith.constant 0 : index
    %70 = vector.load %arg10[%c0_29, %c0_30] : memref<32x64xf32, #tpu.memory_space<vmem>>, vector<32x64xf32>
    %71 = arith.truncf %64 : vector<64x32xf32> to vector<64x32xbf16>
    %72 = arith.truncf %70 : vector<32x64xf32> to vector<32x64xbf16>
    %cst_31 = arith.constant dense<0.000000e+00> : vector<64x64xf32>
    %73 = tpu.matmul %71, %72, %cst_31 {dimension_numbers = #tpu.dot_dimension_numbers<[1], [0], [0], [1], [0, 0, 1, 1], [], []>} : vector<64x32xbf16>, vector<32x64xbf16>, vector<64x64xf32> -> vector<64x64xf32>
    %74 = arith.addf %69, %73 : vector<64x64xf32>
    %75 = vector.extract_strided_slice %65 {offsets = [0, 0], sizes = [1, 64], strides = [1, 1]} : vector<11x64xf32> to vector<1x64xf32>
    %76 = vector.broadcast %75 : vector<1x64xf32> to vector<64x64xf32>
    %77 = arith.addf %74, %76 : vector<64x64xf32>
    %cst_32 = arith.constant 0.000000e+00 : f32
    %78 = vector.broadcast %cst_32 : f32 to vector<64x64xf32>
    %79 = arith.maximumf %77, %78 : vector<64x64xf32>
    %80 = vector.extract_strided_slice %65 {offsets = [1, 0], sizes = [1, 64], strides = [1, 1]} : vector<11x64xf32> to vector<1x64xf32>
    %81 = vector.extract_strided_slice %65 {offsets = [2, 0], sizes = [1, 64], strides = [1, 1]} : vector<11x64xf32> to vector<1x64xf32>
    %cst_33 = arith.constant dense<0.000000e+00> : vector<64xf32>
    %82 = vector.multi_reduction <add>, %79, %cst_33 [1] : vector<64x64xf32> to vector<64xf32>
    %83 = vector.shape_cast %82 : vector<64xf32> to vector<64x1xf32>
    %cst_34 = arith.constant 6.400000e+01 : f32
    %84 = vector.broadcast %cst_34 : f32 to vector<64x1xf32>
    %85 = arith.divf %83, %84 : vector<64x1xf32>
    %86 = vector.broadcast %85 : vector<64x1xf32> to vector<64x64xf32>
    %87 = arith.subf %79, %86 : vector<64x64xf32>
    %88 = arith.mulf %87, %87 : vector<64x64xf32>
    %cst_35 = arith.constant dense<0.000000e+00> : vector<64xf32>
    %89 = vector.multi_reduction <add>, %88, %cst_35 [1] : vector<64x64xf32> to vector<64xf32>
    %90 = vector.shape_cast %89 : vector<64xf32> to vector<64x1xf32>
    %cst_36 = arith.constant 6.400000e+01 : f32
    %91 = vector.broadcast %cst_36 : f32 to vector<64x1xf32>
    %92 = arith.divf %90, %91 : vector<64x1xf32>
    %93 = vector.broadcast %85 : vector<64x1xf32> to vector<64x64xf32>
    %94 = arith.subf %79, %93 : vector<64x64xf32>
    %cst_37 = arith.constant 9.99999974E-6 : f32
    %95 = vector.broadcast %cst_37 : f32 to vector<64x1xf32>
    %96 = arith.addf %92, %95 : vector<64x1xf32>
    %97 = math.rsqrt %96 : vector<64x1xf32>
    %98 = vector.broadcast %97 : vector<64x1xf32> to vector<64x64xf32>
    %99 = arith.mulf %94, %98 : vector<64x64xf32>
    %100 = vector.broadcast %80 : vector<1x64xf32> to vector<64x64xf32>
    %101 = arith.mulf %99, %100 : vector<64x64xf32>
    %102 = vector.broadcast %81 : vector<1x64xf32> to vector<64x64xf32>
    %103 = arith.addf %101, %102 : vector<64x64xf32>
    %c0_38 = arith.constant 0 : index
    %c0_39 = arith.constant 0 : index
    %104 = vector.load %arg11[%c0_38, %c0_39] : memref<64x64xf32, #tpu.memory_space<vmem>>, vector<64x64xf32>
    %105 = arith.truncf %103 : vector<64x64xf32> to vector<64x64xbf16>
    %106 = arith.truncf %104 : vector<64x64xf32> to vector<64x64xbf16>
    %cst_40 = arith.constant dense<0.000000e+00> : vector<64x64xf32>
    %107 = tpu.matmul %105, %106, %cst_40 {dimension_numbers = #tpu.dot_dimension_numbers<[1], [0], [0], [1], [0, 0, 1, 1], [], []>} : vector<64x64xbf16>, vector<64x64xbf16>, vector<64x64xf32> -> vector<64x64xf32>
    %108 = vector.extract_strided_slice %65 {offsets = [3, 0], sizes = [1, 64], strides = [1, 1]} : vector<11x64xf32> to vector<1x64xf32>
    %109 = vector.broadcast %108 : vector<1x64xf32> to vector<64x64xf32>
    %110 = arith.addf %107, %109 : vector<64x64xf32>
    %cst_41 = arith.constant 0.000000e+00 : f32
    %111 = vector.broadcast %cst_41 : f32 to vector<64x64xf32>
    %112 = arith.maximumf %110, %111 : vector<64x64xf32>
    %113 = vector.extract_strided_slice %65 {offsets = [4, 0], sizes = [1, 64], strides = [1, 1]} : vector<11x64xf32> to vector<1x64xf32>
    %114 = vector.extract_strided_slice %65 {offsets = [5, 0], sizes = [1, 64], strides = [1, 1]} : vector<11x64xf32> to vector<1x64xf32>
    %cst_42 = arith.constant dense<0.000000e+00> : vector<64xf32>
    %115 = vector.multi_reduction <add>, %112, %cst_42 [1] : vector<64x64xf32> to vector<64xf32>
    %116 = vector.shape_cast %115 : vector<64xf32> to vector<64x1xf32>
    %cst_43 = arith.constant 6.400000e+01 : f32
    %117 = vector.broadcast %cst_43 : f32 to vector<64x1xf32>
    %118 = arith.divf %116, %117 : vector<64x1xf32>
    %119 = vector.broadcast %118 : vector<64x1xf32> to vector<64x64xf32>
    %120 = arith.subf %112, %119 : vector<64x64xf32>
    %121 = arith.mulf %120, %120 : vector<64x64xf32>
    %cst_44 = arith.constant dense<0.000000e+00> : vector<64xf32>
    %122 = vector.multi_reduction <add>, %121, %cst_44 [1] : vector<64x64xf32> to vector<64xf32>
    %123 = vector.shape_cast %122 : vector<64xf32> to vector<64x1xf32>
    %cst_45 = arith.constant 6.400000e+01 : f32
    %124 = vector.broadcast %cst_45 : f32 to vector<64x1xf32>
    %125 = arith.divf %123, %124 : vector<64x1xf32>
    %126 = vector.broadcast %118 : vector<64x1xf32> to vector<64x64xf32>
    %127 = arith.subf %112, %126 : vector<64x64xf32>
    %cst_46 = arith.constant 9.99999974E-6 : f32
    %128 = vector.broadcast %cst_46 : f32 to vector<64x1xf32>
    %129 = arith.addf %125, %128 : vector<64x1xf32>
    %130 = math.rsqrt %129 : vector<64x1xf32>
    %131 = vector.broadcast %130 : vector<64x1xf32> to vector<64x64xf32>
    %132 = arith.mulf %127, %131 : vector<64x64xf32>
    %133 = vector.broadcast %113 : vector<1x64xf32> to vector<64x64xf32>
    %134 = arith.mulf %132, %133 : vector<64x64xf32>
    %135 = vector.broadcast %114 : vector<1x64xf32> to vector<64x64xf32>
    %136 = arith.addf %134, %135 : vector<64x64xf32>
    %137 = vector.extract_strided_slice %65 {offsets = [6, 0], sizes = [1, 64], strides = [1, 1]} : vector<11x64xf32> to vector<1x64xf32>
    %138 = vector.extract_strided_slice %65 {offsets = [7, 0], sizes = [1, 64], strides = [1, 1]} : vector<11x64xf32> to vector<1x64xf32>
    %cst_47 = arith.constant dense<0.000000e+00> : vector<64xf32>
    %139 = vector.multi_reduction <add>, %136, %cst_47 [1] : vector<64x64xf32> to vector<64xf32>
    %140 = vector.shape_cast %139 : vector<64xf32> to vector<64x1xf32>
    %cst_48 = arith.constant 6.400000e+01 : f32
    %141 = vector.broadcast %cst_48 : f32 to vector<64x1xf32>
    %142 = arith.divf %140, %141 : vector<64x1xf32>
    %143 = vector.broadcast %142 : vector<64x1xf32> to vector<64x64xf32>
    %144 = arith.subf %136, %143 : vector<64x64xf32>
    %145 = arith.mulf %144, %144 : vector<64x64xf32>
    %cst_49 = arith.constant dense<0.000000e+00> : vector<64xf32>
    %146 = vector.multi_reduction <add>, %145, %cst_49 [1] : vector<64x64xf32> to vector<64xf32>
    %147 = vector.shape_cast %146 : vector<64xf32> to vector<64x1xf32>
    %cst_50 = arith.constant 6.400000e+01 : f32
    %148 = vector.broadcast %cst_50 : f32 to vector<64x1xf32>
    %149 = arith.divf %147, %148 : vector<64x1xf32>
    %150 = vector.broadcast %142 : vector<64x1xf32> to vector<64x64xf32>
    %151 = arith.subf %136, %150 : vector<64x64xf32>
    %cst_51 = arith.constant 9.99999974E-6 : f32
    %152 = vector.broadcast %cst_51 : f32 to vector<64x1xf32>
    %153 = arith.addf %149, %152 : vector<64x1xf32>
    %154 = math.rsqrt %153 : vector<64x1xf32>
    %155 = vector.broadcast %154 : vector<64x1xf32> to vector<64x64xf32>
    %156 = arith.mulf %151, %155 : vector<64x64xf32>
    %157 = vector.broadcast %137 : vector<1x64xf32> to vector<64x64xf32>
    %158 = arith.mulf %156, %157 : vector<64x64xf32>
    %159 = vector.broadcast %138 : vector<1x64xf32> to vector<64x64xf32>
    %160 = arith.addf %158, %159 : vector<64x64xf32>
    %c0_52 = arith.constant 0 : index
    %c0_53 = arith.constant 0 : index
    %161 = vector.load %arg12[%c0_52, %c0_53] : memref<64x64xf32, #tpu.memory_space<vmem>>, vector<64x64xf32>
    %162 = arith.truncf %160 : vector<64x64xf32> to vector<64x64xbf16>
    %163 = arith.truncf %161 : vector<64x64xf32> to vector<64x64xbf16>
    %cst_54 = arith.constant dense<0.000000e+00> : vector<64x64xf32>
    %164 = tpu.matmul %162, %163, %cst_54 {dimension_numbers = #tpu.dot_dimension_numbers<[1], [0], [0], [1], [0, 0, 1, 1], [], []>} : vector<64x64xbf16>, vector<64x64xbf16>, vector<64x64xf32> -> vector<64x64xf32>
    %165 = vector.extract_strided_slice %65 {offsets = [8, 0], sizes = [1, 64], strides = [1, 1]} : vector<11x64xf32> to vector<1x64xf32>
    %166 = vector.broadcast %165 : vector<1x64xf32> to vector<64x64xf32>
    %167 = arith.addf %164, %166 : vector<64x64xf32>
    %cst_55 = arith.constant 0.000000e+00 : f32
    %168 = vector.broadcast %cst_55 : f32 to vector<64x64xf32>
    %169 = arith.maximumf %167, %168 : vector<64x64xf32>
    %170 = vector.extract_strided_slice %65 {offsets = [9, 0], sizes = [1, 64], strides = [1, 1]} : vector<11x64xf32> to vector<1x64xf32>
    %171 = vector.extract_strided_slice %65 {offsets = [10, 0], sizes = [1, 64], strides = [1, 1]} : vector<11x64xf32> to vector<1x64xf32>
    %cst_56 = arith.constant dense<0.000000e+00> : vector<64xf32>
    %172 = vector.multi_reduction <add>, %169, %cst_56 [1] : vector<64x64xf32> to vector<64xf32>
    %173 = vector.shape_cast %172 : vector<64xf32> to vector<64x1xf32>
    %cst_57 = arith.constant 6.400000e+01 : f32
    %174 = vector.broadcast %cst_57 : f32 to vector<64x1xf32>
    %175 = arith.divf %173, %174 : vector<64x1xf32>
    %176 = vector.broadcast %175 : vector<64x1xf32> to vector<64x64xf32>
    %177 = arith.subf %169, %176 : vector<64x64xf32>
    %178 = arith.mulf %177, %177 : vector<64x64xf32>
    %cst_58 = arith.constant dense<0.000000e+00> : vector<64xf32>
    %179 = vector.multi_reduction <add>, %178, %cst_58 [1] : vector<64x64xf32> to vector<64xf32>
    %180 = vector.shape_cast %179 : vector<64xf32> to vector<64x1xf32>
    %cst_59 = arith.constant 6.400000e+01 : f32
    %181 = vector.broadcast %cst_59 : f32 to vector<64x1xf32>
    %182 = arith.divf %180, %181 : vector<64x1xf32>
    %183 = vector.broadcast %175 : vector<64x1xf32> to vector<64x64xf32>
    %184 = arith.subf %169, %183 : vector<64x64xf32>
    %cst_60 = arith.constant 9.99999974E-6 : f32
    %185 = vector.broadcast %cst_60 : f32 to vector<64x1xf32>
    %186 = arith.addf %182, %185 : vector<64x1xf32>
    %187 = math.rsqrt %186 : vector<64x1xf32>
    %188 = vector.broadcast %187 : vector<64x1xf32> to vector<64x64xf32>
    %189 = arith.mulf %184, %188 : vector<64x64xf32>
    %190 = vector.broadcast %170 : vector<1x64xf32> to vector<64x64xf32>
    %191 = arith.mulf %189, %190 : vector<64x64xf32>
    %192 = vector.broadcast %171 : vector<1x64xf32> to vector<64x64xf32>
    %193 = arith.addf %191, %192 : vector<64x64xf32>
    %c0_61 = arith.constant 0 : index
    %c0_62 = arith.constant 0 : index
    %194 = vector.load %arg14[%c0_61, %c0_62] : memref<64x64xf32, #tpu.memory_space<vmem>>, vector<64x64xf32>
    tpu.vector_store %arg14[%c0_61, %c0_62], %193 {strides = array<i32>} : memref<64x64xf32, #tpu.memory_space<vmem>>, vector<64x64xf32>,
    %c0_63 = arith.constant 0 : index
    %c0_64 = arith.constant 0 : index
    %195 = vector.load %arg15[%c0_63, %c0_64] : memref<64x16xf32, #tpu.memory_space<vmem>>, vector<64x16xf32>
    tpu.vector_store %arg15[%c0_63, %c0_64], %16 {strides = array<i32>} : memref<64x16xf32, #tpu.memory_space<vmem>>, vector<64x16xf32>,
    return
  }
  func.func @transform_0(%arg0: i32) -> (i32, i32) {
    %c0_i32 = arith.constant 0 : i32
    %c0_i32_0 = arith.constant 0 : i32
    return %arg0, %c0_i32 : i32, i32
  }
  func.func @transform_1(%arg0: i32) -> (i32, i32) {
    %c0_i32 = arith.constant 0 : i32
    %c0_i32_0 = arith.constant 0 : i32
    return %arg0, %c0_i32 : i32, i32
  }
  func.func @transform_2(%arg0: i32) -> (i32, i32) {
    %c0_i32 = arith.constant 0 : i32
    %c0_i32_0 = arith.constant 0 : i32
    %c0_i32_1 = arith.constant 0 : i32
    return %c0_i32, %c0_i32_0 : i32, i32
  }
  func.func @transform_3(%arg0: i32) -> (i32, i32) {
    %c0_i32 = arith.constant 0 : i32
    %c0_i32_0 = arith.constant 0 : i32
    %c0_i32_1 = arith.constant 0 : i32
    return %c0_i32, %c0_i32_0 : i32, i32
  }
  func.func @transform_4(%arg0: i32) -> (i32, i32) {
    %c0_i32 = arith.constant 0 : i32
    %c0_i32_0 = arith.constant 0 : i32
    %c0_i32_1 = arith.constant 0 : i32
    return %c0_i32, %c0_i32_0 : i32, i32
  }
  func.func @transform_5(%arg0: i32) -> (i32, i32) {
    %c0_i32 = arith.constant 0 : i32
    %c0_i32_0 = arith.constant 0 : i32
    %c0_i32_1 = arith.constant 0 : i32
    return %c0_i32, %c0_i32_0 : i32, i32
  }
  func.func @transform_6(%arg0: i32) -> (i32, i32) {
    %c0_i32 = arith.constant 0 : i32
    %c0_i32_0 = arith.constant 0 : i32
    %c0_i32_1 = arith.constant 0 : i32
    return %c0_i32, %c0_i32_0 : i32, i32
  }
  func.func @transform_7(%arg0: i32) -> (i32, i32) {
    %c0_i32 = arith.constant 0 : i32
    %c0_i32_0 = arith.constant 0 : i32
    %c0_i32_1 = arith.constant 0 : i32
    return %c0_i32, %c0_i32_0 : i32, i32
  }
  func.func @transform_8(%arg0: i32) -> (i32, i32) {
    %c0_i32 = arith.constant 0 : i32
    %c0_i32_0 = arith.constant 0 : i32
    %c0_i32_1 = arith.constant 0 : i32
    return %c0_i32, %c0_i32_0 : i32, i32
  }
  func.func @transform_9(%arg0: i32) -> (i32, i32) {
    %c0_i32 = arith.constant 0 : i32
    %c0_i32_0 = arith.constant 0 : i32
    %c0_i32_1 = arith.constant 0 : i32
    return %c0_i32, %c0_i32_0 : i32, i32
  }
  func.func @transform_10(%arg0: i32) -> (i32, i32) {
    %c0_i32 = arith.constant 0 : i32
    %c0_i32_0 = arith.constant 0 : i32
    %c0_i32_1 = arith.constant 0 : i32
    return %c0_i32, %c0_i32_0 : i32, i32
  }
  func.func @transform_11(%arg0: i32) -> (i32, i32) {
    %c0_i32 = arith.constant 0 : i32
    %c0_i32_0 = arith.constant 0 : i32
    %c0_i32_1 = arith.constant 0 : i32
    return %c0_i32, %c0_i32_0 : i32, i32
  }
  func.func @transform_12(%arg0: i32) -> (i32, i32) {
    %c0_i32 = arith.constant 0 : i32
    %c0_i32_0 = arith.constant 0 : i32
    %c0_i32_1 = arith.constant 0 : i32
    return %c0_i32, %c0_i32_0 : i32, i32
  }
  func.func @transform_13(%arg0: i32) -> (i32, i32) {
    %c0_i32 = arith.constant 0 : i32
    %c0_i32_0 = arith.constant 0 : i32
    return %arg0, %c0_i32 : i32, i32
  }
  func.func @transform_14(%arg0: i32) -> (i32, i32) {
    %c0_i32 = arith.constant 0 : i32
    %c0_i32_0 = arith.constant 0 : i32
    return %arg0, %c0_i32 : i32, i32
  }
}

module attributes {stable_mosaic.version = 11 : i64} {
  func.func @graphormer_kernel(%arg0: i32, %arg1: memref<32x64xf32, #tpu.memory_space<vmem>>, %arg2: memref<5x32x32xf32, #tpu.memory_space<vmem>>, %arg3: memref<64x192xf32, #tpu.memory_space<vmem>>, %arg4: memref<64x64xf32, #tpu.memory_space<vmem>>, %arg5: memref<64x64xf32, #tpu.memory_space<vmem>>, %arg6: memref<64x64xf32, #tpu.memory_space<vmem>>, %arg7: memref<10x64xf32, #tpu.memory_space<vmem>>, %arg8: memref<64x192xf32, #tpu.memory_space<vmem>>, %arg9: memref<64x64xf32, #tpu.memory_space<vmem>>, %arg10: memref<64x64xf32, #tpu.memory_space<vmem>>, %arg11: memref<64x64xf32, #tpu.memory_space<vmem>>, %arg12: memref<10x64xf32, #tpu.memory_space<vmem>>, %arg13: memref<2x64xf32, #tpu.memory_space<vmem>>, %arg14: memref<32x1xf32, #tpu.memory_space<vmem>>, %arg15: memref<32x1xf32, #tpu.memory_space<vmem>>) attributes {dimension_semantics = [#tpu.dimension_semantics<parallel>], iteration_bounds = array<i64: 2>, scalar_prefetch = 0 : i64, scratch_operands = 0 : i64, tpu.core_type = #tpu.core_type<tc>, window_params = [{transform_indices = @transform_0, window_bounds = array<i64: 32, 64>}, {transform_indices = @transform_1, window_bounds = array<i64: 5, 32, 32>}, {pipeline_mode = #tpu.pipeline_mode<synchronous>, transform_indices = @transform_2, window_bounds = array<i64: 64, 192>}, {pipeline_mode = #tpu.pipeline_mode<synchronous>, transform_indices = @transform_3, window_bounds = array<i64: 64, 64>}, {pipeline_mode = #tpu.pipeline_mode<synchronous>, transform_indices = @transform_4, window_bounds = array<i64: 64, 64>}, {pipeline_mode = #tpu.pipeline_mode<synchronous>, transform_indices = @transform_5, window_bounds = array<i64: 64, 64>}, {pipeline_mode = #tpu.pipeline_mode<synchronous>, transform_indices = @transform_6, window_bounds = array<i64: 10, 64>}, {pipeline_mode = #tpu.pipeline_mode<synchronous>, transform_indices = @transform_7, window_bounds = array<i64: 64, 192>}, {pipeline_mode = #tpu.pipeline_mode<synchronous>, transform_indices = @transform_8, window_bounds = array<i64: 64, 64>}, {pipeline_mode = #tpu.pipeline_mode<synchronous>, transform_indices = @transform_9, window_bounds = array<i64: 64, 64>}, {pipeline_mode = #tpu.pipeline_mode<synchronous>, transform_indices = @transform_10, window_bounds = array<i64: 64, 64>}, {pipeline_mode = #tpu.pipeline_mode<synchronous>, transform_indices = @transform_11, window_bounds = array<i64: 10, 64>}, {pipeline_mode = #tpu.pipeline_mode<synchronous>, transform_indices = @transform_12, window_bounds = array<i64: 2, 64>}, {transform_indices = @transform_13, window_bounds = array<i64: 32, 1>}, {transform_indices = @transform_14, window_bounds = array<i64: 32, 1>}]} {
    %c0 = arith.constant 0 : index
    %c0_0 = arith.constant 0 : index
    %0 = vector.load %arg1[%c0, %c0_0] : memref<32x64xf32, #tpu.memory_space<vmem>>, vector<32x64xf32>
    %c0_1 = arith.constant 0 : index
    %c0_2 = arith.constant 0 : index
    %c0_3 = arith.constant 0 : index
    %1 = vector.load %arg2[%c0_1, %c0_2, %c0_3] : memref<5x32x32xf32, #tpu.memory_space<vmem>>, vector<5x32x32xf32>
    %2 = vector.extract_strided_slice %1 {offsets = [4, 0, 0], sizes = [1, 32, 32], strides = [1, 1, 1]} : vector<5x32x32xf32> to vector<1x32x32xf32>
    %3 = vector.shape_cast %2 : vector<1x32x32xf32> to vector<32x32xf32>
    %cst = arith.constant 0.000000e+00 : f32
    %4 = vector.broadcast %cst : f32 to vector<32x32xf32>
    %5 = arith.cmpf ogt, %3, %4 : vector<32x32xf32>
    %cst_4 = arith.constant -1.000000e+09 : f32
    %cst_5 = arith.constant -2.000000e+09 : f32
    %6 = vector.broadcast %cst_4 : f32 to vector<32x32xf32>
    %7 = vector.broadcast %cst_5 : f32 to vector<32x32xf32>
    %8 = arith.select %5, %6, %7 : vector<32x32xi1>, vector<32x32xf32>
    %c0_6 = arith.constant 0 : index
    %c0_7 = arith.constant 0 : index
    %9 = vector.load %arg13[%c0_6, %c0_7] : memref<2x64xf32, #tpu.memory_space<vmem>>, vector<2x64xf32>
    %10 = vector.extract_strided_slice %9 {offsets = [0, 0], sizes = [1, 64], strides = [1, 1]} : vector<2x64xf32> to vector<1x64xf32>
    %11 = vector.extract_strided_slice %9 {offsets = [1, 0], sizes = [1, 1], strides = [1, 1]} : vector<2x64xf32> to vector<1x1xf32>
    %c0_8 = arith.constant 0 : index
    %c0_9 = arith.constant 0 : index
    %12 = vector.load %arg7[%c0_8, %c0_9] : memref<10x64xf32, #tpu.memory_space<vmem>>, vector<10x64xf32>
    %c0_10 = arith.constant 0 : index
    %c0_11 = arith.constant 0 : index
    %13 = vector.load %arg3[%c0_10, %c0_11] : memref<64x192xf32, #tpu.memory_space<vmem>>, vector<64x192xf32>
    %14 = arith.truncf %0 : vector<32x64xf32> to vector<32x64xbf16>
    %15 = arith.truncf %13 : vector<64x192xf32> to vector<64x192xbf16>
    %cst_12 = arith.constant dense<0.000000e+00> : vector<32x192xf32>
    %16 = tpu.matmul %14, %15, %cst_12 {dimension_numbers = #tpu.dot_dimension_numbers<[1], [0], [0], [1], [0, 0, 1, 1], [], []>} : vector<32x64xbf16>, vector<64x192xbf16>, vector<32x192xf32> -> vector<32x192xf32>
    %17 = vector.extract_strided_slice %16 {offsets = [0, 0], sizes = [32, 64], strides = [1, 1]} : vector<32x192xf32> to vector<32x64xf32>
    %18 = vector.extract_strided_slice %12 {offsets = [0, 0], sizes = [1, 64], strides = [1, 1]} : vector<10x64xf32> to vector<1x64xf32>
    %19 = vector.broadcast %18 : vector<1x64xf32> to vector<32x64xf32>
    %20 = arith.addf %17, %19 : vector<32x64xf32>
    %cst_13 = arith.constant 1.250000e-01 : f32
    %21 = vector.broadcast %cst_13 : f32 to vector<32x64xf32>
    %22 = arith.mulf %20, %21 : vector<32x64xf32>
    %23 = vector.extract_strided_slice %16 {offsets = [0, 64], sizes = [32, 64], strides = [1, 1]} : vector<32x192xf32> to vector<32x64xf32>
    %24 = vector.extract_strided_slice %12 {offsets = [1, 0], sizes = [1, 64], strides = [1, 1]} : vector<10x64xf32> to vector<1x64xf32>
    %25 = vector.broadcast %24 : vector<1x64xf32> to vector<32x64xf32>
    %26 = arith.addf %23, %25 : vector<32x64xf32>
    %27 = vector.extract_strided_slice %16 {offsets = [0, 128], sizes = [32, 64], strides = [1, 1]} : vector<32x192xf32> to vector<32x64xf32>
    %28 = vector.extract_strided_slice %12 {offsets = [2, 0], sizes = [1, 64], strides = [1, 1]} : vector<10x64xf32> to vector<1x64xf32>
    %29 = vector.broadcast %28 : vector<1x64xf32> to vector<32x64xf32>
    %30 = arith.addf %27, %29 : vector<32x64xf32>
    %31 = arith.truncf %30 : vector<32x64xf32> to vector<32x64xbf16>
    %32 = arith.truncf %22 : vector<32x64xf32> to vector<32x64xbf16>
    %33 = arith.truncf %26 : vector<32x64xf32> to vector<32x64xbf16>
    "tpu.trace_start"() <{level = 10 : i32, message = "ad,bd->ab"}> : () -> ()
    %cst_14 = arith.constant dense<0.000000e+00> : vector<32x32xf32>
    %34 = tpu.matmul %32, %33, %cst_14 {dimension_numbers = #tpu.dot_dimension_numbers<[1], [1], [0], [0], [0, 0, 1, 0], [], []>} : vector<32x64xbf16>, vector<32x64xbf16>, vector<32x32xf32> -> vector<32x32xf32>
    %cst_15 = arith.constant 0.000000e+00 : f32
    "tpu.trace_stop"() : () -> ()
    %35 = vector.broadcast %cst_15 : f32 to vector<5x32x32xf32>
    %36 = arith.cmpf ogt, %1, %35 : vector<5x32x32xf32>
    %37 = vector.shape_cast %34 : vector<32x32xf32> to vector<1x32x32xf32>
    %38 = vector.shape_cast %8 : vector<32x32xf32> to vector<1x32x32xf32>
    %39 = vector.shape_cast %37 : vector<1x32x32xf32> to vector<1x32x32xf32>
    %40 = vector.broadcast %39 : vector<1x32x32xf32> to vector<5x32x32xf32>
    %41 = vector.shape_cast %38 : vector<1x32x32xf32> to vector<1x32x32xf32>
    %42 = vector.broadcast %41 : vector<1x32x32xf32> to vector<5x32x32xf32>
    %43 = arith.select %36, %40, %42 : vector<5x32x32xi1>, vector<5x32x32xf32>
    %cst_16 = arith.constant dense<0xFF800000> : vector<5x32xf32>
    %44 = vector.multi_reduction <maximumf>, %43, %cst_16 [2] : vector<5x32x32xf32> to vector<5x32xf32>
    %45 = vector.shape_cast %44 : vector<5x32xf32> to vector<5x32x1xf32>
    %46 = vector.broadcast %45 : vector<5x32x1xf32> to vector<5x32x32xf32>
    %47 = arith.subf %43, %46 : vector<5x32x32xf32>
    %48 = math.exp %47 : vector<5x32x32xf32>
    %cst_17 = arith.constant dense<0.000000e+00> : vector<5x32xf32>
    %49 = vector.multi_reduction <add>, %48, %cst_17 [2] : vector<5x32x32xf32> to vector<5x32xf32>
    %50 = vector.shape_cast %49 : vector<5x32xf32> to vector<5x32x1xf32>
    %51 = tpu.reciprocal %50 {approx = true} : vector<5x32x1xf32> -> vector<5x32x1xf32>
    %52 = vector.broadcast %51 : vector<5x32x1xf32> to vector<5x32x32xf32>
    %53 = arith.mulf %48, %52 : vector<5x32x32xf32>
    %54 = vector.extract_strided_slice %53 {offsets = [0, 0, 0], sizes = [1, 32, 32], strides = [1, 1, 1]} : vector<5x32x32xf32> to vector<1x32x32xf32>
    %55 = vector.shape_cast %54 : vector<1x32x32xf32> to vector<32x32xf32>
    %56 = arith.truncf %55 : vector<32x32xf32> to vector<32x32xbf16>
    %cst_18 = arith.constant dense<0.000000e+00> : vector<32x64xf32>
    %57 = tpu.matmul %56, %31, %cst_18 {dimension_numbers = #tpu.dot_dimension_numbers<[1], [0], [0], [1], [0, 0, 1, 1], [], []>} : vector<32x32xbf16>, vector<32x64xbf16>, vector<32x64xf32> -> vector<32x64xf32>
    %58 = vector.extract_strided_slice %53 {offsets = [1, 0, 0], sizes = [1, 32, 32], strides = [1, 1, 1]} : vector<5x32x32xf32> to vector<1x32x32xf32>
    %59 = vector.shape_cast %58 : vector<1x32x32xf32> to vector<32x32xf32>
    %60 = arith.truncf %59 : vector<32x32xf32> to vector<32x32xbf16>
    %cst_19 = arith.constant dense<0.000000e+00> : vector<32x64xf32>
    %61 = tpu.matmul %60, %31, %cst_19 {dimension_numbers = #tpu.dot_dimension_numbers<[1], [0], [0], [1], [0, 0, 1, 1], [], []>} : vector<32x32xbf16>, vector<32x64xbf16>, vector<32x64xf32> -> vector<32x64xf32>
    %62 = vector.extract_strided_slice %53 {offsets = [2, 0, 0], sizes = [1, 32, 32], strides = [1, 1, 1]} : vector<5x32x32xf32> to vector<1x32x32xf32>
    %63 = vector.shape_cast %62 : vector<1x32x32xf32> to vector<32x32xf32>
    %64 = arith.truncf %63 : vector<32x32xf32> to vector<32x32xbf16>
    %cst_20 = arith.constant dense<0.000000e+00> : vector<32x64xf32>
    %65 = tpu.matmul %64, %31, %cst_20 {dimension_numbers = #tpu.dot_dimension_numbers<[1], [0], [0], [1], [0, 0, 1, 1], [], []>} : vector<32x32xbf16>, vector<32x64xbf16>, vector<32x64xf32> -> vector<32x64xf32>
    %66 = vector.extract_strided_slice %53 {offsets = [3, 0, 0], sizes = [1, 32, 32], strides = [1, 1, 1]} : vector<5x32x32xf32> to vector<1x32x32xf32>
    %67 = vector.shape_cast %66 : vector<1x32x32xf32> to vector<32x32xf32>
    %68 = arith.truncf %67 : vector<32x32xf32> to vector<32x32xbf16>
    %cst_21 = arith.constant dense<0.000000e+00> : vector<32x64xf32>
    %69 = tpu.matmul %68, %31, %cst_21 {dimension_numbers = #tpu.dot_dimension_numbers<[1], [0], [0], [1], [0, 0, 1, 1], [], []>} : vector<32x32xbf16>, vector<32x64xbf16>, vector<32x64xf32> -> vector<32x64xf32>
    %70 = vector.extract_strided_slice %53 {offsets = [4, 0, 0], sizes = [1, 32, 32], strides = [1, 1, 1]} : vector<5x32x32xf32> to vector<1x32x32xf32>
    %71 = vector.shape_cast %70 : vector<1x32x32xf32> to vector<32x32xf32>
    %72 = arith.truncf %71 : vector<32x32xf32> to vector<32x32xbf16>
    %cst_22 = arith.constant dense<0.000000e+00> : vector<32x64xf32>
    %73 = tpu.matmul %72, %31, %cst_22 {dimension_numbers = #tpu.dot_dimension_numbers<[1], [0], [0], [1], [0, 0, 1, 1], [], []>} : vector<32x32xbf16>, vector<32x64xbf16>, vector<32x64xf32> -> vector<32x64xf32>
    %74 = tpu.concatenate %57, %61, %65, %69, %73 in 0 : vector<32x64xf32>, vector<32x64xf32>, vector<32x64xf32>, vector<32x64xf32>, vector<32x64xf32> -> vector<160x64xf32>
    %75 = tpu.concatenate %0, %0, %0, %0, %0 in 0 : vector<32x64xf32>, vector<32x64xf32>, vector<32x64xf32>, vector<32x64xf32>, vector<32x64xf32> -> vector<160x64xf32>
    %c0_23 = arith.constant 0 : index
    %c0_24 = arith.constant 0 : index
    %76 = vector.load %arg4[%c0_23, %c0_24] : memref<64x64xf32, #tpu.memory_space<vmem>>, vector<64x64xf32>
    %77 = arith.truncf %74 : vector<160x64xf32> to vector<160x64xbf16>
    %78 = arith.truncf %76 : vector<64x64xf32> to vector<64x64xbf16>
    %cst_25 = arith.constant dense<0.000000e+00> : vector<160x64xf32>
    %79 = tpu.matmul %77, %78, %cst_25 {dimension_numbers = #tpu.dot_dimension_numbers<[1], [0], [0], [1], [0, 0, 1, 1], [], []>} : vector<160x64xbf16>, vector<64x64xbf16>, vector<160x64xf32> -> vector<160x64xf32>
    %80 = arith.addf %75, %79 : vector<160x64xf32>
    %81 = vector.extract_strided_slice %12 {offsets = [3, 0], sizes = [1, 64], strides = [1, 1]} : vector<10x64xf32> to vector<1x64xf32>
    %82 = vector.broadcast %81 : vector<1x64xf32> to vector<160x64xf32>
    %83 = arith.addf %80, %82 : vector<160x64xf32>
    %84 = vector.extract_strided_slice %12 {offsets = [4, 0], sizes = [1, 64], strides = [1, 1]} : vector<10x64xf32> to vector<1x64xf32>
    %85 = vector.extract_strided_slice %12 {offsets = [5, 0], sizes = [1, 64], strides = [1, 1]} : vector<10x64xf32> to vector<1x64xf32>
    %cst_26 = arith.constant dense<0.000000e+00> : vector<160xf32>
    %86 = vector.multi_reduction <add>, %83, %cst_26 [1] : vector<160x64xf32> to vector<160xf32>
    %87 = vector.shape_cast %86 : vector<160xf32> to vector<160x1xf32>
    %cst_27 = arith.constant 6.400000e+01 : f32
    %88 = vector.broadcast %cst_27 : f32 to vector<160x1xf32>
    %89 = arith.divf %87, %88 : vector<160x1xf32>
    %90 = vector.broadcast %89 : vector<160x1xf32> to vector<160x64xf32>
    %91 = arith.subf %83, %90 : vector<160x64xf32>
    %92 = arith.mulf %91, %91 : vector<160x64xf32>
    %cst_28 = arith.constant dense<0.000000e+00> : vector<160xf32>
    %93 = vector.multi_reduction <add>, %92, %cst_28 [1] : vector<160x64xf32> to vector<160xf32>
    %94 = vector.shape_cast %93 : vector<160xf32> to vector<160x1xf32>
    %cst_29 = arith.constant 6.400000e+01 : f32
    %95 = vector.broadcast %cst_29 : f32 to vector<160x1xf32>
    %96 = arith.divf %94, %95 : vector<160x1xf32>
    %97 = vector.broadcast %89 : vector<160x1xf32> to vector<160x64xf32>
    %98 = arith.subf %83, %97 : vector<160x64xf32>
    %cst_30 = arith.constant 9.99999974E-6 : f32
    %99 = vector.broadcast %cst_30 : f32 to vector<160x1xf32>
    %100 = arith.addf %96, %99 : vector<160x1xf32>
    %101 = math.rsqrt %100 : vector<160x1xf32>
    %102 = vector.broadcast %101 : vector<160x1xf32> to vector<160x64xf32>
    %103 = arith.mulf %98, %102 : vector<160x64xf32>
    %104 = vector.broadcast %84 : vector<1x64xf32> to vector<160x64xf32>
    %105 = arith.mulf %103, %104 : vector<160x64xf32>
    %106 = vector.broadcast %85 : vector<1x64xf32> to vector<160x64xf32>
    %107 = arith.addf %105, %106 : vector<160x64xf32>
    %c0_31 = arith.constant 0 : index
    %c0_32 = arith.constant 0 : index
    %108 = vector.load %arg5[%c0_31, %c0_32] : memref<64x64xf32, #tpu.memory_space<vmem>>, vector<64x64xf32>
    %109 = arith.truncf %107 : vector<160x64xf32> to vector<160x64xbf16>
    %110 = arith.truncf %108 : vector<64x64xf32> to vector<64x64xbf16>
    %cst_33 = arith.constant dense<0.000000e+00> : vector<160x64xf32>
    %111 = tpu.matmul %109, %110, %cst_33 {dimension_numbers = #tpu.dot_dimension_numbers<[1], [0], [0], [1], [0, 0, 1, 1], [], []>} : vector<160x64xbf16>, vector<64x64xbf16>, vector<160x64xf32> -> vector<160x64xf32>
    %112 = vector.extract_strided_slice %12 {offsets = [6, 0], sizes = [1, 64], strides = [1, 1]} : vector<10x64xf32> to vector<1x64xf32>
    %113 = vector.broadcast %112 : vector<1x64xf32> to vector<160x64xf32>
    %114 = arith.addf %111, %113 : vector<160x64xf32>
    %cst_34 = arith.constant 0.000000e+00 : f32
    %115 = vector.broadcast %cst_34 : f32 to vector<160x64xf32>
    %116 = arith.maximumf %114, %115 : vector<160x64xf32>
    %c0_35 = arith.constant 0 : index
    %c0_36 = arith.constant 0 : index
    %117 = vector.load %arg6[%c0_35, %c0_36] : memref<64x64xf32, #tpu.memory_space<vmem>>, vector<64x64xf32>
    %118 = arith.truncf %116 : vector<160x64xf32> to vector<160x64xbf16>
    %119 = arith.truncf %117 : vector<64x64xf32> to vector<64x64xbf16>
    %cst_37 = arith.constant dense<0.000000e+00> : vector<160x64xf32>
    %120 = tpu.matmul %118, %119, %cst_37 {dimension_numbers = #tpu.dot_dimension_numbers<[1], [0], [0], [1], [0, 0, 1, 1], [], []>} : vector<160x64xbf16>, vector<64x64xbf16>, vector<160x64xf32> -> vector<160x64xf32>
    %121 = vector.extract_strided_slice %12 {offsets = [7, 0], sizes = [1, 64], strides = [1, 1]} : vector<10x64xf32> to vector<1x64xf32>
    %122 = vector.broadcast %121 : vector<1x64xf32> to vector<160x64xf32>
    %123 = arith.addf %120, %122 : vector<160x64xf32>
    %124 = arith.addf %107, %123 : vector<160x64xf32>
    %125 = vector.extract_strided_slice %12 {offsets = [8, 0], sizes = [1, 64], strides = [1, 1]} : vector<10x64xf32> to vector<1x64xf32>
    %126 = vector.extract_strided_slice %12 {offsets = [9, 0], sizes = [1, 64], strides = [1, 1]} : vector<10x64xf32> to vector<1x64xf32>
    %cst_38 = arith.constant dense<0.000000e+00> : vector<160xf32>
    %127 = vector.multi_reduction <add>, %124, %cst_38 [1] : vector<160x64xf32> to vector<160xf32>
    %128 = vector.shape_cast %127 : vector<160xf32> to vector<160x1xf32>
    %cst_39 = arith.constant 6.400000e+01 : f32
    %129 = vector.broadcast %cst_39 : f32 to vector<160x1xf32>
    %130 = arith.divf %128, %129 : vector<160x1xf32>
    %131 = vector.broadcast %130 : vector<160x1xf32> to vector<160x64xf32>
    %132 = arith.subf %124, %131 : vector<160x64xf32>
    %133 = arith.mulf %132, %132 : vector<160x64xf32>
    %cst_40 = arith.constant dense<0.000000e+00> : vector<160xf32>
    %134 = vector.multi_reduction <add>, %133, %cst_40 [1] : vector<160x64xf32> to vector<160xf32>
    %135 = vector.shape_cast %134 : vector<160xf32> to vector<160x1xf32>
    %cst_41 = arith.constant 6.400000e+01 : f32
    %136 = vector.broadcast %cst_41 : f32 to vector<160x1xf32>
    %137 = arith.divf %135, %136 : vector<160x1xf32>
    %138 = vector.broadcast %130 : vector<160x1xf32> to vector<160x64xf32>
    %139 = arith.subf %124, %138 : vector<160x64xf32>
    %cst_42 = arith.constant 9.99999974E-6 : f32
    %140 = vector.broadcast %cst_42 : f32 to vector<160x1xf32>
    %141 = arith.addf %137, %140 : vector<160x1xf32>
    %142 = math.rsqrt %141 : vector<160x1xf32>
    %143 = vector.broadcast %142 : vector<160x1xf32> to vector<160x64xf32>
    %144 = arith.mulf %139, %143 : vector<160x64xf32>
    %145 = vector.broadcast %125 : vector<1x64xf32> to vector<160x64xf32>
    %146 = arith.mulf %144, %145 : vector<160x64xf32>
    %147 = vector.broadcast %126 : vector<1x64xf32> to vector<160x64xf32>
    %148 = arith.addf %146, %147 : vector<160x64xf32>
    %149 = vector.broadcast %10 : vector<1x64xf32> to vector<160x64xf32>
    %150 = arith.mulf %148, %149 : vector<160x64xf32>
    %cst_43 = arith.constant dense<0.000000e+00> : vector<160xf32>
    %151 = vector.multi_reduction <add>, %150, %cst_43 [1] : vector<160x64xf32> to vector<160xf32>
    %152 = vector.shape_cast %151 : vector<160xf32> to vector<160x1xf32>
    %153 = vector.broadcast %11 : vector<1x1xf32> to vector<160x1xf32>
    %154 = arith.addf %152, %153 : vector<160x1xf32>
    %c0_44 = arith.constant 0 : index
    %c0_45 = arith.constant 0 : index
    %155 = vector.load %arg12[%c0_44, %c0_45] : memref<10x64xf32, #tpu.memory_space<vmem>>, vector<10x64xf32>
    %c0_46 = arith.constant 0 : index
    %c0_47 = arith.constant 0 : index
    %156 = vector.load %arg8[%c0_46, %c0_47] : memref<64x192xf32, #tpu.memory_space<vmem>>, vector<64x192xf32>
    %157 = arith.truncf %0 : vector<32x64xf32> to vector<32x64xbf16>
    %158 = arith.truncf %156 : vector<64x192xf32> to vector<64x192xbf16>
    %cst_48 = arith.constant dense<0.000000e+00> : vector<32x192xf32>
    %159 = tpu.matmul %157, %158, %cst_48 {dimension_numbers = #tpu.dot_dimension_numbers<[1], [0], [0], [1], [0, 0, 1, 1], [], []>} : vector<32x64xbf16>, vector<64x192xbf16>, vector<32x192xf32> -> vector<32x192xf32>
    %160 = vector.extract_strided_slice %159 {offsets = [0, 0], sizes = [32, 64], strides = [1, 1]} : vector<32x192xf32> to vector<32x64xf32>
    %161 = vector.extract_strided_slice %155 {offsets = [0, 0], sizes = [1, 64], strides = [1, 1]} : vector<10x64xf32> to vector<1x64xf32>
    %162 = vector.broadcast %161 : vector<1x64xf32> to vector<32x64xf32>
    %163 = arith.addf %160, %162 : vector<32x64xf32>
    %cst_49 = arith.constant 1.250000e-01 : f32
    %164 = vector.broadcast %cst_49 : f32 to vector<32x64xf32>
    %165 = arith.mulf %163, %164 : vector<32x64xf32>
    %166 = vector.extract_strided_slice %159 {offsets = [0, 64], sizes = [32, 64], strides = [1, 1]} : vector<32x192xf32> to vector<32x64xf32>
    %167 = vector.extract_strided_slice %155 {offsets = [1, 0], sizes = [1, 64], strides = [1, 1]} : vector<10x64xf32> to vector<1x64xf32>
    %168 = vector.broadcast %167 : vector<1x64xf32> to vector<32x64xf32>
    %169 = arith.addf %166, %168 : vector<32x64xf32>
    %170 = vector.extract_strided_slice %159 {offsets = [0, 128], sizes = [32, 64], strides = [1, 1]} : vector<32x192xf32> to vector<32x64xf32>
    %171 = vector.extract_strided_slice %155 {offsets = [2, 0], sizes = [1, 64], strides = [1, 1]} : vector<10x64xf32> to vector<1x64xf32>
    %172 = vector.broadcast %171 : vector<1x64xf32> to vector<32x64xf32>
    %173 = arith.addf %170, %172 : vector<32x64xf32>
    %174 = arith.truncf %173 : vector<32x64xf32> to vector<32x64xbf16>
    %175 = arith.truncf %165 : vector<32x64xf32> to vector<32x64xbf16>
    %176 = arith.truncf %169 : vector<32x64xf32> to vector<32x64xbf16>
    "tpu.trace_start"() <{level = 10 : i32, message = "ad,bd->ab"}> : () -> ()
    %cst_50 = arith.constant dense<0.000000e+00> : vector<32x32xf32>
    %177 = tpu.matmul %175, %176, %cst_50 {dimension_numbers = #tpu.dot_dimension_numbers<[1], [1], [0], [0], [0, 0, 1, 0], [], []>} : vector<32x64xbf16>, vector<32x64xbf16>, vector<32x32xf32> -> vector<32x32xf32>
    "tpu.trace_stop"() : () -> ()
    %178 = vector.extract_strided_slice %1 {offsets = [0, 0, 0], sizes = [4, 32, 32], strides = [1, 1, 1]} : vector<5x32x32xf32> to vector<4x32x32xf32>
    %cst_51 = arith.constant 0.000000e+00 : f32
    %179 = vector.broadcast %cst_51 : f32 to vector<4x32x32xf32>
    %180 = arith.cmpf ogt, %178, %179 : vector<4x32x32xf32>
    %181 = vector.shape_cast %177 : vector<32x32xf32> to vector<1x32x32xf32>
    %182 = vector.shape_cast %8 : vector<32x32xf32> to vector<1x32x32xf32>
    %183 = vector.shape_cast %181 : vector<1x32x32xf32> to vector<1x32x32xf32>
    %184 = vector.broadcast %183 : vector<1x32x32xf32> to vector<4x32x32xf32>
    %185 = vector.shape_cast %182 : vector<1x32x32xf32> to vector<1x32x32xf32>
    %186 = vector.broadcast %185 : vector<1x32x32xf32> to vector<4x32x32xf32>
    %187 = arith.select %180, %184, %186 : vector<4x32x32xi1>, vector<4x32x32xf32>
    %cst_52 = arith.constant dense<0xFF800000> : vector<4x32xf32>
    %188 = vector.multi_reduction <maximumf>, %187, %cst_52 [2] : vector<4x32x32xf32> to vector<4x32xf32>
    %189 = vector.shape_cast %188 : vector<4x32xf32> to vector<4x32x1xf32>
    %190 = vector.broadcast %189 : vector<4x32x1xf32> to vector<4x32x32xf32>
    %191 = arith.subf %187, %190 : vector<4x32x32xf32>
    %192 = math.exp %191 : vector<4x32x32xf32>
    %cst_53 = arith.constant dense<0.000000e+00> : vector<4x32xf32>
    %193 = vector.multi_reduction <add>, %192, %cst_53 [2] : vector<4x32x32xf32> to vector<4x32xf32>
    %194 = vector.shape_cast %193 : vector<4x32xf32> to vector<4x32x1xf32>
    %195 = tpu.reciprocal %194 {approx = true} : vector<4x32x1xf32> -> vector<4x32x1xf32>
    %196 = vector.broadcast %195 : vector<4x32x1xf32> to vector<4x32x32xf32>
    %197 = arith.mulf %192, %196 : vector<4x32x32xf32>
    %198 = vector.extract_strided_slice %197 {offsets = [0, 0, 0], sizes = [1, 32, 32], strides = [1, 1, 1]} : vector<4x32x32xf32> to vector<1x32x32xf32>
    %199 = vector.shape_cast %198 : vector<1x32x32xf32> to vector<32x32xf32>
    %200 = arith.truncf %199 : vector<32x32xf32> to vector<32x32xbf16>
    %cst_54 = arith.constant dense<0.000000e+00> : vector<32x64xf32>
    %201 = tpu.matmul %200, %174, %cst_54 {dimension_numbers = #tpu.dot_dimension_numbers<[1], [0], [0], [1], [0, 0, 1, 1], [], []>} : vector<32x32xbf16>, vector<32x64xbf16>, vector<32x64xf32> -> vector<32x64xf32>
    %202 = vector.extract_strided_slice %197 {offsets = [1, 0, 0], sizes = [1, 32, 32], strides = [1, 1, 1]} : vector<4x32x32xf32> to vector<1x32x32xf32>
    %203 = vector.shape_cast %202 : vector<1x32x32xf32> to vector<32x32xf32>
    %204 = arith.truncf %203 : vector<32x32xf32> to vector<32x32xbf16>
    %cst_55 = arith.constant dense<0.000000e+00> : vector<32x64xf32>
    %205 = tpu.matmul %204, %174, %cst_55 {dimension_numbers = #tpu.dot_dimension_numbers<[1], [0], [0], [1], [0, 0, 1, 1], [], []>} : vector<32x32xbf16>, vector<32x64xbf16>, vector<32x64xf32> -> vector<32x64xf32>
    %206 = vector.extract_strided_slice %197 {offsets = [2, 0, 0], sizes = [1, 32, 32], strides = [1, 1, 1]} : vector<4x32x32xf32> to vector<1x32x32xf32>
    %207 = vector.shape_cast %206 : vector<1x32x32xf32> to vector<32x32xf32>
    %208 = arith.truncf %207 : vector<32x32xf32> to vector<32x32xbf16>
    %cst_56 = arith.constant dense<0.000000e+00> : vector<32x64xf32>
    %209 = tpu.matmul %208, %174, %cst_56 {dimension_numbers = #tpu.dot_dimension_numbers<[1], [0], [0], [1], [0, 0, 1, 1], [], []>} : vector<32x32xbf16>, vector<32x64xbf16>, vector<32x64xf32> -> vector<32x64xf32>
    %210 = vector.extract_strided_slice %197 {offsets = [3, 0, 0], sizes = [1, 32, 32], strides = [1, 1, 1]} : vector<4x32x32xf32> to vector<1x32x32xf32>
    %211 = vector.shape_cast %210 : vector<1x32x32xf32> to vector<32x32xf32>
    %212 = arith.truncf %211 : vector<32x32xf32> to vector<32x32xbf16>
    %cst_57 = arith.constant dense<0.000000e+00> : vector<32x64xf32>
    %213 = tpu.matmul %212, %174, %cst_57 {dimension_numbers = #tpu.dot_dimension_numbers<[1], [0], [0], [1], [0, 0, 1, 1], [], []>} : vector<32x32xbf16>, vector<32x64xbf16>, vector<32x64xf32> -> vector<32x64xf32>
    %214 = tpu.concatenate %201, %205, %209, %213 in 0 : vector<32x64xf32>, vector<32x64xf32>, vector<32x64xf32>, vector<32x64xf32> -> vector<128x64xf32>
    %215 = tpu.concatenate %0, %0, %0, %0 in 0 : vector<32x64xf32>, vector<32x64xf32>, vector<32x64xf32>, vector<32x64xf32> -> vector<128x64xf32>
    %c0_58 = arith.constant 0 : index
    %c0_59 = arith.constant 0 : index
    %216 = vector.load %arg9[%c0_58, %c0_59] : memref<64x64xf32, #tpu.memory_space<vmem>>, vector<64x64xf32>
    %217 = arith.truncf %214 : vector<128x64xf32> to vector<128x64xbf16>
    %218 = arith.truncf %216 : vector<64x64xf32> to vector<64x64xbf16>
    %cst_60 = arith.constant dense<0.000000e+00> : vector<128x64xf32>
    %219 = tpu.matmul %217, %218, %cst_60 {dimension_numbers = #tpu.dot_dimension_numbers<[1], [0], [0], [1], [0, 0, 1, 1], [], []>} : vector<128x64xbf16>, vector<64x64xbf16>, vector<128x64xf32> -> vector<128x64xf32>
    %220 = arith.addf %215, %219 : vector<128x64xf32>
    %221 = vector.extract_strided_slice %155 {offsets = [3, 0], sizes = [1, 64], strides = [1, 1]} : vector<10x64xf32> to vector<1x64xf32>
    %222 = vector.broadcast %221 : vector<1x64xf32> to vector<128x64xf32>
    %223 = arith.addf %220, %222 : vector<128x64xf32>
    %224 = vector.extract_strided_slice %155 {offsets = [4, 0], sizes = [1, 64], strides = [1, 1]} : vector<10x64xf32> to vector<1x64xf32>
    %225 = vector.extract_strided_slice %155 {offsets = [5, 0], sizes = [1, 64], strides = [1, 1]} : vector<10x64xf32> to vector<1x64xf32>
    %cst_61 = arith.constant dense<0.000000e+00> : vector<128xf32>
    %226 = vector.multi_reduction <add>, %223, %cst_61 [1] : vector<128x64xf32> to vector<128xf32>
    %227 = vector.shape_cast %226 : vector<128xf32> to vector<128x1xf32>
    %cst_62 = arith.constant 6.400000e+01 : f32
    %228 = vector.broadcast %cst_62 : f32 to vector<128x1xf32>
    %229 = arith.divf %227, %228 : vector<128x1xf32>
    %230 = vector.broadcast %229 : vector<128x1xf32> to vector<128x64xf32>
    %231 = arith.subf %223, %230 : vector<128x64xf32>
    %232 = arith.mulf %231, %231 : vector<128x64xf32>
    %cst_63 = arith.constant dense<0.000000e+00> : vector<128xf32>
    %233 = vector.multi_reduction <add>, %232, %cst_63 [1] : vector<128x64xf32> to vector<128xf32>
    %234 = vector.shape_cast %233 : vector<128xf32> to vector<128x1xf32>
    %cst_64 = arith.constant 6.400000e+01 : f32
    %235 = vector.broadcast %cst_64 : f32 to vector<128x1xf32>
    %236 = arith.divf %234, %235 : vector<128x1xf32>
    %237 = vector.broadcast %229 : vector<128x1xf32> to vector<128x64xf32>
    %238 = arith.subf %223, %237 : vector<128x64xf32>
    %cst_65 = arith.constant 9.99999974E-6 : f32
    %239 = vector.broadcast %cst_65 : f32 to vector<128x1xf32>
    %240 = arith.addf %236, %239 : vector<128x1xf32>
    %241 = math.rsqrt %240 : vector<128x1xf32>
    %242 = vector.broadcast %241 : vector<128x1xf32> to vector<128x64xf32>
    %243 = arith.mulf %238, %242 : vector<128x64xf32>
    %244 = vector.broadcast %224 : vector<1x64xf32> to vector<128x64xf32>
    %245 = arith.mulf %243, %244 : vector<128x64xf32>
    %246 = vector.broadcast %225 : vector<1x64xf32> to vector<128x64xf32>
    %247 = arith.addf %245, %246 : vector<128x64xf32>
    %c0_66 = arith.constant 0 : index
    %c0_67 = arith.constant 0 : index
    %248 = vector.load %arg10[%c0_66, %c0_67] : memref<64x64xf32, #tpu.memory_space<vmem>>, vector<64x64xf32>
    %249 = arith.truncf %247 : vector<128x64xf32> to vector<128x64xbf16>
    %250 = arith.truncf %248 : vector<64x64xf32> to vector<64x64xbf16>
    %cst_68 = arith.constant dense<0.000000e+00> : vector<128x64xf32>
    %251 = tpu.matmul %249, %250, %cst_68 {dimension_numbers = #tpu.dot_dimension_numbers<[1], [0], [0], [1], [0, 0, 1, 1], [], []>} : vector<128x64xbf16>, vector<64x64xbf16>, vector<128x64xf32> -> vector<128x64xf32>
    %252 = vector.extract_strided_slice %155 {offsets = [6, 0], sizes = [1, 64], strides = [1, 1]} : vector<10x64xf32> to vector<1x64xf32>
    %253 = vector.broadcast %252 : vector<1x64xf32> to vector<128x64xf32>
    %254 = arith.addf %251, %253 : vector<128x64xf32>
    %cst_69 = arith.constant 0.000000e+00 : f32
    %255 = vector.broadcast %cst_69 : f32 to vector<128x64xf32>
    %256 = arith.maximumf %254, %255 : vector<128x64xf32>
    %c0_70 = arith.constant 0 : index
    %c0_71 = arith.constant 0 : index
    %257 = vector.load %arg11[%c0_70, %c0_71] : memref<64x64xf32, #tpu.memory_space<vmem>>, vector<64x64xf32>
    %258 = arith.truncf %256 : vector<128x64xf32> to vector<128x64xbf16>
    %259 = arith.truncf %257 : vector<64x64xf32> to vector<64x64xbf16>
    %cst_72 = arith.constant dense<0.000000e+00> : vector<128x64xf32>
    %260 = tpu.matmul %258, %259, %cst_72 {dimension_numbers = #tpu.dot_dimension_numbers<[1], [0], [0], [1], [0, 0, 1, 1], [], []>} : vector<128x64xbf16>, vector<64x64xbf16>, vector<128x64xf32> -> vector<128x64xf32>
    %261 = vector.extract_strided_slice %155 {offsets = [7, 0], sizes = [1, 64], strides = [1, 1]} : vector<10x64xf32> to vector<1x64xf32>
    %262 = vector.broadcast %261 : vector<1x64xf32> to vector<128x64xf32>
    %263 = arith.addf %260, %262 : vector<128x64xf32>
    %264 = arith.addf %247, %263 : vector<128x64xf32>
    %265 = vector.extract_strided_slice %155 {offsets = [8, 0], sizes = [1, 64], strides = [1, 1]} : vector<10x64xf32> to vector<1x64xf32>
    %266 = vector.extract_strided_slice %155 {offsets = [9, 0], sizes = [1, 64], strides = [1, 1]} : vector<10x64xf32> to vector<1x64xf32>
    %cst_73 = arith.constant dense<0.000000e+00> : vector<128xf32>
    %267 = vector.multi_reduction <add>, %264, %cst_73 [1] : vector<128x64xf32> to vector<128xf32>
    %268 = vector.shape_cast %267 : vector<128xf32> to vector<128x1xf32>
    %cst_74 = arith.constant 6.400000e+01 : f32
    %269 = vector.broadcast %cst_74 : f32 to vector<128x1xf32>
    %270 = arith.divf %268, %269 : vector<128x1xf32>
    %271 = vector.broadcast %270 : vector<128x1xf32> to vector<128x64xf32>
    %272 = arith.subf %264, %271 : vector<128x64xf32>
    %273 = arith.mulf %272, %272 : vector<128x64xf32>
    %cst_75 = arith.constant dense<0.000000e+00> : vector<128xf32>
    %274 = vector.multi_reduction <add>, %273, %cst_75 [1] : vector<128x64xf32> to vector<128xf32>
    %275 = vector.shape_cast %274 : vector<128xf32> to vector<128x1xf32>
    %cst_76 = arith.constant 6.400000e+01 : f32
    %276 = vector.broadcast %cst_76 : f32 to vector<128x1xf32>
    %277 = arith.divf %275, %276 : vector<128x1xf32>
    %278 = vector.broadcast %270 : vector<128x1xf32> to vector<128x64xf32>
    %279 = arith.subf %264, %278 : vector<128x64xf32>
    %cst_77 = arith.constant 9.99999974E-6 : f32
    %280 = vector.broadcast %cst_77 : f32 to vector<128x1xf32>
    %281 = arith.addf %277, %280 : vector<128x1xf32>
    %282 = math.rsqrt %281 : vector<128x1xf32>
    %283 = vector.broadcast %282 : vector<128x1xf32> to vector<128x64xf32>
    %284 = arith.mulf %279, %283 : vector<128x64xf32>
    %285 = vector.broadcast %265 : vector<1x64xf32> to vector<128x64xf32>
    %286 = arith.mulf %284, %285 : vector<128x64xf32>
    %287 = vector.broadcast %266 : vector<1x64xf32> to vector<128x64xf32>
    %288 = arith.addf %286, %287 : vector<128x64xf32>
    %289 = vector.broadcast %10 : vector<1x64xf32> to vector<128x64xf32>
    %290 = arith.mulf %288, %289 : vector<128x64xf32>
    %cst_78 = arith.constant dense<0.000000e+00> : vector<128xf32>
    %291 = vector.multi_reduction <add>, %290, %cst_78 [1] : vector<128x64xf32> to vector<128xf32>
    %292 = vector.shape_cast %291 : vector<128xf32> to vector<128x1xf32>
    %293 = vector.broadcast %11 : vector<1x1xf32> to vector<128x1xf32>
    %294 = arith.addf %292, %293 : vector<128x1xf32>
    %295 = vector.extract_strided_slice %154 {offsets = [128, 0], sizes = [32, 1], strides = [1, 1]} : vector<160x1xf32> to vector<32x1xf32>
    %c0_79 = arith.constant 0 : index
    %c0_80 = arith.constant 0 : index
    %296 = vector.load %arg15[%c0_79, %c0_80] : memref<32x1xf32, #tpu.memory_space<vmem>>, vector<32x1xf32>
    tpu.vector_store %arg15[%c0_79, %c0_80], %295 {strides = array<i32>} : memref<32x1xf32, #tpu.memory_space<vmem>>, vector<32x1xf32>,
    %297 = vector.extract_strided_slice %154 {offsets = [0, 0], sizes = [128, 1], strides = [1, 1]} : vector<160x1xf32> to vector<128x1xf32>
    %298 = arith.subf %297, %294 : vector<128x1xf32>
    %299 = vector.extract_strided_slice %298 {offsets = [0, 0], sizes = [32, 1], strides = [1, 1]} : vector<128x1xf32> to vector<32x1xf32>
    %300 = vector.extract_strided_slice %298 {offsets = [32, 0], sizes = [32, 1], strides = [1, 1]} : vector<128x1xf32> to vector<32x1xf32>
    %301 = arith.addf %299, %300 : vector<32x1xf32>
    %302 = vector.extract_strided_slice %298 {offsets = [64, 0], sizes = [32, 1], strides = [1, 1]} : vector<128x1xf32> to vector<32x1xf32>
    %303 = arith.addf %301, %302 : vector<32x1xf32>
    %304 = vector.extract_strided_slice %298 {offsets = [96, 0], sizes = [32, 1], strides = [1, 1]} : vector<128x1xf32> to vector<32x1xf32>
    %305 = arith.addf %303, %304 : vector<32x1xf32>
    %cst_81 = arith.constant 2.500000e-01 : f32
    %306 = vector.broadcast %cst_81 : f32 to vector<32x1xf32>
    %307 = arith.mulf %305, %306 : vector<32x1xf32>
    %c0_82 = arith.constant 0 : index
    %c0_83 = arith.constant 0 : index
    %308 = vector.load %arg14[%c0_82, %c0_83] : memref<32x1xf32, #tpu.memory_space<vmem>>, vector<32x1xf32>
    tpu.vector_store %arg14[%c0_82, %c0_83], %307 {strides = array<i32>} : memref<32x1xf32, #tpu.memory_space<vmem>>, vector<32x1xf32>,
    return
  }
  func.func @transform_0(%arg0: i32) -> (i32, i32) {
    %c0_i32 = arith.constant 0 : i32
    %c0_i32_0 = arith.constant 0 : i32
    return %arg0, %c0_i32 : i32, i32
  }
  func.func @transform_1(%arg0: i32) -> (i32, i32, i32) {
    %c0_i32 = arith.constant 0 : i32
    %c0_i32_0 = arith.constant 0 : i32
    %c0_i32_1 = arith.constant 0 : i32
    return %arg0, %c0_i32, %c0_i32_0 : i32, i32, i32
  }
  func.func @transform_2(%arg0: i32) -> (i32, i32) {
    %c0_i32 = arith.constant 0 : i32
    %c0_i32_0 = arith.constant 0 : i32
    %c0_i32_1 = arith.constant 0 : i32
    return %c0_i32, %c0_i32_0 : i32, i32
  }
  func.func @transform_3(%arg0: i32) -> (i32, i32) {
    %c0_i32 = arith.constant 0 : i32
    %c0_i32_0 = arith.constant 0 : i32
    %c0_i32_1 = arith.constant 0 : i32
    return %c0_i32, %c0_i32_0 : i32, i32
  }
  func.func @transform_4(%arg0: i32) -> (i32, i32) {
    %c0_i32 = arith.constant 0 : i32
    %c0_i32_0 = arith.constant 0 : i32
    %c0_i32_1 = arith.constant 0 : i32
    return %c0_i32, %c0_i32_0 : i32, i32
  }
  func.func @transform_5(%arg0: i32) -> (i32, i32) {
    %c0_i32 = arith.constant 0 : i32
    %c0_i32_0 = arith.constant 0 : i32
    %c0_i32_1 = arith.constant 0 : i32
    return %c0_i32, %c0_i32_0 : i32, i32
  }
  func.func @transform_6(%arg0: i32) -> (i32, i32) {
    %c0_i32 = arith.constant 0 : i32
    %c0_i32_0 = arith.constant 0 : i32
    %c0_i32_1 = arith.constant 0 : i32
    return %c0_i32, %c0_i32_0 : i32, i32
  }
  func.func @transform_7(%arg0: i32) -> (i32, i32) {
    %c0_i32 = arith.constant 0 : i32
    %c0_i32_0 = arith.constant 0 : i32
    %c0_i32_1 = arith.constant 0 : i32
    return %c0_i32, %c0_i32_0 : i32, i32
  }
  func.func @transform_8(%arg0: i32) -> (i32, i32) {
    %c0_i32 = arith.constant 0 : i32
    %c0_i32_0 = arith.constant 0 : i32
    %c0_i32_1 = arith.constant 0 : i32
    return %c0_i32, %c0_i32_0 : i32, i32
  }
  func.func @transform_9(%arg0: i32) -> (i32, i32) {
    %c0_i32 = arith.constant 0 : i32
    %c0_i32_0 = arith.constant 0 : i32
    %c0_i32_1 = arith.constant 0 : i32
    return %c0_i32, %c0_i32_0 : i32, i32
  }
  func.func @transform_10(%arg0: i32) -> (i32, i32) {
    %c0_i32 = arith.constant 0 : i32
    %c0_i32_0 = arith.constant 0 : i32
    %c0_i32_1 = arith.constant 0 : i32
    return %c0_i32, %c0_i32_0 : i32, i32
  }
  func.func @transform_11(%arg0: i32) -> (i32, i32) {
    %c0_i32 = arith.constant 0 : i32
    %c0_i32_0 = arith.constant 0 : i32
    %c0_i32_1 = arith.constant 0 : i32
    return %c0_i32, %c0_i32_0 : i32, i32
  }
  func.func @transform_12(%arg0: i32) -> (i32, i32) {
    %c0_i32 = arith.constant 0 : i32
    %c0_i32_0 = arith.constant 0 : i32
    %c0_i32_1 = arith.constant 0 : i32
    return %c0_i32, %c0_i32_0 : i32, i32
  }
  func.func @transform_13(%arg0: i32) -> (i32, i32) {
    %c0_i32 = arith.constant 0 : i32
    %c0_i32_0 = arith.constant 0 : i32
    return %arg0, %c0_i32 : i32, i32
  }
  func.func @transform_14(%arg0: i32) -> (i32, i32) {
    %c0_i32 = arith.constant 0 : i32
    %c0_i32_0 = arith.constant 0 : i32
    return %arg0, %c0_i32 : i32, i32
  }
}

</mosaic_0001>

<llo_original>
// kernel: shapley_critic2_forward.2
$region0: #{shapley_critic2_forward.2}
  #allocation0 [shape = 'u32[]', space=smem, size = 0x4, offset = 0x4, fixed_abs, tag = 'smem constant byte address 0x4 - core index']
  #allocation1 [shape = 'u32[72,128]{1,0:T(1,128)}', space=vmem, size = 0x9000, scoped, tag = 'internal scratch']
  %s0 = inlined_call_operand.vmem [shape: f32[64,32], index: 0, kind: input, shape index: {}]
  %s1 = inlined_call_operand.vmem [shape: f32[64,16], index: 1, kind: input, shape index: {}]
  %s2 = inlined_call_operand.vmem [shape: f32[22,16], index: 2, kind: input, shape index: {}]
  %s3 = inlined_call_operand.vmem [shape: f32[16,16], index: 3, kind: input, shape index: {}]
  %s4 = inlined_call_operand.vmem [shape: f32[16,16], index: 4, kind: input, shape index: {}]
  %s5 = inlined_call_operand.vmem [shape: f32[2,16], index: 5, kind: input, shape index: {}]
  %s6 = inlined_call_operand.vmem [shape: f32[2,16], index: 6, kind: input, shape index: {}]
  %s7 = inlined_call_operand.vmem [shape: f32[2,32], index: 7, kind: input, shape index: {}]
  %s8 = inlined_call_operand.vmem [shape: f32[16,64], index: 8, kind: input, shape index: {}]
  %s9 = inlined_call_operand.vmem [shape: f32[32,64], index: 9, kind: input, shape index: {}]
  %s10 = inlined_call_operand.vmem [shape: f32[64,64], index: 10, kind: input, shape index: {}]
  %s11 = inlined_call_operand.vmem [shape: f32[64,64], index: 11, kind: input, shape index: {}]
  %s12 = inlined_call_operand.vmem [shape: f32[11,64], index: 12, kind: input, shape index: {}]
  %s13 = inlined_call_operand.vmem [shape: f32[64,64], index: 13, kind: output, shape index: {0}]
  %s14 = inlined_call_operand.hbm [shape: f32[64,16], index: 14, kind: output, shape index: {1}]
  %15 = xla_tuple %s13, %s14
  %s16 = sld [smem:[#allocation0]]
  $region70: #{shapley_critic2_forward.2} parent=0
    _
  %s18 = ssub.s32 1, %s16
  %s19 = scalar_select 0, %s18, %s16
  $region1: #{shapley_critic2_forward.2} parent=0
    #allocation2 [shape = 'u8[32768]{0}', space=vmem, size = 0x8000, scoped, tag = 'output window, operand 1, single buffered']
    #allocation3 [shape = 's32[1]{0}', space=sflag, size = 0x4, scoped, tag = 'scoped memory for shapley_critic2_forward.2']
    %20 = vsyncpa [#allocation3], 0
    // Predicated region
    $region2: #{shapley_critic2_forward.2} parent=1 // pred_check
      _
    $region3: #{shapley_critic2_forward.2} parent=1 // pred_check_branch
      %22 = sbr.rel (0) target = $region5
    $region4: #{shapley_critic2_forward.2} parent=1 // pred_region
      _
    $region5: #{shapley_critic2_forward.2} parent=1 // pred_fallthru
      _
    // Predicated region
    $region6: #{shapley_critic2_forward.2} parent=1 // pred_check
      _
    $region7: #{shapley_critic2_forward.2} parent=1 // pred_check_branch
      %24 = sbr.rel (0) target = $region9
    $region8: #{shapley_critic2_forward.2} parent=1 // pred_region
      _
    $region9: #{shapley_critic2_forward.2} parent=1 // pred_fallthru
      _
    // Predicated region
    $region10: #{shapley_critic2_forward.2} parent=1 // pred_check
      _
    $region11: #{shapley_critic2_forward.2} parent=1 // pred_check_branch
      %26 = sbr.rel (0) target = $region13
    $region12: #{shapley_critic2_forward.2} parent=1 // pred_region
      _
    $region13: #{shapley_critic2_forward.2} parent=1 // pred_fallthru
      _
    // Predicated region
    $region14: #{shapley_critic2_forward.2} parent=1 // pred_check
      _
    $region15: #{shapley_critic2_forward.2} parent=1 // pred_check_branch
      %28 = sbr.rel (0) target = $region17
    $region16: #{shapley_critic2_forward.2} parent=1 // pred_region
      _
    $region17: #{shapley_critic2_forward.2} parent=1 // pred_fallthru
      _
    // Predicated region
    $region18: #{shapley_critic2_forward.2} parent=1 // pred_check
      _
    $region19: #{shapley_critic2_forward.2} parent=1 // pred_check_branch
      %30 = sbr.rel (0) target = $region21
    $region20: #{shapley_critic2_forward.2} parent=1 // pred_region
      _
    $region21: #{shapley_critic2_forward.2} parent=1 // pred_fallthru
      _
    // Predicated region
    $region22: #{shapley_critic2_forward.2} parent=1 // pred_check
      _
    $region23: #{shapley_critic2_forward.2} parent=1 // pred_check_branch
      %32 = sbr.rel (0) target = $region25
    $region24: #{shapley_critic2_forward.2} parent=1 // pred_region
      _
    $region25: #{shapley_critic2_forward.2} parent=1 // pred_fallthru
      _
    // Predicated region
    $region26: #{shapley_critic2_forward.2} parent=1 // pred_check
      _
    $region27: #{shapley_critic2_forward.2} parent=1 // pred_check_branch
      %34 = sbr.rel (0) target = $region29
    $region28: #{shapley_critic2_forward.2} parent=1 // pred_region
      _
    $region29: #{shapley_critic2_forward.2} parent=1 // pred_fallthru
      _
    // Predicated region
    $region30: #{shapley_critic2_forward.2} parent=1 // pred_check
      _
    $region31: #{shapley_critic2_forward.2} parent=1 // pred_check_branch
      %36 = sbr.rel (0) target = $region33
    $region32: #{shapley_critic2_forward.2} parent=1 // pred_region
      _
    $region33: #{shapley_critic2_forward.2} parent=1 // pred_fallthru
      _
    // Predicated region
    $region34: #{shapley_critic2_forward.2} parent=1 // pred_check
      _
    $region35: #{shapley_critic2_forward.2} parent=1 // pred_check_branch
      %38 = sbr.rel (0) target = $region37
    $region36: #{shapley_critic2_forward.2} parent=1 // pred_region
      _
    $region37: #{shapley_critic2_forward.2} parent=1 // pred_fallthru
      _
    // Predicated region
    $region38: #{shapley_critic2_forward.2} parent=1 // pred_check
      _
    $region39: #{shapley_critic2_forward.2} parent=1 // pred_check_branch
      %40 = sbr.rel (0) target = $region41
    $region40: #{shapley_critic2_forward.2} parent=1 // pred_region
      _
    $region41: #{shapley_critic2_forward.2} parent=1 // pred_fallthru
      _
    // Predicated region
    $region42: #{shapley_critic2_forward.2} parent=1 // pred_check
      _
    $region43: #{shapley_critic2_forward.2} parent=1 // pred_check_branch
      %42 = sbr.rel (0) target = $region45
    $region44: #{shapley_critic2_forward.2} parent=1 // pred_region
      _
    $region45: #{shapley_critic2_forward.2} parent=1 // pred_fallthru
      _
    // Predicated region
    $region46: #{shapley_critic2_forward.2} parent=1 // pred_check
      _
    $region47: #{shapley_critic2_forward.2} parent=1 // pred_check_branch
      %44 = sbr.rel (0) target = $region49
    $region48: #{shapley_critic2_forward.2} parent=1 // pred_region
      _
    $region49: #{shapley_critic2_forward.2} parent=1 // pred_fallthru
      _
    // Predicated region
    $region50: #{shapley_critic2_forward.2} parent=1 // pred_check
      _
    $region51: #{shapley_critic2_forward.2} parent=1 // pred_check_branch
      %46 = sbr.rel (0) target = $region53
    $region52: #{shapley_critic2_forward.2} parent=1 // pred_region
      _
    $region53: #{shapley_critic2_forward.2} parent=1 // pred_fallthru
      _
    %v48 = vld [vmem:[%s0] sm:$0xff]
    %v49 = vld [vmem:[%s0 + $0x8] sm:$0xff]
    %v50 = vld [vmem:[%s0 + $0x10] sm:$0xff]
    %v51 = vld [vmem:[%s0 + $0x18] sm:$0xff]
    %v52 = vld [vmem:[%s0 + $0x20] sm:$0xff]
    %v53 = vld [vmem:[%s0 + $0x28] sm:$0xff]
    %v54 = vld [vmem:[%s0 + $0x30] sm:$0xff]
    %v55 = vld [vmem:[%s0 + $0x38] sm:$0xff]
    %v56 = vld [vmem:[%s1] sm:$0xff]
    %v57 = vld [vmem:[%s1 + $0x8] sm:$0xff]
    %v58 = vld [vmem:[%s1 + $0x10] sm:$0xff]
    %v59 = vld [vmem:[%s1 + $0x18] sm:$0xff]
    %v60 = vld [vmem:[%s1 + $0x20] sm:$0xff]
    %v61 = vld [vmem:[%s1 + $0x28] sm:$0xff]
    %v62 = vld [vmem:[%s1 + $0x30] sm:$0xff]
    %v63 = vld [vmem:[%s1 + $0x38] sm:$0xff]
    %v64 = vld [vmem:[%s5] sm:$0x3]
    %v65 = vld [vmem:[%s2] sm:$0xff]
    %v66 = vld [vmem:[%s2 + $0x8] sm:$0xff]
    %v67 = vld [vmem:[%s2 + $0x10] sm:$0x3f]
    %v68 = vpack.c.bf16 %v49, %v48
    %v69 = vpack.c.bf16 %v51, %v50
    %v70 = vpack.c.bf16 %v53, %v52
    %v71 = vpack.c.bf16 %v55, %v54
    %v72 = vpack.c.bf16 %v66, %v65
    %v73 = vpack.c.bf16 %v67, %v67
    %v74 = vld [vmem:[%s3] sm:$0xff]
    %v75 = vld [vmem:[%s3 + $0x8] sm:$0xff]
    %v76 = vpack.c.bf16 %v57, %v56
    %v77 = vpack.c.bf16 %v59, %v58
    %v78 = vpack.c.bf16 %v61, %v60
    %v79 = vpack.c.bf16 %v63, %v62
    %v80 = vpack.c.bf16 %v75, %v74
    %vm81 = vcmask 130048
    %v83 = vsel %vm81, %v76, 0
    %v86 = vsel %vm81, %v77, 0
    %v89 = vsel %vm81, %v78, 0
    %v92 = vsel %vm81, %v79, 0
    %94 = vmatpush.bf16.msra.mxu0 0
    %95 = vmatpush.bf16.msra.mxu0 0
    %96 = vmatpush.bf16.msra.mxu0 0
    %97 = vmatpush.bf16.msra.mxu0 0
    %98 = vmatpush.bf16.msra.mxu0 0
    %99 = vmatpush.bf16.msra.mxu0 0
    %100 = vmatpush.bf16.msra.mxu0 0
    %101 = vmatpush.bf16.msra.mxu0 %v80
    %102 = vmatmul.bf16.gmra.mxu0 %v83
    %v103 = vpop.f32.mrf.mxu0
    %v104 = vadd.f32 0.0, %v103
    %v105 = vpop.f32.mrf.mxu0
    %v106 = vadd.f32 0.0, %v105
    %107 = vmatmul.bf16.gmra.mxu0 %v86
    %v108 = vpop.f32.mrf.mxu0
    %v109 = vadd.f32 0.0, %v108
    %v110 = vpop.f32.mrf.mxu0
    %v111 = vadd.f32 0.0, %v110
    %112 = vmatmul.bf16.gmra.mxu0 %v89
    %v113 = vpop.f32.mrf.mxu0
    %v114 = vadd.f32 0.0, %v113
    %v115 = vpop.f32.mrf.mxu0
    %v116 = vadd.f32 0.0, %v115
    %117 = vmatmul.bf16.gmra.mxu0 %v92
    %v118 = vpop.f32.mrf.mxu0
    %v119 = vadd.f32 0.0, %v118
    %v120 = vpop.f32.mrf.mxu0
    %v121 = vadd.f32 0.0, %v120
    %122 = vdwg.mxu0
    %vm123 = vcmask 179200
    %v125 = vsel %vm123, %v68, 0
    %v128 = vsel %vm123, %v69, 0
    %v131 = vsel %vm123, %v70, 0
    %v134 = vsel %vm123, %v71, 0
    %vm136 = vcmask 1042432
    %v138 = vsel %vm136, %v73, 0
    %140 = vmatpush.bf16.msra.mxu0 0
    %141 = vmatpush.bf16.msra.mxu0 0
    %142 = vmatpush.bf16.msra.mxu0 0
    %143 = vmatpush.bf16.msra.mxu0 0
    %144 = vmatpush.bf16.msra.mxu0 0
    %145 = vmatpush.bf16.msra.mxu0 0
    %146 = vmatpush.bf16.msra.mxu0 %v138
    %147 = vmatpush.bf16.msra.mxu0 %v72
    %148 = vmatmul.bf16.gmra.mxu0 %v125
    %v149 = vpop.f32.mrf.mxu0
    %v150 = vadd.f32 %v104, %v149
    %v151 = vpop.f32.mrf.mxu0
    %v152 = vadd.f32 %v106, %v151
    %153 = vmatmul.bf16.gmra.mxu0 %v128
    %v154 = vpop.f32.mrf.mxu0
    %v155 = vadd.f32 %v109, %v154
    %v156 = vpop.f32.mrf.mxu0
    %v157 = vadd.f32 %v111, %v156
    %158 = vmatmul.bf16.gmra.mxu0 %v131
    %v159 = vpop.f32.mrf.mxu0
    %v160 = vadd.f32 %v114, %v159
    %v161 = vpop.f32.mrf.mxu0
    %v162 = vadd.f32 %v116, %v161
    %163 = vmatmul.bf16.gmra.mxu0 %v134
    %v164 = vpop.f32.mrf.mxu0
    %v165 = vadd.f32 %v119, %v164
    %v166 = vpop.f32.mrf.mxu0
    %v167 = vadd.f32 %v121, %v166
    %168 = vdwg.mxu0
    %v169 = vperm.slane %v64, 0
    %v170 = vadd.f32 %v150, %v169
    %v171 = vadd.f32 %v152, %v169
    %v172 = vadd.f32 %v155, %v169
    %v173 = vadd.f32 %v157, %v169
    %v174 = vadd.f32 %v160, %v169
    %v175 = vadd.f32 %v162, %v169
    %v176 = vadd.f32 %v165, %v169
    %v177 = vadd.f32 %v167, %v169
    %v178 = vtanh.pop %v170
    %v179 = vtanh.pop %v171
    %v180 = vtanh.pop %v172
    %v181 = vtanh.pop %v173
    %v182 = vtanh.pop %v174
    %v183 = vtanh.pop %v175
    %v184 = vtanh.pop %v176
    %v185 = vtanh.pop %v177
    %v186 = vld [vmem:[%s4] sm:$0xff]
    %v187 = vld [vmem:[%s4 + $0x8] sm:$0xff]
    %v188 = vpack.c.bf16 %v179, %v178
    %v189 = vpack.c.bf16 %v181, %v180
    %v190 = vpack.c.bf16 %v183, %v182
    %v191 = vpack.c.bf16 %v185, %v184
    %v192 = vpack.c.bf16 %v187, %v186
    %v193 = vperm.slane %v64, 1
    %v195 = vsel %vm81, %v188, 0
    %v198 = vsel %vm81, %v189, 0
    %v201 = vsel %vm81, %v190, 0
    %v204 = vsel %vm81, %v191, 0
    %206 = vmatpush.bf16.msra.mxu0 0
    %207 = vmatpush.bf16.msra.mxu0 0
    %208 = vmatpush.bf16.msra.mxu0 0
    %209 = vmatpush.bf16.msra.mxu0 0
    %210 = vmatpush.bf16.msra.mxu0 0
    %211 = vmatpush.bf16.msra.mxu0 0
    %212 = vmatpush.bf16.msra.mxu0 0
    %213 = vmatpush.bf16.msra.mxu0 %v192
    %214 = vmatmul.bf16.gmra.mxu0 %v195
    %v215 = vpop.f32.mrf.mxu0
    %v216 = vadd.f32 %v193, %v215
    %v217 = vpop.f32.mrf.mxu0
    %v218 = vadd.f32 %v193, %v217
    %219 = vmatmul.bf16.gmra.mxu0 %v198
    %v220 = vpop.f32.mrf.mxu0
    %v221 = vadd.f32 %v193, %v220
    %v222 = vpop.f32.mrf.mxu0
    %v223 = vadd.f32 %v193, %v222
    %224 = vmatmul.bf16.gmra.mxu0 %v201
    %v225 = vpop.f32.mrf.mxu0
    %v226 = vadd.f32 %v193, %v225
    %v227 = vpop.f32.mrf.mxu0
    %v228 = vadd.f32 %v193, %v227
    %229 = vmatmul.bf16.gmra.mxu0 %v204
    %v230 = vpop.f32.mrf.mxu0
    %v231 = vadd.f32 %v193, %v230
    %v232 = vpop.f32.mrf.mxu0
    %v233 = vadd.f32 %v193, %v232
    %234 = vdwg.mxu0
    %v235 = vld [vmem:[%s6] sm:$0x3]
    %v236 = vld [vmem:[%s7] sm:$0x3]
    %v237 = vsel %vm81, %v216, 0.0
    %238 = vadd.xlane.f32.xlu0 %v237
    %v239 = vpop.xlane.xlu0 %238
    %v240 = vsel %vm81, %v218, 0.0
    %241 = vadd.xlane.f32.xlu0 %v240
    %v242 = vpop.xlane.xlu0 %241
    %v243 = vsel %vm81, %v221, 0.0
    %244 = vadd.xlane.f32.xlu0 %v243
    %v245 = vpop.xlane.xlu0 %244
    %v246 = vsel %vm81, %v223, 0.0
    %247 = vadd.xlane.f32.xlu0 %v246
    %v248 = vpop.xlane.xlu0 %247
    %v249 = vsel %vm81, %v226, 0.0
    %250 = vadd.xlane.f32.xlu0 %v249
    %v251 = vpop.xlane.xlu0 %250
    %v252 = vsel %vm81, %v228, 0.0
    %253 = vadd.xlane.f32.xlu0 %v252
    %v254 = vpop.xlane.xlu0 %253
    %v255 = vsel %vm81, %v231, 0.0
    %256 = vadd.xlane.f32.xlu0 %v255
    %v257 = vpop.xlane.xlu0 %256
    %v258 = vsel %vm81, %v233, 0.0
    %259 = vadd.xlane.f32.xlu0 %v258
    %v260 = vpop.xlane.xlu0 %259
    %vm261 = vcmask 261120
    %v262 = vsel %vm261, %v48, 0.0
    %263 = vadd.xlane.f32.xlu0 %v262
    %v264 = vpop.xlane.xlu0 %263
    %v265 = vsel %vm261, %v49, 0.0
    %266 = vadd.xlane.f32.xlu0 %v265
    %v267 = vpop.xlane.xlu0 %266
    %v268 = vsel %vm261, %v50, 0.0
    %269 = vadd.xlane.f32.xlu0 %v268
    %v270 = vpop.xlane.xlu0 %269
    %v271 = vsel %vm261, %v51, 0.0
    %272 = vadd.xlane.f32.xlu0 %v271
    %v273 = vpop.xlane.xlu0 %272
    %v274 = vsel %vm261, %v52, 0.0
    %275 = vadd.xlane.f32.xlu0 %v274
    %v276 = vpop.xlane.xlu0 %275
    %v277 = vsel %vm261, %v53, 0.0
    %278 = vadd.xlane.f32.xlu0 %v277
    %v279 = vpop.xlane.xlu0 %278
    %v280 = vsel %vm261, %v54, 0.0
    %281 = vadd.xlane.f32.xlu0 %v280
    %v282 = vpop.xlane.xlu0 %281
    %v283 = vsel %vm261, %v55, 0.0
    %284 = vadd.xlane.f32.xlu0 %v283
    %v285 = vpop.xlane.xlu0 %284
    %v286 = vadd.f32 %v239, %v264
    %v287 = vadd.f32 %v242, %v267
    %v288 = vadd.f32 %v245, %v270
    %v289 = vadd.f32 %v248, %v273
    %v290 = vadd.f32 %v251, %v276
    %v291 = vadd.f32 %v254, %v279
    %v292 = vadd.f32 %v257, %v282
    %v293 = vadd.f32 %v260, %v285
    %v294 = vrcp.pop 48.0
    %v295 = vmul.f32 48.0, %v294
    %v296 = vsub.f32 1.0, %v295
    %v297 = vmul.f32 %v294, %v296
    %v298 = vadd.f32 %v294, %v297
    %vm299 = vweird.f32 %v294
    %v300 = vsel %vm299, %v294, %v298
    %v301 = vmul.f32 %v286, %v300
    %v302 = vmul.f32 %v287, %v300
    %v303 = vmul.f32 %v288, %v300
    %v304 = vmul.f32 %v289, %v300
    %v305 = vmul.f32 %v290, %v300
    %v306 = vmul.f32 %v291, %v300
    %v307 = vmul.f32 %v292, %v300
    %v308 = vmul.f32 %v293, %v300
    %v309 = vsub.f32 %v216, %v301
    %v310 = vsub.f32 %v218, %v302
    %v311 = vsub.f32 %v221, %v303
    %v312 = vsub.f32 %v223, %v304
    %v313 = vsub.f32 %v226, %v305
    %v314 = vsub.f32 %v228, %v306
    %v315 = vsub.f32 %v231, %v307
    %v316 = vsub.f32 %v233, %v308
    %v317 = vsub.f32 %v48, %v301
    %v318 = vsub.f32 %v49, %v302
    %v319 = vsub.f32 %v50, %v303
    %v320 = vsub.f32 %v51, %v304
    %v321 = vsub.f32 %v52, %v305
    %v322 = vsub.f32 %v53, %v306
    %v323 = vsub.f32 %v54, %v307
    %v324 = vsub.f32 %v55, %v308
    %v325 = vmul.f32 %v309, %v309
    %v326 = vmul.f32 %v310, %v310
    %v327 = vmul.f32 %v311, %v311
    %v328 = vmul.f32 %v312, %v312
    %v329 = vmul.f32 %v313, %v313
    %v330 = vmul.f32 %v314, %v314
    %v331 = vmul.f32 %v315, %v315
    %v332 = vmul.f32 %v316, %v316
    %v333 = vsel %vm81, %v325, 0.0
    %334 = vadd.xlane.f32.xlu0 %v333
    %v335 = vpop.xlane.xlu0 %334
    %v336 = vsel %vm81, %v326, 0.0
    %337 = vadd.xlane.f32.xlu0 %v336
    %v338 = vpop.xlane.xlu0 %337
    %v339 = vsel %vm81, %v327, 0.0
    %340 = vadd.xlane.f32.xlu0 %v339
    %v341 = vpop.xlane.xlu0 %340
    %v342 = vsel %vm81, %v328, 0.0
    %343 = vadd.xlane.f32.xlu0 %v342
    %v344 = vpop.xlane.xlu0 %343
    %v345 = vsel %vm81, %v329, 0.0
    %346 = vadd.xlane.f32.xlu0 %v345
    %v347 = vpop.xlane.xlu0 %346
    %v348 = vsel %vm81, %v330, 0.0
    %349 = vadd.xlane.f32.xlu0 %v348
    %v350 = vpop.xlane.xlu0 %349
    %v351 = vsel %vm81, %v331, 0.0
    %352 = vadd.xlane.f32.xlu0 %v351
    %v353 = vpop.xlane.xlu0 %352
    %v354 = vsel %vm81, %v332, 0.0
    %355 = vadd.xlane.f32.xlu0 %v354
    %v356 = vpop.xlane.xlu0 %355
    %v357 = vmul.f32 %v317, %v317
    %v358 = vmul.f32 %v318, %v318
    %v359 = vmul.f32 %v319, %v319
    %v360 = vmul.f32 %v320, %v320
    %v361 = vmul.f32 %v321, %v321
    %v362 = vmul.f32 %v322, %v322
    %v363 = vmul.f32 %v323, %v323
    %v364 = vmul.f32 %v324, %v324
    %v365 = vsel %vm261, %v357, 0.0
    %366 = vadd.xlane.f32.xlu0 %v365
    %v367 = vpop.xlane.xlu0 %366
    %v368 = vsel %vm261, %v358, 0.0
    %369 = vadd.xlane.f32.xlu0 %v368
    %v370 = vpop.xlane.xlu0 %369
    %v371 = vsel %vm261, %v359, 0.0
    %372 = vadd.xlane.f32.xlu0 %v371
    %v373 = vpop.xlane.xlu0 %372
    %v374 = vsel %vm261, %v360, 0.0
    %375 = vadd.xlane.f32.xlu0 %v374
    %v376 = vpop.xlane.xlu0 %375
    %v377 = vsel %vm261, %v361, 0.0
    %378 = vadd.xlane.f32.xlu0 %v377
    %v379 = vpop.xlane.xlu0 %378
    %v380 = vsel %vm261, %v362, 0.0
    %381 = vadd.xlane.f32.xlu0 %v380
    %v382 = vpop.xlane.xlu0 %381
    %v383 = vsel %vm261, %v363, 0.0
    %384 = vadd.xlane.f32.xlu0 %v383
    %v385 = vpop.xlane.xlu0 %384
    %v386 = vsel %vm261, %v364, 0.0
    %387 = vadd.xlane.f32.xlu0 %v386
    %v388 = vpop.xlane.xlu0 %387
    %v389 = vadd.f32 %v335, %v367
    %v390 = vadd.f32 %v338, %v370
    %v391 = vadd.f32 %v341, %v373
    %v392 = vadd.f32 %v344, %v376
    %v393 = vadd.f32 %v347, %v379
    %v394 = vadd.f32 %v350, %v382
    %v395 = vadd.f32 %v353, %v385
    %v396 = vadd.f32 %v356, %v388
    %v397 = vmul.f32 %v389, %v300
    %v398 = vmul.f32 %v390, %v300
    %v399 = vmul.f32 %v391, %v300
    %v400 = vmul.f32 %v392, %v300
    %v401 = vmul.f32 %v393, %v300
    %v402 = vmul.f32 %v394, %v300
    %v403 = vmul.f32 %v395, %v300
    %v404 = vmul.f32 %v396, %v300
    %v405 = vadd.f32 %v397, 1e-05
    %v406 = vadd.f32 %v398, 1e-05
    %v407 = vadd.f32 %v399, 1e-05
    %v408 = vadd.f32 %v400, 1e-05
    %v409 = vadd.f32 %v401, 1e-05
    %v410 = vadd.f32 %v402, 1e-05
    %v411 = vadd.f32 %v403, 1e-05
    %v412 = vadd.f32 %v404, 1e-05
    %v413 = vrsqrt.pop %v405
    %v414 = vmul.f32 %v413, %v405
    %v415 = vmul.f32 %v414, %v413
    %v416 = vmul.f32 0.5, %v415
    %v417 = vsub.f32 1.5, %v416
    %v418 = vmul.f32 %v413, %v417
    %vm419 = vweird.f32 %v405
    %vm420 = vweird.f32 %v413
    %vm421 = vmor %vm419, %vm420
    %v422 = vsel %vm421, %v413, %v418
    %v423 = vrsqrt.pop %v406
    %v424 = vmul.f32 %v423, %v406
    %v425 = vmul.f32 %v424, %v423
    %v426 = vmul.f32 0.5, %v425
    %v427 = vsub.f32 1.5, %v426
    %v428 = vmul.f32 %v423, %v427
    %vm429 = vweird.f32 %v406
    %vm430 = vweird.f32 %v423
    %vm431 = vmor %vm429, %vm430
    %v432 = vsel %vm431, %v423, %v428
    %v433 = vrsqrt.pop %v407
    %v434 = vmul.f32 %v433, %v407
    %v435 = vmul.f32 %v434, %v433
    %v436 = vmul.f32 0.5, %v435
    %v437 = vsub.f32 1.5, %v436
    %v438 = vmul.f32 %v433, %v437
    %vm439 = vweird.f32 %v407
    %vm440 = vweird.f32 %v433
    %vm441 = vmor %vm439, %vm440
    %v442 = vsel %vm441, %v433, %v438
    %v443 = vrsqrt.pop %v408
    %v444 = vmul.f32 %v443, %v408
    %v445 = vmul.f32 %v444, %v443
    %v446 = vmul.f32 0.5, %v445
    %v447 = vsub.f32 1.5, %v446
    %v448 = vmul.f32 %v443, %v447
    %vm449 = vweird.f32 %v408
    %vm450 = vweird.f32 %v443
    %vm451 = vmor %vm449, %vm450
    %v452 = vsel %vm451, %v443, %v448
    %v453 = vrsqrt.pop %v409
    %v454 = vmul.f32 %v453, %v409
    %v455 = vmul.f32 %v454, %v453
    %v456 = vmul.f32 0.5, %v455
    %v457 = vsub.f32 1.5, %v456
    %v458 = vmul.f32 %v453, %v457
    %vm459 = vweird.f32 %v409
    %vm460 = vweird.f32 %v453
    %vm461 = vmor %vm459, %vm460
    %v462 = vsel %vm461, %v453, %v458
    %v463 = vrsqrt.pop %v410
    %v464 = vmul.f32 %v463, %v410
    %v465 = vmul.f32 %v464, %v463
    %v466 = vmul.f32 0.5, %v465
    %v467 = vsub.f32 1.5, %v466
    %v468 = vmul.f32 %v463, %v467
    %vm469 = vweird.f32 %v410
    %vm470 = vweird.f32 %v463
    %vm471 = vmor %vm469, %vm470
    %v472 = vsel %vm471, %v463, %v468
    %v473 = vrsqrt.pop %v411
    %v474 = vmul.f32 %v473, %v411
    %v475 = vmul.f32 %v474, %v473
    %v476 = vmul.f32 0.5, %v475
    %v477 = vsub.f32 1.5, %v476
    %v478 = vmul.f32 %v473, %v477
    %vm479 = vweird.f32 %v411
    %vm480 = vweird.f32 %v473
    %vm481 = vmor %vm479, %vm480
    %v482 = vsel %vm481, %v473, %v478
    %v483 = vrsqrt.pop %v412
    %v484 = vmul.f32 %v483, %v412
    %v485 = vmul.f32 %v484, %v483
    %v486 = vmul.f32 0.5, %v485
    %v487 = vsub.f32 1.5, %v486
    %v488 = vmul.f32 %v483, %v487
    %vm489 = vweird.f32 %v412
    %vm490 = vweird.f32 %v483
    %vm491 = vmor %vm489, %vm490
    %v492 = vsel %vm491, %v483, %v488
    %v493 = vmul.f32 %v309, %v422
    %v494 = vmul.f32 %v310, %v432
    %v495 = vmul.f32 %v311, %v442
    %v496 = vmul.f32 %v312, %v452
    %v497 = vmul.f32 %v313, %v462
    %v498 = vmul.f32 %v314, %v472
    %v499 = vmul.f32 %v315, %v482
    %v500 = vmul.f32 %v316, %v492
    %v501 = vperm.slane %v235, 0
    %v502 = vmul.f32 %v493, %v501
    %v503 = vmul.f32 %v494, %v501
    %v504 = vmul.f32 %v495, %v501
    %v505 = vmul.f32 %v496, %v501
    %v506 = vmul.f32 %v497, %v501
    %v507 = vmul.f32 %v498, %v501
    %v508 = vmul.f32 %v499, %v501
    %v509 = vmul.f32 %v500, %v501
    %v510 = vperm.slane %v235, 1
    %v511 = vadd.f32 %v502, %v510
    %v512 = vadd.f32 %v503, %v510
    %v513 = vadd.f32 %v504, %v510
    %v514 = vadd.f32 %v505, %v510
    %v515 = vadd.f32 %v506, %v510
    %v516 = vadd.f32 %v507, %v510
    %v517 = vadd.f32 %v508, %v510
    %v518 = vadd.f32 %v509, %v510
    %v519 = vmul.f32 %v317, %v422
    %v520 = vmul.f32 %v318, %v432
    %v521 = vmul.f32 %v319, %v442
    %v522 = vmul.f32 %v320, %v452
    %v523 = vmul.f32 %v321, %v462
    %v524 = vmul.f32 %v322, %v472
    %v525 = vmul.f32 %v323, %v482
    %v526 = vmul.f32 %v324, %v492
    %v527 = vperm.slane %v236, 0
    %v528 = vmul.f32 %v519, %v527
    %v529 = vmul.f32 %v520, %v527
    %v530 = vmul.f32 %v521, %v527
    %v531 = vmul.f32 %v522, %v527
    %v532 = vmul.f32 %v523, %v527
    %v533 = vmul.f32 %v524, %v527
    %v534 = vmul.f32 %v525, %v527
    %v535 = vmul.f32 %v526, %v527
    %v536 = vperm.slane %v236, 1
    %v537 = vadd.f32 %v528, %v536
    %v538 = vadd.f32 %v529, %v536
    %v539 = vadd.f32 %v530, %v536
    %v540 = vadd.f32 %v531, %v536
    %v541 = vadd.f32 %v532, %v536
    %v542 = vadd.f32 %v533, %v536
    %v543 = vadd.f32 %v534, %v536
    %v544 = vadd.f32 %v535, %v536
    %v545 = vld [vmem:[%s12] sm:$0xff]
    %v546 = vld [vmem:[%s12 + $0x8] sm:$0x7]
    %v547 = vld [vmem:[%s8] sm:$0xff]
    %v548 = vld [vmem:[%s8 + $0x8] sm:$0xff]
    %v549 = vpack.c.bf16 %v512, %v511
    %v550 = vpack.c.bf16 %v514, %v513
    %v551 = vpack.c.bf16 %v516, %v515
    %v552 = vpack.c.bf16 %v518, %v517
    %v553 = vpack.c.bf16 %v548, %v547
    %v554 = vld [vmem:[%s9] sm:$0xff]
    %v555 = vld [vmem:[%s9 + $0x8] sm:$0xff]
    %v556 = vld [vmem:[%s9 + $0x10] sm:$0xff]
    %v557 = vld [vmem:[%s9 + $0x18] sm:$0xff]
    %v558 = vpack.c.bf16 %v538, %v537
    %v559 = vpack.c.bf16 %v540, %v539
    %v560 = vpack.c.bf16 %v542, %v541
    %v561 = vpack.c.bf16 %v544, %v543
    %v562 = vpack.c.bf16 %v555, %v554
    %v563 = vpack.c.bf16 %v557, %v556
    %v565 = vsel %vm261, %v558, 0
    %v568 = vsel %vm261, %v559, 0
    %v571 = vsel %vm261, %v560, 0
    %v574 = vsel %vm261, %v561, 0
    %576 = vmatpush.bf16.msra.mxu0 0
    %577 = vmatpush.bf16.msra.mxu0 0
    %578 = vmatpush.bf16.msra.mxu0 0
    %579 = vmatpush.bf16.msra.mxu0 0
    %580 = vmatpush.bf16.msra.mxu0 0
    %581 = vmatpush.bf16.msra.mxu0 0
    %582 = vmatpush.bf16.msra.mxu0 %v563
    %583 = vmatpush.bf16.msra.mxu0 %v562
    %584 = vmatmul.bf16.gmra.mxu0 %v565
    %v585 = vpop.f32.mrf.mxu0
    %v586 = vadd.f32 0.0, %v585
    %v587 = vpop.f32.mrf.mxu0
    %v588 = vadd.f32 0.0, %v587
    %589 = vmatmul.bf16.gmra.mxu0 %v568
    %v590 = vpop.f32.mrf.mxu0
    %v591 = vadd.f32 0.0, %v590
    %v592 = vpop.f32.mrf.mxu0
    %v593 = vadd.f32 0.0, %v592
    %594 = vmatmul.bf16.gmra.mxu0 %v571
    %v595 = vpop.f32.mrf.mxu0
    %v596 = vadd.f32 0.0, %v595
    %v597 = vpop.f32.mrf.mxu0
    %v598 = vadd.f32 0.0, %v597
    %599 = vmatmul.bf16.gmra.mxu0 %v574
    %v600 = vpop.f32.mrf.mxu0
    %v601 = vadd.f32 0.0, %v600
    %v602 = vpop.f32.mrf.mxu0
    %v603 = vadd.f32 0.0, %v602
    %604 = vdwg.mxu0
    %v606 = vsel %vm81, %v549, 0
    %v609 = vsel %vm81, %v550, 0
    %v612 = vsel %vm81, %v551, 0
    %v615 = vsel %vm81, %v552, 0
    %617 = vmatpush.bf16.msra.mxu0 0
    %618 = vmatpush.bf16.msra.mxu0 0
    %619 = vmatpush.bf16.msra.mxu0 0
    %620 = vmatpush.bf16.msra.mxu0 0
    %621 = vmatpush.bf16.msra.mxu0 0
    %622 = vmatpush.bf16.msra.mxu0 0
    %623 = vmatpush.bf16.msra.mxu0 0
    %624 = vmatpush.bf16.msra.mxu0 %v553
    %625 = vmatmul.bf16.gmra.mxu0 %v606
    %v626 = vpop.f32.mrf.mxu0
    %v627 = vadd.f32 %v586, %v626
    %v628 = vpop.f32.mrf.mxu0
    %v629 = vadd.f32 %v588, %v628
    %630 = vmatmul.bf16.gmra.mxu0 %v609
    %v631 = vpop.f32.mrf.mxu0
    %v632 = vadd.f32 %v591, %v631
    %v633 = vpop.f32.mrf.mxu0
    %v634 = vadd.f32 %v593, %v633
    %635 = vmatmul.bf16.gmra.mxu0 %v612
    %v636 = vpop.f32.mrf.mxu0
    %v637 = vadd.f32 %v596, %v636
    %v638 = vpop.f32.mrf.mxu0
    %v639 = vadd.f32 %v598, %v638
    %640 = vmatmul.bf16.gmra.mxu0 %v615
    %v641 = vpop.f32.mrf.mxu0
    %v642 = vadd.f32 %v601, %v641
    %v643 = vpop.f32.mrf.mxu0
    %v644 = vadd.f32 %v603, %v643
    %645 = vdwg.mxu0
    %v646 = vperm.slane %v545, 0
    %v647 = vadd.f32 %v627, %v646
    %v648 = vadd.f32 %v629, %v646
    %v649 = vadd.f32 %v632, %v646
    %v650 = vadd.f32 %v634, %v646
    %v651 = vadd.f32 %v637, %v646
    %v652 = vadd.f32 %v639, %v646
    %v653 = vadd.f32 %v642, %v646
    %v654 = vadd.f32 %v644, %v646
    %v655 = vmax.f32 %v647, 0.0
    %v656 = vmax.f32 %v648, 0.0
    %v657 = vmax.f32 %v649, 0.0
    %v658 = vmax.f32 %v650, 0.0
    %v659 = vmax.f32 %v651, 0.0
    %v660 = vmax.f32 %v652, 0.0
    %v661 = vmax.f32 %v653, 0.0
    %v662 = vmax.f32 %v654, 0.0
    %vm663 = vcmask 523264
    %v664 = vsel %vm663, %v655, 0.0
    %665 = vadd.xlane.f32.xlu0 %v664
    %v666 = vpop.xlane.xlu0 %665
    %v667 = vsel %vm663, %v656, 0.0
    %668 = vadd.xlane.f32.xlu0 %v667
    %v669 = vpop.xlane.xlu0 %668
    %v670 = vsel %vm663, %v657, 0.0
    %671 = vadd.xlane.f32.xlu0 %v670
    %v672 = vpop.xlane.xlu0 %671
    %v673 = vsel %vm663, %v658, 0.0
    %674 = vadd.xlane.f32.xlu0 %v673
    %v675 = vpop.xlane.xlu0 %674
    %v676 = vsel %vm663, %v659, 0.0
    %677 = vadd.xlane.f32.xlu0 %v676
    %v678 = vpop.xlane.xlu0 %677
    %v679 = vsel %vm663, %v660, 0.0
    %680 = vadd.xlane.f32.xlu0 %v679
    %v681 = vpop.xlane.xlu0 %680
    %v682 = vsel %vm663, %v661, 0.0
    %683 = vadd.xlane.f32.xlu0 %v682
    %v684 = vpop.xlane.xlu0 %683
    %v685 = vsel %vm663, %v662, 0.0
    %686 = vadd.xlane.f32.xlu0 %v685
    %v687 = vpop.xlane.xlu0 %686
    %v688 = vrcp.pop 64.0
    %v689 = vmul.f32 64.0, %v688
    %v690 = vsub.f32 1.0, %v689
    %v691 = vmul.f32 %v688, %v690
    %v692 = vadd.f32 %v688, %v691
    %vm693 = vweird.f32 %v688
    %v694 = vsel %vm693, %v688, %v692
    %v695 = vmul.f32 %v666, %v694
    %v696 = vmul.f32 %v669, %v694
    %v697 = vmul.f32 %v672, %v694
    %v698 = vmul.f32 %v675, %v694
    %v699 = vmul.f32 %v678, %v694
    %v700 = vmul.f32 %v681, %v694
    %v701 = vmul.f32 %v684, %v694
    %v702 = vmul.f32 %v687, %v694
    %v703 = vsub.f32 %v655, %v695
    %v704 = vsub.f32 %v656, %v696
    %v705 = vsub.f32 %v657, %v697
    %v706 = vsub.f32 %v658, %v698
    %v707 = vsub.f32 %v659, %v699
    %v708 = vsub.f32 %v660, %v700
    %v709 = vsub.f32 %v661, %v701
    %v710 = vsub.f32 %v662, %v702
    %v711 = vmul.f32 %v703, %v703
    %v712 = vmul.f32 %v704, %v704
    %v713 = vmul.f32 %v705, %v705
    %v714 = vmul.f32 %v706, %v706
    %v715 = vmul.f32 %v707, %v707
    %v716 = vmul.f32 %v708, %v708
    %v717 = vmul.f32 %v709, %v709
    %v718 = vmul.f32 %v710, %v710
    %v719 = vsel %vm663, %v711, 0.0
    %720 = vadd.xlane.f32.xlu0 %v719
    %v721 = vpop.xlane.xlu0 %720
    %v722 = vsel %vm663, %v712, 0.0
    %723 = vadd.xlane.f32.xlu0 %v722
    %v724 = vpop.xlane.xlu0 %723
    %v725 = vsel %vm663, %v713, 0.0
    %726 = vadd.xlane.f32.xlu0 %v725
    %v727 = vpop.xlane.xlu0 %726
    %v728 = vsel %vm663, %v714, 0.0
    %729 = vadd.xlane.f32.xlu0 %v728
    %v730 = vpop.xlane.xlu0 %729
    %v731 = vsel %vm663, %v715, 0.0
    %732 = vadd.xlane.f32.xlu0 %v731
    %v733 = vpop.xlane.xlu0 %732
    %v734 = vsel %vm663, %v716, 0.0
    %735 = vadd.xlane.f32.xlu0 %v734
    %v736 = vpop.xlane.xlu0 %735
    %v737 = vsel %vm663, %v717, 0.0
    %738 = vadd.xlane.f32.xlu0 %v737
    %v739 = vpop.xlane.xlu0 %738
    %v740 = vsel %vm663, %v718, 0.0
    %741 = vadd.xlane.f32.xlu0 %v740
    %v742 = vpop.xlane.xlu0 %741
    %v743 = vmul.f32 %v721, %v694
    %v744 = vmul.f32 %v724, %v694
    %v745 = vmul.f32 %v727, %v694
    %v746 = vmul.f32 %v730, %v694
    %v747 = vmul.f32 %v733, %v694
    %v748 = vmul.f32 %v736, %v694
    %v749 = vmul.f32 %v739, %v694
    %v750 = vmul.f32 %v742, %v694
    %v751 = vadd.f32 %v743, 1e-05
    %v752 = vadd.f32 %v744, 1e-05
    %v753 = vadd.f32 %v745, 1e-05
    %v754 = vadd.f32 %v746, 1e-05
    %v755 = vadd.f32 %v747, 1e-05
    %v756 = vadd.f32 %v748, 1e-05
    %v757 = vadd.f32 %v749, 1e-05
    %v758 = vadd.f32 %v750, 1e-05
    %v759 = vrsqrt.pop %v751
    %v760 = vmul.f32 %v759, %v751
    %v761 = vmul.f32 %v760, %v759
    %v762 = vmul.f32 0.5, %v761
    %v763 = vsub.f32 1.5, %v762
    %v764 = vmul.f32 %v759, %v763
    %vm765 = vweird.f32 %v751
    %vm766 = vweird.f32 %v759
    %vm767 = vmor %vm765, %vm766
    %v768 = vsel %vm767, %v759, %v764
    %v769 = vrsqrt.pop %v752
    %v770 = vmul.f32 %v769, %v752
    %v771 = vmul.f32 %v770, %v769
    %v772 = vmul.f32 0.5, %v771
    %v773 = vsub.f32 1.5, %v772
    %v774 = vmul.f32 %v769, %v773
    %vm775 = vweird.f32 %v752
    %vm776 = vweird.f32 %v769
    %vm777 = vmor %vm775, %vm776
    %v778 = vsel %vm777, %v769, %v774
    %v779 = vrsqrt.pop %v753
    %v780 = vmul.f32 %v779, %v753
    %v781 = vmul.f32 %v780, %v779
    %v782 = vmul.f32 0.5, %v781
    %v783 = vsub.f32 1.5, %v782
    %v784 = vmul.f32 %v779, %v783
    %vm785 = vweird.f32 %v753
    %vm786 = vweird.f32 %v779
    %vm787 = vmor %vm785, %vm786
    %v788 = vsel %vm787, %v779, %v784
    %v789 = vrsqrt.pop %v754
    %v790 = vmul.f32 %v789, %v754
    %v791 = vmul.f32 %v790, %v789
    %v792 = vmul.f32 0.5, %v791
    %v793 = vsub.f32 1.5, %v792
    %v794 = vmul.f32 %v789, %v793
    %vm795 = vweird.f32 %v754
    %vm796 = vweird.f32 %v789
    %vm797 = vmor %vm795, %vm796
    %v798 = vsel %vm797, %v789, %v794
    %v799 = vrsqrt.pop %v755
    %v800 = vmul.f32 %v799, %v755
    %v801 = vmul.f32 %v800, %v799
    %v802 = vmul.f32 0.5, %v801
    %v803 = vsub.f32 1.5, %v802
    %v804 = vmul.f32 %v799, %v803
    %vm805 = vweird.f32 %v755
    %vm806 = vweird.f32 %v799
    %vm807 = vmor %vm805, %vm806
    %v808 = vsel %vm807, %v799, %v804
    %v809 = vrsqrt.pop %v756
    %v810 = vmul.f32 %v809, %v756
    %v811 = vmul.f32 %v810, %v809
    %v812 = vmul.f32 0.5, %v811
    %v813 = vsub.f32 1.5, %v812
    %v814 = vmul.f32 %v809, %v813
    %vm815 = vweird.f32 %v756
    %vm816 = vweird.f32 %v809
    %vm817 = vmor %vm815, %vm816
    %v818 = vsel %vm817, %v809, %v814
    %v819 = vrsqrt.pop %v757
    %v820 = vmul.f32 %v819, %v757
    %v821 = vmul.f32 %v820, %v819
    %v822 = vmul.f32 0.5, %v821
    %v823 = vsub.f32 1.5, %v822
    %v824 = vmul.f32 %v819, %v823
    %vm825 = vweird.f32 %v757
    %vm826 = vweird.f32 %v819
    %vm827 = vmor %vm825, %vm826
    %v828 = vsel %vm827, %v819, %v824
    %v829 = vrsqrt.pop %v758
    %v830 = vmul.f32 %v829, %v758
    %v831 = vmul.f32 %v830, %v829
    %v832 = vmul.f32 0.5, %v831
    %v833 = vsub.f32 1.5, %v832
    %v834 = vmul.f32 %v829, %v833
    %vm835 = vweird.f32 %v758
    %vm836 = vweird.f32 %v829
    %vm837 = vmor %vm835, %vm836
    %v838 = vsel %vm837, %v829, %v834
    %v839 = vmul.f32 %v703, %v768
    %v840 = vmul.f32 %v704, %v778
    %v841 = vmul.f32 %v705, %v788
    %v842 = vmul.f32 %v706, %v798
    %v843 = vmul.f32 %v707, %v808
    %v844 = vmul.f32 %v708, %v818
    %v845 = vmul.f32 %v709, %v828
    %v846 = vmul.f32 %v710, %v838
    %v847 = vperm.slane %v545, 1
    %v848 = vmul.f32 %v839, %v847
    %v849 = vmul.f32 %v840, %v847
    %v850 = vmul.f32 %v841, %v847
    %v851 = vmul.f32 %v842, %v847
    %v852 = vmul.f32 %v843, %v847
    %v853 = vmul.f32 %v844, %v847
    %v854 = vmul.f32 %v845, %v847
    %v855 = vmul.f32 %v846, %v847
    %v856 = vperm.slane %v545, 2
    %v857 = vadd.f32 %v848, %v856
    %v858 = vadd.f32 %v849, %v856
    %v859 = vadd.f32 %v850, %v856
    %v860 = vadd.f32 %v851, %v856
    %v861 = vadd.f32 %v852, %v856
    %v862 = vadd.f32 %v853, %v856
    %v863 = vadd.f32 %v854, %v856
    %v864 = vadd.f32 %v855, %v856
    %v865 = vld [vmem:[%s10] sm:$0xff]
    %v866 = vld [vmem:[%s10 + $0x8] sm:$0xff]
    %v867 = vld [vmem:[%s10 + $0x10] sm:$0xff]
    %v868 = vld [vmem:[%s10 + $0x18] sm:$0xff]
    %v869 = vld [vmem:[%s10 + $0x20] sm:$0xff]
    %v870 = vld [vmem:[%s10 + $0x28] sm:$0xff]
    %v871 = vld [vmem:[%s10 + $0x30] sm:$0xff]
    %v872 = vld [vmem:[%s10 + $0x38] sm:$0xff]
    %v873 = vpack.c.bf16 %v858, %v857
    %v874 = vpack.c.bf16 %v860, %v859
    %v875 = vpack.c.bf16 %v862, %v861
    %v876 = vpack.c.bf16 %v864, %v863
    %v877 = vpack.c.bf16 %v866, %v865
    %v878 = vpack.c.bf16 %v868, %v867
    %v879 = vpack.c.bf16 %v870, %v869
    %v880 = vpack.c.bf16 %v872, %v871
    %v881 = vperm.slane %v545, 3
    %v883 = vsel %vm663, %v873, 0
    %v886 = vsel %vm663, %v874, 0
    %v889 = vsel %vm663, %v875, 0
    %v892 = vsel %vm663, %v876, 0
    %894 = vmatpush.bf16.msra.mxu0 0
    %895 = vmatpush.bf16.msra.mxu0 0
    %896 = vmatpush.bf16.msra.mxu0 0
    %897 = vmatpush.bf16.msra.mxu0 0
    %898 = vmatpush.bf16.msra.mxu0 %v880
    %899 = vmatpush.bf16.msra.mxu0 %v879
    %900 = vmatpush.bf16.msra.mxu0 %v878
    %901 = vmatpush.bf16.msra.mxu0 %v877
    %902 = vmatmul.bf16.gmra.mxu0 %v883
    %v903 = vpop.f32.mrf.mxu0
    %v904 = vadd.f32 %v881, %v903
    %v905 = vpop.f32.mrf.mxu0
    %v906 = vadd.f32 %v881, %v905
    %907 = vmatmul.bf16.gmra.mxu0 %v886
    %v908 = vpop.f32.mrf.mxu0
    %v909 = vadd.f32 %v881, %v908
    %v910 = vpop.f32.mrf.mxu0
    %v911 = vadd.f32 %v881, %v910
    %912 = vmatmul.bf16.gmra.mxu0 %v889
    %v913 = vpop.f32.mrf.mxu0
    %v914 = vadd.f32 %v881, %v913
    %v915 = vpop.f32.mrf.mxu0
    %v916 = vadd.f32 %v881, %v915
    %917 = vmatmul.bf16.gmra.mxu0 %v892
    %v918 = vpop.f32.mrf.mxu0
    %v919 = vadd.f32 %v881, %v918
    %v920 = vpop.f32.mrf.mxu0
    %v921 = vadd.f32 %v881, %v920
    %922 = vdwg.mxu0
    %v923 = vmax.f32 %v904, 0.0
    %v924 = vmax.f32 %v906, 0.0
    %v925 = vmax.f32 %v909, 0.0
    %v926 = vmax.f32 %v911, 0.0
    %v927 = vmax.f32 %v914, 0.0
    %v928 = vmax.f32 %v916, 0.0
    %v929 = vmax.f32 %v919, 0.0
    %v930 = vmax.f32 %v921, 0.0
    %v931 = vsel %vm663, %v923, 0.0
    %932 = vadd.xlane.f32.xlu0 %v931
    %v933 = vpop.xlane.xlu0 %932
    %v934 = vsel %vm663, %v924, 0.0
    %935 = vadd.xlane.f32.xlu0 %v934
    %v936 = vpop.xlane.xlu0 %935
    %v937 = vsel %vm663, %v925, 0.0
    %938 = vadd.xlane.f32.xlu0 %v937
    %v939 = vpop.xlane.xlu0 %938
    %v940 = vsel %vm663, %v926, 0.0
    %941 = vadd.xlane.f32.xlu0 %v940
    %v942 = vpop.xlane.xlu0 %941
    %v943 = vsel %vm663, %v927, 0.0
    %944 = vadd.xlane.f32.xlu0 %v943
    %v945 = vpop.xlane.xlu0 %944
    %v946 = vsel %vm663, %v928, 0.0
    %947 = vadd.xlane.f32.xlu0 %v946
    %v948 = vpop.xlane.xlu0 %947
    %v949 = vsel %vm663, %v929, 0.0
    %950 = vadd.xlane.f32.xlu0 %v949
    %v951 = vpop.xlane.xlu0 %950
    %v952 = vsel %vm663, %v930, 0.0
    %953 = vadd.xlane.f32.xlu0 %v952
    %v954 = vpop.xlane.xlu0 %953
    %v955 = vmul.f32 %v933, %v694
    %v956 = vmul.f32 %v936, %v694
    %v957 = vmul.f32 %v939, %v694
    %v958 = vmul.f32 %v942, %v694
    %v959 = vmul.f32 %v945, %v694
    %v960 = vmul.f32 %v948, %v694
    %v961 = vmul.f32 %v951, %v694
    %v962 = vmul.f32 %v954, %v694
    %v963 = vsub.f32 %v923, %v955
    %v964 = vsub.f32 %v924, %v956
    %v965 = vsub.f32 %v925, %v957
    %v966 = vsub.f32 %v926, %v958
    %v967 = vsub.f32 %v927, %v959
    %v968 = vsub.f32 %v928, %v960
    %v969 = vsub.f32 %v929, %v961
    %v970 = vsub.f32 %v930, %v962
    %v971 = vmul.f32 %v963, %v963
    %v972 = vmul.f32 %v964, %v964
    %v973 = vmul.f32 %v965, %v965
    %v974 = vmul.f32 %v966, %v966
    %v975 = vmul.f32 %v967, %v967
    %v976 = vmul.f32 %v968, %v968
    %v977 = vmul.f32 %v969, %v969
    %v978 = vmul.f32 %v970, %v970
    %v979 = vsel %vm663, %v971, 0.0
    %980 = vadd.xlane.f32.xlu0 %v979
    %v981 = vpop.xlane.xlu0 %980
    %v982 = vsel %vm663, %v972, 0.0
    %983 = vadd.xlane.f32.xlu0 %v982
    %v984 = vpop.xlane.xlu0 %983
    %v985 = vsel %vm663, %v973, 0.0
    %986 = vadd.xlane.f32.xlu0 %v985
    %v987 = vpop.xlane.xlu0 %986
    %v988 = vsel %vm663, %v974, 0.0
    %989 = vadd.xlane.f32.xlu0 %v988
    %v990 = vpop.xlane.xlu0 %989
    %v991 = vsel %vm663, %v975, 0.0
    %992 = vadd.xlane.f32.xlu0 %v991
    %v993 = vpop.xlane.xlu0 %992
    %v994 = vsel %vm663, %v976, 0.0
    %995 = vadd.xlane.f32.xlu0 %v994
    %v996 = vpop.xlane.xlu0 %995
    %v997 = vsel %vm663, %v977, 0.0
    %998 = vadd.xlane.f32.xlu0 %v997
    %v999 = vpop.xlane.xlu0 %998
    %v1000 = vsel %vm663, %v978, 0.0
    %1001 = vadd.xlane.f32.xlu0 %v1000
    %v1002 = vpop.xlane.xlu0 %1001
    %v1003 = vmul.f32 %v981, %v694
    %v1004 = vmul.f32 %v984, %v694
    %v1005 = vmul.f32 %v987, %v694
    %v1006 = vmul.f32 %v990, %v694
    %v1007 = vmul.f32 %v993, %v694
    %v1008 = vmul.f32 %v996, %v694
    %v1009 = vmul.f32 %v999, %v694
    %v1010 = vmul.f32 %v1002, %v694
    %v1011 = vadd.f32 %v1003, 1e-05
    %v1012 = vadd.f32 %v1004, 1e-05
    %v1013 = vadd.f32 %v1005, 1e-05
    %v1014 = vadd.f32 %v1006, 1e-05
    %v1015 = vadd.f32 %v1007, 1e-05
    %v1016 = vadd.f32 %v1008, 1e-05
    %v1017 = vadd.f32 %v1009, 1e-05
    %v1018 = vadd.f32 %v1010, 1e-05
    %v1019 = vrsqrt.pop %v1011
    %v1020 = vmul.f32 %v1019, %v1011
    %v1021 = vmul.f32 %v1020, %v1019
    %v1022 = vmul.f32 0.5, %v1021
    %v1023 = vsub.f32 1.5, %v1022
    %v1024 = vmul.f32 %v1019, %v1023
    %vm1025 = vweird.f32 %v1011
    %vm1026 = vweird.f32 %v1019
    %vm1027 = vmor %vm1025, %vm1026
    %v1028 = vsel %vm1027, %v1019, %v1024
    %v1029 = vrsqrt.pop %v1012
    %v1030 = vmul.f32 %v1029, %v1012
    %v1031 = vmul.f32 %v1030, %v1029
    %v1032 = vmul.f32 0.5, %v1031
    %v1033 = vsub.f32 1.5, %v1032
    %v1034 = vmul.f32 %v1029, %v1033
    %vm1035 = vweird.f32 %v1012
    %vm1036 = vweird.f32 %v1029
    %vm1037 = vmor %vm1035, %vm1036
    %v1038 = vsel %vm1037, %v1029, %v1034
    %v1039 = vrsqrt.pop %v1013
    %v1040 = vmul.f32 %v1039, %v1013
    %v1041 = vmul.f32 %v1040, %v1039
    %v1042 = vmul.f32 0.5, %v1041
    %v1043 = vsub.f32 1.5, %v1042
    %v1044 = vmul.f32 %v1039, %v1043
    %vm1045 = vweird.f32 %v1013
    %vm1046 = vweird.f32 %v1039
    %vm1047 = vmor %vm1045, %vm1046
    %v1048 = vsel %vm1047, %v1039, %v1044
    %v1049 = vrsqrt.pop %v1014
    %v1050 = vmul.f32 %v1049, %v1014
    %v1051 = vmul.f32 %v1050, %v1049
    %v1052 = vmul.f32 0.5, %v1051
    %v1053 = vsub.f32 1.5, %v1052
    %v1054 = vmul.f32 %v1049, %v1053
    %vm1055 = vweird.f32 %v1014
    %vm1056 = vweird.f32 %v1049
    %vm1057 = vmor %vm1055, %vm1056
    %v1058 = vsel %vm1057, %v1049, %v1054
    %v1059 = vrsqrt.pop %v1015
    %v1060 = vmul.f32 %v1059, %v1015
    %v1061 = vmul.f32 %v1060, %v1059
    %v1062 = vmul.f32 0.5, %v1061
    %v1063 = vsub.f32 1.5, %v1062
    %v1064 = vmul.f32 %v1059, %v1063
    %vm1065 = vweird.f32 %v1015
    %vm1066 = vweird.f32 %v1059
    %vm1067 = vmor %vm1065, %vm1066
    %v1068 = vsel %vm1067, %v1059, %v1064
    %v1069 = vrsqrt.pop %v1016
    %v1070 = vmul.f32 %v1069, %v1016
    %v1071 = vmul.f32 %v1070, %v1069
    %v1072 = vmul.f32 0.5, %v1071
    %v1073 = vsub.f32 1.5, %v1072
    %v1074 = vmul.f32 %v1069, %v1073
    %vm1075 = vweird.f32 %v1016
    %vm1076 = vweird.f32 %v1069
    %vm1077 = vmor %vm1075, %vm1076
    %v1078 = vsel %vm1077, %v1069, %v1074
    %v1079 = vrsqrt.pop %v1017
    %v1080 = vmul.f32 %v1079, %v1017
    %v1081 = vmul.f32 %v1080, %v1079
    %v1082 = vmul.f32 0.5, %v1081
    %v1083 = vsub.f32 1.5, %v1082
    %v1084 = vmul.f32 %v1079, %v1083
    %vm1085 = vweird.f32 %v1017
    %vm1086 = vweird.f32 %v1079
    %vm1087 = vmor %vm1085, %vm1086
    %v1088 = vsel %vm1087, %v1079, %v1084
    %v1089 = vrsqrt.pop %v1018
    %v1090 = vmul.f32 %v1089, %v1018
    %v1091 = vmul.f32 %v1090, %v1089
    %v1092 = vmul.f32 0.5, %v1091
    %v1093 = vsub.f32 1.5, %v1092
    %v1094 = vmul.f32 %v1089, %v1093
    %vm1095 = vweird.f32 %v1018
    %vm1096 = vweird.f32 %v1089
    %vm1097 = vmor %vm1095, %vm1096
    %v1098 = vsel %vm1097, %v1089, %v1094
    %v1099 = vmul.f32 %v963, %v1028
    %v1100 = vmul.f32 %v964, %v1038
    %v1101 = vmul.f32 %v965, %v1048
    %v1102 = vmul.f32 %v966, %v1058
    %v1103 = vmul.f32 %v967, %v1068
    %v1104 = vmul.f32 %v968, %v1078
    %v1105 = vmul.f32 %v969, %v1088
    %v1106 = vmul.f32 %v970, %v1098
    %v1107 = vperm.slane %v545, 4
    %v1108 = vmul.f32 %v1099, %v1107
    %v1109 = vmul.f32 %v1100, %v1107
    %v1110 = vmul.f32 %v1101, %v1107
    %v1111 = vmul.f32 %v1102, %v1107
    %v1112 = vmul.f32 %v1103, %v1107
    %v1113 = vmul.f32 %v1104, %v1107
    %v1114 = vmul.f32 %v1105, %v1107
    %v1115 = vmul.f32 %v1106, %v1107
    %v1116 = vperm.slane %v545, 5
    %v1117 = vadd.f32 %v1108, %v1116
    %v1118 = vadd.f32 %v1109, %v1116
    %v1119 = vadd.f32 %v1110, %v1116
    %v1120 = vadd.f32 %v1111, %v1116
    %v1121 = vadd.f32 %v1112, %v1116
    %v1122 = vadd.f32 %v1113, %v1116
    %v1123 = vadd.f32 %v1114, %v1116
    %v1124 = vadd.f32 %v1115, %v1116
    %v1125 = vsel %vm663, %v1117, 0.0
    %1126 = vadd.xlane.f32.xlu0 %v1125
    %v1127 = vpop.xlane.xlu0 %1126
    %v1128 = vsel %vm663, %v1118, 0.0
    %1129 = vadd.xlane.f32.xlu0 %v1128
    %v1130 = vpop.xlane.xlu0 %1129
    %v1131 = vsel %vm663, %v1119, 0.0
    %1132 = vadd.xlane.f32.xlu0 %v1131
    %v1133 = vpop.xlane.xlu0 %1132
    %v1134 = vsel %vm663, %v1120, 0.0
    %1135 = vadd.xlane.f32.xlu0 %v1134
    %v1136 = vpop.xlane.xlu0 %1135
    %v1137 = vsel %vm663, %v1121, 0.0
    %1138 = vadd.xlane.f32.xlu0 %v1137
    %v1139 = vpop.xlane.xlu0 %1138
    %v1140 = vsel %vm663, %v1122, 0.0
    %1141 = vadd.xlane.f32.xlu0 %v1140
    %v1142 = vpop.xlane.xlu0 %1141
    %v1143 = vsel %vm663, %v1123, 0.0
    %1144 = vadd.xlane.f32.xlu0 %v1143
    %v1145 = vpop.xlane.xlu0 %1144
    %v1146 = vsel %vm663, %v1124, 0.0
    %1147 = vadd.xlane.f32.xlu0 %v1146
    %v1148 = vpop.xlane.xlu0 %1147
    %v1149 = vmul.f32 %v1127, %v694
    %v1150 = vmul.f32 %v1130, %v694
    %v1151 = vmul.f32 %v1133, %v694
    %v1152 = vmul.f32 %v1136, %v694
    %v1153 = vmul.f32 %v1139, %v694
    %v1154 = vmul.f32 %v1142, %v694
    %v1155 = vmul.f32 %v1145, %v694
    %v1156 = vmul.f32 %v1148, %v694
    %v1157 = vsub.f32 %v1117, %v1149
    %v1158 = vsub.f32 %v1118, %v1150
    %v1159 = vsub.f32 %v1119, %v1151
    %v1160 = vsub.f32 %v1120, %v1152
    %v1161 = vsub.f32 %v1121, %v1153
    %v1162 = vsub.f32 %v1122, %v1154
    %v1163 = vsub.f32 %v1123, %v1155
    %v1164 = vsub.f32 %v1124, %v1156
    %v1165 = vmul.f32 %v1157, %v1157
    %v1166 = vmul.f32 %v1158, %v1158
    %v1167 = vmul.f32 %v1159, %v1159
    %v1168 = vmul.f32 %v1160, %v1160
    %v1169 = vmul.f32 %v1161, %v1161
    %v1170 = vmul.f32 %v1162, %v1162
    %v1171 = vmul.f32 %v1163, %v1163
    %v1172 = vmul.f32 %v1164, %v1164
    %v1173 = vsel %vm663, %v1165, 0.0
    %1174 = vadd.xlane.f32.xlu0 %v1173
    %v1175 = vpop.xlane.xlu0 %1174
    %v1176 = vsel %vm663, %v1166, 0.0
    %1177 = vadd.xlane.f32.xlu0 %v1176
    %v1178 = vpop.xlane.xlu0 %1177
    %v1179 = vsel %vm663, %v1167, 0.0
    %1180 = vadd.xlane.f32.xlu0 %v1179
    %v1181 = vpop.xlane.xlu0 %1180
    %v1182 = vsel %vm663, %v1168, 0.0
    %1183 = vadd.xlane.f32.xlu0 %v1182
    %v1184 = vpop.xlane.xlu0 %1183
    %v1185 = vsel %vm663, %v1169, 0.0
    %1186 = vadd.xlane.f32.xlu0 %v1185
    %v1187 = vpop.xlane.xlu0 %1186
    %v1188 = vsel %vm663, %v1170, 0.0
    %1189 = vadd.xlane.f32.xlu0 %v1188
    %v1190 = vpop.xlane.xlu0 %1189
    %v1191 = vsel %vm663, %v1171, 0.0
    %1192 = vadd.xlane.f32.xlu0 %v1191
    %v1193 = vpop.xlane.xlu0 %1192
    %v1194 = vsel %vm663, %v1172, 0.0
    %1195 = vadd.xlane.f32.xlu0 %v1194
    %v1196 = vpop.xlane.xlu0 %1195
    %v1197 = vmul.f32 %v1175, %v694
    %v1198 = vmul.f32 %v1178, %v694
    %v1199 = vmul.f32 %v1181, %v694
    %v1200 = vmul.f32 %v1184, %v694
    %v1201 = vmul.f32 %v1187, %v694
    %v1202 = vmul.f32 %v1190, %v694
    %v1203 = vmul.f32 %v1193, %v694
    %v1204 = vmul.f32 %v1196, %v694
    %v1205 = vadd.f32 %v1197, 1e-05
    %v1206 = vadd.f32 %v1198, 1e-05
    %v1207 = vadd.f32 %v1199, 1e-05
    %v1208 = vadd.f32 %v1200, 1e-05
    %v1209 = vadd.f32 %v1201, 1e-05
    %v1210 = vadd.f32 %v1202, 1e-05
    %v1211 = vadd.f32 %v1203, 1e-05
    %v1212 = vadd.f32 %v1204, 1e-05
    %v1213 = vrsqrt.pop %v1205
    %v1214 = vmul.f32 %v1213, %v1205
    %v1215 = vmul.f32 %v1214, %v1213
    %v1216 = vmul.f32 0.5, %v1215
    %v1217 = vsub.f32 1.5, %v1216
    %v1218 = vmul.f32 %v1213, %v1217
    %vm1219 = vweird.f32 %v1205
    %vm1220 = vweird.f32 %v1213
    %vm1221 = vmor %vm1219, %vm1220
    %v1222 = vsel %vm1221, %v1213, %v1218
    %v1223 = vrsqrt.pop %v1206
    %v1224 = vmul.f32 %v1223, %v1206
    %v1225 = vmul.f32 %v1224, %v1223
    %v1226 = vmul.f32 0.5, %v1225
    %v1227 = vsub.f32 1.5, %v1226
    %v1228 = vmul.f32 %v1223, %v1227
    %vm1229 = vweird.f32 %v1206
    %vm1230 = vweird.f32 %v1223
    %vm1231 = vmor %vm1229, %vm1230
    %v1232 = vsel %vm1231, %v1223, %v1228
    %v1233 = vrsqrt.pop %v1207
    %v1234 = vmul.f32 %v1233, %v1207
    %v1235 = vmul.f32 %v1234, %v1233
    %v1236 = vmul.f32 0.5, %v1235
    %v1237 = vsub.f32 1.5, %v1236
    %v1238 = vmul.f32 %v1233, %v1237
    %vm1239 = vweird.f32 %v1207
    %vm1240 = vweird.f32 %v1233
    %vm1241 = vmor %vm1239, %vm1240
    %v1242 = vsel %vm1241, %v1233, %v1238
    %v1243 = vrsqrt.pop %v1208
    %v1244 = vmul.f32 %v1243, %v1208
    %v1245 = vmul.f32 %v1244, %v1243
    %v1246 = vmul.f32 0.5, %v1245
    %v1247 = vsub.f32 1.5, %v1246
    %v1248 = vmul.f32 %v1243, %v1247
    %vm1249 = vweird.f32 %v1208
    %vm1250 = vweird.f32 %v1243
    %vm1251 = vmor %vm1249, %vm1250
    %v1252 = vsel %vm1251, %v1243, %v1248
    %v1253 = vrsqrt.pop %v1209
    %v1254 = vmul.f32 %v1253, %v1209
    %v1255 = vmul.f32 %v1254, %v1253
    %v1256 = vmul.f32 0.5, %v1255
    %v1257 = vsub.f32 1.5, %v1256
    %v1258 = vmul.f32 %v1253, %v1257
    %vm1259 = vweird.f32 %v1209
    %vm1260 = vweird.f32 %v1253
    %vm1261 = vmor %vm1259, %vm1260
    %v1262 = vsel %vm1261, %v1253, %v1258
    %v1263 = vrsqrt.pop %v1210
    %v1264 = vmul.f32 %v1263, %v1210
    %v1265 = vmul.f32 %v1264, %v1263
    %v1266 = vmul.f32 0.5, %v1265
    %v1267 = vsub.f32 1.5, %v1266
    %v1268 = vmul.f32 %v1263, %v1267
    %vm1269 = vweird.f32 %v1210
    %vm1270 = vweird.f32 %v1263
    %vm1271 = vmor %vm1269, %vm1270
    %v1272 = vsel %vm1271, %v1263, %v1268
    %v1273 = vrsqrt.pop %v1211
    %v1274 = vmul.f32 %v1273, %v1211
    %v1275 = vmul.f32 %v1274, %v1273
    %v1276 = vmul.f32 0.5, %v1275
    %v1277 = vsub.f32 1.5, %v1276
    %v1278 = vmul.f32 %v1273, %v1277
    %vm1279 = vweird.f32 %v1211
    %vm1280 = vweird.f32 %v1273
    %vm1281 = vmor %vm1279, %vm1280
    %v1282 = vsel %vm1281, %v1273, %v1278
    %v1283 = vrsqrt.pop %v1212
    %v1284 = vmul.f32 %v1283, %v1212
    %v1285 = vmul.f32 %v1284, %v1283
    %v1286 = vmul.f32 0.5, %v1285
    %v1287 = vsub.f32 1.5, %v1286
    %v1288 = vmul.f32 %v1283, %v1287
    %vm1289 = vweird.f32 %v1212
    %vm1290 = vweird.f32 %v1283
    %vm1291 = vmor %vm1289, %vm1290
    %v1292 = vsel %vm1291, %v1283, %v1288
    %v1293 = vmul.f32 %v1157, %v1222
    %v1294 = vmul.f32 %v1158, %v1232
    %v1295 = vmul.f32 %v1159, %v1242
    %v1296 = vmul.f32 %v1160, %v1252
    %v1297 = vmul.f32 %v1161, %v1262
    %v1298 = vmul.f32 %v1162, %v1272
    %v1299 = vmul.f32 %v1163, %v1282
    %v1300 = vmul.f32 %v1164, %v1292
    %v1301 = vperm.slane %v545, 6
    %v1302 = vmul.f32 %v1293, %v1301
    %v1303 = vmul.f32 %v1294, %v1301
    %v1304 = vmul.f32 %v1295, %v1301
    %v1305 = vmul.f32 %v1296, %v1301
    %v1306 = vmul.f32 %v1297, %v1301
    %v1307 = vmul.f32 %v1298, %v1301
    %v1308 = vmul.f32 %v1299, %v1301
    %v1309 = vmul.f32 %v1300, %v1301
    %v1310 = vperm.slane %v545, 7
    %v1311 = vadd.f32 %v1302, %v1310
    %v1312 = vadd.f32 %v1303, %v1310
    %v1313 = vadd.f32 %v1304, %v1310
    %v1314 = vadd.f32 %v1305, %v1310
    %v1315 = vadd.f32 %v1306, %v1310
    %v1316 = vadd.f32 %v1307, %v1310
    %v1317 = vadd.f32 %v1308, %v1310
    %v1318 = vadd.f32 %v1309, %v1310
    %v1319 = vld [vmem:[%s11] sm:$0xff]
    %v1320 = vld [vmem:[%s11 + $0x8] sm:$0xff]
    %v1321 = vld [vmem:[%s11 + $0x10] sm:$0xff]
    %v1322 = vld [vmem:[%s11 + $0x18] sm:$0xff]
    %v1323 = vld [vmem:[%s11 + $0x20] sm:$0xff]
    %v1324 = vld [vmem:[%s11 + $0x28] sm:$0xff]
    %v1325 = vld [vmem:[%s11 + $0x30] sm:$0xff]
    %v1326 = vld [vmem:[%s11 + $0x38] sm:$0xff]
    %v1327 = vpack.c.bf16 %v1312, %v1311
    %v1328 = vpack.c.bf16 %v1314, %v1313
    %v1329 = vpack.c.bf16 %v1316, %v1315
    %v1330 = vpack.c.bf16 %v1318, %v1317
    %v1331 = vpack.c.bf16 %v1320, %v1319
    %v1332 = vpack.c.bf16 %v1322, %v1321
    %v1333 = vpack.c.bf16 %v1324, %v1323
    %v1334 = vpack.c.bf16 %v1326, %v1325
    %v1335 = vperm.slane %v546, 0
    %v1337 = vsel %vm663, %v1327, 0
    %v1340 = vsel %vm663, %v1328, 0
    %v1343 = vsel %vm663, %v1329, 0
    %v1346 = vsel %vm663, %v1330, 0
    %1348 = vmatpush.bf16.msra.mxu0 0
    %1349 = vmatpush.bf16.msra.mxu0 0
    %1350 = vmatpush.bf16.msra.mxu0 0
    %1351 = vmatpush.bf16.msra.mxu0 0
    %1352 = vmatpush.bf16.msra.mxu0 %v1334
    %1353 = vmatpush.bf16.msra.mxu0 %v1333
    %1354 = vmatpush.bf16.msra.mxu0 %v1332
    %1355 = vmatpush.bf16.msra.mxu0 %v1331
    %1356 = vmatmul.bf16.gmra.mxu0 %v1337
    %v1357 = vpop.f32.mrf.mxu0
    %v1358 = vadd.f32 %v1335, %v1357
    %v1359 = vpop.f32.mrf.mxu0
    %v1360 = vadd.f32 %v1335, %v1359
    %1361 = vmatmul.bf16.gmra.mxu0 %v1340
    %v1362 = vpop.f32.mrf.mxu0
    %v1363 = vadd.f32 %v1335, %v1362
    %v1364 = vpop.f32.mrf.mxu0
    %v1365 = vadd.f32 %v1335, %v1364
    %1366 = vmatmul.bf16.gmra.mxu0 %v1343
    %v1367 = vpop.f32.mrf.mxu0
    %v1368 = vadd.f32 %v1335, %v1367
    %v1369 = vpop.f32.mrf.mxu0
    %v1370 = vadd.f32 %v1335, %v1369
    %1371 = vmatmul.bf16.gmra.mxu0 %v1346
    %v1372 = vpop.f32.mrf.mxu0
    %v1373 = vadd.f32 %v1335, %v1372
    %v1374 = vpop.f32.mrf.mxu0
    %v1375 = vadd.f32 %v1335, %v1374
    %1376 = vdwg.mxu0
    %v1377 = vmax.f32 %v1358, 0.0
    %v1378 = vmax.f32 %v1360, 0.0
    %v1379 = vmax.f32 %v1363, 0.0
    %v1380 = vmax.f32 %v1365, 0.0
    %v1381 = vmax.f32 %v1368, 0.0
    %v1382 = vmax.f32 %v1370, 0.0
    %v1383 = vmax.f32 %v1373, 0.0
    %v1384 = vmax.f32 %v1375, 0.0
    %v1385 = vsel %vm663, %v1377, 0.0
    %1386 = vadd.xlane.f32.xlu0 %v1385
    %v1387 = vpop.xlane.xlu0 %1386
    %v1388 = vsel %vm663, %v1378, 0.0
    %1389 = vadd.xlane.f32.xlu0 %v1388
    %v1390 = vpop.xlane.xlu0 %1389
    %v1391 = vsel %vm663, %v1379, 0.0
    %1392 = vadd.xlane.f32.xlu0 %v1391
    %v1393 = vpop.xlane.xlu0 %1392
    %v1394 = vsel %vm663, %v1380, 0.0
    %1395 = vadd.xlane.f32.xlu0 %v1394
    %v1396 = vpop.xlane.xlu0 %1395
    %v1397 = vsel %vm663, %v1381, 0.0
    %1398 = vadd.xlane.f32.xlu0 %v1397
    %v1399 = vpop.xlane.xlu0 %1398
    %v1400 = vsel %vm663, %v1382, 0.0
    %1401 = vadd.xlane.f32.xlu0 %v1400
    %v1402 = vpop.xlane.xlu0 %1401
    %v1403 = vsel %vm663, %v1383, 0.0
    %1404 = vadd.xlane.f32.xlu0 %v1403
    %v1405 = vpop.xlane.xlu0 %1404
    %v1406 = vsel %vm663, %v1384, 0.0
    %1407 = vadd.xlane.f32.xlu0 %v1406
    %v1408 = vpop.xlane.xlu0 %1407
    %v1409 = vmul.f32 %v1387, %v694
    %v1410 = vmul.f32 %v1390, %v694
    %v1411 = vmul.f32 %v1393, %v694
    %v1412 = vmul.f32 %v1396, %v694
    %v1413 = vmul.f32 %v1399, %v694
    %v1414 = vmul.f32 %v1402, %v694
    %v1415 = vmul.f32 %v1405, %v694
    %v1416 = vmul.f32 %v1408, %v694
    %v1417 = vsub.f32 %v1377, %v1409
    %v1418 = vsub.f32 %v1378, %v1410
    %v1419 = vsub.f32 %v1379, %v1411
    %v1420 = vsub.f32 %v1380, %v1412
    %v1421 = vsub.f32 %v1381, %v1413
    %v1422 = vsub.f32 %v1382, %v1414
    %v1423 = vsub.f32 %v1383, %v1415
    %v1424 = vsub.f32 %v1384, %v1416
    %v1425 = vmul.f32 %v1417, %v1417
    %v1426 = vmul.f32 %v1418, %v1418
    %v1427 = vmul.f32 %v1419, %v1419
    %v1428 = vmul.f32 %v1420, %v1420
    %v1429 = vmul.f32 %v1421, %v1421
    %v1430 = vmul.f32 %v1422, %v1422
    %v1431 = vmul.f32 %v1423, %v1423
    %v1432 = vmul.f32 %v1424, %v1424
    %v1433 = vsel %vm663, %v1425, 0.0
    %1434 = vadd.xlane.f32.xlu0 %v1433
    %v1435 = vpop.xlane.xlu0 %1434
    %v1436 = vsel %vm663, %v1426, 0.0
    %1437 = vadd.xlane.f32.xlu0 %v1436
    %v1438 = vpop.xlane.xlu0 %1437
    %v1439 = vsel %vm663, %v1427, 0.0
    %1440 = vadd.xlane.f32.xlu0 %v1439
    %v1441 = vpop.xlane.xlu0 %1440
    %v1442 = vsel %vm663, %v1428, 0.0
    %1443 = vadd.xlane.f32.xlu0 %v1442
    %v1444 = vpop.xlane.xlu0 %1443
    %v1445 = vsel %vm663, %v1429, 0.0
    %1446 = vadd.xlane.f32.xlu0 %v1445
    %v1447 = vpop.xlane.xlu0 %1446
    %v1448 = vsel %vm663, %v1430, 0.0
    %1449 = vadd.xlane.f32.xlu0 %v1448
    %v1450 = vpop.xlane.xlu0 %1449
    %v1451 = vsel %vm663, %v1431, 0.0
    %1452 = vadd.xlane.f32.xlu0 %v1451
    %v1453 = vpop.xlane.xlu0 %1452
    %v1454 = vsel %vm663, %v1432, 0.0
    %1455 = vadd.xlane.f32.xlu0 %v1454
    %v1456 = vpop.xlane.xlu0 %1455
    %v1457 = vmul.f32 %v1435, %v694
    %v1458 = vmul.f32 %v1438, %v694
    %v1459 = vmul.f32 %v1441, %v694
    %v1460 = vmul.f32 %v1444, %v694
    %v1461 = vmul.f32 %v1447, %v694
    %v1462 = vmul.f32 %v1450, %v694
    %v1463 = vmul.f32 %v1453, %v694
    %v1464 = vmul.f32 %v1456, %v694
    %v1465 = vadd.f32 %v1457, 1e-05
    %v1466 = vadd.f32 %v1458, 1e-05
    %v1467 = vadd.f32 %v1459, 1e-05
    %v1468 = vadd.f32 %v1460, 1e-05
    %v1469 = vadd.f32 %v1461, 1e-05
    %v1470 = vadd.f32 %v1462, 1e-05
    %v1471 = vadd.f32 %v1463, 1e-05
    %v1472 = vadd.f32 %v1464, 1e-05
    %v1473 = vrsqrt.pop %v1465
    %v1474 = vmul.f32 %v1473, %v1465
    %v1475 = vmul.f32 %v1474, %v1473
    %v1476 = vmul.f32 0.5, %v1475
    %v1477 = vsub.f32 1.5, %v1476
    %v1478 = vmul.f32 %v1473, %v1477
    %vm1479 = vweird.f32 %v1465
    %vm1480 = vweird.f32 %v1473
    %vm1481 = vmor %vm1479, %vm1480
    %v1482 = vsel %vm1481, %v1473, %v1478
    %v1483 = vrsqrt.pop %v1466
    %v1484 = vmul.f32 %v1483, %v1466
    %v1485 = vmul.f32 %v1484, %v1483
    %v1486 = vmul.f32 0.5, %v1485
    %v1487 = vsub.f32 1.5, %v1486
    %v1488 = vmul.f32 %v1483, %v1487
    %vm1489 = vweird.f32 %v1466
    %vm1490 = vweird.f32 %v1483
    %vm1491 = vmor %vm1489, %vm1490
    %v1492 = vsel %vm1491, %v1483, %v1488
    %v1493 = vrsqrt.pop %v1467
    %v1494 = vmul.f32 %v1493, %v1467
    %v1495 = vmul.f32 %v1494, %v1493
    %v1496 = vmul.f32 0.5, %v1495
    %v1497 = vsub.f32 1.5, %v1496
    %v1498 = vmul.f32 %v1493, %v1497
    %vm1499 = vweird.f32 %v1467
    %vm1500 = vweird.f32 %v1493
    %vm1501 = vmor %vm1499, %vm1500
    %v1502 = vsel %vm1501, %v1493, %v1498
    %v1503 = vrsqrt.pop %v1468
    %v1504 = vmul.f32 %v1503, %v1468
    %v1505 = vmul.f32 %v1504, %v1503
    %v1506 = vmul.f32 0.5, %v1505
    %v1507 = vsub.f32 1.5, %v1506
    %v1508 = vmul.f32 %v1503, %v1507
    %vm1509 = vweird.f32 %v1468
    %vm1510 = vweird.f32 %v1503
    %vm1511 = vmor %vm1509, %vm1510
    %v1512 = vsel %vm1511, %v1503, %v1508
    %v1513 = vrsqrt.pop %v1469
    %v1514 = vmul.f32 %v1513, %v1469
    %v1515 = vmul.f32 %v1514, %v1513
    %v1516 = vmul.f32 0.5, %v1515
    %v1517 = vsub.f32 1.5, %v1516
    %v1518 = vmul.f32 %v1513, %v1517
    %vm1519 = vweird.f32 %v1469
    %vm1520 = vweird.f32 %v1513
    %vm1521 = vmor %vm1519, %vm1520
    %v1522 = vsel %vm1521, %v1513, %v1518
    %v1523 = vrsqrt.pop %v1470
    %v1524 = vmul.f32 %v1523, %v1470
    %v1525 = vmul.f32 %v1524, %v1523
    %v1526 = vmul.f32 0.5, %v1525
    %v1527 = vsub.f32 1.5, %v1526
    %v1528 = vmul.f32 %v1523, %v1527
    %vm1529 = vweird.f32 %v1470
    %vm1530 = vweird.f32 %v1523
    %vm1531 = vmor %vm1529, %vm1530
    %v1532 = vsel %vm1531, %v1523, %v1528
    %v1533 = vrsqrt.pop %v1471
    %v1534 = vmul.f32 %v1533, %v1471
    %v1535 = vmul.f32 %v1534, %v1533
    %v1536 = vmul.f32 0.5, %v1535
    %v1537 = vsub.f32 1.5, %v1536
    %v1538 = vmul.f32 %v1533, %v1537
    %vm1539 = vweird.f32 %v1471
    %vm1540 = vweird.f32 %v1533
    %vm1541 = vmor %vm1539, %vm1540
    %v1542 = vsel %vm1541, %v1533, %v1538
    %v1543 = vrsqrt.pop %v1472
    %v1544 = vmul.f32 %v1543, %v1472
    %v1545 = vmul.f32 %v1544, %v1543
    %v1546 = vmul.f32 0.5, %v1545
    %v1547 = vsub.f32 1.5, %v1546
    %v1548 = vmul.f32 %v1543, %v1547
    %vm1549 = vweird.f32 %v1472
    %vm1550 = vweird.f32 %v1543
    %vm1551 = vmor %vm1549, %vm1550
    %v1552 = vsel %vm1551, %v1543, %v1548
    %v1553 = vmul.f32 %v1417, %v1482
    %v1554 = vmul.f32 %v1418, %v1492
    %v1555 = vmul.f32 %v1419, %v1502
    %v1556 = vmul.f32 %v1420, %v1512
    %v1557 = vmul.f32 %v1421, %v1522
    %v1558 = vmul.f32 %v1422, %v1532
    %v1559 = vmul.f32 %v1423, %v1542
    %v1560 = vmul.f32 %v1424, %v1552
    %v1561 = vperm.slane %v546, 1
    %v1562 = vmul.f32 %v1553, %v1561
    %v1563 = vmul.f32 %v1554, %v1561
    %v1564 = vmul.f32 %v1555, %v1561
    %v1565 = vmul.f32 %v1556, %v1561
    %v1566 = vmul.f32 %v1557, %v1561
    %v1567 = vmul.f32 %v1558, %v1561
    %v1568 = vmul.f32 %v1559, %v1561
    %v1569 = vmul.f32 %v1560, %v1561
    %v1570 = vperm.slane %v546, 2
    %v1571 = vadd.f32 %v1562, %v1570
    %v1572 = vadd.f32 %v1563, %v1570
    %v1573 = vadd.f32 %v1564, %v1570
    %v1574 = vadd.f32 %v1565, %v1570
    %v1575 = vadd.f32 %v1566, %v1570
    %v1576 = vadd.f32 %v1567, %v1570
    %v1577 = vadd.f32 %v1568, %v1570
    %v1578 = vadd.f32 %v1569, %v1570
    %1579 = vst.msk [vmem:[%s13] sm:$0xff] %vm663, %v1571
    %1580 = vst.msk [vmem:[%s13 + $0x8] sm:$0xff] %vm663, %v1572
    %1581 = vst.msk [vmem:[%s13 + $0x10] sm:$0xff] %vm663, %v1573
    %1582 = vst.msk [vmem:[%s13 + $0x18] sm:$0xff] %vm663, %v1574
    %1583 = vst.msk [vmem:[%s13 + $0x20] sm:$0xff] %vm663, %v1575
    %1584 = vst.msk [vmem:[%s13 + $0x28] sm:$0xff] %vm663, %v1576
    %1585 = vst.msk [vmem:[%s13 + $0x30] sm:$0xff] %vm663, %v1577
    %1586 = vst.msk [vmem:[%s13 + $0x38] sm:$0xff] %vm663, %v1578
    %1587 = vst.msk [vmem:[#allocation2] sm:$0xff] %vm81, %v178
    %1588 = vst.msk [vmem:[#allocation2 + $0x8] sm:$0xff] %vm81, %v179
    %1589 = vst.msk [vmem:[#allocation2 + $0x10] sm:$0xff] %vm81, %v180
    %1590 = vst.msk [vmem:[#allocation2 + $0x18] sm:$0xff] %vm81, %v181
    %1591 = vst.msk [vmem:[#allocation2 + $0x20] sm:$0xff] %vm81, %v182
    %1592 = vst.msk [vmem:[#allocation2 + $0x28] sm:$0xff] %vm81, %v183
    %1593 = vst.msk [vmem:[#allocation2 + $0x30] sm:$0xff] %vm81, %v184
    %1594 = vst.msk [vmem:[#allocation2 + $0x38] sm:$0xff] %vm81, %v185
    // Predicated region
    $region54: #{shapley_critic2_forward.2} parent=1 // pred_check
      _
    $region55: #{shapley_critic2_forward.2} parent=1 // pred_check_branch
      %1596 = sbr.rel (0) target = $region57
    $region56: #{shapley_critic2_forward.2} parent=1 // pred_region
      _
    $region57: #{shapley_critic2_forward.2} parent=1 // pred_fallthru
      _
    // Predicated region
    $region58: #{shapley_critic2_forward.2} parent=1 // pred_check
      _
    $region59: #{shapley_critic2_forward.2} parent=1 // pred_check_branch
      %1598 = sbr.rel (0) target = $region61
    $region60: #{shapley_critic2_forward.2} parent=1 // pred_region
      %1600 = vsyncadd [#allocation3], 0
      %s1601 = sshll.u32 [#allocation2], 4
      %s1602 = int_to_ptr.vmem [resolvable:$true] %s1601
      %s1603 = sshll.u32 %s14, 4
      %s1604 = int_to_ptr.hbm [resolvable:$true] %s1603
      %1609 = dma.vmem_to_hbm [thread:$0]  %s1602, 1024, %s1604, [#allocation3], 128, 128, 8
    $region61: #{shapley_critic2_forward.2} parent=1 // pred_fallthru
      _
    // Predicated region
    $region62: #{shapley_critic2_forward.2} parent=1 // pred_check
      _
    $region63: #{shapley_critic2_forward.2} parent=1 // pred_check_branch
      %1611 = sbr.rel (0) target = $region65
    $region64: #{shapley_critic2_forward.2} parent=1 // pred_region
      _
    $region65: #{shapley_critic2_forward.2} parent=1 // pred_fallthru
      _
    // Predicated region
    $region66: #{shapley_critic2_forward.2} parent=1 // pred_check
      _
    $region67: #{shapley_critic2_forward.2} parent=1 // pred_check_branch
      %1613 = sbr.rel (0) target = $region69
    $region68: #{shapley_critic2_forward.2} parent=1 // pred_region
      %1615 = dma.done [#allocation3], 1024
    $region69: #{shapley_critic2_forward.2} parent=1 // pred_fallthru
      _
    %1616 = vsyncpa [#allocation3], 1

// kernel: shapley_critic2_forward.3
$region0: #{shapley_critic2_forward.3}
  #allocation0 [shape = 'u32[]', space=smem, size = 0x4, offset = 0x4, fixed_abs, tag = 'smem constant byte address 0x4 - core index']
  #allocation1 [shape = 'u32[72,128]{1,0:T(1,128)}', space=vmem, size = 0x9000, scoped, tag = 'internal scratch']
  %s0 = inlined_call_operand.vmem [shape: f32[64,64], index: 0, kind: input, shape index: {}]
  %s1 = inlined_call_operand.vmem [shape: f32[10,32,32], index: 1, kind: input, shape index: {}]
  %s2 = inlined_call_operand.vmem [shape: f32[64,192], index: 2, kind: input, shape index: {}]
  %s3 = inlined_call_operand.vmem [shape: f32[64,64], index: 3, kind: input, shape index: {}]
  %s4 = inlined_call_operand.vmem [shape: f32[64,64], index: 4, kind: input, shape index: {}]
  %s5 = inlined_call_operand.vmem [shape: f32[64,64], index: 5, kind: input, shape index: {}]
  %s6 = inlined_call_operand.vmem [shape: f32[10,64], index: 6, kind: input, shape index: {}]
  %s7 = inlined_call_operand.vmem [shape: f32[64,192], index: 7, kind: input, shape index: {}]
  %s8 = inlined_call_operand.vmem [shape: f32[64,64], index: 8, kind: input, shape index: {}]
  %s9 = inlined_call_operand.vmem [shape: f32[64,64], index: 9, kind: input, shape index: {}]
  %s10 = inlined_call_operand.vmem [shape: f32[64,64], index: 10, kind: input, shape index: {}]
  %s11 = inlined_call_operand.vmem [shape: f32[10,64], index: 11, kind: input, shape index: {}]
  %s12 = inlined_call_operand.vmem [shape: f32[2,64], index: 12, kind: input, shape index: {}]
  %s13 = inlined_call_operand.vmem [shape: f32[64,1], index: 13, kind: output, shape index: {0}]
  %s14 = inlined_call_operand.vmem [shape: f32[64,1], index: 14, kind: output, shape index: {1}]
  %15 = xla_tuple %s13, %s14
  %s16 = sld [smem:[#allocation0]]
  $region93: #{shapley_critic2_forward.3} parent=0
    _
  %s18 = ssub.s32 1, %s16
  %s19 = scalar_select 0, %s18, %s16
  loop: start=0, step=1, limit=4
  $region2: #{shapley_critic2_forward.3} parent=0 // loop_pre_header
    _
  $region3: #{shapley_critic2_forward.3} parent=0 // loop_header
    %s21 = sphi 0, %s25
    %p22 = scmp.ge.s32.totalorder %s21, 4
    %s31 = sphi 0, %s33
    %s34 = sphi 0, %s31
    %s35 = sphi 0, %s34
    %s51 = sphi 0, %s35
    %s57 = sphi 0, %s59
    %s60 = sphi 0, %s57
    %s61 = sphi 0, %s60
    %s77 = sphi 0, %s61
    %s81 = sphi 0, %s81
    %s83 = sphi 0, %s81
    %s84 = sphi 0, %s83
    %s98 = sphi 0, %s84
    %s102 = sphi 0, %s102
    %s104 = sphi 0, %s102
    %s105 = sphi 0, %s104
    %s119 = sphi 0, %s105
    %s123 = sphi 0, %s123
    %s125 = sphi 0, %s123
    %s126 = sphi 0, %s125
    %s140 = sphi 0, %s126
    %s144 = sphi 0, %s144
    %s146 = sphi 0, %s144
    %s147 = sphi 0, %s146
    %s161 = sphi 0, %s147
    %s165 = sphi 0, %s165
    %s167 = sphi 0, %s165
    %s168 = sphi 0, %s167
    %s182 = sphi 0, %s168
    %s186 = sphi 0, %s186
    %s188 = sphi 0, %s186
    %s189 = sphi 0, %s188
    %s203 = sphi 0, %s189
    %s207 = sphi 0, %s207
    %s209 = sphi 0, %s207
    %s210 = sphi 0, %s209
    %s224 = sphi 0, %s210
    %s228 = sphi 0, %s228
    %s230 = sphi 0, %s228
    %s231 = sphi 0, %s230
    %s245 = sphi 0, %s231
    %s249 = sphi 0, %s249
    %s251 = sphi 0, %s249
    %s252 = sphi 0, %s251
    %s266 = sphi 0, %s252
    %s270 = sphi 0, %s270
    %s272 = sphi 0, %s270
    %s273 = sphi 0, %s272
    %s287 = sphi 0, %s273
    %s291 = sphi 0, %s291
    %s293 = sphi 0, %s291
    %s294 = sphi 0, %s293
    %s308 = sphi 0, %s294
    %s314 = sphi 0, %s316
    %s317 = sphi 0, %s314
    %s318 = sphi 0, %s317
    %s334 = sphi 0, %s318
    %s340 = sphi 0, %s342
    %s343 = sphi 0, %s340
    %s344 = sphi 0, %s343
    %s360 = sphi 0, %s344
  $region4: #{shapley_critic2_forward.3} parent=0 // loop_header_branch
    %24 = sbr.rel (%p22) target = $region8
  $region5: #{shapley_critic2_forward.3} parent=0 // loop_body
    %s26 = ssub.s32 %s21, 1
    %s27 = ssub.s32 %s21, 2
    %s28 = sadd.s32 %s21, 1
    %s29 = ssub.s32 %s21, %s28
    %p30 = scmp.eq.s32.totalorder %s29, 0
    %s32 = sadd.s32 %s31, 1
    %s33 = scalar_select %p30, %s31, %s32
    %p36 = pneg %p30
    %p37 = scmp.eq.s32.totalorder %s21, 1
    %p38 = por %p36, %p37
    %p39 = scmp.ne.s32.totalorder %s31, %s34
    %p40 = scmp.eq.s32.totalorder %s21, 0
    %p41 = por %p39, %p40
    %p42 = scmp.ne.s32.totalorder %s31, %s34
    %p43 = scmp.eq.s32.totalorder %s26, 1
    %p44 = por %p42, %p43
    %p45 = scmp.ne.s32.totalorder %s34, %s35
    %p46 = scmp.eq.s32.totalorder %s26, 0
    %p47 = por %p45, %p46
    %p48 = scmp.ne.s32.totalorder %s34, %s35
    %p49 = scmp.eq.s32.totalorder %s27, 1
    %p50 = por %p48, %p49
    %p52 = scmp.ne.s32.totalorder %s35, %s51
    %p53 = scmp.eq.s32.totalorder %s27, 0
    %p54 = por %p52, %p53
    %s55 = ssub.s32 %s21, %s28
    %p56 = scmp.eq.s32.totalorder %s55, 0
    %s58 = sadd.s32 %s57, 1
    %s59 = scalar_select %p56, %s57, %s58
    %p62 = pneg %p56
    %p63 = scmp.eq.s32.totalorder %s21, 1
    %p64 = por %p62, %p63
    %p65 = scmp.ne.s32.totalorder %s57, %s60
    %p66 = scmp.eq.s32.totalorder %s21, 0
    %p67 = por %p65, %p66
    %p68 = scmp.ne.s32.totalorder %s57, %s60
    %p69 = scmp.eq.s32.totalorder %s26, 1
    %p70 = por %p68, %p69
    %p71 = scmp.ne.s32.totalorder %s60, %s61
    %p72 = scmp.eq.s32.totalorder %s26, 0
    %p73 = por %p71, %p72
    %p74 = scmp.ne.s32.totalorder %s60, %s61
    %p75 = scmp.eq.s32.totalorder %s27, 1
    %p76 = por %p74, %p75
    %p78 = scmp.ne.s32.totalorder %s61, %s77
    %p79 = scmp.eq.s32.totalorder %s27, 0
    %p80 = por %p78, %p79
    %s82 = sadd.s32 %s81, 1
    %p85 = scmp.eq.s32.totalorder %s21, 1
    %p86 = scmp.ne.s32.totalorder %s81, %s83
    %p87 = scmp.eq.s32.totalorder %s21, 0
    %p88 = por %p86, %p87
    %p89 = scmp.ne.s32.totalorder %s81, %s83
    %p90 = scmp.eq.s32.totalorder %s26, 1
    %p91 = por %p89, %p90
    %p92 = scmp.ne.s32.totalorder %s83, %s84
    %p93 = scmp.eq.s32.totalorder %s26, 0
    %p94 = por %p92, %p93
    %p95 = scmp.ne.s32.totalorder %s83, %s84
    %p96 = scmp.eq.s32.totalorder %s27, 1
    %p97 = por %p95, %p96
    %p99 = scmp.ne.s32.totalorder %s84, %s98
    %p100 = scmp.eq.s32.totalorder %s27, 0
    %p101 = por %p99, %p100
    %s103 = sadd.s32 %s102, 1
    %p106 = scmp.eq.s32.totalorder %s21, 1
    %p107 = scmp.ne.s32.totalorder %s102, %s104
    %p108 = scmp.eq.s32.totalorder %s21, 0
    %p109 = por %p107, %p108
    %p110 = scmp.ne.s32.totalorder %s102, %s104
    %p111 = scmp.eq.s32.totalorder %s26, 1
    %p112 = por %p110, %p111
    %p113 = scmp.ne.s32.totalorder %s104, %s105
    %p114 = scmp.eq.s32.totalorder %s26, 0
    %p115 = por %p113, %p114
    %p116 = scmp.ne.s32.totalorder %s104, %s105
    %p117 = scmp.eq.s32.totalorder %s27, 1
    %p118 = por %p116, %p117
    %p120 = scmp.ne.s32.totalorder %s105, %s119
    %p121 = scmp.eq.s32.totalorder %s27, 0
    %p122 = por %p120, %p121
    %s124 = sadd.s32 %s123, 1
    %p127 = scmp.eq.s32.totalorder %s21, 1
    %p128 = scmp.ne.s32.totalorder %s123, %s125
    %p129 = scmp.eq.s32.totalorder %s21, 0
    %p130 = por %p128, %p129
    %p131 = scmp.ne.s32.totalorder %s123, %s125
    %p132 = scmp.eq.s32.totalorder %s26, 1
    %p133 = por %p131, %p132
    %p134 = scmp.ne.s32.totalorder %s125, %s126
    %p135 = scmp.eq.s32.totalorder %s26, 0
    %p136 = por %p134, %p135
    %p137 = scmp.ne.s32.totalorder %s125, %s126
    %p138 = scmp.eq.s32.totalorder %s27, 1
    %p139 = por %p137, %p138
    %p141 = scmp.ne.s32.totalorder %s126, %s140
    %p142 = scmp.eq.s32.totalorder %s27, 0
    %p143 = por %p141, %p142
    %s145 = sadd.s32 %s144, 1
    %p148 = scmp.eq.s32.totalorder %s21, 1
    %p149 = scmp.ne.s32.totalorder %s144, %s146
    %p150 = scmp.eq.s32.totalorder %s21, 0
    %p151 = por %p149, %p150
    %p152 = scmp.ne.s32.totalorder %s144, %s146
    %p153 = scmp.eq.s32.totalorder %s26, 1
    %p154 = por %p152, %p153
    %p155 = scmp.ne.s32.totalorder %s146, %s147
    %p156 = scmp.eq.s32.totalorder %s26, 0
    %p157 = por %p155, %p156
    %p158 = scmp.ne.s32.totalorder %s146, %s147
    %p159 = scmp.eq.s32.totalorder %s27, 1
    %p160 = por %p158, %p159
    %p162 = scmp.ne.s32.totalorder %s147, %s161
    %p163 = scmp.eq.s32.totalorder %s27, 0
    %p164 = por %p162, %p163
    %s166 = sadd.s32 %s165, 1
    %p169 = scmp.eq.s32.totalorder %s21, 1
    %p170 = scmp.ne.s32.totalorder %s165, %s167
    %p171 = scmp.eq.s32.totalorder %s21, 0
    %p172 = por %p170, %p171
    %p173 = scmp.ne.s32.totalorder %s165, %s167
    %p174 = scmp.eq.s32.totalorder %s26, 1
    %p175 = por %p173, %p174
    %p176 = scmp.ne.s32.totalorder %s167, %s168
    %p177 = scmp.eq.s32.totalorder %s26, 0
    %p178 = por %p176, %p177
    %p179 = scmp.ne.s32.totalorder %s167, %s168
    %p180 = scmp.eq.s32.totalorder %s27, 1
    %p181 = por %p179, %p180
    %p183 = scmp.ne.s32.totalorder %s168, %s182
    %p184 = scmp.eq.s32.totalorder %s27, 0
    %p185 = por %p183, %p184
    %s187 = sadd.s32 %s186, 1
    %p190 = scmp.eq.s32.totalorder %s21, 1
    %p191 = scmp.ne.s32.totalorder %s186, %s188
    %p192 = scmp.eq.s32.totalorder %s21, 0
    %p193 = por %p191, %p192
    %p194 = scmp.ne.s32.totalorder %s186, %s188
    %p195 = scmp.eq.s32.totalorder %s26, 1
    %p196 = por %p194, %p195
    %p197 = scmp.ne.s32.totalorder %s188, %s189
    %p198 = scmp.eq.s32.totalorder %s26, 0
    %p199 = por %p197, %p198
    %p200 = scmp.ne.s32.totalorder %s188, %s189
    %p201 = scmp.eq.s32.totalorder %s27, 1
    %p202 = por %p200, %p201
    %p204 = scmp.ne.s32.totalorder %s189, %s203
    %p205 = scmp.eq.s32.totalorder %s27, 0
    %p206 = por %p204, %p205
    %s208 = sadd.s32 %s207, 1
    %p211 = scmp.eq.s32.totalorder %s21, 1
    %p212 = scmp.ne.s32.totalorder %s207, %s209
    %p213 = scmp.eq.s32.totalorder %s21, 0
    %p214 = por %p212, %p213
    %p215 = scmp.ne.s32.totalorder %s207, %s209
    %p216 = scmp.eq.s32.totalorder %s26, 1
    %p217 = por %p215, %p216
    %p218 = scmp.ne.s32.totalorder %s209, %s210
    %p219 = scmp.eq.s32.totalorder %s26, 0
    %p220 = por %p218, %p219
    %p221 = scmp.ne.s32.totalorder %s209, %s210
    %p222 = scmp.eq.s32.totalorder %s27, 1
    %p223 = por %p221, %p222
    %p225 = scmp.ne.s32.totalorder %s210, %s224
    %p226 = scmp.eq.s32.totalorder %s27, 0
    %p227 = por %p225, %p226
    %s229 = sadd.s32 %s228, 1
    %p232 = scmp.eq.s32.totalorder %s21, 1
    %p233 = scmp.ne.s32.totalorder %s228, %s230
    %p234 = scmp.eq.s32.totalorder %s21, 0
    %p235 = por %p233, %p234
    %p236 = scmp.ne.s32.totalorder %s228, %s230
    %p237 = scmp.eq.s32.totalorder %s26, 1
    %p238 = por %p236, %p237
    %p239 = scmp.ne.s32.totalorder %s230, %s231
    %p240 = scmp.eq.s32.totalorder %s26, 0
    %p241 = por %p239, %p240
    %p242 = scmp.ne.s32.totalorder %s230, %s231
    %p243 = scmp.eq.s32.totalorder %s27, 1
    %p244 = por %p242, %p243
    %p246 = scmp.ne.s32.totalorder %s231, %s245
    %p247 = scmp.eq.s32.totalorder %s27, 0
    %p248 = por %p246, %p247
    %s250 = sadd.s32 %s249, 1
    %p253 = scmp.eq.s32.totalorder %s21, 1
    %p254 = scmp.ne.s32.totalorder %s249, %s251
    %p255 = scmp.eq.s32.totalorder %s21, 0
    %p256 = por %p254, %p255
    %p257 = scmp.ne.s32.totalorder %s249, %s251
    %p258 = scmp.eq.s32.totalorder %s26, 1
    %p259 = por %p257, %p258
    %p260 = scmp.ne.s32.totalorder %s251, %s252
    %p261 = scmp.eq.s32.totalorder %s26, 0
    %p262 = por %p260, %p261
    %p263 = scmp.ne.s32.totalorder %s251, %s252
    %p264 = scmp.eq.s32.totalorder %s27, 1
    %p265 = por %p263, %p264
    %p267 = scmp.ne.s32.totalorder %s252, %s266
    %p268 = scmp.eq.s32.totalorder %s27, 0
    %p269 = por %p267, %p268
    %s271 = sadd.s32 %s270, 1
    %p274 = scmp.eq.s32.totalorder %s21, 1
    %p275 = scmp.ne.s32.totalorder %s270, %s272
    %p276 = scmp.eq.s32.totalorder %s21, 0
    %p277 = por %p275, %p276
    %p278 = scmp.ne.s32.totalorder %s270, %s272
    %p279 = scmp.eq.s32.totalorder %s26, 1
    %p280 = por %p278, %p279
    %p281 = scmp.ne.s32.totalorder %s272, %s273
    %p282 = scmp.eq.s32.totalorder %s26, 0
    %p283 = por %p281, %p282
    %p284 = scmp.ne.s32.totalorder %s272, %s273
    %p285 = scmp.eq.s32.totalorder %s27, 1
    %p286 = por %p284, %p285
    %p288 = scmp.ne.s32.totalorder %s273, %s287
    %p289 = scmp.eq.s32.totalorder %s27, 0
    %p290 = por %p288, %p289
    %s292 = sadd.s32 %s291, 1
    %p295 = scmp.eq.s32.totalorder %s21, 1
    %p296 = scmp.ne.s32.totalorder %s291, %s293
    %p297 = scmp.eq.s32.totalorder %s21, 0
    %p298 = por %p296, %p297
    %p299 = scmp.ne.s32.totalorder %s291, %s293
    %p300 = scmp.eq.s32.totalorder %s26, 1
    %p301 = por %p299, %p300
    %p302 = scmp.ne.s32.totalorder %s293, %s294
    %p303 = scmp.eq.s32.totalorder %s26, 0
    %p304 = por %p302, %p303
    %p305 = scmp.ne.s32.totalorder %s293, %s294
    %p306 = scmp.eq.s32.totalorder %s27, 1
    %p307 = por %p305, %p306
    %p309 = scmp.ne.s32.totalorder %s294, %s308
    %p310 = scmp.eq.s32.totalorder %s27, 0
    %p311 = por %p309, %p310
    %s312 = ssub.s32 %s21, %s28
    %p313 = scmp.eq.s32.totalorder %s312, 0
    %s315 = sadd.s32 %s314, 1
    %s316 = scalar_select %p313, %s314, %s315
    %p319 = pneg %p313
    %p320 = scmp.eq.s32.totalorder %s21, 1
    %p321 = por %p319, %p320
    %p322 = scmp.ne.s32.totalorder %s314, %s317
    %p323 = scmp.eq.s32.totalorder %s21, 0
    %p324 = por %p322, %p323
    %p325 = scmp.ne.s32.totalorder %s314, %s317
    %p326 = scmp.eq.s32.totalorder %s26, 1
    %p327 = por %p325, %p326
    %p328 = scmp.ne.s32.totalorder %s317, %s318
    %p329 = scmp.eq.s32.totalorder %s26, 0
    %p330 = por %p328, %p329
    %p331 = scmp.ne.s32.totalorder %s317, %s318
    %p332 = scmp.eq.s32.totalorder %s27, 1
    %p333 = por %p331, %p332
    %p335 = scmp.ne.s32.totalorder %s318, %s334
    %p336 = scmp.eq.s32.totalorder %s27, 0
    %p337 = por %p335, %p336
    %s338 = ssub.s32 %s21, %s28
    %p339 = scmp.eq.s32.totalorder %s338, 0
    %s341 = sadd.s32 %s340, 1
    %s342 = scalar_select %p339, %s340, %s341
    %p345 = pneg %p339
    %p346 = scmp.eq.s32.totalorder %s21, 1
    %p347 = por %p345, %p346
    %p348 = scmp.ne.s32.totalorder %s340, %s343
    %p349 = scmp.eq.s32.totalorder %s21, 0
    %p350 = por %p348, %p349
    %p351 = scmp.ne.s32.totalorder %s340, %s343
    %p352 = scmp.eq.s32.totalorder %s26, 1
    %p353 = por %p351, %p352
    %p354 = scmp.ne.s32.totalorder %s343, %s344
    %p355 = scmp.eq.s32.totalorder %s26, 0
    %p356 = por %p354, %p355
    %p357 = scmp.ne.s32.totalorder %s343, %s344
    %p358 = scmp.eq.s32.totalorder %s27, 1
    %p359 = por %p357, %p358
    %p361 = scmp.ne.s32.totalorder %s344, %s360
    %p362 = scmp.eq.s32.totalorder %s27, 0
    %p363 = por %p361, %p362
    %p364 = scmp.le.s32.totalorder 1, %s21
    %p365 = scmp.lt.s32.totalorder %s21, 3
    %p366 = pnand %p364, %p365
    %p367 = pneg %p366
    // Predicated region
    $region9: #{shapley_critic2_forward.3} parent=5 // pred_check
      _
    $region10: #{shapley_critic2_forward.3} parent=5 // pred_check_branch
      %369 = sbr.rel (%p366) target = $region12
    $region11: #{shapley_critic2_forward.3} parent=5 // pred_region
      %s370 = ssub.s32 %s21, 1
      // Predicated region
      $region13: #{shapley_critic2_forward.3} parent=11 // pred_check
        %p371 = pneg %p94
      $region14: #{shapley_critic2_forward.3} parent=11 // pred_check_branch
        %373 = sbr.rel (%p371) target = $region16
      $region15: #{shapley_critic2_forward.3} parent=11 // pred_region
        _
      $region16: #{shapley_critic2_forward.3} parent=11 // pred_fallthru
        _
      // Predicated region
      $region17: #{shapley_critic2_forward.3} parent=11 // pred_check
        %p374 = pneg %p115
      $region18: #{shapley_critic2_forward.3} parent=11 // pred_check_branch
        %376 = sbr.rel (%p374) target = $region20
      $region19: #{shapley_critic2_forward.3} parent=11 // pred_region
        _
      $region20: #{shapley_critic2_forward.3} parent=11 // pred_fallthru
        _
      // Predicated region
      $region21: #{shapley_critic2_forward.3} parent=11 // pred_check
        %p377 = pneg %p136
      $region22: #{shapley_critic2_forward.3} parent=11 // pred_check_branch
        %379 = sbr.rel (%p377) target = $region24
      $region23: #{shapley_critic2_forward.3} parent=11 // pred_region
        _
      $region24: #{shapley_critic2_forward.3} parent=11 // pred_fallthru
        _
      // Predicated region
      $region25: #{shapley_critic2_forward.3} parent=11 // pred_check
        %p380 = pneg %p157
      $region26: #{shapley_critic2_forward.3} parent=11 // pred_check_branch
        %382 = sbr.rel (%p380) target = $region28
      $region27: #{shapley_critic2_forward.3} parent=11 // pred_region
        _
      $region28: #{shapley_critic2_forward.3} parent=11 // pred_fallthru
        _
      // Predicated region
      $region29: #{shapley_critic2_forward.3} parent=11 // pred_check
        %p383 = pneg %p178
      $region30: #{shapley_critic2_forward.3} parent=11 // pred_check_branch
        %385 = sbr.rel (%p383) target = $region32
      $region31: #{shapley_critic2_forward.3} parent=11 // pred_region
        _
      $region32: #{shapley_critic2_forward.3} parent=11 // pred_fallthru
        _
      // Predicated region
      $region33: #{shapley_critic2_forward.3} parent=11 // pred_check
        %p386 = pneg %p199
      $region34: #{shapley_critic2_forward.3} parent=11 // pred_check_branch
        %388 = sbr.rel (%p386) target = $region36
      $region35: #{shapley_critic2_forward.3} parent=11 // pred_region
        _
      $region36: #{shapley_critic2_forward.3} parent=11 // pred_fallthru
        _
      // Predicated region
      $region37: #{shapley_critic2_forward.3} parent=11 // pred_check
        %p389 = pneg %p220
      $region38: #{shapley_critic2_forward.3} parent=11 // pred_check_branch
        %391 = sbr.rel (%p389) target = $region40
      $region39: #{shapley_critic2_forward.3} parent=11 // pred_region
        _
      $region40: #{shapley_critic2_forward.3} parent=11 // pred_fallthru
        _
      // Predicated region
      $region41: #{shapley_critic2_forward.3} parent=11 // pred_check
        %p392 = pneg %p241
      $region42: #{shapley_critic2_forward.3} parent=11 // pred_check_branch
        %394 = sbr.rel (%p392) target = $region44
      $region43: #{shapley_critic2_forward.3} parent=11 // pred_region
        _
      $region44: #{shapley_critic2_forward.3} parent=11 // pred_fallthru
        _
      // Predicated region
      $region45: #{shapley_critic2_forward.3} parent=11 // pred_check
        %p395 = pneg %p262
      $region46: #{shapley_critic2_forward.3} parent=11 // pred_check_branch
        %397 = sbr.rel (%p395) target = $region48
      $region47: #{shapley_critic2_forward.3} parent=11 // pred_region
        _
      $region48: #{shapley_critic2_forward.3} parent=11 // pred_fallthru
        _
      // Predicated region
      $region49: #{shapley_critic2_forward.3} parent=11 // pred_check
        %p398 = pneg %p283
      $region50: #{shapley_critic2_forward.3} parent=11 // pred_check_branch
        %400 = sbr.rel (%p398) target = $region52
      $region51: #{shapley_critic2_forward.3} parent=11 // pred_region
        _
      $region52: #{shapley_critic2_forward.3} parent=11 // pred_fallthru
        _
      // Predicated region
      $region53: #{shapley_critic2_forward.3} parent=11 // pred_check
        %p401 = pneg %p304
      $region54: #{shapley_critic2_forward.3} parent=11 // pred_check_branch
        %403 = sbr.rel (%p401) target = $region56
      $region55: #{shapley_critic2_forward.3} parent=11 // pred_region
        _
      $region56: #{shapley_critic2_forward.3} parent=11 // pred_fallthru
        _
    $region12: #{shapley_critic2_forward.3} parent=5 // pred_fallthru
      _
    %p404 = scmp.lt.s32.totalorder %s21, 2
    // Predicated region
    $region57: #{shapley_critic2_forward.3} parent=5 // pred_check
      %p405 = pneg %p404
    $region58: #{shapley_critic2_forward.3} parent=5 // pred_check_branch
      %407 = sbr.rel (%p405) target = $region60
    $region59: #{shapley_critic2_forward.3} parent=5 // pred_region
      // Predicated region
      $region61: #{shapley_critic2_forward.3} parent=59 // pred_check
        %p408 = pneg %p41
      $region62: #{shapley_critic2_forward.3} parent=59 // pred_check_branch
        %410 = sbr.rel (%p408) target = $region64
      $region63: #{shapley_critic2_forward.3} parent=59 // pred_region
        %s411 = smul.u32 4, %s21
        %p412 = scmp.lt.s32.totalorder %s411, 7
        %s413 = scalar_select %p412, %s411, 7
        %s414 = smul.addr %s413, 8
        %s415 = scalar_lea.vmem %s0, %s414
        %s416 = smul.u32 4, %s21
      $region64: #{shapley_critic2_forward.3} parent=59 // pred_fallthru
        _
      // Predicated region
      $region65: #{shapley_critic2_forward.3} parent=59 // pred_check
        %p417 = pneg %p67
      $region66: #{shapley_critic2_forward.3} parent=59 // pred_check_branch
        %419 = sbr.rel (%p417) target = $region68
      $region67: #{shapley_critic2_forward.3} parent=59 // pred_region
        %s420 = smul.u32 5, %s21
        %p421 = scmp.lt.s32.totalorder %s420, 9
        %s422 = scalar_select %p421, %s420, 9
        %s423 = smul.addr %s422, 4
        %s424 = smul.addr %s423, 8
        %s425 = scalar_lea.vmem %s1, %s424
        %s426 = smul.u32 5, %s21
      $region68: #{shapley_critic2_forward.3} parent=59 // pred_fallthru
        _
    $region60: #{shapley_critic2_forward.3} parent=5 // pred_fallthru
      _
    %p427 = scmp.le.s32.totalorder 1, %s21
    %p428 = scmp.lt.s32.totalorder %s21, 3
    %p429 = pnand %p427, %p428
    %p430 = pneg %p429
    // Predicated region
    $region69: #{shapley_critic2_forward.3} parent=5 // pred_check
      _
    $region70: #{shapley_critic2_forward.3} parent=5 // pred_check_branch
      %432 = sbr.rel (%p429) target = $region72
    $region71: #{shapley_critic2_forward.3} parent=5 // pred_region
      %s433 = ssub.s32 %s21, 1
      %s434 = smul.u32 4, %s26
      %p435 = scmp.lt.s32.totalorder %s434, 7
      %s436 = scalar_select %p435, %s434, 7
      %s437 = smul.addr %s436, 8
      %s438 = scalar_lea.vmem %s0, %s437
      %p439 = pneg %p47
      %p440 = pneg %p44
      %s441 = smul.u32 5, %s26
      %p442 = scmp.lt.s32.totalorder %s441, 9
      %s443 = scalar_select %p442, %s441, 9
      %s444 = smul.addr %s443, 4
      %s445 = smul.addr %s444, 8
      %s446 = scalar_lea.vmem %s1, %s445
      %p447 = pneg %p73
      %p448 = pneg %p70
      %p449 = pneg %p94
      %p450 = pneg %p91
      %p451 = pneg %p115
      %p452 = pneg %p112
      %p453 = pneg %p136
      %p454 = pneg %p133
      %p455 = pneg %p157
      %p456 = pneg %p154
      %p457 = pneg %p178
      %p458 = pneg %p175
      %p459 = pneg %p199
      %p460 = pneg %p196
      %p461 = pneg %p220
      %p462 = pneg %p217
      %p463 = pneg %p241
      %p464 = pneg %p238
      %p465 = pneg %p262
      %p466 = pneg %p259
      %p467 = pneg %p283
      %p468 = pneg %p280
      %p469 = pneg %p304
      %p470 = pneg %p301
      %p471 = pneg %p330
      %p472 = pneg %p327
      %s473 = smul.u32 4, %s26
      %p474 = scmp.lt.s32.totalorder %s473, 7
      %s475 = scalar_select %p474, %s473, 7
      %s476 = smul.addr %s475, 8
      %s477 = scalar_lea.vmem %s13, %s476
      %p478 = pneg %p356
      %p479 = pneg %p353
      %s480 = smul.u32 4, %s26
      %p481 = scmp.lt.s32.totalorder %s480, 7
      %s482 = scalar_select %p481, %s480, 7
      %s483 = smul.addr %s482, 8
      %s484 = scalar_lea.vmem %s14, %s483
      %s485 = smul.u32 4, %s26
      %p486 = scmp.lt.s32.totalorder %s485, 7
      %s487 = scalar_select %p486, %s485, 7
      %s488 = smul.addr %s487, 8
      %s489 = scalar_lea.vmem %s0, %s488
      %s490 = smul.u32 4, %s26
      %s491 = smul.u32 5, %s26
      %p492 = scmp.lt.s32.totalorder %s491, 9
      %s493 = scalar_select %p492, %s491, 9
      %s494 = smul.addr %s493, 4
      %s495 = smul.addr %s494, 8
      %s496 = scalar_lea.vmem %s1, %s495
      %s497 = smul.u32 5, %s26
      %s498 = smul.u32 4, %s26
      %p499 = scmp.lt.s32.totalorder %s498, 7
      %s500 = scalar_select %p499, %s498, 7
      %s501 = smul.addr %s500, 8
      %s502 = scalar_lea.vmem %s13, %s501
      %s503 = smul.u32 4, %s26
      %s504 = smul.u32 4, %s26
      %p505 = scmp.lt.s32.totalorder %s504, 7
      %s506 = scalar_select %p505, %s504, 7
      %s507 = smul.addr %s506, 8
      %s508 = scalar_lea.vmem %s14, %s507
      %s509 = smul.u32 4, %s26
      %v511 = vld [vmem:[%s489] sm:$0xff]
      %v512 = vld [vmem:[%s489 + $0x8] sm:$0xff]
      %v513 = vld [vmem:[%s489 + $0x10] sm:$0xff]
      %v514 = vld [vmem:[%s489 + $0x18] sm:$0xff]
      %v515 = vld [vmem:[%s496] sm:$0xff]
      %v516 = vld [vmem:[%s496 + $0x8] sm:$0xff]
      %v517 = vld [vmem:[%s496 + $0x10] sm:$0xff]
      %v518 = vld [vmem:[%s496 + $0x18] sm:$0xff]
      %v519 = vld [vmem:[%s496 + $0x20] sm:$0xff]
      %v520 = vld [vmem:[%s496 + $0x28] sm:$0xff]
      %v521 = vld [vmem:[%s496 + $0x30] sm:$0xff]
      %v522 = vld [vmem:[%s496 + $0x38] sm:$0xff]
      %v523 = vld [vmem:[%s496 + $0x40] sm:$0xff]
      %v524 = vld [vmem:[%s496 + $0x48] sm:$0xff]
      %v525 = vld [vmem:[%s496 + $0x50] sm:$0xff]
      %v526 = vld [vmem:[%s496 + $0x58] sm:$0xff]
      %v527 = vld [vmem:[%s496 + $0x60] sm:$0xff]
      %v528 = vld [vmem:[%s496 + $0x68] sm:$0xff]
      %v529 = vld [vmem:[%s496 + $0x70] sm:$0xff]
      %v530 = vld [vmem:[%s496 + $0x78] sm:$0xff]
      %v531 = vld [vmem:[%s496 + $0x80] sm:$0xff]
      %v532 = vld [vmem:[%s496 + $0x88] sm:$0xff]
      %v533 = vld [vmem:[%s496 + $0x90] sm:$0xff]
      %v534 = vld [vmem:[%s496 + $0x98] sm:$0xff]
      %vm535 = vcmp.gt.f32.partialorder %v531, 0.0
      %vm536 = vcmp.gt.f32.partialorder %v532, 0.0
      %vm537 = vcmp.gt.f32.partialorder %v533, 0.0
      %vm538 = vcmp.gt.f32.partialorder %v534, 0.0
      %v539 = vsel %vm535, -1e+09, -2e+09
      %v540 = vsel %vm536, -1e+09, -2e+09
      %v541 = vsel %vm537, -1e+09, -2e+09
      %v542 = vsel %vm538, -1e+09, -2e+09
      %v543 = vld [vmem:[%s12] sm:$0x3]
      %v544 = vld [vmem:[%s6] sm:$0xff]
      %v545 = vld [vmem:[%s6 + $0x8] sm:$0x3]
      %v546 = vld [vmem:[%s2] sm:$0xff]
      %v547 = vld [vmem:[%s2 + $0x8] sm:$0xff]
      %v548 = vld [vmem:[%s2 + $0x10] sm:$0xff]
      %v549 = vld [vmem:[%s2 + $0x18] sm:$0xff]
      %v550 = vld [vmem:[%s2 + $0x20] sm:$0xff]
      %v551 = vld [vmem:[%s2 + $0x28] sm:$0xff]
      %v552 = vld [vmem:[%s2 + $0x30] sm:$0xff]
      %v553 = vld [vmem:[%s2 + $0x38] sm:$0xff]
      %v554 = vld [vmem:[%s2 + $0x40] sm:$0xff]
      %v555 = vld [vmem:[%s2 + $0x48] sm:$0xff]
      %v556 = vld [vmem:[%s2 + $0x50] sm:$0xff]
      %v557 = vld [vmem:[%s2 + $0x58] sm:$0xff]
      %v558 = vld [vmem:[%s2 + $0x60] sm:$0xff]
      %v559 = vld [vmem:[%s2 + $0x68] sm:$0xff]
      %v560 = vld [vmem:[%s2 + $0x70] sm:$0xff]
      %v561 = vld [vmem:[%s2 + $0x78] sm:$0xff]
      %v562 = vpack.c.bf16 %v512, %v511
      %v563 = vpack.c.bf16 %v514, %v513
      %v564 = vpack.c.bf16 %v548, %v546
      %v565 = vpack.c.bf16 %v549, %v547
      %v566 = vpack.c.bf16 %v552, %v550
      %v567 = vpack.c.bf16 %v553, %v551
      %v568 = vpack.c.bf16 %v556, %v554
      %v569 = vpack.c.bf16 %v557, %v555
      %v570 = vpack.c.bf16 %v560, %v558
      %v571 = vpack.c.bf16 %v561, %v559
      %vm572 = vcmask 523264
      %v574 = vsel %vm572, %v562, 0
      %v577 = vsel %vm572, %v563, 0
      %579 = vmatpush.bf16.msra.mxu0 0
      %580 = vmatpush.bf16.msra.mxu0 0
      %581 = vmatpush.bf16.msra.mxu0 0
      %582 = vmatpush.bf16.msra.mxu0 0
      %583 = vmatpush.bf16.msra.mxu0 %v570
      %584 = vmatpush.bf16.msra.mxu0 %v568
      %585 = vmatpush.bf16.msra.mxu0 %v566
      %586 = vmatpush.bf16.msra.mxu0 %v564
      %587 = vmatmul.bf16.gmra.mxu0 %v574
      %v588 = vpop.f32.mrf.mxu0
      %v589 = vadd.f32 0.0, %v588
      %v590 = vpop.f32.mrf.mxu0
      %v591 = vadd.f32 0.0, %v590
      %592 = vmatmul.bf16.gmra.mxu0 %v577
      %v593 = vpop.f32.mrf.mxu0
      %v594 = vadd.f32 0.0, %v593
      %v595 = vpop.f32.mrf.mxu0
      %v596 = vadd.f32 0.0, %v595
      %597 = vdwg.mxu0
      %598 = vmatpush.bf16.msra.mxu0 0
      %599 = vmatpush.bf16.msra.mxu0 0
      %600 = vmatpush.bf16.msra.mxu0 0
      %601 = vmatpush.bf16.msra.mxu0 0
      %602 = vmatpush.bf16.msra.mxu0 %v571
      %603 = vmatpush.bf16.msra.mxu0 %v569
      %604 = vmatpush.bf16.msra.mxu0 %v567
      %605 = vmatpush.bf16.msra.mxu0 %v565
      %606 = vmatmul.bf16.gmra.mxu0 %v574
      %v607 = vpop.f32.mrf.mxu0
      %v608 = vadd.f32 0.0, %v607
      %v609 = vpop.f32.mrf.mxu0
      %v610 = vadd.f32 0.0, %v609
      %611 = vmatmul.bf16.gmra.mxu0 %v577
      %v612 = vpop.f32.mrf.mxu0
      %v613 = vadd.f32 0.0, %v612
      %v614 = vpop.f32.mrf.mxu0
      %v615 = vadd.f32 0.0, %v614
      %616 = vdwg.mxu0
      %v617 = vperm.slane %v544, 0
      %v618 = vadd.f32 %v589, %v617
      %v619 = vadd.f32 %v591, %v617
      %v620 = vadd.f32 %v594, %v617
      %v621 = vadd.f32 %v596, %v617
      %v622 = vmul.f32 %v618, 0.125
      %v623 = vmul.f32 %v619, 0.125
      %v624 = vmul.f32 %v620, 0.125
      %v625 = vmul.f32 %v621, 0.125
      %v626 = vperm.slane %v544, 1
      %628 = vrot.lane.b32.xlu0 %v626, 64
      %v629 = vpop.permute.xlu0 %628
      %v631 = vadd.f32 %v589, %v629
      %v632 = vadd.f32 %v591, %v629
      %v633 = vadd.f32 %v594, %v629
      %v634 = vadd.f32 %v596, %v629
      %v635 = vperm.slane %v544, 2
      %v636 = vadd.f32 %v608, %v635
      %v637 = vadd.f32 %v610, %v635
      %v638 = vadd.f32 %v613, %v635
      %v639 = vadd.f32 %v615, %v635
      %v640 = vpack.c.bf16 %v637, %v636
      %v641 = vpack.c.bf16 %v639, %v638
      %v642 = vpack.c.bf16 %v623, %v622
      %v643 = vpack.c.bf16 %v625, %v624
      %v644 = vpack.c.bf16 %v632, %v631
      %v645 = vpack.c.bf16 %v634, %v633
      %648 = vrot.lane.b32.xlu0 %v644, 64
      %v649 = vpop.permute.xlu0 %648
      %650 = vrot.lane.b32.xlu0 %v645, 64
      %v651 = vpop.permute.xlu0 %650
      %v653 = vsel %vm572, %v642, 0
      %v656 = vsel %vm572, %v643, 0
      %v659 = vsel %vm572, %v649, 0
      %v662 = vsel %vm572, %v651, 0
      %664 = vmatpush.bf16.xpose.msra.mxu0 0
      %665 = vmatpush.bf16.xpose.msra.mxu0 0
      %666 = vmatpush.bf16.xpose.msra.mxu0 0
      %667 = vmatpush.bf16.xpose.msra.mxu0 0
      %668 = vmatpush.bf16.xpose.msra.mxu0 0
      %669 = vmatpush.bf16.xpose.msra.mxu0 0
      %670 = vmatpush.bf16.xpose.msra.mxu0 %v662
      %671 = vmatpush.bf16.xpose.msra.mxu0 %v659
      %672 = vmatmul.bf16.gmra.mxu0 %v653
      %v673 = vpop.f32.mrf.mxu0
      %v674 = vadd.f32 0.0, %v673
      %v675 = vpop.f32.mrf.mxu0
      %v676 = vadd.f32 0.0, %v675
      %677 = vmatmul.bf16.gmra.mxu0 %v656
      %v678 = vpop.f32.mrf.mxu0
      %v679 = vadd.f32 0.0, %v678
      %v680 = vpop.f32.mrf.mxu0
      %v681 = vadd.f32 0.0, %v680
      %682 = vdwg.mxu0
      %vm683 = vcmp.gt.f32.partialorder %v515, 0.0
      %vm684 = vcmp.gt.f32.partialorder %v516, 0.0
      %vm685 = vcmp.gt.f32.partialorder %v517, 0.0
      %vm686 = vcmp.gt.f32.partialorder %v518, 0.0
      %vm687 = vcmp.gt.f32.partialorder %v519, 0.0
      %vm688 = vcmp.gt.f32.partialorder %v520, 0.0
      %vm689 = vcmp.gt.f32.partialorder %v521, 0.0
      %vm690 = vcmp.gt.f32.partialorder %v522, 0.0
      %vm691 = vcmp.gt.f32.partialorder %v523, 0.0
      %vm692 = vcmp.gt.f32.partialorder %v524, 0.0
      %vm693 = vcmp.gt.f32.partialorder %v525, 0.0
      %vm694 = vcmp.gt.f32.partialorder %v526, 0.0
      %vm695 = vcmp.gt.f32.partialorder %v527, 0.0
      %vm696 = vcmp.gt.f32.partialorder %v528, 0.0
      %vm697 = vcmp.gt.f32.partialorder %v529, 0.0
      %vm698 = vcmp.gt.f32.partialorder %v530, 0.0
      %v699 = vsel %vm683, %v674, %v539
      %v700 = vsel %vm684, %v676, %v540
      %v701 = vsel %vm685, %v679, %v541
      %v702 = vsel %vm686, %v681, %v542
      %v703 = vsel %vm687, %v674, %v539
      %v704 = vsel %vm688, %v676, %v540
      %v705 = vsel %vm689, %v679, %v541
      %v706 = vsel %vm690, %v681, %v542
      %v707 = vsel %vm691, %v674, %v539
      %v708 = vsel %vm692, %v676, %v540
      %v709 = vsel %vm693, %v679, %v541
      %v710 = vsel %vm694, %v681, %v542
      %v711 = vsel %vm695, %v674, %v539
      %v712 = vsel %vm696, %v676, %v540
      %v713 = vsel %vm697, %v679, %v541
      %v714 = vsel %vm698, %v681, %v542
      %v715 = vsel %vm535, %v674, %v539
      %v716 = vsel %vm536, %v676, %v540
      %v717 = vsel %vm537, %v679, %v541
      %v718 = vsel %vm538, %v681, %v542
      %vm719 = vcmask 261120
      %v720 = vsel %vm719, %v699, -inf
      %721 = vmax.xlane.f32.xlu0 %v720
      %v722 = vpop.xlane.xlu0 %721
      %v723 = vsel %vm719, %v700, -inf
      %724 = vmax.xlane.f32.xlu0 %v723
      %v725 = vpop.xlane.xlu0 %724
      %v726 = vsel %vm719, %v701, -inf
      %727 = vmax.xlane.f32.xlu0 %v726
      %v728 = vpop.xlane.xlu0 %727
      %v729 = vsel %vm719, %v702, -inf
      %730 = vmax.xlane.f32.xlu0 %v729
      %v731 = vpop.xlane.xlu0 %730
      %v732 = vsel %vm719, %v703, -inf
      %733 = vmax.xlane.f32.xlu0 %v732
      %v734 = vpop.xlane.xlu0 %733
      %v735 = vsel %vm719, %v704, -inf
      %736 = vmax.xlane.f32.xlu0 %v735
      %v737 = vpop.xlane.xlu0 %736
      %v738 = vsel %vm719, %v705, -inf
      %739 = vmax.xlane.f32.xlu0 %v738
      %v740 = vpop.xlane.xlu0 %739
      %v741 = vsel %vm719, %v706, -inf
      %742 = vmax.xlane.f32.xlu0 %v741
      %v743 = vpop.xlane.xlu0 %742
      %v744 = vsel %vm719, %v707, -inf
      %745 = vmax.xlane.f32.xlu0 %v744
      %v746 = vpop.xlane.xlu0 %745
      %v747 = vsel %vm719, %v708, -inf
      %748 = vmax.xlane.f32.xlu0 %v747
      %v749 = vpop.xlane.xlu0 %748
      %v750 = vsel %vm719, %v709, -inf
      %751 = vmax.xlane.f32.xlu0 %v750
      %v752 = vpop.xlane.xlu0 %751
      %v753 = vsel %vm719, %v710, -inf
      %754 = vmax.xlane.f32.xlu0 %v753
      %v755 = vpop.xlane.xlu0 %754
      %v756 = vsel %vm719, %v711, -inf
      %757 = vmax.xlane.f32.xlu0 %v756
      %v758 = vpop.xlane.xlu0 %757
      %v759 = vsel %vm719, %v712, -inf
      %760 = vmax.xlane.f32.xlu0 %v759
      %v761 = vpop.xlane.xlu0 %760
      %v762 = vsel %vm719, %v713, -inf
      %763 = vmax.xlane.f32.xlu0 %v762
      %v764 = vpop.xlane.xlu0 %763
      %v765 = vsel %vm719, %v714, -inf
      %766 = vmax.xlane.f32.xlu0 %v765
      %v767 = vpop.xlane.xlu0 %766
      %v768 = vsel %vm719, %v715, -inf
      %769 = vmax.xlane.f32.xlu0 %v768
      %v770 = vpop.xlane.xlu0 %769
      %v771 = vsel %vm719, %v716, -inf
      %772 = vmax.xlane.f32.xlu0 %v771
      %v773 = vpop.xlane.xlu0 %772
      %v774 = vsel %vm719, %v717, -inf
      %775 = vmax.xlane.f32.xlu0 %v774
      %v776 = vpop.xlane.xlu0 %775
      %v777 = vsel %vm719, %v718, -inf
      %778 = vmax.xlane.f32.xlu0 %v777
      %v779 = vpop.xlane.xlu0 %778
      %v780 = vsub.f32 %v699, %v722
      %v781 = vsub.f32 %v700, %v725
      %v782 = vsub.f32 %v701, %v728
      %v783 = vsub.f32 %v702, %v731
      %v784 = vsub.f32 %v703, %v734
      %v785 = vsub.f32 %v704, %v737
      %v786 = vsub.f32 %v705, %v740
      %v787 = vsub.f32 %v706, %v743
      %v788 = vsub.f32 %v707, %v746
      %v789 = vsub.f32 %v708, %v749
      %v790 = vsub.f32 %v709, %v752
      %v791 = vsub.f32 %v710, %v755
      %v792 = vsub.f32 %v711, %v758
      %v793 = vsub.f32 %v712, %v761
      %v794 = vsub.f32 %v713, %v764
      %v795 = vsub.f32 %v714, %v767
      %v796 = vsub.f32 %v715, %v770
      %v797 = vsub.f32 %v716, %v773
      %v798 = vsub.f32 %v717, %v776
      %v799 = vsub.f32 %v718, %v779
      %v800 = vmul.f32 %v780, 1.442695
      %v801 = vpow.pop %v800
      %v802 = vmul.f32 %v781, 1.442695
      %v803 = vpow.pop %v802
      %v804 = vmul.f32 %v782, 1.442695
      %v805 = vpow.pop %v804
      %v806 = vmul.f32 %v783, 1.442695
      %v807 = vpow.pop %v806
      %v808 = vmul.f32 %v784, 1.442695
      %v809 = vpow.pop %v808
      %v810 = vmul.f32 %v785, 1.442695
      %v811 = vpow.pop %v810
      %v812 = vmul.f32 %v786, 1.442695
      %v813 = vpow.pop %v812
      %v814 = vmul.f32 %v787, 1.442695
      %v815 = vpow.pop %v814
      %v816 = vmul.f32 %v788, 1.442695
      %v817 = vpow.pop %v816
      %v818 = vmul.f32 %v789, 1.442695
      %v819 = vpow.pop %v818
      %v820 = vmul.f32 %v790, 1.442695
      %v821 = vpow.pop %v820
      %v822 = vmul.f32 %v791, 1.442695
      %v823 = vpow.pop %v822
      %v824 = vmul.f32 %v792, 1.442695
      %v825 = vpow.pop %v824
      %v826 = vmul.f32 %v793, 1.442695
      %v827 = vpow.pop %v826
      %v828 = vmul.f32 %v794, 1.442695
      %v829 = vpow.pop %v828
      %v830 = vmul.f32 %v795, 1.442695
      %v831 = vpow.pop %v830
      %v832 = vmul.f32 %v796, 1.442695
      %v833 = vpow.pop %v832
      %v834 = vmul.f32 %v797, 1.442695
      %v835 = vpow.pop %v834
      %v836 = vmul.f32 %v798, 1.442695
      %v837 = vpow.pop %v836
      %v838 = vmul.f32 %v799, 1.442695
      %v839 = vpow.pop %v838
      %v840 = vsel %vm719, %v801, 0.0
      %841 = vadd.xlane.f32.xlu0 %v840
      %v842 = vpop.xlane.xlu0 %841
      %v843 = vsel %vm719, %v803, 0.0
      %844 = vadd.xlane.f32.xlu0 %v843
      %v845 = vpop.xlane.xlu0 %844
      %v846 = vsel %vm719, %v805, 0.0
      %847 = vadd.xlane.f32.xlu0 %v846
      %v848 = vpop.xlane.xlu0 %847
      %v849 = vsel %vm719, %v807, 0.0
      %850 = vadd.xlane.f32.xlu0 %v849
      %v851 = vpop.xlane.xlu0 %850
      %v852 = vsel %vm719, %v809, 0.0
      %853 = vadd.xlane.f32.xlu0 %v852
      %v854 = vpop.xlane.xlu0 %853
      %v855 = vsel %vm719, %v811, 0.0
      %856 = vadd.xlane.f32.xlu0 %v855
      %v857 = vpop.xlane.xlu0 %856
      %v858 = vsel %vm719, %v813, 0.0
      %859 = vadd.xlane.f32.xlu0 %v858
      %v860 = vpop.xlane.xlu0 %859
      %v861 = vsel %vm719, %v815, 0.0
      %862 = vadd.xlane.f32.xlu0 %v861
      %v863 = vpop.xlane.xlu0 %862
      %v864 = vsel %vm719, %v817, 0.0
      %865 = vadd.xlane.f32.xlu0 %v864
      %v866 = vpop.xlane.xlu0 %865
      %v867 = vsel %vm719, %v819, 0.0
      %868 = vadd.xlane.f32.xlu0 %v867
      %v869 = vpop.xlane.xlu0 %868
      %v870 = vsel %vm719, %v821, 0.0
      %871 = vadd.xlane.f32.xlu0 %v870
      %v872 = vpop.xlane.xlu0 %871
      %v873 = vsel %vm719, %v823, 0.0
      %874 = vadd.xlane.f32.xlu0 %v873
      %v875 = vpop.xlane.xlu0 %874
      %v876 = vsel %vm719, %v825, 0.0
      %877 = vadd.xlane.f32.xlu0 %v876
      %v878 = vpop.xlane.xlu0 %877
      %v879 = vsel %vm719, %v827, 0.0
      %880 = vadd.xlane.f32.xlu0 %v879
      %v881 = vpop.xlane.xlu0 %880
      %v882 = vsel %vm719, %v829, 0.0
      %883 = vadd.xlane.f32.xlu0 %v882
      %v884 = vpop.xlane.xlu0 %883
      %v885 = vsel %vm719, %v831, 0.0
      %886 = vadd.xlane.f32.xlu0 %v885
      %v887 = vpop.xlane.xlu0 %886
      %v888 = vsel %vm719, %v833, 0.0
      %889 = vadd.xlane.f32.xlu0 %v888
      %v890 = vpop.xlane.xlu0 %889
      %v891 = vsel %vm719, %v835, 0.0
      %892 = vadd.xlane.f32.xlu0 %v891
      %v893 = vpop.xlane.xlu0 %892
      %v894 = vsel %vm719, %v837, 0.0
      %895 = vadd.xlane.f32.xlu0 %v894
      %v896 = vpop.xlane.xlu0 %895
      %v897 = vsel %vm719, %v839, 0.0
      %898 = vadd.xlane.f32.xlu0 %v897
      %v899 = vpop.xlane.xlu0 %898
      %v900 = vrcp.pop %v842
      %v901 = vrcp.pop %v845
      %v902 = vrcp.pop %v848
      %v903 = vrcp.pop %v851
      %v904 = vrcp.pop %v854
      %v905 = vrcp.pop %v857
      %v906 = vrcp.pop %v860
      %v907 = vrcp.pop %v863
      %v908 = vrcp.pop %v866
      %v909 = vrcp.pop %v869
      %v910 = vrcp.pop %v872
      %v911 = vrcp.pop %v875
      %v912 = vrcp.pop %v878
      %v913 = vrcp.pop %v881
      %v914 = vrcp.pop %v884
      %v915 = vrcp.pop %v887
      %v916 = vrcp.pop %v890
      %v917 = vrcp.pop %v893
      %v918 = vrcp.pop %v896
      %v919 = vrcp.pop %v899
      %v920 = vmul.f32 %v801, %v900
      %v921 = vmul.f32 %v803, %v901
      %v922 = vmul.f32 %v805, %v902
      %v923 = vmul.f32 %v807, %v903
      %v924 = vmul.f32 %v809, %v904
      %v925 = vmul.f32 %v811, %v905
      %v926 = vmul.f32 %v813, %v906
      %v927 = vmul.f32 %v815, %v907
      %v928 = vmul.f32 %v817, %v908
      %v929 = vmul.f32 %v819, %v909
      %v930 = vmul.f32 %v821, %v910
      %v931 = vmul.f32 %v823, %v911
      %v932 = vmul.f32 %v825, %v912
      %v933 = vmul.f32 %v827, %v913
      %v934 = vmul.f32 %v829, %v914
      %v935 = vmul.f32 %v831, %v915
      %v936 = vmul.f32 %v833, %v916
      %v937 = vmul.f32 %v835, %v917
      %v938 = vmul.f32 %v837, %v918
      %v939 = vmul.f32 %v839, %v919
      %v940 = vpack.c.bf16 %v921, %v920
      %v941 = vpack.c.bf16 %v923, %v922
      %v943 = vsel %vm719, %v940, 0
      %v946 = vsel %vm719, %v941, 0
      %948 = vmatpush.bf16.msra.mxu0 0
      %949 = vmatpush.bf16.msra.mxu0 0
      %950 = vmatpush.bf16.msra.mxu0 0
      %951 = vmatpush.bf16.msra.mxu0 0
      %952 = vmatpush.bf16.msra.mxu0 0
      %953 = vmatpush.bf16.msra.mxu0 0
      %954 = vmatpush.bf16.msra.mxu0 %v641
      %955 = vmatpush.bf16.msra.mxu0 %v640
      %956 = vmatmul.bf16.gmra.mxu0 %v943
      %v957 = vpop.f32.mrf.mxu0
      %v958 = vadd.f32 0.0, %v957
      %v959 = vpop.f32.mrf.mxu0
      %v960 = vadd.f32 0.0, %v959
      %961 = vmatmul.bf16.gmra.mxu0 %v946
      %v962 = vpop.f32.mrf.mxu0
      %v963 = vadd.f32 0.0, %v962
      %v964 = vpop.f32.mrf.mxu0
      %v965 = vadd.f32 0.0, %v964
      %966 = vdwg.mxu0
      %v967 = vpack.c.bf16 %v925, %v924
      %v968 = vpack.c.bf16 %v927, %v926
      %v970 = vsel %vm719, %v967, 0
      %v973 = vsel %vm719, %v968, 0
      %975 = vmatpush.bf16.msra.mxu0 0
      %976 = vmatpush.bf16.msra.mxu0 0
      %977 = vmatpush.bf16.msra.mxu0 0
      %978 = vmatpush.bf16.msra.mxu0 0
      %979 = vmatpush.bf16.msra.mxu0 0
      %980 = vmatpush.bf16.msra.mxu0 0
      %981 = vmatpush.bf16.msra.mxu0 %v641
      %982 = vmatpush.bf16.msra.mxu0 %v640
      %983 = vmatmul.bf16.gmra.mxu0 %v970
      %v984 = vpop.f32.mrf.mxu0
      %v985 = vadd.f32 0.0, %v984
      %v986 = vpop.f32.mrf.mxu0
      %v987 = vadd.f32 0.0, %v986
      %988 = vmatmul.bf16.gmra.mxu0 %v973
      %v989 = vpop.f32.mrf.mxu0
      %v990 = vadd.f32 0.0, %v989
      %v991 = vpop.f32.mrf.mxu0
      %v992 = vadd.f32 0.0, %v991
      %993 = vdwg.mxu0
      %v994 = vpack.c.bf16 %v929, %v928
      %v995 = vpack.c.bf16 %v931, %v930
      %v997 = vsel %vm719, %v994, 0
      %v1000 = vsel %vm719, %v995, 0
      %1002 = vmatpush.bf16.msra.mxu0 0
      %1003 = vmatpush.bf16.msra.mxu0 0
      %1004 = vmatpush.bf16.msra.mxu0 0
      %1005 = vmatpush.bf16.msra.mxu0 0
      %1006 = vmatpush.bf16.msra.mxu0 0
      %1007 = vmatpush.bf16.msra.mxu0 0
      %1008 = vmatpush.bf16.msra.mxu0 %v641
      %1009 = vmatpush.bf16.msra.mxu0 %v640
      %1010 = vmatmul.bf16.gmra.mxu0 %v997
      %v1011 = vpop.f32.mrf.mxu0
      %v1012 = vadd.f32 0.0, %v1011
      %v1013 = vpop.f32.mrf.mxu0
      %v1014 = vadd.f32 0.0, %v1013
      %1015 = vmatmul.bf16.gmra.mxu0 %v1000
      %v1016 = vpop.f32.mrf.mxu0
      %v1017 = vadd.f32 0.0, %v1016
      %v1018 = vpop.f32.mrf.mxu0
      %v1019 = vadd.f32 0.0, %v1018
      %1020 = vdwg.mxu0
      %v1021 = vpack.c.bf16 %v933, %v932
      %v1022 = vpack.c.bf16 %v935, %v934
      %v1024 = vsel %vm719, %v1021, 0
      %v1027 = vsel %vm719, %v1022, 0
      %1029 = vmatpush.bf16.msra.mxu0 0
      %1030 = vmatpush.bf16.msra.mxu0 0
      %1031 = vmatpush.bf16.msra.mxu0 0
      %1032 = vmatpush.bf16.msra.mxu0 0
      %1033 = vmatpush.bf16.msra.mxu0 0
      %1034 = vmatpush.bf16.msra.mxu0 0
      %1035 = vmatpush.bf16.msra.mxu0 %v641
      %1036 = vmatpush.bf16.msra.mxu0 %v640
      %1037 = vmatmul.bf16.gmra.mxu0 %v1024
      %v1038 = vpop.f32.mrf.mxu0
      %v1039 = vadd.f32 0.0, %v1038
      %v1040 = vpop.f32.mrf.mxu0
      %v1041 = vadd.f32 0.0, %v1040
      %1042 = vmatmul.bf16.gmra.mxu0 %v1027
      %v1043 = vpop.f32.mrf.mxu0
      %v1044 = vadd.f32 0.0, %v1043
      %v1045 = vpop.f32.mrf.mxu0
      %v1046 = vadd.f32 0.0, %v1045
      %1047 = vdwg.mxu0
      %v1048 = vpack.c.bf16 %v937, %v936
      %v1049 = vpack.c.bf16 %v939, %v938
      %v1051 = vsel %vm719, %v1048, 0
      %v1054 = vsel %vm719, %v1049, 0
      %1056 = vmatpush.bf16.msra.mxu0 0
      %1057 = vmatpush.bf16.msra.mxu0 0
      %1058 = vmatpush.bf16.msra.mxu0 0
      %1059 = vmatpush.bf16.msra.mxu0 0
      %1060 = vmatpush.bf16.msra.mxu0 0
      %1061 = vmatpush.bf16.msra.mxu0 0
      %1062 = vmatpush.bf16.msra.mxu0 %v641
      %1063 = vmatpush.bf16.msra.mxu0 %v640
      %1064 = vmatmul.bf16.gmra.mxu0 %v1051
      %v1065 = vpop.f32.mrf.mxu0
      %v1066 = vadd.f32 0.0, %v1065
      %v1067 = vpop.f32.mrf.mxu0
      %v1068 = vadd.f32 0.0, %v1067
      %1069 = vmatmul.bf16.gmra.mxu0 %v1054
      %v1070 = vpop.f32.mrf.mxu0
      %v1071 = vadd.f32 0.0, %v1070
      %v1072 = vpop.f32.mrf.mxu0
      %v1073 = vadd.f32 0.0, %v1072
      %1074 = vdwg.mxu0
      %v1075 = vld [vmem:[%s3] sm:$0xff]
      %v1076 = vld [vmem:[%s3 + $0x8] sm:$0xff]
      %v1077 = vld [vmem:[%s3 + $0x10] sm:$0xff]
      %v1078 = vld [vmem:[%s3 + $0x18] sm:$0xff]
      %v1079 = vld [vmem:[%s3 + $0x20] sm:$0xff]
      %v1080 = vld [vmem:[%s3 + $0x28] sm:$0xff]
      %v1081 = vld [vmem:[%s3 + $0x30] sm:$0xff]
      %v1082 = vld [vmem:[%s3 + $0x38] sm:$0xff]
      %v1083 = vpack.c.bf16 %v960, %v958
      %v1084 = vpack.c.bf16 %v965, %v963
      %v1085 = vpack.c.bf16 %v987, %v985
      %v1086 = vpack.c.bf16 %v992, %v990
      %v1087 = vpack.c.bf16 %v1014, %v1012
      %v1088 = vpack.c.bf16 %v1019, %v1017
      %v1089 = vpack.c.bf16 %v1041, %v1039
      %v1090 = vpack.c.bf16 %v1046, %v1044
      %v1091 = vpack.c.bf16 %v1068, %v1066
      %v1092 = vpack.c.bf16 %v1073, %v1071
      %v1093 = vpack.c.bf16 %v1076, %v1075
      %v1094 = vpack.c.bf16 %v1078, %v1077
      %v1095 = vpack.c.bf16 %v1080, %v1079
      %v1096 = vpack.c.bf16 %v1082, %v1081
      %v1098 = vsel %vm572, %v1083, 0
      %v1101 = vsel %vm572, %v1084, 0
      %v1104 = vsel %vm572, %v1085, 0
      %v1107 = vsel %vm572, %v1086, 0
      %v1110 = vsel %vm572, %v1087, 0
      %v1113 = vsel %vm572, %v1088, 0
      %v1116 = vsel %vm572, %v1089, 0
      %v1119 = vsel %vm572, %v1090, 0
      %v1122 = vsel %vm572, %v1091, 0
      %v1125 = vsel %vm572, %v1092, 0
      %1127 = vmatpush.bf16.msra.mxu0 0
      %1128 = vmatpush.bf16.msra.mxu0 0
      %1129 = vmatpush.bf16.msra.mxu0 0
      %1130 = vmatpush.bf16.msra.mxu0 0
      %1131 = vmatpush.bf16.msra.mxu0 %v1096
      %1132 = vmatpush.bf16.msra.mxu0 %v1095
      %1133 = vmatpush.bf16.msra.mxu0 %v1094
      %1134 = vmatpush.bf16.msra.mxu0 %v1093
      %1135 = vmatmul.bf16.gmra.mxu0 %v1098
      %v1136 = vpop.f32.mrf.mxu0
      %v1137 = vadd.f32 0.0, %v1136
      %v1138 = vpop.f32.mrf.mxu0
      %v1139 = vadd.f32 0.0, %v1138
      %1140 = vmatmul.bf16.gmra.mxu0 %v1101
      %v1141 = vpop.f32.mrf.mxu0
      %v1142 = vadd.f32 0.0, %v1141
      %v1143 = vpop.f32.mrf.mxu0
      %v1144 = vadd.f32 0.0, %v1143
      %1145 = vmatmul.bf16.gmra.mxu0 %v1104
      %v1146 = vpop.f32.mrf.mxu0
      %v1147 = vadd.f32 0.0, %v1146
      %v1148 = vpop.f32.mrf.mxu0
      %v1149 = vadd.f32 0.0, %v1148
      %1150 = vmatmul.bf16.gmra.mxu0 %v1107
      %v1151 = vpop.f32.mrf.mxu0
      %v1152 = vadd.f32 0.0, %v1151
      %v1153 = vpop.f32.mrf.mxu0
      %v1154 = vadd.f32 0.0, %v1153
      %1155 = vmatmul.bf16.gmra.mxu0 %v1110
      %v1156 = vpop.f32.mrf.mxu0
      %v1157 = vadd.f32 0.0, %v1156
      %v1158 = vpop.f32.mrf.mxu0
      %v1159 = vadd.f32 0.0, %v1158
      %1160 = vmatmul.bf16.gmra.mxu0 %v1113
      %v1161 = vpop.f32.mrf.mxu0
      %v1162 = vadd.f32 0.0, %v1161
      %v1163 = vpop.f32.mrf.mxu0
      %v1164 = vadd.f32 0.0, %v1163
      %1165 = vmatmul.bf16.gmra.mxu0 %v1116
      %v1166 = vpop.f32.mrf.mxu0
      %v1167 = vadd.f32 0.0, %v1166
      %v1168 = vpop.f32.mrf.mxu0
      %v1169 = vadd.f32 0.0, %v1168
      %1170 = vmatmul.bf16.gmra.mxu0 %v1119
      %v1171 = vpop.f32.mrf.mxu0
      %v1172 = vadd.f32 0.0, %v1171
      %v1173 = vpop.f32.mrf.mxu0
      %v1174 = vadd.f32 0.0, %v1173
      %1175 = vmatmul.bf16.gmra.mxu0 %v1122
      %v1176 = vpop.f32.mrf.mxu0
      %v1177 = vadd.f32 0.0, %v1176
      %v1178 = vpop.f32.mrf.mxu0
      %v1179 = vadd.f32 0.0, %v1178
      %1180 = vmatmul.bf16.gmra.mxu0 %v1125
      %v1181 = vpop.f32.mrf.mxu0
      %v1182 = vadd.f32 0.0, %v1181
      %v1183 = vpop.f32.mrf.mxu0
      %v1184 = vadd.f32 0.0, %v1183
      %1185 = vdwg.mxu0
      %v1186 = vadd.f32 %v511, %v1137
      %v1187 = vadd.f32 %v512, %v1139
      %v1188 = vadd.f32 %v513, %v1142
      %v1189 = vadd.f32 %v514, %v1144
      %v1190 = vadd.f32 %v511, %v1147
      %v1191 = vadd.f32 %v512, %v1149
      %v1192 = vadd.f32 %v513, %v1152
      %v1193 = vadd.f32 %v514, %v1154
      %v1194 = vadd.f32 %v511, %v1157
      %v1195 = vadd.f32 %v512, %v1159
      %v1196 = vadd.f32 %v513, %v1162
      %v1197 = vadd.f32 %v514, %v1164
      %v1198 = vadd.f32 %v511, %v1167
      %v1199 = vadd.f32 %v512, %v1169
      %v1200 = vadd.f32 %v513, %v1172
      %v1201 = vadd.f32 %v514, %v1174
      %v1202 = vadd.f32 %v511, %v1177
      %v1203 = vadd.f32 %v512, %v1179
      %v1204 = vadd.f32 %v513, %v1182
      %v1205 = vadd.f32 %v514, %v1184
      %v1206 = vperm.slane %v544, 3
      %v1207 = vadd.f32 %v1186, %v1206
      %v1208 = vadd.f32 %v1187, %v1206
      %v1209 = vadd.f32 %v1188, %v1206
      %v1210 = vadd.f32 %v1189, %v1206
      %v1211 = vadd.f32 %v1190, %v1206
      %v1212 = vadd.f32 %v1191, %v1206
      %v1213 = vadd.f32 %v1192, %v1206
      %v1214 = vadd.f32 %v1193, %v1206
      %v1215 = vadd.f32 %v1194, %v1206
      %v1216 = vadd.f32 %v1195, %v1206
      %v1217 = vadd.f32 %v1196, %v1206
      %v1218 = vadd.f32 %v1197, %v1206
      %v1219 = vadd.f32 %v1198, %v1206
      %v1220 = vadd.f32 %v1199, %v1206
      %v1221 = vadd.f32 %v1200, %v1206
      %v1222 = vadd.f32 %v1201, %v1206
      %v1223 = vadd.f32 %v1202, %v1206
      %v1224 = vadd.f32 %v1203, %v1206
      %v1225 = vadd.f32 %v1204, %v1206
      %v1226 = vadd.f32 %v1205, %v1206
      %v1227 = vsel %vm572, %v1207, 0.0
      %1228 = vadd.xlane.f32.xlu0 %v1227
      %v1229 = vpop.xlane.xlu0 %1228
      %v1230 = vsel %vm572, %v1208, 0.0
      %1231 = vadd.xlane.f32.xlu0 %v1230
      %v1232 = vpop.xlane.xlu0 %1231
      %v1233 = vsel %vm572, %v1209, 0.0
      %1234 = vadd.xlane.f32.xlu0 %v1233
      %v1235 = vpop.xlane.xlu0 %1234
      %v1236 = vsel %vm572, %v1210, 0.0
      %1237 = vadd.xlane.f32.xlu0 %v1236
      %v1238 = vpop.xlane.xlu0 %1237
      %v1239 = vsel %vm572, %v1211, 0.0
      %1240 = vadd.xlane.f32.xlu0 %v1239
      %v1241 = vpop.xlane.xlu0 %1240
      %v1242 = vsel %vm572, %v1212, 0.0
      %1243 = vadd.xlane.f32.xlu0 %v1242
      %v1244 = vpop.xlane.xlu0 %1243
      %v1245 = vsel %vm572, %v1213, 0.0
      %1246 = vadd.xlane.f32.xlu0 %v1245
      %v1247 = vpop.xlane.xlu0 %1246
      %v1248 = vsel %vm572, %v1214, 0.0
      %1249 = vadd.xlane.f32.xlu0 %v1248
      %v1250 = vpop.xlane.xlu0 %1249
      %v1251 = vsel %vm572, %v1215, 0.0
      %1252 = vadd.xlane.f32.xlu0 %v1251
      %v1253 = vpop.xlane.xlu0 %1252
      %v1254 = vsel %vm572, %v1216, 0.0
      %1255 = vadd.xlane.f32.xlu0 %v1254
      %v1256 = vpop.xlane.xlu0 %1255
      %v1257 = vsel %vm572, %v1217, 0.0
      %1258 = vadd.xlane.f32.xlu0 %v1257
      %v1259 = vpop.xlane.xlu0 %1258
      %v1260 = vsel %vm572, %v1218, 0.0
      %1261 = vadd.xlane.f32.xlu0 %v1260
      %v1262 = vpop.xlane.xlu0 %1261
      %v1263 = vsel %vm572, %v1219, 0.0
      %1264 = vadd.xlane.f32.xlu0 %v1263
      %v1265 = vpop.xlane.xlu0 %1264
      %v1266 = vsel %vm572, %v1220, 0.0
      %1267 = vadd.xlane.f32.xlu0 %v1266
      %v1268 = vpop.xlane.xlu0 %1267
      %v1269 = vsel %vm572, %v1221, 0.0
      %1270 = vadd.xlane.f32.xlu0 %v1269
      %v1271 = vpop.xlane.xlu0 %1270
      %v1272 = vsel %vm572, %v1222, 0.0
      %1273 = vadd.xlane.f32.xlu0 %v1272
      %v1274 = vpop.xlane.xlu0 %1273
      %v1275 = vsel %vm572, %v1223, 0.0
      %1276 = vadd.xlane.f32.xlu0 %v1275
      %v1277 = vpop.xlane.xlu0 %1276
      %v1278 = vsel %vm572, %v1224, 0.0
      %1279 = vadd.xlane.f32.xlu0 %v1278
      %v1280 = vpop.xlane.xlu0 %1279
      %v1281 = vsel %vm572, %v1225, 0.0
      %1282 = vadd.xlane.f32.xlu0 %v1281
      %v1283 = vpop.xlane.xlu0 %1282
      %v1284 = vsel %vm572, %v1226, 0.0
      %1285 = vadd.xlane.f32.xlu0 %v1284
      %v1286 = vpop.xlane.xlu0 %1285
      %v1287 = vrcp.pop 64.0
      %v1288 = vmul.f32 64.0, %v1287
      %v1289 = vsub.f32 1.0, %v1288
      %v1290 = vmul.f32 %v1287, %v1289
      %v1291 = vadd.f32 %v1287, %v1290
      %vm1292 = vweird.f32 %v1287
      %v1293 = vsel %vm1292, %v1287, %v1291
      %v1294 = vmul.f32 %v1229, %v1293
      %v1295 = vmul.f32 %v1232, %v1293
      %v1296 = vmul.f32 %v1235, %v1293
      %v1297 = vmul.f32 %v1238, %v1293
      %v1298 = vmul.f32 %v1241, %v1293
      %v1299 = vmul.f32 %v1244, %v1293
      %v1300 = vmul.f32 %v1247, %v1293
      %v1301 = vmul.f32 %v1250, %v1293
      %v1302 = vmul.f32 %v1253, %v1293
      %v1303 = vmul.f32 %v1256, %v1293
      %v1304 = vmul.f32 %v1259, %v1293
      %v1305 = vmul.f32 %v1262, %v1293
      %v1306 = vmul.f32 %v1265, %v1293
      %v1307 = vmul.f32 %v1268, %v1293
      %v1308 = vmul.f32 %v1271, %v1293
      %v1309 = vmul.f32 %v1274, %v1293
      %v1310 = vmul.f32 %v1277, %v1293
      %v1311 = vmul.f32 %v1280, %v1293
      %v1312 = vmul.f32 %v1283, %v1293
      %v1313 = vmul.f32 %v1286, %v1293
      %v1314 = vsub.f32 %v1207, %v1294
      %v1315 = vsub.f32 %v1208, %v1295
      %v1316 = vsub.f32 %v1209, %v1296
      %v1317 = vsub.f32 %v1210, %v1297
      %v1318 = vsub.f32 %v1211, %v1298
      %v1319 = vsub.f32 %v1212, %v1299
      %v1320 = vsub.f32 %v1213, %v1300
      %v1321 = vsub.f32 %v1214, %v1301
      %v1322 = vsub.f32 %v1215, %v1302
      %v1323 = vsub.f32 %v1216, %v1303
      %v1324 = vsub.f32 %v1217, %v1304
      %v1325 = vsub.f32 %v1218, %v1305
      %v1326 = vsub.f32 %v1219, %v1306
      %v1327 = vsub.f32 %v1220, %v1307
      %v1328 = vsub.f32 %v1221, %v1308
      %v1329 = vsub.f32 %v1222, %v1309
      %v1330 = vsub.f32 %v1223, %v1310
      %v1331 = vsub.f32 %v1224, %v1311
      %v1332 = vsub.f32 %v1225, %v1312
      %v1333 = vsub.f32 %v1226, %v1313
      %v1334 = vmul.f32 %v1314, %v1314
      %v1335 = vmul.f32 %v1315, %v1315
      %v1336 = vmul.f32 %v1316, %v1316
      %v1337 = vmul.f32 %v1317, %v1317
      %v1338 = vmul.f32 %v1318, %v1318
      %v1339 = vmul.f32 %v1319, %v1319
      %v1340 = vmul.f32 %v1320, %v1320
      %v1341 = vmul.f32 %v1321, %v1321
      %v1342 = vmul.f32 %v1322, %v1322
      %v1343 = vmul.f32 %v1323, %v1323
      %v1344 = vmul.f32 %v1324, %v1324
      %v1345 = vmul.f32 %v1325, %v1325
      %v1346 = vmul.f32 %v1326, %v1326
      %v1347 = vmul.f32 %v1327, %v1327
      %v1348 = vmul.f32 %v1328, %v1328
      %v1349 = vmul.f32 %v1329, %v1329
      %v1350 = vmul.f32 %v1330, %v1330
      %v1351 = vmul.f32 %v1331, %v1331
      %v1352 = vmul.f32 %v1332, %v1332
      %v1353 = vmul.f32 %v1333, %v1333
      %v1354 = vsel %vm572, %v1334, 0.0
      %1355 = vadd.xlane.f32.xlu0 %v1354
      %v1356 = vpop.xlane.xlu0 %1355
      %v1357 = vsel %vm572, %v1335, 0.0
      %1358 = vadd.xlane.f32.xlu0 %v1357
      %v1359 = vpop.xlane.xlu0 %1358
      %v1360 = vsel %vm572, %v1336, 0.0
      %1361 = vadd.xlane.f32.xlu0 %v1360
      %v1362 = vpop.xlane.xlu0 %1361
      %v1363 = vsel %vm572, %v1337, 0.0
      %1364 = vadd.xlane.f32.xlu0 %v1363
      %v1365 = vpop.xlane.xlu0 %1364
      %v1366 = vsel %vm572, %v1338, 0.0
      %1367 = vadd.xlane.f32.xlu0 %v1366
      %v1368 = vpop.xlane.xlu0 %1367
      %v1369 = vsel %vm572, %v1339, 0.0
      %1370 = vadd.xlane.f32.xlu0 %v1369
      %v1371 = vpop.xlane.xlu0 %1370
      %v1372 = vsel %vm572, %v1340, 0.0
      %1373 = vadd.xlane.f32.xlu0 %v1372
      %v1374 = vpop.xlane.xlu0 %1373
      %v1375 = vsel %vm572, %v1341, 0.0
      %1376 = vadd.xlane.f32.xlu0 %v1375
      %v1377 = vpop.xlane.xlu0 %1376
      %v1378 = vsel %vm572, %v1342, 0.0
      %1379 = vadd.xlane.f32.xlu0 %v1378
      %v1380 = vpop.xlane.xlu0 %1379
      %v1381 = vsel %vm572, %v1343, 0.0
      %1382 = vadd.xlane.f32.xlu0 %v1381
      %v1383 = vpop.xlane.xlu0 %1382
      %v1384 = vsel %vm572, %v1344, 0.0
      %1385 = vadd.xlane.f32.xlu0 %v1384
      %v1386 = vpop.xlane.xlu0 %1385
      %v1387 = vsel %vm572, %v1345, 0.0
      %1388 = vadd.xlane.f32.xlu0 %v1387
      %v1389 = vpop.xlane.xlu0 %1388
      %v1390 = vsel %vm572, %v1346, 0.0
      %1391 = vadd.xlane.f32.xlu0 %v1390
      %v1392 = vpop.xlane.xlu0 %1391
      %v1393 = vsel %vm572, %v1347, 0.0
      %1394 = vadd.xlane.f32.xlu0 %v1393
      %v1395 = vpop.xlane.xlu0 %1394
      %v1396 = vsel %vm572, %v1348, 0.0
      %1397 = vadd.xlane.f32.xlu0 %v1396
      %v1398 = vpop.xlane.xlu0 %1397
      %v1399 = vsel %vm572, %v1349, 0.0
      %1400 = vadd.xlane.f32.xlu0 %v1399
      %v1401 = vpop.xlane.xlu0 %1400
      %v1402 = vsel %vm572, %v1350, 0.0
      %1403 = vadd.xlane.f32.xlu0 %v1402
      %v1404 = vpop.xlane.xlu0 %1403
      %v1405 = vsel %vm572, %v1351, 0.0
      %1406 = vadd.xlane.f32.xlu0 %v1405
      %v1407 = vpop.xlane.xlu0 %1406
      %v1408 = vsel %vm572, %v1352, 0.0
      %1409 = vadd.xlane.f32.xlu0 %v1408
      %v1410 = vpop.xlane.xlu0 %1409
      %v1411 = vsel %vm572, %v1353, 0.0
      %1412 = vadd.xlane.f32.xlu0 %v1411
      %v1413 = vpop.xlane.xlu0 %1412
      %v1414 = vmul.f32 %v1356, %v1293
      %v1415 = vmul.f32 %v1359, %v1293
      %v1416 = vmul.f32 %v1362, %v1293
      %v1417 = vmul.f32 %v1365, %v1293
      %v1418 = vmul.f32 %v1368, %v1293
      %v1419 = vmul.f32 %v1371, %v1293
      %v1420 = vmul.f32 %v1374, %v1293
      %v1421 = vmul.f32 %v1377, %v1293
      %v1422 = vmul.f32 %v1380, %v1293
      %v1423 = vmul.f32 %v1383, %v1293
      %v1424 = vmul.f32 %v1386, %v1293
      %v1425 = vmul.f32 %v1389, %v1293
      %v1426 = vmul.f32 %v1392, %v1293
      %v1427 = vmul.f32 %v1395, %v1293
      %v1428 = vmul.f32 %v1398, %v1293
      %v1429 = vmul.f32 %v1401, %v1293
      %v1430 = vmul.f32 %v1404, %v1293
      %v1431 = vmul.f32 %v1407, %v1293
      %v1432 = vmul.f32 %v1410, %v1293
      %v1433 = vmul.f32 %v1413, %v1293
      %v1434 = vadd.f32 %v1414, 1e-05
      %v1435 = vadd.f32 %v1415, 1e-05
      %v1436 = vadd.f32 %v1416, 1e-05
      %v1437 = vadd.f32 %v1417, 1e-05
      %v1438 = vadd.f32 %v1418, 1e-05
      %v1439 = vadd.f32 %v1419, 1e-05
      %v1440 = vadd.f32 %v1420, 1e-05
      %v1441 = vadd.f32 %v1421, 1e-05
      %v1442 = vadd.f32 %v1422, 1e-05
      %v1443 = vadd.f32 %v1423, 1e-05
      %v1444 = vadd.f32 %v1424, 1e-05
      %v1445 = vadd.f32 %v1425, 1e-05
      %v1446 = vadd.f32 %v1426, 1e-05
      %v1447 = vadd.f32 %v1427, 1e-05
      %v1448 = vadd.f32 %v1428, 1e-05
      %v1449 = vadd.f32 %v1429, 1e-05
      %v1450 = vadd.f32 %v1430, 1e-05
      %v1451 = vadd.f32 %v1431, 1e-05
      %v1452 = vadd.f32 %v1432, 1e-05
      %v1453 = vadd.f32 %v1433, 1e-05
      %v1454 = vrsqrt.pop %v1434
      %v1455 = vmul.f32 %v1454, %v1434
      %v1456 = vmul.f32 %v1455, %v1454
      %v1457 = vmul.f32 0.5, %v1456
      %v1458 = vsub.f32 1.5, %v1457
      %v1459 = vmul.f32 %v1454, %v1458
      %vm1460 = vweird.f32 %v1434
      %vm1461 = vweird.f32 %v1454
      %vm1462 = vmor %vm1460, %vm1461
      %v1463 = vsel %vm1462, %v1454, %v1459
      %v1464 = vrsqrt.pop %v1435
      %v1465 = vmul.f32 %v1464, %v1435
      %v1466 = vmul.f32 %v1465, %v1464
      %v1467 = vmul.f32 0.5, %v1466
      %v1468 = vsub.f32 1.5, %v1467
      %v1469 = vmul.f32 %v1464, %v1468
      %vm1470 = vweird.f32 %v1435
      %vm1471 = vweird.f32 %v1464
      %vm1472 = vmor %vm1470, %vm1471
      %v1473 = vsel %vm1472, %v1464, %v1469
      %v1474 = vrsqrt.pop %v1436
      %v1475 = vmul.f32 %v1474, %v1436
      %v1476 = vmul.f32 %v1475, %v1474
      %v1477 = vmul.f32 0.5, %v1476
      %v1478 = vsub.f32 1.5, %v1477
      %v1479 = vmul.f32 %v1474, %v1478
      %vm1480 = vweird.f32 %v1436
      %vm1481 = vweird.f32 %v1474
      %vm1482 = vmor %vm1480, %vm1481
      %v1483 = vsel %vm1482, %v1474, %v1479
      %v1484 = vrsqrt.pop %v1437
      %v1485 = vmul.f32 %v1484, %v1437
      %v1486 = vmul.f32 %v1485, %v1484
      %v1487 = vmul.f32 0.5, %v1486
      %v1488 = vsub.f32 1.5, %v1487
      %v1489 = vmul.f32 %v1484, %v1488
      %vm1490 = vweird.f32 %v1437
      %vm1491 = vweird.f32 %v1484
      %vm1492 = vmor %vm1490, %vm1491
      %v1493 = vsel %vm1492, %v1484, %v1489
      %v1494 = vrsqrt.pop %v1438
      %v1495 = vmul.f32 %v1494, %v1438
      %v1496 = vmul.f32 %v1495, %v1494
      %v1497 = vmul.f32 0.5, %v1496
      %v1498 = vsub.f32 1.5, %v1497
      %v1499 = vmul.f32 %v1494, %v1498
      %vm1500 = vweird.f32 %v1438
      %vm1501 = vweird.f32 %v1494
      %vm1502 = vmor %vm1500, %vm1501
      %v1503 = vsel %vm1502, %v1494, %v1499
      %v1504 = vrsqrt.pop %v1439
      %v1505 = vmul.f32 %v1504, %v1439
      %v1506 = vmul.f32 %v1505, %v1504
      %v1507 = vmul.f32 0.5, %v1506
      %v1508 = vsub.f32 1.5, %v1507
      %v1509 = vmul.f32 %v1504, %v1508
      %vm1510 = vweird.f32 %v1439
      %vm1511 = vweird.f32 %v1504
      %vm1512 = vmor %vm1510, %vm1511
      %v1513 = vsel %vm1512, %v1504, %v1509
      %v1514 = vrsqrt.pop %v1440
      %v1515 = vmul.f32 %v1514, %v1440
      %v1516 = vmul.f32 %v1515, %v1514
      %v1517 = vmul.f32 0.5, %v1516
      %v1518 = vsub.f32 1.5, %v1517
      %v1519 = vmul.f32 %v1514, %v1518
      %vm1520 = vweird.f32 %v1440
      %vm1521 = vweird.f32 %v1514
      %vm1522 = vmor %vm1520, %vm1521
      %v1523 = vsel %vm1522, %v1514, %v1519
      %v1524 = vrsqrt.pop %v1441
      %v1525 = vmul.f32 %v1524, %v1441
      %v1526 = vmul.f32 %v1525, %v1524
      %v1527 = vmul.f32 0.5, %v1526
      %v1528 = vsub.f32 1.5, %v1527
      %v1529 = vmul.f32 %v1524, %v1528
      %vm1530 = vweird.f32 %v1441
      %vm1531 = vweird.f32 %v1524
      %vm1532 = vmor %vm1530, %vm1531
      %v1533 = vsel %vm1532, %v1524, %v1529
      %v1534 = vrsqrt.pop %v1442
      %v1535 = vmul.f32 %v1534, %v1442
      %v1536 = vmul.f32 %v1535, %v1534
      %v1537 = vmul.f32 0.5, %v1536
      %v1538 = vsub.f32 1.5, %v1537
      %v1539 = vmul.f32 %v1534, %v1538
      %vm1540 = vweird.f32 %v1442
      %vm1541 = vweird.f32 %v1534
      %vm1542 = vmor %vm1540, %vm1541
      %v1543 = vsel %vm1542, %v1534, %v1539
      %v1544 = vrsqrt.pop %v1443
      %v1545 = vmul.f32 %v1544, %v1443
      %v1546 = vmul.f32 %v1545, %v1544
      %v1547 = vmul.f32 0.5, %v1546
      %v1548 = vsub.f32 1.5, %v1547
      %v1549 = vmul.f32 %v1544, %v1548
      %vm1550 = vweird.f32 %v1443
      %vm1551 = vweird.f32 %v1544
      %vm1552 = vmor %vm1550, %vm1551
      %v1553 = vsel %vm1552, %v1544, %v1549
      %v1554 = vrsqrt.pop %v1444
      %v1555 = vmul.f32 %v1554, %v1444
      %v1556 = vmul.f32 %v1555, %v1554
      %v1557 = vmul.f32 0.5, %v1556
      %v1558 = vsub.f32 1.5, %v1557
      %v1559 = vmul.f32 %v1554, %v1558
      %vm1560 = vweird.f32 %v1444
      %vm1561 = vweird.f32 %v1554
      %vm1562 = vmor %vm1560, %vm1561
      %v1563 = vsel %vm1562, %v1554, %v1559
      %v1564 = vrsqrt.pop %v1445
      %v1565 = vmul.f32 %v1564, %v1445
      %v1566 = vmul.f32 %v1565, %v1564
      %v1567 = vmul.f32 0.5, %v1566
      %v1568 = vsub.f32 1.5, %v1567
      %v1569 = vmul.f32 %v1564, %v1568
      %vm1570 = vweird.f32 %v1445
      %vm1571 = vweird.f32 %v1564
      %vm1572 = vmor %vm1570, %vm1571
      %v1573 = vsel %vm1572, %v1564, %v1569
      %v1574 = vrsqrt.pop %v1446
      %v1575 = vmul.f32 %v1574, %v1446
      %v1576 = vmul.f32 %v1575, %v1574
      %v1577 = vmul.f32 0.5, %v1576
      %v1578 = vsub.f32 1.5, %v1577
      %v1579 = vmul.f32 %v1574, %v1578
      %vm1580 = vweird.f32 %v1446
      %vm1581 = vweird.f32 %v1574
      %vm1582 = vmor %vm1580, %vm1581
      %v1583 = vsel %vm1582, %v1574, %v1579
      %v1584 = vrsqrt.pop %v1447
      %v1585 = vmul.f32 %v1584, %v1447
      %v1586 = vmul.f32 %v1585, %v1584
      %v1587 = vmul.f32 0.5, %v1586
      %v1588 = vsub.f32 1.5, %v1587
      %v1589 = vmul.f32 %v1584, %v1588
      %vm1590 = vweird.f32 %v1447
      %vm1591 = vweird.f32 %v1584
      %vm1592 = vmor %vm1590, %vm1591
      %v1593 = vsel %vm1592, %v1584, %v1589
      %v1594 = vrsqrt.pop %v1448
      %v1595 = vmul.f32 %v1594, %v1448
      %v1596 = vmul.f32 %v1595, %v1594
      %v1597 = vmul.f32 0.5, %v1596
      %v1598 = vsub.f32 1.5, %v1597
      %v1599 = vmul.f32 %v1594, %v1598
      %vm1600 = vweird.f32 %v1448
      %vm1601 = vweird.f32 %v1594
      %vm1602 = vmor %vm1600, %vm1601
      %v1603 = vsel %vm1602, %v1594, %v1599
      %v1604 = vrsqrt.pop %v1449
      %v1605 = vmul.f32 %v1604, %v1449
      %v1606 = vmul.f32 %v1605, %v1604
      %v1607 = vmul.f32 0.5, %v1606
      %v1608 = vsub.f32 1.5, %v1607
      %v1609 = vmul.f32 %v1604, %v1608
      %vm1610 = vweird.f32 %v1449
      %vm1611 = vweird.f32 %v1604
      %vm1612 = vmor %vm1610, %vm1611
      %v1613 = vsel %vm1612, %v1604, %v1609
      %v1614 = vrsqrt.pop %v1450
      %v1615 = vmul.f32 %v1614, %v1450
      %v1616 = vmul.f32 %v1615, %v1614
      %v1617 = vmul.f32 0.5, %v1616
      %v1618 = vsub.f32 1.5, %v1617
      %v1619 = vmul.f32 %v1614, %v1618
      %vm1620 = vweird.f32 %v1450
      %vm1621 = vweird.f32 %v1614
      %vm1622 = vmor %vm1620, %vm1621
      %v1623 = vsel %vm1622, %v1614, %v1619
      %v1624 = vrsqrt.pop %v1451
      %v1625 = vmul.f32 %v1624, %v1451
      %v1626 = vmul.f32 %v1625, %v1624
      %v1627 = vmul.f32 0.5, %v1626
      %v1628 = vsub.f32 1.5, %v1627
      %v1629 = vmul.f32 %v1624, %v1628
      %vm1630 = vweird.f32 %v1451
      %vm1631 = vweird.f32 %v1624
      %vm1632 = vmor %vm1630, %vm1631
      %v1633 = vsel %vm1632, %v1624, %v1629
      %v1634 = vrsqrt.pop %v1452
      %v1635 = vmul.f32 %v1634, %v1452
      %v1636 = vmul.f32 %v1635, %v1634
      %v1637 = vmul.f32 0.5, %v1636
      %v1638 = vsub.f32 1.5, %v1637
      %v1639 = vmul.f32 %v1634, %v1638
      %vm1640 = vweird.f32 %v1452
      %vm1641 = vweird.f32 %v1634
      %vm1642 = vmor %vm1640, %vm1641
      %v1643 = vsel %vm1642, %v1634, %v1639
      %v1644 = vrsqrt.pop %v1453
      %v1645 = vmul.f32 %v1644, %v1453
      %v1646 = vmul.f32 %v1645, %v1644
      %v1647 = vmul.f32 0.5, %v1646
      %v1648 = vsub.f32 1.5, %v1647
      %v1649 = vmul.f32 %v1644, %v1648
      %vm1650 = vweird.f32 %v1453
      %vm1651 = vweird.f32 %v1644
      %vm1652 = vmor %vm1650, %vm1651
      %v1653 = vsel %vm1652, %v1644, %v1649
      %v1654 = vmul.f32 %v1314, %v1463
      %v1655 = vmul.f32 %v1315, %v1473
      %v1656 = vmul.f32 %v1316, %v1483
      %v1657 = vmul.f32 %v1317, %v1493
      %v1658 = vmul.f32 %v1318, %v1503
      %v1659 = vmul.f32 %v1319, %v1513
      %v1660 = vmul.f32 %v1320, %v1523
      %v1661 = vmul.f32 %v1321, %v1533
      %v1662 = vmul.f32 %v1322, %v1543
      %v1663 = vmul.f32 %v1323, %v1553
      %v1664 = vmul.f32 %v1324, %v1563
      %v1665 = vmul.f32 %v1325, %v1573
      %v1666 = vmul.f32 %v1326, %v1583
      %v1667 = vmul.f32 %v1327, %v1593
      %v1668 = vmul.f32 %v1328, %v1603
      %v1669 = vmul.f32 %v1329, %v1613
      %v1670 = vmul.f32 %v1330, %v1623
      %v1671 = vmul.f32 %v1331, %v1633
      %v1672 = vmul.f32 %v1332, %v1643
      %v1673 = vmul.f32 %v1333, %v1653
      %v1674 = vperm.slane %v544, 4
      %v1675 = vmul.f32 %v1654, %v1674
      %v1676 = vmul.f32 %v1655, %v1674
      %v1677 = vmul.f32 %v1656, %v1674
      %v1678 = vmul.f32 %v1657, %v1674
      %v1679 = vmul.f32 %v1658, %v1674
      %v1680 = vmul.f32 %v1659, %v1674
      %v1681 = vmul.f32 %v1660, %v1674
      %v1682 = vmul.f32 %v1661, %v1674
      %v1683 = vmul.f32 %v1662, %v1674
      %v1684 = vmul.f32 %v1663, %v1674
      %v1685 = vmul.f32 %v1664, %v1674
      %v1686 = vmul.f32 %v1665, %v1674
      %v1687 = vmul.f32 %v1666, %v1674
      %v1688 = vmul.f32 %v1667, %v1674
      %v1689 = vmul.f32 %v1668, %v1674
      %v1690 = vmul.f32 %v1669, %v1674
      %v1691 = vmul.f32 %v1670, %v1674
      %v1692 = vmul.f32 %v1671, %v1674
      %v1693 = vmul.f32 %v1672, %v1674
      %v1694 = vmul.f32 %v1673, %v1674
      %v1695 = vperm.slane %v544, 5
      %v1696 = vadd.f32 %v1675, %v1695
      %v1697 = vadd.f32 %v1676, %v1695
      %v1698 = vadd.f32 %v1677, %v1695
      %v1699 = vadd.f32 %v1678, %v1695
      %v1700 = vadd.f32 %v1679, %v1695
      %v1701 = vadd.f32 %v1680, %v1695
      %v1702 = vadd.f32 %v1681, %v1695
      %v1703 = vadd.f32 %v1682, %v1695
      %v1704 = vadd.f32 %v1683, %v1695
      %v1705 = vadd.f32 %v1684, %v1695
      %v1706 = vadd.f32 %v1685, %v1695
      %v1707 = vadd.f32 %v1686, %v1695
      %v1708 = vadd.f32 %v1687, %v1695
      %v1709 = vadd.f32 %v1688, %v1695
      %v1710 = vadd.f32 %v1689, %v1695
      %v1711 = vadd.f32 %v1690, %v1695
      %v1712 = vadd.f32 %v1691, %v1695
      %v1713 = vadd.f32 %v1692, %v1695
      %v1714 = vadd.f32 %v1693, %v1695
      %v1715 = vadd.f32 %v1694, %v1695
      %v1716 = vld [vmem:[%s4] sm:$0xff]
      %v1717 = vld [vmem:[%s4 + $0x8] sm:$0xff]
      %v1718 = vld [vmem:[%s4 + $0x10] sm:$0xff]
      %v1719 = vld [vmem:[%s4 + $0x18] sm:$0xff]
      %v1720 = vld [vmem:[%s4 + $0x20] sm:$0xff]
      %v1721 = vld [vmem:[%s4 + $0x28] sm:$0xff]
      %v1722 = vld [vmem:[%s4 + $0x30] sm:$0xff]
      %v1723 = vld [vmem:[%s4 + $0x38] sm:$0xff]
      %v1724 = vpack.c.bf16 %v1697, %v1696
      %v1725 = vpack.c.bf16 %v1699, %v1698
      %v1726 = vpack.c.bf16 %v1701, %v1700
      %v1727 = vpack.c.bf16 %v1703, %v1702
      %v1728 = vpack.c.bf16 %v1705, %v1704
      %v1729 = vpack.c.bf16 %v1707, %v1706
      %v1730 = vpack.c.bf16 %v1709, %v1708
      %v1731 = vpack.c.bf16 %v1711, %v1710
      %v1732 = vpack.c.bf16 %v1713, %v1712
      %v1733 = vpack.c.bf16 %v1715, %v1714
      %v1734 = vpack.c.bf16 %v1717, %v1716
      %v1735 = vpack.c.bf16 %v1719, %v1718
      %v1736 = vpack.c.bf16 %v1721, %v1720
      %v1737 = vpack.c.bf16 %v1723, %v1722
      %v1738 = vperm.slane %v544, 6
      %v1740 = vsel %vm572, %v1724, 0
      %v1743 = vsel %vm572, %v1725, 0
      %v1746 = vsel %vm572, %v1726, 0
      %v1749 = vsel %vm572, %v1727, 0
      %v1752 = vsel %vm572, %v1728, 0
      %v1755 = vsel %vm572, %v1729, 0
      %v1758 = vsel %vm572, %v1730, 0
      %v1761 = vsel %vm572, %v1731, 0
      %v1764 = vsel %vm572, %v1732, 0
      %v1767 = vsel %vm572, %v1733, 0
      %1769 = vmatpush.bf16.msra.mxu0 0
      %1770 = vmatpush.bf16.msra.mxu0 0
      %1771 = vmatpush.bf16.msra.mxu0 0
      %1772 = vmatpush.bf16.msra.mxu0 0
      %1773 = vmatpush.bf16.msra.mxu0 %v1737
      %1774 = vmatpush.bf16.msra.mxu0 %v1736
      %1775 = vmatpush.bf16.msra.mxu0 %v1735
      %1776 = vmatpush.bf16.msra.mxu0 %v1734
      %1777 = vmatmul.bf16.gmra.mxu0 %v1740
      %v1778 = vpop.f32.mrf.mxu0
      %v1779 = vadd.f32 %v1738, %v1778
      %v1780 = vpop.f32.mrf.mxu0
      %v1781 = vadd.f32 %v1738, %v1780
      %1782 = vmatmul.bf16.gmra.mxu0 %v1743
      %v1783 = vpop.f32.mrf.mxu0
      %v1784 = vadd.f32 %v1738, %v1783
      %v1785 = vpop.f32.mrf.mxu0
      %v1786 = vadd.f32 %v1738, %v1785
      %1787 = vmatmul.bf16.gmra.mxu0 %v1746
      %v1788 = vpop.f32.mrf.mxu0
      %v1789 = vadd.f32 %v1738, %v1788
      %v1790 = vpop.f32.mrf.mxu0
      %v1791 = vadd.f32 %v1738, %v1790
      %1792 = vmatmul.bf16.gmra.mxu0 %v1749
      %v1793 = vpop.f32.mrf.mxu0
      %v1794 = vadd.f32 %v1738, %v1793
      %v1795 = vpop.f32.mrf.mxu0
      %v1796 = vadd.f32 %v1738, %v1795
      %1797 = vmatmul.bf16.gmra.mxu0 %v1752
      %v1798 = vpop.f32.mrf.mxu0
      %v1799 = vadd.f32 %v1738, %v1798
      %v1800 = vpop.f32.mrf.mxu0
      %v1801 = vadd.f32 %v1738, %v1800
      %1802 = vmatmul.bf16.gmra.mxu0 %v1755
      %v1803 = vpop.f32.mrf.mxu0
      %v1804 = vadd.f32 %v1738, %v1803
      %v1805 = vpop.f32.mrf.mxu0
      %v1806 = vadd.f32 %v1738, %v1805
      %1807 = vmatmul.bf16.gmra.mxu0 %v1758
      %v1808 = vpop.f32.mrf.mxu0
      %v1809 = vadd.f32 %v1738, %v1808
      %v1810 = vpop.f32.mrf.mxu0
      %v1811 = vadd.f32 %v1738, %v1810
      %1812 = vmatmul.bf16.gmra.mxu0 %v1761
      %v1813 = vpop.f32.mrf.mxu0
      %v1814 = vadd.f32 %v1738, %v1813
      %v1815 = vpop.f32.mrf.mxu0
      %v1816 = vadd.f32 %v1738, %v1815
      %1817 = vmatmul.bf16.gmra.mxu0 %v1764
      %v1818 = vpop.f32.mrf.mxu0
      %v1819 = vadd.f32 %v1738, %v1818
      %v1820 = vpop.f32.mrf.mxu0
      %v1821 = vadd.f32 %v1738, %v1820
      %1822 = vmatmul.bf16.gmra.mxu0 %v1767
      %v1823 = vpop.f32.mrf.mxu0
      %v1824 = vadd.f32 %v1738, %v1823
      %v1825 = vpop.f32.mrf.mxu0
      %v1826 = vadd.f32 %v1738, %v1825
      %1827 = vdwg.mxu0
      %v1828 = vmax.f32 %v1779, 0.0
      %v1829 = vmax.f32 %v1781, 0.0
      %v1830 = vmax.f32 %v1784, 0.0
      %v1831 = vmax.f32 %v1786, 0.0
      %v1832 = vmax.f32 %v1789, 0.0
      %v1833 = vmax.f32 %v1791, 0.0
      %v1834 = vmax.f32 %v1794, 0.0
      %v1835 = vmax.f32 %v1796, 0.0
      %v1836 = vmax.f32 %v1799, 0.0
      %v1837 = vmax.f32 %v1801, 0.0
      %v1838 = vmax.f32 %v1804, 0.0
      %v1839 = vmax.f32 %v1806, 0.0
      %v1840 = vmax.f32 %v1809, 0.0
      %v1841 = vmax.f32 %v1811, 0.0
      %v1842 = vmax.f32 %v1814, 0.0
      %v1843 = vmax.f32 %v1816, 0.0
      %v1844 = vmax.f32 %v1819, 0.0
      %v1845 = vmax.f32 %v1821, 0.0
      %v1846 = vmax.f32 %v1824, 0.0
      %v1847 = vmax.f32 %v1826, 0.0
      %v1848 = vld [vmem:[%s5] sm:$0xff]
      %v1849 = vld [vmem:[%s5 + $0x8] sm:$0xff]
      %v1850 = vld [vmem:[%s5 + $0x10] sm:$0xff]
      %v1851 = vld [vmem:[%s5 + $0x18] sm:$0xff]
      %v1852 = vld [vmem:[%s5 + $0x20] sm:$0xff]
      %v1853 = vld [vmem:[%s5 + $0x28] sm:$0xff]
      %v1854 = vld [vmem:[%s5 + $0x30] sm:$0xff]
      %v1855 = vld [vmem:[%s5 + $0x38] sm:$0xff]
      %v1856 = vpack.c.bf16 %v1829, %v1828
      %v1857 = vpack.c.bf16 %v1831, %v1830
      %v1858 = vpack.c.bf16 %v1833, %v1832
      %v1859 = vpack.c.bf16 %v1835, %v1834
      %v1860 = vpack.c.bf16 %v1837, %v1836
      %v1861 = vpack.c.bf16 %v1839, %v1838
      %v1862 = vpack.c.bf16 %v1841, %v1840
      %v1863 = vpack.c.bf16 %v1843, %v1842
      %v1864 = vpack.c.bf16 %v1845, %v1844
      %v1865 = vpack.c.bf16 %v1847, %v1846
      %v1866 = vpack.c.bf16 %v1849, %v1848
      %v1867 = vpack.c.bf16 %v1851, %v1850
      %v1868 = vpack.c.bf16 %v1853, %v1852
      %v1869 = vpack.c.bf16 %v1855, %v1854
      %v1870 = vperm.slane %v544, 7
      %v1872 = vsel %vm572, %v1856, 0
      %v1875 = vsel %vm572, %v1857, 0
      %v1878 = vsel %vm572, %v1858, 0
      %v1881 = vsel %vm572, %v1859, 0
      %v1884 = vsel %vm572, %v1860, 0
      %v1887 = vsel %vm572, %v1861, 0
      %v1890 = vsel %vm572, %v1862, 0
      %v1893 = vsel %vm572, %v1863, 0
      %v1896 = vsel %vm572, %v1864, 0
      %v1899 = vsel %vm572, %v1865, 0
      %1901 = vmatpush.bf16.msra.mxu0 0
      %1902 = vmatpush.bf16.msra.mxu0 0
      %1903 = vmatpush.bf16.msra.mxu0 0
      %1904 = vmatpush.bf16.msra.mxu0 0
      %1905 = vmatpush.bf16.msra.mxu0 %v1869
      %1906 = vmatpush.bf16.msra.mxu0 %v1868
      %1907 = vmatpush.bf16.msra.mxu0 %v1867
      %1908 = vmatpush.bf16.msra.mxu0 %v1866
      %1909 = vmatmul.bf16.gmra.mxu0 %v1872
      %v1910 = vpop.f32.mrf.mxu0
      %v1911 = vadd.f32 %v1870, %v1910
      %v1912 = vpop.f32.mrf.mxu0
      %v1913 = vadd.f32 %v1870, %v1912
      %1914 = vmatmul.bf16.gmra.mxu0 %v1875
      %v1915 = vpop.f32.mrf.mxu0
      %v1916 = vadd.f32 %v1870, %v1915
      %v1917 = vpop.f32.mrf.mxu0
      %v1918 = vadd.f32 %v1870, %v1917
      %1919 = vmatmul.bf16.gmra.mxu0 %v1878
      %v1920 = vpop.f32.mrf.mxu0
      %v1921 = vadd.f32 %v1870, %v1920
      %v1922 = vpop.f32.mrf.mxu0
      %v1923 = vadd.f32 %v1870, %v1922
      %1924 = vmatmul.bf16.gmra.mxu0 %v1881
      %v1925 = vpop.f32.mrf.mxu0
      %v1926 = vadd.f32 %v1870, %v1925
      %v1927 = vpop.f32.mrf.mxu0
      %v1928 = vadd.f32 %v1870, %v1927
      %1929 = vmatmul.bf16.gmra.mxu0 %v1884
      %v1930 = vpop.f32.mrf.mxu0
      %v1931 = vadd.f32 %v1870, %v1930
      %v1932 = vpop.f32.mrf.mxu0
      %v1933 = vadd.f32 %v1870, %v1932
      %1934 = vmatmul.bf16.gmra.mxu0 %v1887
      %v1935 = vpop.f32.mrf.mxu0
      %v1936 = vadd.f32 %v1870, %v1935
      %v1937 = vpop.f32.mrf.mxu0
      %v1938 = vadd.f32 %v1870, %v1937
      %1939 = vmatmul.bf16.gmra.mxu0 %v1890
      %v1940 = vpop.f32.mrf.mxu0
      %v1941 = vadd.f32 %v1870, %v1940
      %v1942 = vpop.f32.mrf.mxu0
      %v1943 = vadd.f32 %v1870, %v1942
      %1944 = vmatmul.bf16.gmra.mxu0 %v1893
      %v1945 = vpop.f32.mrf.mxu0
      %v1946 = vadd.f32 %v1870, %v1945
      %v1947 = vpop.f32.mrf.mxu0
      %v1948 = vadd.f32 %v1870, %v1947
      %1949 = vmatmul.bf16.gmra.mxu0 %v1896
      %v1950 = vpop.f32.mrf.mxu0
      %v1951 = vadd.f32 %v1870, %v1950
      %v1952 = vpop.f32.mrf.mxu0
      %v1953 = vadd.f32 %v1870, %v1952
      %1954 = vmatmul.bf16.gmra.mxu0 %v1899
      %v1955 = vpop.f32.mrf.mxu0
      %v1956 = vadd.f32 %v1870, %v1955
      %v1957 = vpop.f32.mrf.mxu0
      %v1958 = vadd.f32 %v1870, %v1957
      %1959 = vdwg.mxu0
      %v1960 = vadd.f32 %v1696, %v1911
      %v1961 = vadd.f32 %v1697, %v1913
      %v1962 = vadd.f32 %v1698, %v1916
      %v1963 = vadd.f32 %v1699, %v1918
      %v1964 = vadd.f32 %v1700, %v1921
      %v1965 = vadd.f32 %v1701, %v1923
      %v1966 = vadd.f32 %v1702, %v1926
      %v1967 = vadd.f32 %v1703, %v1928
      %v1968 = vadd.f32 %v1704, %v1931
      %v1969 = vadd.f32 %v1705, %v1933
      %v1970 = vadd.f32 %v1706, %v1936
      %v1971 = vadd.f32 %v1707, %v1938
      %v1972 = vadd.f32 %v1708, %v1941
      %v1973 = vadd.f32 %v1709, %v1943
      %v1974 = vadd.f32 %v1710, %v1946
      %v1975 = vadd.f32 %v1711, %v1948
      %v1976 = vadd.f32 %v1712, %v1951
      %v1977 = vadd.f32 %v1713, %v1953
      %v1978 = vadd.f32 %v1714, %v1956
      %v1979 = vadd.f32 %v1715, %v1958
      %v1980 = vsel %vm572, %v1960, 0.0
      %1981 = vadd.xlane.f32.xlu0 %v1980
      %v1982 = vpop.xlane.xlu0 %1981
      %v1983 = vsel %vm572, %v1961, 0.0
      %1984 = vadd.xlane.f32.xlu0 %v1983
      %v1985 = vpop.xlane.xlu0 %1984
      %v1986 = vsel %vm572, %v1962, 0.0
      %1987 = vadd.xlane.f32.xlu0 %v1986
      %v1988 = vpop.xlane.xlu0 %1987
      %v1989 = vsel %vm572, %v1963, 0.0
      %1990 = vadd.xlane.f32.xlu0 %v1989
      %v1991 = vpop.xlane.xlu0 %1990
      %v1992 = vsel %vm572, %v1964, 0.0
      %1993 = vadd.xlane.f32.xlu0 %v1992
      %v1994 = vpop.xlane.xlu0 %1993
      %v1995 = vsel %vm572, %v1965, 0.0
      %1996 = vadd.xlane.f32.xlu0 %v1995
      %v1997 = vpop.xlane.xlu0 %1996
      %v1998 = vsel %vm572, %v1966, 0.0
      %1999 = vadd.xlane.f32.xlu0 %v1998
      %v2000 = vpop.xlane.xlu0 %1999
      %v2001 = vsel %vm572, %v1967, 0.0
      %2002 = vadd.xlane.f32.xlu0 %v2001
      %v2003 = vpop.xlane.xlu0 %2002
      %v2004 = vsel %vm572, %v1968, 0.0
      %2005 = vadd.xlane.f32.xlu0 %v2004
      %v2006 = vpop.xlane.xlu0 %2005
      %v2007 = vsel %vm572, %v1969, 0.0
      %2008 = vadd.xlane.f32.xlu0 %v2007
      %v2009 = vpop.xlane.xlu0 %2008
      %v2010 = vsel %vm572, %v1970, 0.0
      %2011 = vadd.xlane.f32.xlu0 %v2010
      %v2012 = vpop.xlane.xlu0 %2011
      %v2013 = vsel %vm572, %v1971, 0.0
      %2014 = vadd.xlane.f32.xlu0 %v2013
      %v2015 = vpop.xlane.xlu0 %2014
      %v2016 = vsel %vm572, %v1972, 0.0
      %2017 = vadd.xlane.f32.xlu0 %v2016
      %v2018 = vpop.xlane.xlu0 %2017
      %v2019 = vsel %vm572, %v1973, 0.0
      %2020 = vadd.xlane.f32.xlu0 %v2019
      %v2021 = vpop.xlane.xlu0 %2020
      %v2022 = vsel %vm572, %v1974, 0.0
      %2023 = vadd.xlane.f32.xlu0 %v2022
      %v2024 = vpop.xlane.xlu0 %2023
      %v2025 = vsel %vm572, %v1975, 0.0
      %2026 = vadd.xlane.f32.xlu0 %v2025
      %v2027 = vpop.xlane.xlu0 %2026
      %v2028 = vsel %vm572, %v1976, 0.0
      %2029 = vadd.xlane.f32.xlu0 %v2028
      %v2030 = vpop.xlane.xlu0 %2029
      %v2031 = vsel %vm572, %v1977, 0.0
      %2032 = vadd.xlane.f32.xlu0 %v2031
      %v2033 = vpop.xlane.xlu0 %2032
      %v2034 = vsel %vm572, %v1978, 0.0
      %2035 = vadd.xlane.f32.xlu0 %v2034
      %v2036 = vpop.xlane.xlu0 %2035
      %v2037 = vsel %vm572, %v1979, 0.0
      %2038 = vadd.xlane.f32.xlu0 %v2037
      %v2039 = vpop.xlane.xlu0 %2038
      %v2040 = vmul.f32 %v1982, %v1293
      %v2041 = vmul.f32 %v1985, %v1293
      %v2042 = vmul.f32 %v1988, %v1293
      %v2043 = vmul.f32 %v1991, %v1293
      %v2044 = vmul.f32 %v1994, %v1293
      %v2045 = vmul.f32 %v1997, %v1293
      %v2046 = vmul.f32 %v2000, %v1293
      %v2047 = vmul.f32 %v2003, %v1293
      %v2048 = vmul.f32 %v2006, %v1293
      %v2049 = vmul.f32 %v2009, %v1293
      %v2050 = vmul.f32 %v2012, %v1293
      %v2051 = vmul.f32 %v2015, %v1293
      %v2052 = vmul.f32 %v2018, %v1293
      %v2053 = vmul.f32 %v2021, %v1293
      %v2054 = vmul.f32 %v2024, %v1293
      %v2055 = vmul.f32 %v2027, %v1293
      %v2056 = vmul.f32 %v2030, %v1293
      %v2057 = vmul.f32 %v2033, %v1293
      %v2058 = vmul.f32 %v2036, %v1293
      %v2059 = vmul.f32 %v2039, %v1293
      %v2060 = vsub.f32 %v1960, %v2040
      %v2061 = vsub.f32 %v1961, %v2041
      %v2062 = vsub.f32 %v1962, %v2042
      %v2063 = vsub.f32 %v1963, %v2043
      %v2064 = vsub.f32 %v1964, %v2044
      %v2065 = vsub.f32 %v1965, %v2045
      %v2066 = vsub.f32 %v1966, %v2046
      %v2067 = vsub.f32 %v1967, %v2047
      %v2068 = vsub.f32 %v1968, %v2048
      %v2069 = vsub.f32 %v1969, %v2049
      %v2070 = vsub.f32 %v1970, %v2050
      %v2071 = vsub.f32 %v1971, %v2051
      %v2072 = vsub.f32 %v1972, %v2052
      %v2073 = vsub.f32 %v1973, %v2053
      %v2074 = vsub.f32 %v1974, %v2054
      %v2075 = vsub.f32 %v1975, %v2055
      %v2076 = vsub.f32 %v1976, %v2056
      %v2077 = vsub.f32 %v1977, %v2057
      %v2078 = vsub.f32 %v1978, %v2058
      %v2079 = vsub.f32 %v1979, %v2059
      %v2080 = vmul.f32 %v2060, %v2060
      %v2081 = vmul.f32 %v2061, %v2061
      %v2082 = vmul.f32 %v2062, %v2062
      %v2083 = vmul.f32 %v2063, %v2063
      %v2084 = vmul.f32 %v2064, %v2064
      %v2085 = vmul.f32 %v2065, %v2065
      %v2086 = vmul.f32 %v2066, %v2066
      %v2087 = vmul.f32 %v2067, %v2067
      %v2088 = vmul.f32 %v2068, %v2068
      %v2089 = vmul.f32 %v2069, %v2069
      %v2090 = vmul.f32 %v2070, %v2070
      %v2091 = vmul.f32 %v2071, %v2071
      %v2092 = vmul.f32 %v2072, %v2072
      %v2093 = vmul.f32 %v2073, %v2073
      %v2094 = vmul.f32 %v2074, %v2074
      %v2095 = vmul.f32 %v2075, %v2075
      %v2096 = vmul.f32 %v2076, %v2076
      %v2097 = vmul.f32 %v2077, %v2077
      %v2098 = vmul.f32 %v2078, %v2078
      %v2099 = vmul.f32 %v2079, %v2079
      %v2100 = vsel %vm572, %v2080, 0.0
      %2101 = vadd.xlane.f32.xlu0 %v2100
      %v2102 = vpop.xlane.xlu0 %2101
      %v2103 = vsel %vm572, %v2081, 0.0
      %2104 = vadd.xlane.f32.xlu0 %v2103
      %v2105 = vpop.xlane.xlu0 %2104
      %v2106 = vsel %vm572, %v2082, 0.0
      %2107 = vadd.xlane.f32.xlu0 %v2106
      %v2108 = vpop.xlane.xlu0 %2107
      %v2109 = vsel %vm572, %v2083, 0.0
      %2110 = vadd.xlane.f32.xlu0 %v2109
      %v2111 = vpop.xlane.xlu0 %2110
      %v2112 = vsel %vm572, %v2084, 0.0
      %2113 = vadd.xlane.f32.xlu0 %v2112
      %v2114 = vpop.xlane.xlu0 %2113
      %v2115 = vsel %vm572, %v2085, 0.0
      %2116 = vadd.xlane.f32.xlu0 %v2115
      %v2117 = vpop.xlane.xlu0 %2116
      %v2118 = vsel %vm572, %v2086, 0.0
      %2119 = vadd.xlane.f32.xlu0 %v2118
      %v2120 = vpop.xlane.xlu0 %2119
      %v2121 = vsel %vm572, %v2087, 0.0
      %2122 = vadd.xlane.f32.xlu0 %v2121
      %v2123 = vpop.xlane.xlu0 %2122
      %v2124 = vsel %vm572, %v2088, 0.0
      %2125 = vadd.xlane.f32.xlu0 %v2124
      %v2126 = vpop.xlane.xlu0 %2125
      %v2127 = vsel %vm572, %v2089, 0.0
      %2128 = vadd.xlane.f32.xlu0 %v2127
      %v2129 = vpop.xlane.xlu0 %2128
      %v2130 = vsel %vm572, %v2090, 0.0
      %2131 = vadd.xlane.f32.xlu0 %v2130
      %v2132 = vpop.xlane.xlu0 %2131
      %v2133 = vsel %vm572, %v2091, 0.0
      %2134 = vadd.xlane.f32.xlu0 %v2133
      %v2135 = vpop.xlane.xlu0 %2134
      %v2136 = vsel %vm572, %v2092, 0.0
      %2137 = vadd.xlane.f32.xlu0 %v2136
      %v2138 = vpop.xlane.xlu0 %2137
      %v2139 = vsel %vm572, %v2093, 0.0
      %2140 = vadd.xlane.f32.xlu0 %v2139
      %v2141 = vpop.xlane.xlu0 %2140
      %v2142 = vsel %vm572, %v2094, 0.0
      %2143 = vadd.xlane.f32.xlu0 %v2142
      %v2144 = vpop.xlane.xlu0 %2143
      %v2145 = vsel %vm572, %v2095, 0.0
      %2146 = vadd.xlane.f32.xlu0 %v2145
      %v2147 = vpop.xlane.xlu0 %2146
      %v2148 = vsel %vm572, %v2096, 0.0
      %2149 = vadd.xlane.f32.xlu0 %v2148
      %v2150 = vpop.xlane.xlu0 %2149
      %v2151 = vsel %vm572, %v2097, 0.0
      %2152 = vadd.xlane.f32.xlu0 %v2151
      %v2153 = vpop.xlane.xlu0 %2152
      %v2154 = vsel %vm572, %v2098, 0.0
      %2155 = vadd.xlane.f32.xlu0 %v2154
      %v2156 = vpop.xlane.xlu0 %2155
      %v2157 = vsel %vm572, %v2099, 0.0
      %2158 = vadd.xlane.f32.xlu0 %v2157
      %v2159 = vpop.xlane.xlu0 %2158
      %v2160 = vmul.f32 %v2102, %v1293
      %v2161 = vmul.f32 %v2105, %v1293
      %v2162 = vmul.f32 %v2108, %v1293
      %v2163 = vmul.f32 %v2111, %v1293
      %v2164 = vmul.f32 %v2114, %v1293
      %v2165 = vmul.f32 %v2117, %v1293
      %v2166 = vmul.f32 %v2120, %v1293
      %v2167 = vmul.f32 %v2123, %v1293
      %v2168 = vmul.f32 %v2126, %v1293
      %v2169 = vmul.f32 %v2129, %v1293
      %v2170 = vmul.f32 %v2132, %v1293
      %v2171 = vmul.f32 %v2135, %v1293
      %v2172 = vmul.f32 %v2138, %v1293
      %v2173 = vmul.f32 %v2141, %v1293
      %v2174 = vmul.f32 %v2144, %v1293
      %v2175 = vmul.f32 %v2147, %v1293
      %v2176 = vmul.f32 %v2150, %v1293
      %v2177 = vmul.f32 %v2153, %v1293
      %v2178 = vmul.f32 %v2156, %v1293
      %v2179 = vmul.f32 %v2159, %v1293
      %v2180 = vadd.f32 %v2160, 1e-05
      %v2181 = vadd.f32 %v2161, 1e-05
      %v2182 = vadd.f32 %v2162, 1e-05
      %v2183 = vadd.f32 %v2163, 1e-05
      %v2184 = vadd.f32 %v2164, 1e-05
      %v2185 = vadd.f32 %v2165, 1e-05
      %v2186 = vadd.f32 %v2166, 1e-05
      %v2187 = vadd.f32 %v2167, 1e-05
      %v2188 = vadd.f32 %v2168, 1e-05
      %v2189 = vadd.f32 %v2169, 1e-05
      %v2190 = vadd.f32 %v2170, 1e-05
      %v2191 = vadd.f32 %v2171, 1e-05
      %v2192 = vadd.f32 %v2172, 1e-05
      %v2193 = vadd.f32 %v2173, 1e-05
      %v2194 = vadd.f32 %v2174, 1e-05
      %v2195 = vadd.f32 %v2175, 1e-05
      %v2196 = vadd.f32 %v2176, 1e-05
      %v2197 = vadd.f32 %v2177, 1e-05
      %v2198 = vadd.f32 %v2178, 1e-05
      %v2199 = vadd.f32 %v2179, 1e-05
      %v2200 = vrsqrt.pop %v2180
      %v2201 = vmul.f32 %v2200, %v2180
      %v2202 = vmul.f32 %v2201, %v2200
      %v2203 = vmul.f32 0.5, %v2202
      %v2204 = vsub.f32 1.5, %v2203
      %v2205 = vmul.f32 %v2200, %v2204
      %vm2206 = vweird.f32 %v2180
      %vm2207 = vweird.f32 %v2200
      %vm2208 = vmor %vm2206, %vm2207
      %v2209 = vsel %vm2208, %v2200, %v2205
      %v2210 = vrsqrt.pop %v2181
      %v2211 = vmul.f32 %v2210, %v2181
      %v2212 = vmul.f32 %v2211, %v2210
      %v2213 = vmul.f32 0.5, %v2212
      %v2214 = vsub.f32 1.5, %v2213
      %v2215 = vmul.f32 %v2210, %v2214
      %vm2216 = vweird.f32 %v2181
      %vm2217 = vweird.f32 %v2210
      %vm2218 = vmor %vm2216, %vm2217
      %v2219 = vsel %vm2218, %v2210, %v2215
      %v2220 = vrsqrt.pop %v2182
      %v2221 = vmul.f32 %v2220, %v2182
      %v2222 = vmul.f32 %v2221, %v2220
      %v2223 = vmul.f32 0.5, %v2222
      %v2224 = vsub.f32 1.5, %v2223
      %v2225 = vmul.f32 %v2220, %v2224
      %vm2226 = vweird.f32 %v2182
      %vm2227 = vweird.f32 %v2220
      %vm2228 = vmor %vm2226, %vm2227
      %v2229 = vsel %vm2228, %v2220, %v2225
      %v2230 = vrsqrt.pop %v2183
      %v2231 = vmul.f32 %v2230, %v2183
      %v2232 = vmul.f32 %v2231, %v2230
      %v2233 = vmul.f32 0.5, %v2232
      %v2234 = vsub.f32 1.5, %v2233
      %v2235 = vmul.f32 %v2230, %v2234
      %vm2236 = vweird.f32 %v2183
      %vm2237 = vweird.f32 %v2230
      %vm2238 = vmor %vm2236, %vm2237
      %v2239 = vsel %vm2238, %v2230, %v2235
      %v2240 = vrsqrt.pop %v2184
      %v2241 = vmul.f32 %v2240, %v2184
      %v2242 = vmul.f32 %v2241, %v2240
      %v2243 = vmul.f32 0.5, %v2242
      %v2244 = vsub.f32 1.5, %v2243
      %v2245 = vmul.f32 %v2240, %v2244
      %vm2246 = vweird.f32 %v2184
      %vm2247 = vweird.f32 %v2240
      %vm2248 = vmor %vm2246, %vm2247
      %v2249 = vsel %vm2248, %v2240, %v2245
      %v2250 = vrsqrt.pop %v2185
      %v2251 = vmul.f32 %v2250, %v2185
      %v2252 = vmul.f32 %v2251, %v2250
      %v2253 = vmul.f32 0.5, %v2252
      %v2254 = vsub.f32 1.5, %v2253
      %v2255 = vmul.f32 %v2250, %v2254
      %vm2256 = vweird.f32 %v2185
      %vm2257 = vweird.f32 %v2250
      %vm2258 = vmor %vm2256, %vm2257
      %v2259 = vsel %vm2258, %v2250, %v2255
      %v2260 = vrsqrt.pop %v2186
      %v2261 = vmul.f32 %v2260, %v2186
      %v2262 = vmul.f32 %v2261, %v2260
      %v2263 = vmul.f32 0.5, %v2262
      %v2264 = vsub.f32 1.5, %v2263
      %v2265 = vmul.f32 %v2260, %v2264
      %vm2266 = vweird.f32 %v2186
      %vm2267 = vweird.f32 %v2260
      %vm2268 = vmor %vm2266, %vm2267
      %v2269 = vsel %vm2268, %v2260, %v2265
      %v2270 = vrsqrt.pop %v2187
      %v2271 = vmul.f32 %v2270, %v2187
      %v2272 = vmul.f32 %v2271, %v2270
      %v2273 = vmul.f32 0.5, %v2272
      %v2274 = vsub.f32 1.5, %v2273
      %v2275 = vmul.f32 %v2270, %v2274
      %vm2276 = vweird.f32 %v2187
      %vm2277 = vweird.f32 %v2270
      %vm2278 = vmor %vm2276, %vm2277
      %v2279 = vsel %vm2278, %v2270, %v2275
      %v2280 = vrsqrt.pop %v2188
      %v2281 = vmul.f32 %v2280, %v2188
      %v2282 = vmul.f32 %v2281, %v2280
      %v2283 = vmul.f32 0.5, %v2282
      %v2284 = vsub.f32 1.5, %v2283
      %v2285 = vmul.f32 %v2280, %v2284
      %vm2286 = vweird.f32 %v2188
      %vm2287 = vweird.f32 %v2280
      %vm2288 = vmor %vm2286, %vm2287
      %v2289 = vsel %vm2288, %v2280, %v2285
      %v2290 = vrsqrt.pop %v2189
      %v2291 = vmul.f32 %v2290, %v2189
      %v2292 = vmul.f32 %v2291, %v2290
      %v2293 = vmul.f32 0.5, %v2292
      %v2294 = vsub.f32 1.5, %v2293
      %v2295 = vmul.f32 %v2290, %v2294
      %vm2296 = vweird.f32 %v2189
      %vm2297 = vweird.f32 %v2290
      %vm2298 = vmor %vm2296, %vm2297
      %v2299 = vsel %vm2298, %v2290, %v2295
      %v2300 = vrsqrt.pop %v2190
      %v2301 = vmul.f32 %v2300, %v2190
      %v2302 = vmul.f32 %v2301, %v2300
      %v2303 = vmul.f32 0.5, %v2302
      %v2304 = vsub.f32 1.5, %v2303
      %v2305 = vmul.f32 %v2300, %v2304
      %vm2306 = vweird.f32 %v2190
      %vm2307 = vweird.f32 %v2300
      %vm2308 = vmor %vm2306, %vm2307
      %v2309 = vsel %vm2308, %v2300, %v2305
      %v2310 = vrsqrt.pop %v2191
      %v2311 = vmul.f32 %v2310, %v2191
      %v2312 = vmul.f32 %v2311, %v2310
      %v2313 = vmul.f32 0.5, %v2312
      %v2314 = vsub.f32 1.5, %v2313
      %v2315 = vmul.f32 %v2310, %v2314
      %vm2316 = vweird.f32 %v2191
      %vm2317 = vweird.f32 %v2310
      %vm2318 = vmor %vm2316, %vm2317
      %v2319 = vsel %vm2318, %v2310, %v2315
      %v2320 = vrsqrt.pop %v2192
      %v2321 = vmul.f32 %v2320, %v2192
      %v2322 = vmul.f32 %v2321, %v2320
      %v2323 = vmul.f32 0.5, %v2322
      %v2324 = vsub.f32 1.5, %v2323
      %v2325 = vmul.f32 %v2320, %v2324
      %vm2326 = vweird.f32 %v2192
      %vm2327 = vweird.f32 %v2320
      %vm2328 = vmor %vm2326, %vm2327
      %v2329 = vsel %vm2328, %v2320, %v2325
      %v2330 = vrsqrt.pop %v2193
      %v2331 = vmul.f32 %v2330, %v2193
      %v2332 = vmul.f32 %v2331, %v2330
      %v2333 = vmul.f32 0.5, %v2332
      %v2334 = vsub.f32 1.5, %v2333
      %v2335 = vmul.f32 %v2330, %v2334
      %vm2336 = vweird.f32 %v2193
      %vm2337 = vweird.f32 %v2330
      %vm2338 = vmor %vm2336, %vm2337
      %v2339 = vsel %vm2338, %v2330, %v2335
      %v2340 = vrsqrt.pop %v2194
      %v2341 = vmul.f32 %v2340, %v2194
      %v2342 = vmul.f32 %v2341, %v2340
      %v2343 = vmul.f32 0.5, %v2342
      %v2344 = vsub.f32 1.5, %v2343
      %v2345 = vmul.f32 %v2340, %v2344
      %vm2346 = vweird.f32 %v2194
      %vm2347 = vweird.f32 %v2340
      %vm2348 = vmor %vm2346, %vm2347
      %v2349 = vsel %vm2348, %v2340, %v2345
      %v2350 = vrsqrt.pop %v2195
      %v2351 = vmul.f32 %v2350, %v2195
      %v2352 = vmul.f32 %v2351, %v2350
      %v2353 = vmul.f32 0.5, %v2352
      %v2354 = vsub.f32 1.5, %v2353
      %v2355 = vmul.f32 %v2350, %v2354
      %vm2356 = vweird.f32 %v2195
      %vm2357 = vweird.f32 %v2350
      %vm2358 = vmor %vm2356, %vm2357
      %v2359 = vsel %vm2358, %v2350, %v2355
      %v2360 = vrsqrt.pop %v2196
      %v2361 = vmul.f32 %v2360, %v2196
      %v2362 = vmul.f32 %v2361, %v2360
      %v2363 = vmul.f32 0.5, %v2362
      %v2364 = vsub.f32 1.5, %v2363
      %v2365 = vmul.f32 %v2360, %v2364
      %vm2366 = vweird.f32 %v2196
      %vm2367 = vweird.f32 %v2360
      %vm2368 = vmor %vm2366, %vm2367
      %v2369 = vsel %vm2368, %v2360, %v2365
      %v2370 = vrsqrt.pop %v2197
      %v2371 = vmul.f32 %v2370, %v2197
      %v2372 = vmul.f32 %v2371, %v2370
      %v2373 = vmul.f32 0.5, %v2372
      %v2374 = vsub.f32 1.5, %v2373
      %v2375 = vmul.f32 %v2370, %v2374
      %vm2376 = vweird.f32 %v2197
      %vm2377 = vweird.f32 %v2370
      %vm2378 = vmor %vm2376, %vm2377
      %v2379 = vsel %vm2378, %v2370, %v2375
      %v2380 = vrsqrt.pop %v2198
      %v2381 = vmul.f32 %v2380, %v2198
      %v2382 = vmul.f32 %v2381, %v2380
      %v2383 = vmul.f32 0.5, %v2382
      %v2384 = vsub.f32 1.5, %v2383
      %v2385 = vmul.f32 %v2380, %v2384
      %vm2386 = vweird.f32 %v2198
      %vm2387 = vweird.f32 %v2380
      %vm2388 = vmor %vm2386, %vm2387
      %v2389 = vsel %vm2388, %v2380, %v2385
      %v2390 = vrsqrt.pop %v2199
      %v2391 = vmul.f32 %v2390, %v2199
      %v2392 = vmul.f32 %v2391, %v2390
      %v2393 = vmul.f32 0.5, %v2392
      %v2394 = vsub.f32 1.5, %v2393
      %v2395 = vmul.f32 %v2390, %v2394
      %vm2396 = vweird.f32 %v2199
      %vm2397 = vweird.f32 %v2390
      %vm2398 = vmor %vm2396, %vm2397
      %v2399 = vsel %vm2398, %v2390, %v2395
      %v2400 = vmul.f32 %v2060, %v2209
      %v2401 = vmul.f32 %v2061, %v2219
      %v2402 = vmul.f32 %v2062, %v2229
      %v2403 = vmul.f32 %v2063, %v2239
      %v2404 = vmul.f32 %v2064, %v2249
      %v2405 = vmul.f32 %v2065, %v2259
      %v2406 = vmul.f32 %v2066, %v2269
      %v2407 = vmul.f32 %v2067, %v2279
      %v2408 = vmul.f32 %v2068, %v2289
      %v2409 = vmul.f32 %v2069, %v2299
      %v2410 = vmul.f32 %v2070, %v2309
      %v2411 = vmul.f32 %v2071, %v2319
      %v2412 = vmul.f32 %v2072, %v2329
      %v2413 = vmul.f32 %v2073, %v2339
      %v2414 = vmul.f32 %v2074, %v2349
      %v2415 = vmul.f32 %v2075, %v2359
      %v2416 = vmul.f32 %v2076, %v2369
      %v2417 = vmul.f32 %v2077, %v2379
      %v2418 = vmul.f32 %v2078, %v2389
      %v2419 = vmul.f32 %v2079, %v2399
      %v2420 = vperm.slane %v545, 0
      %v2421 = vmul.f32 %v2400, %v2420
      %v2422 = vmul.f32 %v2401, %v2420
      %v2423 = vmul.f32 %v2402, %v2420
      %v2424 = vmul.f32 %v2403, %v2420
      %v2425 = vmul.f32 %v2404, %v2420
      %v2426 = vmul.f32 %v2405, %v2420
      %v2427 = vmul.f32 %v2406, %v2420
      %v2428 = vmul.f32 %v2407, %v2420
      %v2429 = vmul.f32 %v2408, %v2420
      %v2430 = vmul.f32 %v2409, %v2420
      %v2431 = vmul.f32 %v2410, %v2420
      %v2432 = vmul.f32 %v2411, %v2420
      %v2433 = vmul.f32 %v2412, %v2420
      %v2434 = vmul.f32 %v2413, %v2420
      %v2435 = vmul.f32 %v2414, %v2420
      %v2436 = vmul.f32 %v2415, %v2420
      %v2437 = vmul.f32 %v2416, %v2420
      %v2438 = vmul.f32 %v2417, %v2420
      %v2439 = vmul.f32 %v2418, %v2420
      %v2440 = vmul.f32 %v2419, %v2420
      %v2441 = vperm.slane %v545, 1
      %v2442 = vadd.f32 %v2421, %v2441
      %v2443 = vadd.f32 %v2422, %v2441
      %v2444 = vadd.f32 %v2423, %v2441
      %v2445 = vadd.f32 %v2424, %v2441
      %v2446 = vadd.f32 %v2425, %v2441
      %v2447 = vadd.f32 %v2426, %v2441
      %v2448 = vadd.f32 %v2427, %v2441
      %v2449 = vadd.f32 %v2428, %v2441
      %v2450 = vadd.f32 %v2429, %v2441
      %v2451 = vadd.f32 %v2430, %v2441
      %v2452 = vadd.f32 %v2431, %v2441
      %v2453 = vadd.f32 %v2432, %v2441
      %v2454 = vadd.f32 %v2433, %v2441
      %v2455 = vadd.f32 %v2434, %v2441
      %v2456 = vadd.f32 %v2435, %v2441
      %v2457 = vadd.f32 %v2436, %v2441
      %v2458 = vadd.f32 %v2437, %v2441
      %v2459 = vadd.f32 %v2438, %v2441
      %v2460 = vadd.f32 %v2439, %v2441
      %v2461 = vadd.f32 %v2440, %v2441
      %v2462 = vperm.slane %v543, 0
      %v2463 = vmul.f32 %v2442, %v2462
      %v2464 = vmul.f32 %v2443, %v2462
      %v2465 = vmul.f32 %v2444, %v2462
      %v2466 = vmul.f32 %v2445, %v2462
      %v2467 = vmul.f32 %v2446, %v2462
      %v2468 = vmul.f32 %v2447, %v2462
      %v2469 = vmul.f32 %v2448, %v2462
      %v2470 = vmul.f32 %v2449, %v2462
      %v2471 = vmul.f32 %v2450, %v2462
      %v2472 = vmul.f32 %v2451, %v2462
      %v2473 = vmul.f32 %v2452, %v2462
      %v2474 = vmul.f32 %v2453, %v2462
      %v2475 = vmul.f32 %v2454, %v2462
      %v2476 = vmul.f32 %v2455, %v2462
      %v2477 = vmul.f32 %v2456, %v2462
      %v2478 = vmul.f32 %v2457, %v2462
      %v2479 = vmul.f32 %v2458, %v2462
      %v2480 = vmul.f32 %v2459, %v2462
      %v2481 = vmul.f32 %v2460, %v2462
      %v2482 = vmul.f32 %v2461, %v2462
      %v2483 = vsel %vm572, %v2463, 0.0
      %2484 = vadd.xlane.f32.xlu0 %v2483
      %v2485 = vpop.xlane.xlu0 %2484
      %v2486 = vsel %vm572, %v2464, 0.0
      %2487 = vadd.xlane.f32.xlu0 %v2486
      %v2488 = vpop.xlane.xlu0 %2487
      %v2489 = vsel %vm572, %v2465, 0.0
      %2490 = vadd.xlane.f32.xlu0 %v2489
      %v2491 = vpop.xlane.xlu0 %2490
      %v2492 = vsel %vm572, %v2466, 0.0
      %2493 = vadd.xlane.f32.xlu0 %v2492
      %v2494 = vpop.xlane.xlu0 %2493
      %v2495 = vsel %vm572, %v2467, 0.0
      %2496 = vadd.xlane.f32.xlu0 %v2495
      %v2497 = vpop.xlane.xlu0 %2496
      %v2498 = vsel %vm572, %v2468, 0.0
      %2499 = vadd.xlane.f32.xlu0 %v2498
      %v2500 = vpop.xlane.xlu0 %2499
      %v2501 = vsel %vm572, %v2469, 0.0
      %2502 = vadd.xlane.f32.xlu0 %v2501
      %v2503 = vpop.xlane.xlu0 %2502
      %v2504 = vsel %vm572, %v2470, 0.0
      %2505 = vadd.xlane.f32.xlu0 %v2504
      %v2506 = vpop.xlane.xlu0 %2505
      %v2507 = vsel %vm572, %v2471, 0.0
      %2508 = vadd.xlane.f32.xlu0 %v2507
      %v2509 = vpop.xlane.xlu0 %2508
      %v2510 = vsel %vm572, %v2472, 0.0
      %2511 = vadd.xlane.f32.xlu0 %v2510
      %v2512 = vpop.xlane.xlu0 %2511
      %v2513 = vsel %vm572, %v2473, 0.0
      %2514 = vadd.xlane.f32.xlu0 %v2513
      %v2515 = vpop.xlane.xlu0 %2514
      %v2516 = vsel %vm572, %v2474, 0.0
      %2517 = vadd.xlane.f32.xlu0 %v2516
      %v2518 = vpop.xlane.xlu0 %2517
      %v2519 = vsel %vm572, %v2475, 0.0
      %2520 = vadd.xlane.f32.xlu0 %v2519
      %v2521 = vpop.xlane.xlu0 %2520
      %v2522 = vsel %vm572, %v2476, 0.0
      %2523 = vadd.xlane.f32.xlu0 %v2522
      %v2524 = vpop.xlane.xlu0 %2523
      %v2525 = vsel %vm572, %v2477, 0.0
      %2526 = vadd.xlane.f32.xlu0 %v2525
      %v2527 = vpop.xlane.xlu0 %2526
      %v2528 = vsel %vm572, %v2478, 0.0
      %2529 = vadd.xlane.f32.xlu0 %v2528
      %v2530 = vpop.xlane.xlu0 %2529
      %v2531 = vsel %vm572, %v2479, 0.0
      %2532 = vadd.xlane.f32.xlu0 %v2531
      %v2533 = vpop.xlane.xlu0 %2532
      %v2534 = vsel %vm572, %v2480, 0.0
      %2535 = vadd.xlane.f32.xlu0 %v2534
      %v2536 = vpop.xlane.xlu0 %2535
      %v2537 = vsel %vm572, %v2481, 0.0
      %2538 = vadd.xlane.f32.xlu0 %v2537
      %v2539 = vpop.xlane.xlu0 %2538
      %v2540 = vsel %vm572, %v2482, 0.0
      %2541 = vadd.xlane.f32.xlu0 %v2540
      %v2542 = vpop.xlane.xlu0 %2541
      %v2543 = vperm.slane %v543, 1
      %v2544 = vadd.f32 %v2485, %v2543
      %v2545 = vadd.f32 %v2488, %v2543
      %v2546 = vadd.f32 %v2491, %v2543
      %v2547 = vadd.f32 %v2494, %v2543
      %v2548 = vadd.f32 %v2497, %v2543
      %v2549 = vadd.f32 %v2500, %v2543
      %v2550 = vadd.f32 %v2503, %v2543
      %v2551 = vadd.f32 %v2506, %v2543
      %v2552 = vadd.f32 %v2509, %v2543
      %v2553 = vadd.f32 %v2512, %v2543
      %v2554 = vadd.f32 %v2515, %v2543
      %v2555 = vadd.f32 %v2518, %v2543
      %v2556 = vadd.f32 %v2521, %v2543
      %v2557 = vadd.f32 %v2524, %v2543
      %v2558 = vadd.f32 %v2527, %v2543
      %v2559 = vadd.f32 %v2530, %v2543
      %v2560 = vadd.f32 %v2533, %v2543
      %v2561 = vadd.f32 %v2536, %v2543
      %v2562 = vadd.f32 %v2539, %v2543
      %v2563 = vadd.f32 %v2542, %v2543
      %v2564 = vld [vmem:[%s11] sm:$0xff]
      %v2565 = vld [vmem:[%s11 + $0x8] sm:$0x3]
      %v2566 = vld [vmem:[%s7] sm:$0xff]
      %v2567 = vld [vmem:[%s7 + $0x8] sm:$0xff]
      %v2568 = vld [vmem:[%s7 + $0x10] sm:$0xff]
      %v2569 = vld [vmem:[%s7 + $0x18] sm:$0xff]
      %v2570 = vld [vmem:[%s7 + $0x20] sm:$0xff]
      %v2571 = vld [vmem:[%s7 + $0x28] sm:$0xff]
      %v2572 = vld [vmem:[%s7 + $0x30] sm:$0xff]
      %v2573 = vld [vmem:[%s7 + $0x38] sm:$0xff]
      %v2574 = vld [vmem:[%s7 + $0x40] sm:$0xff]
      %v2575 = vld [vmem:[%s7 + $0x48] sm:$0xff]
      %v2576 = vld [vmem:[%s7 + $0x50] sm:$0xff]
      %v2577 = vld [vmem:[%s7 + $0x58] sm:$0xff]
      %v2578 = vld [vmem:[%s7 + $0x60] sm:$0xff]
      %v2579 = vld [vmem:[%s7 + $0x68] sm:$0xff]
      %v2580 = vld [vmem:[%s7 + $0x70] sm:$0xff]
      %v2581 = vld [vmem:[%s7 + $0x78] sm:$0xff]
      %v2582 = vpack.c.bf16 %v2568, %v2566
      %v2583 = vpack.c.bf16 %v2569, %v2567
      %v2584 = vpack.c.bf16 %v2572, %v2570
      %v2585 = vpack.c.bf16 %v2573, %v2571
      %v2586 = vpack.c.bf16 %v2576, %v2574
      %v2587 = vpack.c.bf16 %v2577, %v2575
      %v2588 = vpack.c.bf16 %v2580, %v2578
      %v2589 = vpack.c.bf16 %v2581, %v2579
      %2590 = vmatpush.bf16.msra.mxu0 0
      %2591 = vmatpush.bf16.msra.mxu0 0
      %2592 = vmatpush.bf16.msra.mxu0 0
      %2593 = vmatpush.bf16.msra.mxu0 0
      %2594 = vmatpush.bf16.msra.mxu0 %v2588
      %2595 = vmatpush.bf16.msra.mxu0 %v2586
      %2596 = vmatpush.bf16.msra.mxu0 %v2584
      %2597 = vmatpush.bf16.msra.mxu0 %v2582
      %2598 = vmatmul.bf16.gmra.mxu0 %v574
      %v2599 = vpop.f32.mrf.mxu0
      %v2600 = vadd.f32 0.0, %v2599
      %v2601 = vpop.f32.mrf.mxu0
      %v2602 = vadd.f32 0.0, %v2601
      %2603 = vmatmul.bf16.gmra.mxu0 %v577
      %v2604 = vpop.f32.mrf.mxu0
      %v2605 = vadd.f32 0.0, %v2604
      %v2606 = vpop.f32.mrf.mxu0
      %v2607 = vadd.f32 0.0, %v2606
      %2608 = vdwg.mxu0
      %2609 = vmatpush.bf16.msra.mxu0 0
      %2610 = vmatpush.bf16.msra.mxu0 0
      %2611 = vmatpush.bf16.msra.mxu0 0
      %2612 = vmatpush.bf16.msra.mxu0 0
      %2613 = vmatpush.bf16.msra.mxu0 %v2589
      %2614 = vmatpush.bf16.msra.mxu0 %v2587
      %2615 = vmatpush.bf16.msra.mxu0 %v2585
      %2616 = vmatpush.bf16.msra.mxu0 %v2583
      %2617 = vmatmul.bf16.gmra.mxu0 %v574
      %v2618 = vpop.f32.mrf.mxu0
      %v2619 = vadd.f32 0.0, %v2618
      %v2620 = vpop.f32.mrf.mxu0
      %v2621 = vadd.f32 0.0, %v2620
      %2622 = vmatmul.bf16.gmra.mxu0 %v577
      %v2623 = vpop.f32.mrf.mxu0
      %v2624 = vadd.f32 0.0, %v2623
      %v2625 = vpop.f32.mrf.mxu0
      %v2626 = vadd.f32 0.0, %v2625
      %2627 = vdwg.mxu0
      %v2628 = vperm.slane %v2564, 0
      %v2629 = vadd.f32 %v2600, %v2628
      %v2630 = vadd.f32 %v2602, %v2628
      %v2631 = vadd.f32 %v2605, %v2628
      %v2632 = vadd.f32 %v2607, %v2628
      %v2633 = vmul.f32 %v2629, 0.125
      %v2634 = vmul.f32 %v2630, 0.125
      %v2635 = vmul.f32 %v2631, 0.125
      %v2636 = vmul.f32 %v2632, 0.125
      %v2637 = vperm.slane %v2564, 1
      %2639 = vrot.lane.b32.xlu0 %v2637, 64
      %v2640 = vpop.permute.xlu0 %2639
      %v2642 = vadd.f32 %v2600, %v2640
      %v2643 = vadd.f32 %v2602, %v2640
      %v2644 = vadd.f32 %v2605, %v2640
      %v2645 = vadd.f32 %v2607, %v2640
      %v2646 = vperm.slane %v2564, 2
      %v2647 = vadd.f32 %v2619, %v2646
      %v2648 = vadd.f32 %v2621, %v2646
      %v2649 = vadd.f32 %v2624, %v2646
      %v2650 = vadd.f32 %v2626, %v2646
      %v2651 = vpack.c.bf16 %v2648, %v2647
      %v2652 = vpack.c.bf16 %v2650, %v2649
      %v2653 = vpack.c.bf16 %v2634, %v2633
      %v2654 = vpack.c.bf16 %v2636, %v2635
      %v2655 = vpack.c.bf16 %v2643, %v2642
      %v2656 = vpack.c.bf16 %v2645, %v2644
      %2659 = vrot.lane.b32.xlu0 %v2655, 64
      %v2660 = vpop.permute.xlu0 %2659
      %2661 = vrot.lane.b32.xlu0 %v2656, 64
      %v2662 = vpop.permute.xlu0 %2661
      %v2664 = vsel %vm572, %v2653, 0
      %v2667 = vsel %vm572, %v2654, 0
      %v2670 = vsel %vm572, %v2660, 0
      %v2673 = vsel %vm572, %v2662, 0
      %2675 = vmatpush.bf16.xpose.msra.mxu0 0
      %2676 = vmatpush.bf16.xpose.msra.mxu0 0
      %2677 = vmatpush.bf16.xpose.msra.mxu0 0
      %2678 = vmatpush.bf16.xpose.msra.mxu0 0
      %2679 = vmatpush.bf16.xpose.msra.mxu0 0
      %2680 = vmatpush.bf16.xpose.msra.mxu0 0
      %2681 = vmatpush.bf16.xpose.msra.mxu0 %v2673
      %2682 = vmatpush.bf16.xpose.msra.mxu0 %v2670
      %2683 = vmatmul.bf16.gmra.mxu0 %v2664
      %v2684 = vpop.f32.mrf.mxu0
      %v2685 = vadd.f32 0.0, %v2684
      %v2686 = vpop.f32.mrf.mxu0
      %v2687 = vadd.f32 0.0, %v2686
      %2688 = vmatmul.bf16.gmra.mxu0 %v2667
      %v2689 = vpop.f32.mrf.mxu0
      %v2690 = vadd.f32 0.0, %v2689
      %v2691 = vpop.f32.mrf.mxu0
      %v2692 = vadd.f32 0.0, %v2691
      %2693 = vdwg.mxu0
      %v2694 = vsel %vm683, %v2685, %v539
      %v2695 = vsel %vm684, %v2687, %v540
      %v2696 = vsel %vm685, %v2690, %v541
      %v2697 = vsel %vm686, %v2692, %v542
      %v2698 = vsel %vm687, %v2685, %v539
      %v2699 = vsel %vm688, %v2687, %v540
      %v2700 = vsel %vm689, %v2690, %v541
      %v2701 = vsel %vm690, %v2692, %v542
      %v2702 = vsel %vm691, %v2685, %v539
      %v2703 = vsel %vm692, %v2687, %v540
      %v2704 = vsel %vm693, %v2690, %v541
      %v2705 = vsel %vm694, %v2692, %v542
      %v2706 = vsel %vm695, %v2685, %v539
      %v2707 = vsel %vm696, %v2687, %v540
      %v2708 = vsel %vm697, %v2690, %v541
      %v2709 = vsel %vm698, %v2692, %v542
      %v2710 = vsel %vm719, %v2694, -inf
      %2711 = vmax.xlane.f32.xlu0 %v2710
      %v2712 = vpop.xlane.xlu0 %2711
      %v2713 = vsel %vm719, %v2695, -inf
      %2714 = vmax.xlane.f32.xlu0 %v2713
      %v2715 = vpop.xlane.xlu0 %2714
      %v2716 = vsel %vm719, %v2696, -inf
      %2717 = vmax.xlane.f32.xlu0 %v2716
      %v2718 = vpop.xlane.xlu0 %2717
      %v2719 = vsel %vm719, %v2697, -inf
      %2720 = vmax.xlane.f32.xlu0 %v2719
      %v2721 = vpop.xlane.xlu0 %2720
      %v2722 = vsel %vm719, %v2698, -inf
      %2723 = vmax.xlane.f32.xlu0 %v2722
      %v2724 = vpop.xlane.xlu0 %2723
      %v2725 = vsel %vm719, %v2699, -inf
      %2726 = vmax.xlane.f32.xlu0 %v2725
      %v2727 = vpop.xlane.xlu0 %2726
      %v2728 = vsel %vm719, %v2700, -inf
      %2729 = vmax.xlane.f32.xlu0 %v2728
      %v2730 = vpop.xlane.xlu0 %2729
      %v2731 = vsel %vm719, %v2701, -inf
      %2732 = vmax.xlane.f32.xlu0 %v2731
      %v2733 = vpop.xlane.xlu0 %2732
      %v2734 = vsel %vm719, %v2702, -inf
      %2735 = vmax.xlane.f32.xlu0 %v2734
      %v2736 = vpop.xlane.xlu0 %2735
      %v2737 = vsel %vm719, %v2703, -inf
      %2738 = vmax.xlane.f32.xlu0 %v2737
      %v2739 = vpop.xlane.xlu0 %2738
      %v2740 = vsel %vm719, %v2704, -inf
      %2741 = vmax.xlane.f32.xlu0 %v2740
      %v2742 = vpop.xlane.xlu0 %2741
      %v2743 = vsel %vm719, %v2705, -inf
      %2744 = vmax.xlane.f32.xlu0 %v2743
      %v2745 = vpop.xlane.xlu0 %2744
      %v2746 = vsel %vm719, %v2706, -inf
      %2747 = vmax.xlane.f32.xlu0 %v2746
      %v2748 = vpop.xlane.xlu0 %2747
      %v2749 = vsel %vm719, %v2707, -inf
      %2750 = vmax.xlane.f32.xlu0 %v2749
      %v2751 = vpop.xlane.xlu0 %2750
      %v2752 = vsel %vm719, %v2708, -inf
      %2753 = vmax.xlane.f32.xlu0 %v2752
      %v2754 = vpop.xlane.xlu0 %2753
      %v2755 = vsel %vm719, %v2709, -inf
      %2756 = vmax.xlane.f32.xlu0 %v2755
      %v2757 = vpop.xlane.xlu0 %2756
      %v2758 = vsub.f32 %v2694, %v2712
      %v2759 = vsub.f32 %v2695, %v2715
      %v2760 = vsub.f32 %v2696, %v2718
      %v2761 = vsub.f32 %v2697, %v2721
      %v2762 = vsub.f32 %v2698, %v2724
      %v2763 = vsub.f32 %v2699, %v2727
      %v2764 = vsub.f32 %v2700, %v2730
      %v2765 = vsub.f32 %v2701, %v2733
      %v2766 = vsub.f32 %v2702, %v2736
      %v2767 = vsub.f32 %v2703, %v2739
      %v2768 = vsub.f32 %v2704, %v2742
      %v2769 = vsub.f32 %v2705, %v2745
      %v2770 = vsub.f32 %v2706, %v2748
      %v2771 = vsub.f32 %v2707, %v2751
      %v2772 = vsub.f32 %v2708, %v2754
      %v2773 = vsub.f32 %v2709, %v2757
      %v2774 = vmul.f32 %v2758, 1.442695
      %v2775 = vpow.pop %v2774
      %v2776 = vmul.f32 %v2759, 1.442695
      %v2777 = vpow.pop %v2776
      %v2778 = vmul.f32 %v2760, 1.442695
      %v2779 = vpow.pop %v2778
      %v2780 = vmul.f32 %v2761, 1.442695
      %v2781 = vpow.pop %v2780
      %v2782 = vmul.f32 %v2762, 1.442695
      %v2783 = vpow.pop %v2782
      %v2784 = vmul.f32 %v2763, 1.442695
      %v2785 = vpow.pop %v2784
      %v2786 = vmul.f32 %v2764, 1.442695
      %v2787 = vpow.pop %v2786
      %v2788 = vmul.f32 %v2765, 1.442695
      %v2789 = vpow.pop %v2788
      %v2790 = vmul.f32 %v2766, 1.442695
      %v2791 = vpow.pop %v2790
      %v2792 = vmul.f32 %v2767, 1.442695
      %v2793 = vpow.pop %v2792
      %v2794 = vmul.f32 %v2768, 1.442695
      %v2795 = vpow.pop %v2794
      %v2796 = vmul.f32 %v2769, 1.442695
      %v2797 = vpow.pop %v2796
      %v2798 = vmul.f32 %v2770, 1.442695
      %v2799 = vpow.pop %v2798
      %v2800 = vmul.f32 %v2771, 1.442695
      %v2801 = vpow.pop %v2800
      %v2802 = vmul.f32 %v2772, 1.442695
      %v2803 = vpow.pop %v2802
      %v2804 = vmul.f32 %v2773, 1.442695
      %v2805 = vpow.pop %v2804
      %v2806 = vsel %vm719, %v2775, 0.0
      %2807 = vadd.xlane.f32.xlu0 %v2806
      %v2808 = vpop.xlane.xlu0 %2807
      %v2809 = vsel %vm719, %v2777, 0.0
      %2810 = vadd.xlane.f32.xlu0 %v2809
      %v2811 = vpop.xlane.xlu0 %2810
      %v2812 = vsel %vm719, %v2779, 0.0
      %2813 = vadd.xlane.f32.xlu0 %v2812
      %v2814 = vpop.xlane.xlu0 %2813
      %v2815 = vsel %vm719, %v2781, 0.0
      %2816 = vadd.xlane.f32.xlu0 %v2815
      %v2817 = vpop.xlane.xlu0 %2816
      %v2818 = vsel %vm719, %v2783, 0.0
      %2819 = vadd.xlane.f32.xlu0 %v2818
      %v2820 = vpop.xlane.xlu0 %2819
      %v2821 = vsel %vm719, %v2785, 0.0
      %2822 = vadd.xlane.f32.xlu0 %v2821
      %v2823 = vpop.xlane.xlu0 %2822
      %v2824 = vsel %vm719, %v2787, 0.0
      %2825 = vadd.xlane.f32.xlu0 %v2824
      %v2826 = vpop.xlane.xlu0 %2825
      %v2827 = vsel %vm719, %v2789, 0.0
      %2828 = vadd.xlane.f32.xlu0 %v2827
      %v2829 = vpop.xlane.xlu0 %2828
      %v2830 = vsel %vm719, %v2791, 0.0
      %2831 = vadd.xlane.f32.xlu0 %v2830
      %v2832 = vpop.xlane.xlu0 %2831
      %v2833 = vsel %vm719, %v2793, 0.0
      %2834 = vadd.xlane.f32.xlu0 %v2833
      %v2835 = vpop.xlane.xlu0 %2834
      %v2836 = vsel %vm719, %v2795, 0.0
      %2837 = vadd.xlane.f32.xlu0 %v2836
      %v2838 = vpop.xlane.xlu0 %2837
      %v2839 = vsel %vm719, %v2797, 0.0
      %2840 = vadd.xlane.f32.xlu0 %v2839
      %v2841 = vpop.xlane.xlu0 %2840
      %v2842 = vsel %vm719, %v2799, 0.0
      %2843 = vadd.xlane.f32.xlu0 %v2842
      %v2844 = vpop.xlane.xlu0 %2843
      %v2845 = vsel %vm719, %v2801, 0.0
      %2846 = vadd.xlane.f32.xlu0 %v2845
      %v2847 = vpop.xlane.xlu0 %2846
      %v2848 = vsel %vm719, %v2803, 0.0
      %2849 = vadd.xlane.f32.xlu0 %v2848
      %v2850 = vpop.xlane.xlu0 %2849
      %v2851 = vsel %vm719, %v2805, 0.0
      %2852 = vadd.xlane.f32.xlu0 %v2851
      %v2853 = vpop.xlane.xlu0 %2852
      %v2854 = vrcp.pop %v2808
      %v2855 = vrcp.pop %v2811
      %v2856 = vrcp.pop %v2814
      %v2857 = vrcp.pop %v2817
      %v2858 = vrcp.pop %v2820
      %v2859 = vrcp.pop %v2823
      %v2860 = vrcp.pop %v2826
      %v2861 = vrcp.pop %v2829
      %v2862 = vrcp.pop %v2832
      %v2863 = vrcp.pop %v2835
      %v2864 = vrcp.pop %v2838
      %v2865 = vrcp.pop %v2841
      %v2866 = vrcp.pop %v2844
      %v2867 = vrcp.pop %v2847
      %v2868 = vrcp.pop %v2850
      %v2869 = vrcp.pop %v2853
      %v2870 = vmul.f32 %v2775, %v2854
      %v2871 = vmul.f32 %v2777, %v2855
      %v2872 = vmul.f32 %v2779, %v2856
      %v2873 = vmul.f32 %v2781, %v2857
      %v2874 = vmul.f32 %v2783, %v2858
      %v2875 = vmul.f32 %v2785, %v2859
      %v2876 = vmul.f32 %v2787, %v2860
      %v2877 = vmul.f32 %v2789, %v2861
      %v2878 = vmul.f32 %v2791, %v2862
      %v2879 = vmul.f32 %v2793, %v2863
      %v2880 = vmul.f32 %v2795, %v2864
      %v2881 = vmul.f32 %v2797, %v2865
      %v2882 = vmul.f32 %v2799, %v2866
      %v2883 = vmul.f32 %v2801, %v2867
      %v2884 = vmul.f32 %v2803, %v2868
      %v2885 = vmul.f32 %v2805, %v2869
      %v2886 = vpack.c.bf16 %v2871, %v2870
      %v2887 = vpack.c.bf16 %v2873, %v2872
      %v2889 = vsel %vm719, %v2886, 0
      %v2892 = vsel %vm719, %v2887, 0
      %2894 = vmatpush.bf16.msra.mxu0 0
      %2895 = vmatpush.bf16.msra.mxu0 0
      %2896 = vmatpush.bf16.msra.mxu0 0
      %2897 = vmatpush.bf16.msra.mxu0 0
      %2898 = vmatpush.bf16.msra.mxu0 0
      %2899 = vmatpush.bf16.msra.mxu0 0
      %2900 = vmatpush.bf16.msra.mxu0 %v2652
      %2901 = vmatpush.bf16.msra.mxu0 %v2651
      %2902 = vmatmul.bf16.gmra.mxu0 %v2889
      %v2903 = vpop.f32.mrf.mxu0
      %v2904 = vadd.f32 0.0, %v2903
      %v2905 = vpop.f32.mrf.mxu0
      %v2906 = vadd.f32 0.0, %v2905
      %2907 = vmatmul.bf16.gmra.mxu0 %v2892
      %v2908 = vpop.f32.mrf.mxu0
      %v2909 = vadd.f32 0.0, %v2908
      %v2910 = vpop.f32.mrf.mxu0
      %v2911 = vadd.f32 0.0, %v2910
      %2912 = vdwg.mxu0
      %v2913 = vpack.c.bf16 %v2875, %v2874
      %v2914 = vpack.c.bf16 %v2877, %v2876
      %v2916 = vsel %vm719, %v2913, 0
      %v2919 = vsel %vm719, %v2914, 0
      %2921 = vmatpush.bf16.msra.mxu0 0
      %2922 = vmatpush.bf16.msra.mxu0 0
      %2923 = vmatpush.bf16.msra.mxu0 0
      %2924 = vmatpush.bf16.msra.mxu0 0
      %2925 = vmatpush.bf16.msra.mxu0 0
      %2926 = vmatpush.bf16.msra.mxu0 0
      %2927 = vmatpush.bf16.msra.mxu0 %v2652
      %2928 = vmatpush.bf16.msra.mxu0 %v2651
      %2929 = vmatmul.bf16.gmra.mxu0 %v2916
      %v2930 = vpop.f32.mrf.mxu0
      %v2931 = vadd.f32 0.0, %v2930
      %v2932 = vpop.f32.mrf.mxu0
      %v2933 = vadd.f32 0.0, %v2932
      %2934 = vmatmul.bf16.gmra.mxu0 %v2919
      %v2935 = vpop.f32.mrf.mxu0
      %v2936 = vadd.f32 0.0, %v2935
      %v2937 = vpop.f32.mrf.mxu0
      %v2938 = vadd.f32 0.0, %v2937
      %2939 = vdwg.mxu0
      %v2940 = vpack.c.bf16 %v2879, %v2878
      %v2941 = vpack.c.bf16 %v2881, %v2880
      %v2943 = vsel %vm719, %v2940, 0
      %v2946 = vsel %vm719, %v2941, 0
      %2948 = vmatpush.bf16.msra.mxu0 0
      %2949 = vmatpush.bf16.msra.mxu0 0
      %2950 = vmatpush.bf16.msra.mxu0 0
      %2951 = vmatpush.bf16.msra.mxu0 0
      %2952 = vmatpush.bf16.msra.mxu0 0
      %2953 = vmatpush.bf16.msra.mxu0 0
      %2954 = vmatpush.bf16.msra.mxu0 %v2652
      %2955 = vmatpush.bf16.msra.mxu0 %v2651
      %2956 = vmatmul.bf16.gmra.mxu0 %v2943
      %v2957 = vpop.f32.mrf.mxu0
      %v2958 = vadd.f32 0.0, %v2957
      %v2959 = vpop.f32.mrf.mxu0
      %v2960 = vadd.f32 0.0, %v2959
      %2961 = vmatmul.bf16.gmra.mxu0 %v2946
      %v2962 = vpop.f32.mrf.mxu0
      %v2963 = vadd.f32 0.0, %v2962
      %v2964 = vpop.f32.mrf.mxu0
      %v2965 = vadd.f32 0.0, %v2964
      %2966 = vdwg.mxu0
      %v2967 = vpack.c.bf16 %v2883, %v2882
      %v2968 = vpack.c.bf16 %v2885, %v2884
      %v2970 = vsel %vm719, %v2967, 0
      %v2973 = vsel %vm719, %v2968, 0
      %2975 = vmatpush.bf16.msra.mxu0 0
      %2976 = vmatpush.bf16.msra.mxu0 0
      %2977 = vmatpush.bf16.msra.mxu0 0
      %2978 = vmatpush.bf16.msra.mxu0 0
      %2979 = vmatpush.bf16.msra.mxu0 0
      %2980 = vmatpush.bf16.msra.mxu0 0
      %2981 = vmatpush.bf16.msra.mxu0 %v2652
      %2982 = vmatpush.bf16.msra.mxu0 %v2651
      %2983 = vmatmul.bf16.gmra.mxu0 %v2970
      %v2984 = vpop.f32.mrf.mxu0
      %v2985 = vadd.f32 0.0, %v2984
      %v2986 = vpop.f32.mrf.mxu0
      %v2987 = vadd.f32 0.0, %v2986
      %2988 = vmatmul.bf16.gmra.mxu0 %v2973
      %v2989 = vpop.f32.mrf.mxu0
      %v2990 = vadd.f32 0.0, %v2989
      %v2991 = vpop.f32.mrf.mxu0
      %v2992 = vadd.f32 0.0, %v2991
      %2993 = vdwg.mxu0
      %v2994 = vld [vmem:[%s8] sm:$0xff]
      %v2995 = vld [vmem:[%s8 + $0x8] sm:$0xff]
      %v2996 = vld [vmem:[%s8 + $0x10] sm:$0xff]
      %v2997 = vld [vmem:[%s8 + $0x18] sm:$0xff]
      %v2998 = vld [vmem:[%s8 + $0x20] sm:$0xff]
      %v2999 = vld [vmem:[%s8 + $0x28] sm:$0xff]
      %v3000 = vld [vmem:[%s8 + $0x30] sm:$0xff]
      %v3001 = vld [vmem:[%s8 + $0x38] sm:$0xff]
      %v3002 = vpack.c.bf16 %v2906, %v2904
      %v3003 = vpack.c.bf16 %v2911, %v2909
      %v3004 = vpack.c.bf16 %v2933, %v2931
      %v3005 = vpack.c.bf16 %v2938, %v2936
      %v3006 = vpack.c.bf16 %v2960, %v2958
      %v3007 = vpack.c.bf16 %v2965, %v2963
      %v3008 = vpack.c.bf16 %v2987, %v2985
      %v3009 = vpack.c.bf16 %v2992, %v2990
      %v3010 = vpack.c.bf16 %v2995, %v2994
      %v3011 = vpack.c.bf16 %v2997, %v2996
      %v3012 = vpack.c.bf16 %v2999, %v2998
      %v3013 = vpack.c.bf16 %v3001, %v3000
      %v3015 = vsel %vm572, %v3002, 0
      %v3018 = vsel %vm572, %v3003, 0
      %v3021 = vsel %vm572, %v3004, 0
      %v3024 = vsel %vm572, %v3005, 0
      %v3027 = vsel %vm572, %v3006, 0
      %v3030 = vsel %vm572, %v3007, 0
      %v3033 = vsel %vm572, %v3008, 0
      %v3036 = vsel %vm572, %v3009, 0
      %3038 = vmatpush.bf16.msra.mxu0 0
      %3039 = vmatpush.bf16.msra.mxu0 0
      %3040 = vmatpush.bf16.msra.mxu0 0
      %3041 = vmatpush.bf16.msra.mxu0 0
      %3042 = vmatpush.bf16.msra.mxu0 %v3013
      %3043 = vmatpush.bf16.msra.mxu0 %v3012
      %3044 = vmatpush.bf16.msra.mxu0 %v3011
      %3045 = vmatpush.bf16.msra.mxu0 %v3010
      %3046 = vmatmul.bf16.gmra.mxu0 %v3015
      %v3047 = vpop.f32.mrf.mxu0
      %v3048 = vadd.f32 0.0, %v3047
      %v3049 = vpop.f32.mrf.mxu0
      %v3050 = vadd.f32 0.0, %v3049
      %3051 = vmatmul.bf16.gmra.mxu0 %v3018
      %v3052 = vpop.f32.mrf.mxu0
      %v3053 = vadd.f32 0.0, %v3052
      %v3054 = vpop.f32.mrf.mxu0
      %v3055 = vadd.f32 0.0, %v3054
      %3056 = vmatmul.bf16.gmra.mxu0 %v3021
      %v3057 = vpop.f32.mrf.mxu0
      %v3058 = vadd.f32 0.0, %v3057
      %v3059 = vpop.f32.mrf.mxu0
      %v3060 = vadd.f32 0.0, %v3059
      %3061 = vmatmul.bf16.gmra.mxu0 %v3024
      %v3062 = vpop.f32.mrf.mxu0
      %v3063 = vadd.f32 0.0, %v3062
      %v3064 = vpop.f32.mrf.mxu0
      %v3065 = vadd.f32 0.0, %v3064
      %3066 = vmatmul.bf16.gmra.mxu0 %v3027
      %v3067 = vpop.f32.mrf.mxu0
      %v3068 = vadd.f32 0.0, %v3067
      %v3069 = vpop.f32.mrf.mxu0
      %v3070 = vadd.f32 0.0, %v3069
      %3071 = vmatmul.bf16.gmra.mxu0 %v3030
      %v3072 = vpop.f32.mrf.mxu0
      %v3073 = vadd.f32 0.0, %v3072
      %v3074 = vpop.f32.mrf.mxu0
      %v3075 = vadd.f32 0.0, %v3074
      %3076 = vmatmul.bf16.gmra.mxu0 %v3033
      %v3077 = vpop.f32.mrf.mxu0
      %v3078 = vadd.f32 0.0, %v3077
      %v3079 = vpop.f32.mrf.mxu0
      %v3080 = vadd.f32 0.0, %v3079
      %3081 = vmatmul.bf16.gmra.mxu0 %v3036
      %v3082 = vpop.f32.mrf.mxu0
      %v3083 = vadd.f32 0.0, %v3082
      %v3084 = vpop.f32.mrf.mxu0
      %v3085 = vadd.f32 0.0, %v3084
      %3086 = vdwg.mxu0
      %v3087 = vadd.f32 %v511, %v3048
      %v3088 = vadd.f32 %v512, %v3050
      %v3089 = vadd.f32 %v513, %v3053
      %v3090 = vadd.f32 %v514, %v3055
      %v3091 = vadd.f32 %v511, %v3058
      %v3092 = vadd.f32 %v512, %v3060
      %v3093 = vadd.f32 %v513, %v3063
      %v3094 = vadd.f32 %v514, %v3065
      %v3095 = vadd.f32 %v511, %v3068
      %v3096 = vadd.f32 %v512, %v3070
      %v3097 = vadd.f32 %v513, %v3073
      %v3098 = vadd.f32 %v514, %v3075
      %v3099 = vadd.f32 %v511, %v3078
      %v3100 = vadd.f32 %v512, %v3080
      %v3101 = vadd.f32 %v513, %v3083
      %v3102 = vadd.f32 %v514, %v3085
      %v3103 = vperm.slane %v2564, 3
      %v3104 = vadd.f32 %v3087, %v3103
      %v3105 = vadd.f32 %v3088, %v3103
      %v3106 = vadd.f32 %v3089, %v3103
      %v3107 = vadd.f32 %v3090, %v3103
      %v3108 = vadd.f32 %v3091, %v3103
      %v3109 = vadd.f32 %v3092, %v3103
      %v3110 = vadd.f32 %v3093, %v3103
      %v3111 = vadd.f32 %v3094, %v3103
      %v3112 = vadd.f32 %v3095, %v3103
      %v3113 = vadd.f32 %v3096, %v3103
      %v3114 = vadd.f32 %v3097, %v3103
      %v3115 = vadd.f32 %v3098, %v3103
      %v3116 = vadd.f32 %v3099, %v3103
      %v3117 = vadd.f32 %v3100, %v3103
      %v3118 = vadd.f32 %v3101, %v3103
      %v3119 = vadd.f32 %v3102, %v3103
      %v3120 = vsel %vm572, %v3104, 0.0
      %3121 = vadd.xlane.f32.xlu0 %v3120
      %v3122 = vpop.xlane.xlu0 %3121
      %v3123 = vsel %vm572, %v3105, 0.0
      %3124 = vadd.xlane.f32.xlu0 %v3123
      %v3125 = vpop.xlane.xlu0 %3124
      %v3126 = vsel %vm572, %v3106, 0.0
      %3127 = vadd.xlane.f32.xlu0 %v3126
      %v3128 = vpop.xlane.xlu0 %3127
      %v3129 = vsel %vm572, %v3107, 0.0
      %3130 = vadd.xlane.f32.xlu0 %v3129
      %v3131 = vpop.xlane.xlu0 %3130
      %v3132 = vsel %vm572, %v3108, 0.0
      %3133 = vadd.xlane.f32.xlu0 %v3132
      %v3134 = vpop.xlane.xlu0 %3133
      %v3135 = vsel %vm572, %v3109, 0.0
      %3136 = vadd.xlane.f32.xlu0 %v3135
      %v3137 = vpop.xlane.xlu0 %3136
      %v3138 = vsel %vm572, %v3110, 0.0
      %3139 = vadd.xlane.f32.xlu0 %v3138
      %v3140 = vpop.xlane.xlu0 %3139
      %v3141 = vsel %vm572, %v3111, 0.0
      %3142 = vadd.xlane.f32.xlu0 %v3141
      %v3143 = vpop.xlane.xlu0 %3142
      %v3144 = vsel %vm572, %v3112, 0.0
      %3145 = vadd.xlane.f32.xlu0 %v3144
      %v3146 = vpop.xlane.xlu0 %3145
      %v3147 = vsel %vm572, %v3113, 0.0
      %3148 = vadd.xlane.f32.xlu0 %v3147
      %v3149 = vpop.xlane.xlu0 %3148
      %v3150 = vsel %vm572, %v3114, 0.0
      %3151 = vadd.xlane.f32.xlu0 %v3150
      %v3152 = vpop.xlane.xlu0 %3151
      %v3153 = vsel %vm572, %v3115, 0.0
      %3154 = vadd.xlane.f32.xlu0 %v3153
      %v3155 = vpop.xlane.xlu0 %3154
      %v3156 = vsel %vm572, %v3116, 0.0
      %3157 = vadd.xlane.f32.xlu0 %v3156
      %v3158 = vpop.xlane.xlu0 %3157
      %v3159 = vsel %vm572, %v3117, 0.0
      %3160 = vadd.xlane.f32.xlu0 %v3159
      %v3161 = vpop.xlane.xlu0 %3160
      %v3162 = vsel %vm572, %v3118, 0.0
      %3163 = vadd.xlane.f32.xlu0 %v3162
      %v3164 = vpop.xlane.xlu0 %3163
      %v3165 = vsel %vm572, %v3119, 0.0
      %3166 = vadd.xlane.f32.xlu0 %v3165
      %v3167 = vpop.xlane.xlu0 %3166
      %v3168 = vmul.f32 %v3122, %v1293
      %v3169 = vmul.f32 %v3125, %v1293
      %v3170 = vmul.f32 %v3128, %v1293
      %v3171 = vmul.f32 %v3131, %v1293
      %v3172 = vmul.f32 %v3134, %v1293
      %v3173 = vmul.f32 %v3137, %v1293
      %v3174 = vmul.f32 %v3140, %v1293
      %v3175 = vmul.f32 %v3143, %v1293
      %v3176 = vmul.f32 %v3146, %v1293
      %v3177 = vmul.f32 %v3149, %v1293
      %v3178 = vmul.f32 %v3152, %v1293
      %v3179 = vmul.f32 %v3155, %v1293
      %v3180 = vmul.f32 %v3158, %v1293
      %v3181 = vmul.f32 %v3161, %v1293
      %v3182 = vmul.f32 %v3164, %v1293
      %v3183 = vmul.f32 %v3167, %v1293
      %v3184 = vsub.f32 %v3104, %v3168
      %v3185 = vsub.f32 %v3105, %v3169
      %v3186 = vsub.f32 %v3106, %v3170
      %v3187 = vsub.f32 %v3107, %v3171
      %v3188 = vsub.f32 %v3108, %v3172
      %v3189 = vsub.f32 %v3109, %v3173
      %v3190 = vsub.f32 %v3110, %v3174
      %v3191 = vsub.f32 %v3111, %v3175
      %v3192 = vsub.f32 %v3112, %v3176
      %v3193 = vsub.f32 %v3113, %v3177
      %v3194 = vsub.f32 %v3114, %v3178
      %v3195 = vsub.f32 %v3115, %v3179
      %v3196 = vsub.f32 %v3116, %v3180
      %v3197 = vsub.f32 %v3117, %v3181
      %v3198 = vsub.f32 %v3118, %v3182
      %v3199 = vsub.f32 %v3119, %v3183
      %v3200 = vmul.f32 %v3184, %v3184
      %v3201 = vmul.f32 %v3185, %v3185
      %v3202 = vmul.f32 %v3186, %v3186
      %v3203 = vmul.f32 %v3187, %v3187
      %v3204 = vmul.f32 %v3188, %v3188
      %v3205 = vmul.f32 %v3189, %v3189
      %v3206 = vmul.f32 %v3190, %v3190
      %v3207 = vmul.f32 %v3191, %v3191
      %v3208 = vmul.f32 %v3192, %v3192
      %v3209 = vmul.f32 %v3193, %v3193
      %v3210 = vmul.f32 %v3194, %v3194
      %v3211 = vmul.f32 %v3195, %v3195
      %v3212 = vmul.f32 %v3196, %v3196
      %v3213 = vmul.f32 %v3197, %v3197
      %v3214 = vmul.f32 %v3198, %v3198
      %v3215 = vmul.f32 %v3199, %v3199
      %v3216 = vsel %vm572, %v3200, 0.0
      %3217 = vadd.xlane.f32.xlu0 %v3216
      %v3218 = vpop.xlane.xlu0 %3217
      %v3219 = vsel %vm572, %v3201, 0.0
      %3220 = vadd.xlane.f32.xlu0 %v3219
      %v3221 = vpop.xlane.xlu0 %3220
      %v3222 = vsel %vm572, %v3202, 0.0
      %3223 = vadd.xlane.f32.xlu0 %v3222
      %v3224 = vpop.xlane.xlu0 %3223
      %v3225 = vsel %vm572, %v3203, 0.0
      %3226 = vadd.xlane.f32.xlu0 %v3225
      %v3227 = vpop.xlane.xlu0 %3226
      %v3228 = vsel %vm572, %v3204, 0.0
      %3229 = vadd.xlane.f32.xlu0 %v3228
      %v3230 = vpop.xlane.xlu0 %3229
      %v3231 = vsel %vm572, %v3205, 0.0
      %3232 = vadd.xlane.f32.xlu0 %v3231
      %v3233 = vpop.xlane.xlu0 %3232
      %v3234 = vsel %vm572, %v3206, 0.0
      %3235 = vadd.xlane.f32.xlu0 %v3234
      %v3236 = vpop.xlane.xlu0 %3235
      %v3237 = vsel %vm572, %v3207, 0.0
      %3238 = vadd.xlane.f32.xlu0 %v3237
      %v3239 = vpop.xlane.xlu0 %3238
      %v3240 = vsel %vm572, %v3208, 0.0
      %3241 = vadd.xlane.f32.xlu0 %v3240
      %v3242 = vpop.xlane.xlu0 %3241
      %v3243 = vsel %vm572, %v3209, 0.0
      %3244 = vadd.xlane.f32.xlu0 %v3243
      %v3245 = vpop.xlane.xlu0 %3244
      %v3246 = vsel %vm572, %v3210, 0.0
      %3247 = vadd.xlane.f32.xlu0 %v3246
      %v3248 = vpop.xlane.xlu0 %3247
      %v3249 = vsel %vm572, %v3211, 0.0
      %3250 = vadd.xlane.f32.xlu0 %v3249
      %v3251 = vpop.xlane.xlu0 %3250
      %v3252 = vsel %vm572, %v3212, 0.0
      %3253 = vadd.xlane.f32.xlu0 %v3252
      %v3254 = vpop.xlane.xlu0 %3253
      %v3255 = vsel %vm572, %v3213, 0.0
      %3256 = vadd.xlane.f32.xlu0 %v3255
      %v3257 = vpop.xlane.xlu0 %3256
      %v3258 = vsel %vm572, %v3214, 0.0
      %3259 = vadd.xlane.f32.xlu0 %v3258
      %v3260 = vpop.xlane.xlu0 %3259
      %v3261 = vsel %vm572, %v3215, 0.0
      %3262 = vadd.xlane.f32.xlu0 %v3261
      %v3263 = vpop.xlane.xlu0 %3262
      %v3264 = vmul.f32 %v3218, %v1293
      %v3265 = vmul.f32 %v3221, %v1293
      %v3266 = vmul.f32 %v3224, %v1293
      %v3267 = vmul.f32 %v3227, %v1293
      %v3268 = vmul.f32 %v3230, %v1293
      %v3269 = vmul.f32 %v3233, %v1293
      %v3270 = vmul.f32 %v3236, %v1293
      %v3271 = vmul.f32 %v3239, %v1293
      %v3272 = vmul.f32 %v3242, %v1293
      %v3273 = vmul.f32 %v3245, %v1293
      %v3274 = vmul.f32 %v3248, %v1293
      %v3275 = vmul.f32 %v3251, %v1293
      %v3276 = vmul.f32 %v3254, %v1293
      %v3277 = vmul.f32 %v3257, %v1293
      %v3278 = vmul.f32 %v3260, %v1293
      %v3279 = vmul.f32 %v3263, %v1293
      %v3280 = vadd.f32 %v3264, 1e-05
      %v3281 = vadd.f32 %v3265, 1e-05
      %v3282 = vadd.f32 %v3266, 1e-05
      %v3283 = vadd.f32 %v3267, 1e-05
      %v3284 = vadd.f32 %v3268, 1e-05
      %v3285 = vadd.f32 %v3269, 1e-05
      %v3286 = vadd.f32 %v3270, 1e-05
      %v3287 = vadd.f32 %v3271, 1e-05
      %v3288 = vadd.f32 %v3272, 1e-05
      %v3289 = vadd.f32 %v3273, 1e-05
      %v3290 = vadd.f32 %v3274, 1e-05
      %v3291 = vadd.f32 %v3275, 1e-05
      %v3292 = vadd.f32 %v3276, 1e-05
      %v3293 = vadd.f32 %v3277, 1e-05
      %v3294 = vadd.f32 %v3278, 1e-05
      %v3295 = vadd.f32 %v3279, 1e-05
      %v3296 = vrsqrt.pop %v3280
      %v3297 = vmul.f32 %v3296, %v3280
      %v3298 = vmul.f32 %v3297, %v3296
      %v3299 = vmul.f32 0.5, %v3298
      %v3300 = vsub.f32 1.5, %v3299
      %v3301 = vmul.f32 %v3296, %v3300
      %vm3302 = vweird.f32 %v3280
      %vm3303 = vweird.f32 %v3296
      %vm3304 = vmor %vm3302, %vm3303
      %v3305 = vsel %vm3304, %v3296, %v3301
      %v3306 = vrsqrt.pop %v3281
      %v3307 = vmul.f32 %v3306, %v3281
      %v3308 = vmul.f32 %v3307, %v3306
      %v3309 = vmul.f32 0.5, %v3308
      %v3310 = vsub.f32 1.5, %v3309
      %v3311 = vmul.f32 %v3306, %v3310
      %vm3312 = vweird.f32 %v3281
      %vm3313 = vweird.f32 %v3306
      %vm3314 = vmor %vm3312, %vm3313
      %v3315 = vsel %vm3314, %v3306, %v3311
      %v3316 = vrsqrt.pop %v3282
      %v3317 = vmul.f32 %v3316, %v3282
      %v3318 = vmul.f32 %v3317, %v3316
      %v3319 = vmul.f32 0.5, %v3318
      %v3320 = vsub.f32 1.5, %v3319
      %v3321 = vmul.f32 %v3316, %v3320
      %vm3322 = vweird.f32 %v3282
      %vm3323 = vweird.f32 %v3316
      %vm3324 = vmor %vm3322, %vm3323
      %v3325 = vsel %vm3324, %v3316, %v3321
      %v3326 = vrsqrt.pop %v3283
      %v3327 = vmul.f32 %v3326, %v3283
      %v3328 = vmul.f32 %v3327, %v3326
      %v3329 = vmul.f32 0.5, %v3328
      %v3330 = vsub.f32 1.5, %v3329
      %v3331 = vmul.f32 %v3326, %v3330
      %vm3332 = vweird.f32 %v3283
      %vm3333 = vweird.f32 %v3326
      %vm3334 = vmor %vm3332, %vm3333
      %v3335 = vsel %vm3334, %v3326, %v3331
      %v3336 = vrsqrt.pop %v3284
      %v3337 = vmul.f32 %v3336, %v3284
      %v3338 = vmul.f32 %v3337, %v3336
      %v3339 = vmul.f32 0.5, %v3338
      %v3340 = vsub.f32 1.5, %v3339
      %v3341 = vmul.f32 %v3336, %v3340
      %vm3342 = vweird.f32 %v3284
      %vm3343 = vweird.f32 %v3336
      %vm3344 = vmor %vm3342, %vm3343
      %v3345 = vsel %vm3344, %v3336, %v3341
      %v3346 = vrsqrt.pop %v3285
      %v3347 = vmul.f32 %v3346, %v3285
      %v3348 = vmul.f32 %v3347, %v3346
      %v3349 = vmul.f32 0.5, %v3348
      %v3350 = vsub.f32 1.5, %v3349
      %v3351 = vmul.f32 %v3346, %v3350
      %vm3352 = vweird.f32 %v3285
      %vm3353 = vweird.f32 %v3346
      %vm3354 = vmor %vm3352, %vm3353
      %v3355 = vsel %vm3354, %v3346, %v3351
      %v3356 = vrsqrt.pop %v3286
      %v3357 = vmul.f32 %v3356, %v3286
      %v3358 = vmul.f32 %v3357, %v3356
      %v3359 = vmul.f32 0.5, %v3358
      %v3360 = vsub.f32 1.5, %v3359
      %v3361 = vmul.f32 %v3356, %v3360
      %vm3362 = vweird.f32 %v3286
      %vm3363 = vweird.f32 %v3356
      %vm3364 = vmor %vm3362, %vm3363
      %v3365 = vsel %vm3364, %v3356, %v3361
      %v3366 = vrsqrt.pop %v3287
      %v3367 = vmul.f32 %v3366, %v3287
      %v3368 = vmul.f32 %v3367, %v3366
      %v3369 = vmul.f32 0.5, %v3368
      %v3370 = vsub.f32 1.5, %v3369
      %v3371 = vmul.f32 %v3366, %v3370
      %vm3372 = vweird.f32 %v3287
      %vm3373 = vweird.f32 %v3366
      %vm3374 = vmor %vm3372, %vm3373
      %v3375 = vsel %vm3374, %v3366, %v3371
      %v3376 = vrsqrt.pop %v3288
      %v3377 = vmul.f32 %v3376, %v3288
      %v3378 = vmul.f32 %v3377, %v3376
      %v3379 = vmul.f32 0.5, %v3378
      %v3380 = vsub.f32 1.5, %v3379
      %v3381 = vmul.f32 %v3376, %v3380
      %vm3382 = vweird.f32 %v3288
      %vm3383 = vweird.f32 %v3376
      %vm3384 = vmor %vm3382, %vm3383
      %v3385 = vsel %vm3384, %v3376, %v3381
      %v3386 = vrsqrt.pop %v3289
      %v3387 = vmul.f32 %v3386, %v3289
      %v3388 = vmul.f32 %v3387, %v3386
      %v3389 = vmul.f32 0.5, %v3388
      %v3390 = vsub.f32 1.5, %v3389
      %v3391 = vmul.f32 %v3386, %v3390
      %vm3392 = vweird.f32 %v3289
      %vm3393 = vweird.f32 %v3386
      %vm3394 = vmor %vm3392, %vm3393
      %v3395 = vsel %vm3394, %v3386, %v3391
      %v3396 = vrsqrt.pop %v3290
      %v3397 = vmul.f32 %v3396, %v3290
      %v3398 = vmul.f32 %v3397, %v3396
      %v3399 = vmul.f32 0.5, %v3398
      %v3400 = vsub.f32 1.5, %v3399
      %v3401 = vmul.f32 %v3396, %v3400
      %vm3402 = vweird.f32 %v3290
      %vm3403 = vweird.f32 %v3396
      %vm3404 = vmor %vm3402, %vm3403
      %v3405 = vsel %vm3404, %v3396, %v3401
      %v3406 = vrsqrt.pop %v3291
      %v3407 = vmul.f32 %v3406, %v3291
      %v3408 = vmul.f32 %v3407, %v3406
      %v3409 = vmul.f32 0.5, %v3408
      %v3410 = vsub.f32 1.5, %v3409
      %v3411 = vmul.f32 %v3406, %v3410
      %vm3412 = vweird.f32 %v3291
      %vm3413 = vweird.f32 %v3406
      %vm3414 = vmor %vm3412, %vm3413
      %v3415 = vsel %vm3414, %v3406, %v3411
      %v3416 = vrsqrt.pop %v3292
      %v3417 = vmul.f32 %v3416, %v3292
      %v3418 = vmul.f32 %v3417, %v3416
      %v3419 = vmul.f32 0.5, %v3418
      %v3420 = vsub.f32 1.5, %v3419
      %v3421 = vmul.f32 %v3416, %v3420
      %vm3422 = vweird.f32 %v3292
      %vm3423 = vweird.f32 %v3416
      %vm3424 = vmor %vm3422, %vm3423
      %v3425 = vsel %vm3424, %v3416, %v3421
      %v3426 = vrsqrt.pop %v3293
      %v3427 = vmul.f32 %v3426, %v3293
      %v3428 = vmul.f32 %v3427, %v3426
      %v3429 = vmul.f32 0.5, %v3428
      %v3430 = vsub.f32 1.5, %v3429
      %v3431 = vmul.f32 %v3426, %v3430
      %vm3432 = vweird.f32 %v3293
      %vm3433 = vweird.f32 %v3426
      %vm3434 = vmor %vm3432, %vm3433
      %v3435 = vsel %vm3434, %v3426, %v3431
      %v3436 = vrsqrt.pop %v3294
      %v3437 = vmul.f32 %v3436, %v3294
      %v3438 = vmul.f32 %v3437, %v3436
      %v3439 = vmul.f32 0.5, %v3438
      %v3440 = vsub.f32 1.5, %v3439
      %v3441 = vmul.f32 %v3436, %v3440
      %vm3442 = vweird.f32 %v3294
      %vm3443 = vweird.f32 %v3436
      %vm3444 = vmor %vm3442, %vm3443
      %v3445 = vsel %vm3444, %v3436, %v3441
      %v3446 = vrsqrt.pop %v3295
      %v3447 = vmul.f32 %v3446, %v3295
      %v3448 = vmul.f32 %v3447, %v3446
      %v3449 = vmul.f32 0.5, %v3448
      %v3450 = vsub.f32 1.5, %v3449
      %v3451 = vmul.f32 %v3446, %v3450
      %vm3452 = vweird.f32 %v3295
      %vm3453 = vweird.f32 %v3446
      %vm3454 = vmor %vm3452, %vm3453
      %v3455 = vsel %vm3454, %v3446, %v3451
      %v3456 = vmul.f32 %v3184, %v3305
      %v3457 = vmul.f32 %v3185, %v3315
      %v3458 = vmul.f32 %v3186, %v3325
      %v3459 = vmul.f32 %v3187, %v3335
      %v3460 = vmul.f32 %v3188, %v3345
      %v3461 = vmul.f32 %v3189, %v3355
      %v3462 = vmul.f32 %v3190, %v3365
      %v3463 = vmul.f32 %v3191, %v3375
      %v3464 = vmul.f32 %v3192, %v3385
      %v3465 = vmul.f32 %v3193, %v3395
      %v3466 = vmul.f32 %v3194, %v3405
      %v3467 = vmul.f32 %v3195, %v3415
      %v3468 = vmul.f32 %v3196, %v3425
      %v3469 = vmul.f32 %v3197, %v3435
      %v3470 = vmul.f32 %v3198, %v3445
      %v3471 = vmul.f32 %v3199, %v3455
      %v3472 = vperm.slane %v2564, 4
      %v3473 = vmul.f32 %v3456, %v3472
      %v3474 = vmul.f32 %v3457, %v3472
      %v3475 = vmul.f32 %v3458, %v3472
      %v3476 = vmul.f32 %v3459, %v3472
      %v3477 = vmul.f32 %v3460, %v3472
      %v3478 = vmul.f32 %v3461, %v3472
      %v3479 = vmul.f32 %v3462, %v3472
      %v3480 = vmul.f32 %v3463, %v3472
      %v3481 = vmul.f32 %v3464, %v3472
      %v3482 = vmul.f32 %v3465, %v3472
      %v3483 = vmul.f32 %v3466, %v3472
      %v3484 = vmul.f32 %v3467, %v3472
      %v3485 = vmul.f32 %v3468, %v3472
      %v3486 = vmul.f32 %v3469, %v3472
      %v3487 = vmul.f32 %v3470, %v3472
      %v3488 = vmul.f32 %v3471, %v3472
      %v3489 = vperm.slane %v2564, 5
      %v3490 = vadd.f32 %v3473, %v3489
      %v3491 = vadd.f32 %v3474, %v3489
      %v3492 = vadd.f32 %v3475, %v3489
      %v3493 = vadd.f32 %v3476, %v3489
      %v3494 = vadd.f32 %v3477, %v3489
      %v3495 = vadd.f32 %v3478, %v3489
      %v3496 = vadd.f32 %v3479, %v3489
      %v3497 = vadd.f32 %v3480, %v3489
      %v3498 = vadd.f32 %v3481, %v3489
      %v3499 = vadd.f32 %v3482, %v3489
      %v3500 = vadd.f32 %v3483, %v3489
      %v3501 = vadd.f32 %v3484, %v3489
      %v3502 = vadd.f32 %v3485, %v3489
      %v3503 = vadd.f32 %v3486, %v3489
      %v3504 = vadd.f32 %v3487, %v3489
      %v3505 = vadd.f32 %v3488, %v3489
      %v3506 = vld [vmem:[%s9] sm:$0xff]
      %v3507 = vld [vmem:[%s9 + $0x8] sm:$0xff]
      %v3508 = vld [vmem:[%s9 + $0x10] sm:$0xff]
      %v3509 = vld [vmem:[%s9 + $0x18] sm:$0xff]
      %v3510 = vld [vmem:[%s9 + $0x20] sm:$0xff]
      %v3511 = vld [vmem:[%s9 + $0x28] sm:$0xff]
      %v3512 = vld [vmem:[%s9 + $0x30] sm:$0xff]
      %v3513 = vld [vmem:[%s9 + $0x38] sm:$0xff]
      %v3514 = vpack.c.bf16 %v3491, %v3490
      %v3515 = vpack.c.bf16 %v3493, %v3492
      %v3516 = vpack.c.bf16 %v3495, %v3494
      %v3517 = vpack.c.bf16 %v3497, %v3496
      %v3518 = vpack.c.bf16 %v3499, %v3498
      %v3519 = vpack.c.bf16 %v3501, %v3500
      %v3520 = vpack.c.bf16 %v3503, %v3502
      %v3521 = vpack.c.bf16 %v3505, %v3504
      %v3522 = vpack.c.bf16 %v3507, %v3506
      %v3523 = vpack.c.bf16 %v3509, %v3508
      %v3524 = vpack.c.bf16 %v3511, %v3510
      %v3525 = vpack.c.bf16 %v3513, %v3512
      %v3526 = vperm.slane %v2564, 6
      %v3528 = vsel %vm572, %v3514, 0
      %v3531 = vsel %vm572, %v3515, 0
      %v3534 = vsel %vm572, %v3516, 0
      %v3537 = vsel %vm572, %v3517, 0
      %v3540 = vsel %vm572, %v3518, 0
      %v3543 = vsel %vm572, %v3519, 0
      %v3546 = vsel %vm572, %v3520, 0
      %v3549 = vsel %vm572, %v3521, 0
      %3551 = vmatpush.bf16.msra.mxu0 0
      %3552 = vmatpush.bf16.msra.mxu0 0
      %3553 = vmatpush.bf16.msra.mxu0 0
      %3554 = vmatpush.bf16.msra.mxu0 0
      %3555 = vmatpush.bf16.msra.mxu0 %v3525
      %3556 = vmatpush.bf16.msra.mxu0 %v3524
      %3557 = vmatpush.bf16.msra.mxu0 %v3523
      %3558 = vmatpush.bf16.msra.mxu0 %v3522
      %3559 = vmatmul.bf16.gmra.mxu0 %v3528
      %v3560 = vpop.f32.mrf.mxu0
      %v3561 = vadd.f32 %v3526, %v3560
      %v3562 = vpop.f32.mrf.mxu0
      %v3563 = vadd.f32 %v3526, %v3562
      %3564 = vmatmul.bf16.gmra.mxu0 %v3531
      %v3565 = vpop.f32.mrf.mxu0
      %v3566 = vadd.f32 %v3526, %v3565
      %v3567 = vpop.f32.mrf.mxu0
      %v3568 = vadd.f32 %v3526, %v3567
      %3569 = vmatmul.bf16.gmra.mxu0 %v3534
      %v3570 = vpop.f32.mrf.mxu0
      %v3571 = vadd.f32 %v3526, %v3570
      %v3572 = vpop.f32.mrf.mxu0
      %v3573 = vadd.f32 %v3526, %v3572
      %3574 = vmatmul.bf16.gmra.mxu0 %v3537
      %v3575 = vpop.f32.mrf.mxu0
      %v3576 = vadd.f32 %v3526, %v3575
      %v3577 = vpop.f32.mrf.mxu0
      %v3578 = vadd.f32 %v3526, %v3577
      %3579 = vmatmul.bf16.gmra.mxu0 %v3540
      %v3580 = vpop.f32.mrf.mxu0
      %v3581 = vadd.f32 %v3526, %v3580
      %v3582 = vpop.f32.mrf.mxu0
      %v3583 = vadd.f32 %v3526, %v3582
      %3584 = vmatmul.bf16.gmra.mxu0 %v3543
      %v3585 = vpop.f32.mrf.mxu0
      %v3586 = vadd.f32 %v3526, %v3585
      %v3587 = vpop.f32.mrf.mxu0
      %v3588 = vadd.f32 %v3526, %v3587
      %3589 = vmatmul.bf16.gmra.mxu0 %v3546
      %v3590 = vpop.f32.mrf.mxu0
      %v3591 = vadd.f32 %v3526, %v3590
      %v3592 = vpop.f32.mrf.mxu0
      %v3593 = vadd.f32 %v3526, %v3592
      %3594 = vmatmul.bf16.gmra.mxu0 %v3549
      %v3595 = vpop.f32.mrf.mxu0
      %v3596 = vadd.f32 %v3526, %v3595
      %v3597 = vpop.f32.mrf.mxu0
      %v3598 = vadd.f32 %v3526, %v3597
      %3599 = vdwg.mxu0
      %v3600 = vmax.f32 %v3561, 0.0
      %v3601 = vmax.f32 %v3563, 0.0
      %v3602 = vmax.f32 %v3566, 0.0
      %v3603 = vmax.f32 %v3568, 0.0
      %v3604 = vmax.f32 %v3571, 0.0
      %v3605 = vmax.f32 %v3573, 0.0
      %v3606 = vmax.f32 %v3576, 0.0
      %v3607 = vmax.f32 %v3578, 0.0
      %v3608 = vmax.f32 %v3581, 0.0
      %v3609 = vmax.f32 %v3583, 0.0
      %v3610 = vmax.f32 %v3586, 0.0
      %v3611 = vmax.f32 %v3588, 0.0
      %v3612 = vmax.f32 %v3591, 0.0
      %v3613 = vmax.f32 %v3593, 0.0
      %v3614 = vmax.f32 %v3596, 0.0
      %v3615 = vmax.f32 %v3598, 0.0
      %v3616 = vld [vmem:[%s10] sm:$0xff]
      %v3617 = vld [vmem:[%s10 + $0x8] sm:$0xff]
      %v3618 = vld [vmem:[%s10 + $0x10] sm:$0xff]
      %v3619 = vld [vmem:[%s10 + $0x18] sm:$0xff]
      %v3620 = vld [vmem:[%s10 + $0x20] sm:$0xff]
      %v3621 = vld [vmem:[%s10 + $0x28] sm:$0xff]
      %v3622 = vld [vmem:[%s10 + $0x30] sm:$0xff]
      %v3623 = vld [vmem:[%s10 + $0x38] sm:$0xff]
      %v3624 = vpack.c.bf16 %v3601, %v3600
      %v3625 = vpack.c.bf16 %v3603, %v3602
      %v3626 = vpack.c.bf16 %v3605, %v3604
      %v3627 = vpack.c.bf16 %v3607, %v3606
      %v3628 = vpack.c.bf16 %v3609, %v3608
      %v3629 = vpack.c.bf16 %v3611, %v3610
      %v3630 = vpack.c.bf16 %v3613, %v3612
      %v3631 = vpack.c.bf16 %v3615, %v3614
      %v3632 = vpack.c.bf16 %v3617, %v3616
      %v3633 = vpack.c.bf16 %v3619, %v3618
      %v3634 = vpack.c.bf16 %v3621, %v3620
      %v3635 = vpack.c.bf16 %v3623, %v3622
      %v3636 = vperm.slane %v2564, 7
      %v3638 = vsel %vm572, %v3624, 0
      %v3641 = vsel %vm572, %v3625, 0
      %v3644 = vsel %vm572, %v3626, 0
      %v3647 = vsel %vm572, %v3627, 0
      %v3650 = vsel %vm572, %v3628, 0
      %v3653 = vsel %vm572, %v3629, 0
      %v3656 = vsel %vm572, %v3630, 0
      %v3659 = vsel %vm572, %v3631, 0
      %3661 = vmatpush.bf16.msra.mxu0 0
      %3662 = vmatpush.bf16.msra.mxu0 0
      %3663 = vmatpush.bf16.msra.mxu0 0
      %3664 = vmatpush.bf16.msra.mxu0 0
      %3665 = vmatpush.bf16.msra.mxu0 %v3635
      %3666 = vmatpush.bf16.msra.mxu0 %v3634
      %3667 = vmatpush.bf16.msra.mxu0 %v3633
      %3668 = vmatpush.bf16.msra.mxu0 %v3632
      %3669 = vmatmul.bf16.gmra.mxu0 %v3638
      %v3670 = vpop.f32.mrf.mxu0
      %v3671 = vadd.f32 %v3636, %v3670
      %v3672 = vpop.f32.mrf.mxu0
      %v3673 = vadd.f32 %v3636, %v3672
      %3674 = vmatmul.bf16.gmra.mxu0 %v3641
      %v3675 = vpop.f32.mrf.mxu0
      %v3676 = vadd.f32 %v3636, %v3675
      %v3677 = vpop.f32.mrf.mxu0
      %v3678 = vadd.f32 %v3636, %v3677
      %3679 = vmatmul.bf16.gmra.mxu0 %v3644
      %v3680 = vpop.f32.mrf.mxu0
      %v3681 = vadd.f32 %v3636, %v3680
      %v3682 = vpop.f32.mrf.mxu0
      %v3683 = vadd.f32 %v3636, %v3682
      %3684 = vmatmul.bf16.gmra.mxu0 %v3647
      %v3685 = vpop.f32.mrf.mxu0
      %v3686 = vadd.f32 %v3636, %v3685
      %v3687 = vpop.f32.mrf.mxu0
      %v3688 = vadd.f32 %v3636, %v3687
      %3689 = vmatmul.bf16.gmra.mxu0 %v3650
      %v3690 = vpop.f32.mrf.mxu0
      %v3691 = vadd.f32 %v3636, %v3690
      %v3692 = vpop.f32.mrf.mxu0
      %v3693 = vadd.f32 %v3636, %v3692
      %3694 = vmatmul.bf16.gmra.mxu0 %v3653
      %v3695 = vpop.f32.mrf.mxu0
      %v3696 = vadd.f32 %v3636, %v3695
      %v3697 = vpop.f32.mrf.mxu0
      %v3698 = vadd.f32 %v3636, %v3697
      %3699 = vmatmul.bf16.gmra.mxu0 %v3656
      %v3700 = vpop.f32.mrf.mxu0
      %v3701 = vadd.f32 %v3636, %v3700
      %v3702 = vpop.f32.mrf.mxu0
      %v3703 = vadd.f32 %v3636, %v3702
      %3704 = vmatmul.bf16.gmra.mxu0 %v3659
      %v3705 = vpop.f32.mrf.mxu0
      %v3706 = vadd.f32 %v3636, %v3705
      %v3707 = vpop.f32.mrf.mxu0
      %v3708 = vadd.f32 %v3636, %v3707
      %3709 = vdwg.mxu0
      %v3710 = vadd.f32 %v3490, %v3671
      %v3711 = vadd.f32 %v3491, %v3673
      %v3712 = vadd.f32 %v3492, %v3676
      %v3713 = vadd.f32 %v3493, %v3678
      %v3714 = vadd.f32 %v3494, %v3681
      %v3715 = vadd.f32 %v3495, %v3683
      %v3716 = vadd.f32 %v3496, %v3686
      %v3717 = vadd.f32 %v3497, %v3688
      %v3718 = vadd.f32 %v3498, %v3691
      %v3719 = vadd.f32 %v3499, %v3693
      %v3720 = vadd.f32 %v3500, %v3696
      %v3721 = vadd.f32 %v3501, %v3698
      %v3722 = vadd.f32 %v3502, %v3701
      %v3723 = vadd.f32 %v3503, %v3703
      %v3724 = vadd.f32 %v3504, %v3706
      %v3725 = vadd.f32 %v3505, %v3708
      %v3726 = vsel %vm572, %v3710, 0.0
      %3727 = vadd.xlane.f32.xlu0 %v3726
      %v3728 = vpop.xlane.xlu0 %3727
      %v3729 = vsel %vm572, %v3711, 0.0
      %3730 = vadd.xlane.f32.xlu0 %v3729
      %v3731 = vpop.xlane.xlu0 %3730
      %v3732 = vsel %vm572, %v3712, 0.0
      %3733 = vadd.xlane.f32.xlu0 %v3732
      %v3734 = vpop.xlane.xlu0 %3733
      %v3735 = vsel %vm572, %v3713, 0.0
      %3736 = vadd.xlane.f32.xlu0 %v3735
      %v3737 = vpop.xlane.xlu0 %3736
      %v3738 = vsel %vm572, %v3714, 0.0
      %3739 = vadd.xlane.f32.xlu0 %v3738
      %v3740 = vpop.xlane.xlu0 %3739
      %v3741 = vsel %vm572, %v3715, 0.0
      %3742 = vadd.xlane.f32.xlu0 %v3741
      %v3743 = vpop.xlane.xlu0 %3742
      %v3744 = vsel %vm572, %v3716, 0.0
      %3745 = vadd.xlane.f32.xlu0 %v3744
      %v3746 = vpop.xlane.xlu0 %3745
      %v3747 = vsel %vm572, %v3717, 0.0
      %3748 = vadd.xlane.f32.xlu0 %v3747
      %v3749 = vpop.xlane.xlu0 %3748
      %v3750 = vsel %vm572, %v3718, 0.0
      %3751 = vadd.xlane.f32.xlu0 %v3750
      %v3752 = vpop.xlane.xlu0 %3751
      %v3753 = vsel %vm572, %v3719, 0.0
      %3754 = vadd.xlane.f32.xlu0 %v3753
      %v3755 = vpop.xlane.xlu0 %3754
      %v3756 = vsel %vm572, %v3720, 0.0
      %3757 = vadd.xlane.f32.xlu0 %v3756
      %v3758 = vpop.xlane.xlu0 %3757
      %v3759 = vsel %vm572, %v3721, 0.0
      %3760 = vadd.xlane.f32.xlu0 %v3759
      %v3761 = vpop.xlane.xlu0 %3760
      %v3762 = vsel %vm572, %v3722, 0.0
      %3763 = vadd.xlane.f32.xlu0 %v3762
      %v3764 = vpop.xlane.xlu0 %3763
      %v3765 = vsel %vm572, %v3723, 0.0
      %3766 = vadd.xlane.f32.xlu0 %v3765
      %v3767 = vpop.xlane.xlu0 %3766
      %v3768 = vsel %vm572, %v3724, 0.0
      %3769 = vadd.xlane.f32.xlu0 %v3768
      %v3770 = vpop.xlane.xlu0 %3769
      %v3771 = vsel %vm572, %v3725, 0.0
      %3772 = vadd.xlane.f32.xlu0 %v3771
      %v3773 = vpop.xlane.xlu0 %3772
      %v3774 = vmul.f32 %v3728, %v1293
      %v3775 = vmul.f32 %v3731, %v1293
      %v3776 = vmul.f32 %v3734, %v1293
      %v3777 = vmul.f32 %v3737, %v1293
      %v3778 = vmul.f32 %v3740, %v1293
      %v3779 = vmul.f32 %v3743, %v1293
      %v3780 = vmul.f32 %v3746, %v1293
      %v3781 = vmul.f32 %v3749, %v1293
      %v3782 = vmul.f32 %v3752, %v1293
      %v3783 = vmul.f32 %v3755, %v1293
      %v3784 = vmul.f32 %v3758, %v1293
      %v3785 = vmul.f32 %v3761, %v1293
      %v3786 = vmul.f32 %v3764, %v1293
      %v3787 = vmul.f32 %v3767, %v1293
      %v3788 = vmul.f32 %v3770, %v1293
      %v3789 = vmul.f32 %v3773, %v1293
      %v3790 = vsub.f32 %v3710, %v3774
      %v3791 = vsub.f32 %v3711, %v3775
      %v3792 = vsub.f32 %v3712, %v3776
      %v3793 = vsub.f32 %v3713, %v3777
      %v3794 = vsub.f32 %v3714, %v3778
      %v3795 = vsub.f32 %v3715, %v3779
      %v3796 = vsub.f32 %v3716, %v3780
      %v3797 = vsub.f32 %v3717, %v3781
      %v3798 = vsub.f32 %v3718, %v3782
      %v3799 = vsub.f32 %v3719, %v3783
      %v3800 = vsub.f32 %v3720, %v3784
      %v3801 = vsub.f32 %v3721, %v3785
      %v3802 = vsub.f32 %v3722, %v3786
      %v3803 = vsub.f32 %v3723, %v3787
      %v3804 = vsub.f32 %v3724, %v3788
      %v3805 = vsub.f32 %v3725, %v3789
      %v3806 = vmul.f32 %v3790, %v3790
      %v3807 = vmul.f32 %v3791, %v3791
      %v3808 = vmul.f32 %v3792, %v3792
      %v3809 = vmul.f32 %v3793, %v3793
      %v3810 = vmul.f32 %v3794, %v3794
      %v3811 = vmul.f32 %v3795, %v3795
      %v3812 = vmul.f32 %v3796, %v3796
      %v3813 = vmul.f32 %v3797, %v3797
      %v3814 = vmul.f32 %v3798, %v3798
      %v3815 = vmul.f32 %v3799, %v3799
      %v3816 = vmul.f32 %v3800, %v3800
      %v3817 = vmul.f32 %v3801, %v3801
      %v3818 = vmul.f32 %v3802, %v3802
      %v3819 = vmul.f32 %v3803, %v3803
      %v3820 = vmul.f32 %v3804, %v3804
      %v3821 = vmul.f32 %v3805, %v3805
      %v3822 = vsel %vm572, %v3806, 0.0
      %3823 = vadd.xlane.f32.xlu0 %v3822
      %v3824 = vpop.xlane.xlu0 %3823
      %v3825 = vsel %vm572, %v3807, 0.0
      %3826 = vadd.xlane.f32.xlu0 %v3825
      %v3827 = vpop.xlane.xlu0 %3826
      %v3828 = vsel %vm572, %v3808, 0.0
      %3829 = vadd.xlane.f32.xlu0 %v3828
      %v3830 = vpop.xlane.xlu0 %3829
      %v3831 = vsel %vm572, %v3809, 0.0
      %3832 = vadd.xlane.f32.xlu0 %v3831
      %v3833 = vpop.xlane.xlu0 %3832
      %v3834 = vsel %vm572, %v3810, 0.0
      %3835 = vadd.xlane.f32.xlu0 %v3834
      %v3836 = vpop.xlane.xlu0 %3835
      %v3837 = vsel %vm572, %v3811, 0.0
      %3838 = vadd.xlane.f32.xlu0 %v3837
      %v3839 = vpop.xlane.xlu0 %3838
      %v3840 = vsel %vm572, %v3812, 0.0
      %3841 = vadd.xlane.f32.xlu0 %v3840
      %v3842 = vpop.xlane.xlu0 %3841
      %v3843 = vsel %vm572, %v3813, 0.0
      %3844 = vadd.xlane.f32.xlu0 %v3843
      %v3845 = vpop.xlane.xlu0 %3844
      %v3846 = vsel %vm572, %v3814, 0.0
      %3847 = vadd.xlane.f32.xlu0 %v3846
      %v3848 = vpop.xlane.xlu0 %3847
      %v3849 = vsel %vm572, %v3815, 0.0
      %3850 = vadd.xlane.f32.xlu0 %v3849
      %v3851 = vpop.xlane.xlu0 %3850
      %v3852 = vsel %vm572, %v3816, 0.0
      %3853 = vadd.xlane.f32.xlu0 %v3852
      %v3854 = vpop.xlane.xlu0 %3853
      %v3855 = vsel %vm572, %v3817, 0.0
      %3856 = vadd.xlane.f32.xlu0 %v3855
      %v3857 = vpop.xlane.xlu0 %3856
      %v3858 = vsel %vm572, %v3818, 0.0
      %3859 = vadd.xlane.f32.xlu0 %v3858
      %v3860 = vpop.xlane.xlu0 %3859
      %v3861 = vsel %vm572, %v3819, 0.0
      %3862 = vadd.xlane.f32.xlu0 %v3861
      %v3863 = vpop.xlane.xlu0 %3862
      %v3864 = vsel %vm572, %v3820, 0.0
      %3865 = vadd.xlane.f32.xlu0 %v3864
      %v3866 = vpop.xlane.xlu0 %3865
      %v3867 = vsel %vm572, %v3821, 0.0
      %3868 = vadd.xlane.f32.xlu0 %v3867
      %v3869 = vpop.xlane.xlu0 %3868
      %v3870 = vmul.f32 %v3824, %v1293
      %v3871 = vmul.f32 %v3827, %v1293
      %v3872 = vmul.f32 %v3830, %v1293
      %v3873 = vmul.f32 %v3833, %v1293
      %v3874 = vmul.f32 %v3836, %v1293
      %v3875 = vmul.f32 %v3839, %v1293
      %v3876 = vmul.f32 %v3842, %v1293
      %v3877 = vmul.f32 %v3845, %v1293
      %v3878 = vmul.f32 %v3848, %v1293
      %v3879 = vmul.f32 %v3851, %v1293
      %v3880 = vmul.f32 %v3854, %v1293
      %v3881 = vmul.f32 %v3857, %v1293
      %v3882 = vmul.f32 %v3860, %v1293
      %v3883 = vmul.f32 %v3863, %v1293
      %v3884 = vmul.f32 %v3866, %v1293
      %v3885 = vmul.f32 %v3869, %v1293
      %v3886 = vadd.f32 %v3870, 1e-05
      %v3887 = vadd.f32 %v3871, 1e-05
      %v3888 = vadd.f32 %v3872, 1e-05
      %v3889 = vadd.f32 %v3873, 1e-05
      %v3890 = vadd.f32 %v3874, 1e-05
      %v3891 = vadd.f32 %v3875, 1e-05
      %v3892 = vadd.f32 %v3876, 1e-05
      %v3893 = vadd.f32 %v3877, 1e-05
      %v3894 = vadd.f32 %v3878, 1e-05
      %v3895 = vadd.f32 %v3879, 1e-05
      %v3896 = vadd.f32 %v3880, 1e-05
      %v3897 = vadd.f32 %v3881, 1e-05
      %v3898 = vadd.f32 %v3882, 1e-05
      %v3899 = vadd.f32 %v3883, 1e-05
      %v3900 = vadd.f32 %v3884, 1e-05
      %v3901 = vadd.f32 %v3885, 1e-05
      %v3902 = vrsqrt.pop %v3886
      %v3903 = vmul.f32 %v3902, %v3886
      %v3904 = vmul.f32 %v3903, %v3902
      %v3905 = vmul.f32 0.5, %v3904
      %v3906 = vsub.f32 1.5, %v3905
      %v3907 = vmul.f32 %v3902, %v3906
      %vm3908 = vweird.f32 %v3886
      %vm3909 = vweird.f32 %v3902
      %vm3910 = vmor %vm3908, %vm3909
      %v3911 = vsel %vm3910, %v3902, %v3907
      %v3912 = vrsqrt.pop %v3887
      %v3913 = vmul.f32 %v3912, %v3887
      %v3914 = vmul.f32 %v3913, %v3912
      %v3915 = vmul.f32 0.5, %v3914
      %v3916 = vsub.f32 1.5, %v3915
      %v3917 = vmul.f32 %v3912, %v3916
      %vm3918 = vweird.f32 %v3887
      %vm3919 = vweird.f32 %v3912
      %vm3920 = vmor %vm3918, %vm3919
      %v3921 = vsel %vm3920, %v3912, %v3917
      %v3922 = vrsqrt.pop %v3888
      %v3923 = vmul.f32 %v3922, %v3888
      %v3924 = vmul.f32 %v3923, %v3922
      %v3925 = vmul.f32 0.5, %v3924
      %v3926 = vsub.f32 1.5, %v3925
      %v3927 = vmul.f32 %v3922, %v3926
      %vm3928 = vweird.f32 %v3888
      %vm3929 = vweird.f32 %v3922
      %vm3930 = vmor %vm3928, %vm3929
      %v3931 = vsel %vm3930, %v3922, %v3927
      %v3932 = vrsqrt.pop %v3889
      %v3933 = vmul.f32 %v3932, %v3889
      %v3934 = vmul.f32 %v3933, %v3932
      %v3935 = vmul.f32 0.5, %v3934
      %v3936 = vsub.f32 1.5, %v3935
      %v3937 = vmul.f32 %v3932, %v3936
      %vm3938 = vweird.f32 %v3889
      %vm3939 = vweird.f32 %v3932
      %vm3940 = vmor %vm3938, %vm3939
      %v3941 = vsel %vm3940, %v3932, %v3937
      %v3942 = vrsqrt.pop %v3890
      %v3943 = vmul.f32 %v3942, %v3890
      %v3944 = vmul.f32 %v3943, %v3942
      %v3945 = vmul.f32 0.5, %v3944
      %v3946 = vsub.f32 1.5, %v3945
      %v3947 = vmul.f32 %v3942, %v3946
      %vm3948 = vweird.f32 %v3890
      %vm3949 = vweird.f32 %v3942
      %vm3950 = vmor %vm3948, %vm3949
      %v3951 = vsel %vm3950, %v3942, %v3947
      %v3952 = vrsqrt.pop %v3891
      %v3953 = vmul.f32 %v3952, %v3891
      %v3954 = vmul.f32 %v3953, %v3952
      %v3955 = vmul.f32 0.5, %v3954
      %v3956 = vsub.f32 1.5, %v3955
      %v3957 = vmul.f32 %v3952, %v3956
      %vm3958 = vweird.f32 %v3891
      %vm3959 = vweird.f32 %v3952
      %vm3960 = vmor %vm3958, %vm3959
      %v3961 = vsel %vm3960, %v3952, %v3957
      %v3962 = vrsqrt.pop %v3892
      %v3963 = vmul.f32 %v3962, %v3892
      %v3964 = vmul.f32 %v3963, %v3962
      %v3965 = vmul.f32 0.5, %v3964
      %v3966 = vsub.f32 1.5, %v3965
      %v3967 = vmul.f32 %v3962, %v3966
      %vm3968 = vweird.f32 %v3892
      %vm3969 = vweird.f32 %v3962
      %vm3970 = vmor %vm3968, %vm3969
      %v3971 = vsel %vm3970, %v3962, %v3967
      %v3972 = vrsqrt.pop %v3893
      %v3973 = vmul.f32 %v3972, %v3893
      %v3974 = vmul.f32 %v3973, %v3972
      %v3975 = vmul.f32 0.5, %v3974
      %v3976 = vsub.f32 1.5, %v3975
      %v3977 = vmul.f32 %v3972, %v3976
      %vm3978 = vweird.f32 %v3893
      %vm3979 = vweird.f32 %v3972
      %vm3980 = vmor %vm3978, %vm3979
      %v3981 = vsel %vm3980, %v3972, %v3977
      %v3982 = vrsqrt.pop %v3894
      %v3983 = vmul.f32 %v3982, %v3894
      %v3984 = vmul.f32 %v3983, %v3982
      %v3985 = vmul.f32 0.5, %v3984
      %v3986 = vsub.f32 1.5, %v3985
      %v3987 = vmul.f32 %v3982, %v3986
      %vm3988 = vweird.f32 %v3894
      %vm3989 = vweird.f32 %v3982
      %vm3990 = vmor %vm3988, %vm3989
      %v3991 = vsel %vm3990, %v3982, %v3987
      %v3992 = vrsqrt.pop %v3895
      %v3993 = vmul.f32 %v3992, %v3895
      %v3994 = vmul.f32 %v3993, %v3992
      %v3995 = vmul.f32 0.5, %v3994
      %v3996 = vsub.f32 1.5, %v3995
      %v3997 = vmul.f32 %v3992, %v3996
      %vm3998 = vweird.f32 %v3895
      %vm3999 = vweird.f32 %v3992
      %vm4000 = vmor %vm3998, %vm3999
      %v4001 = vsel %vm4000, %v3992, %v3997
      %v4002 = vrsqrt.pop %v3896
      %v4003 = vmul.f32 %v4002, %v3896
      %v4004 = vmul.f32 %v4003, %v4002
      %v4005 = vmul.f32 0.5, %v4004
      %v4006 = vsub.f32 1.5, %v4005
      %v4007 = vmul.f32 %v4002, %v4006
      %vm4008 = vweird.f32 %v3896
      %vm4009 = vweird.f32 %v4002
      %vm4010 = vmor %vm4008, %vm4009
      %v4011 = vsel %vm4010, %v4002, %v4007
      %v4012 = vrsqrt.pop %v3897
      %v4013 = vmul.f32 %v4012, %v3897
      %v4014 = vmul.f32 %v4013, %v4012
      %v4015 = vmul.f32 0.5, %v4014
      %v4016 = vsub.f32 1.5, %v4015
      %v4017 = vmul.f32 %v4012, %v4016
      %vm4018 = vweird.f32 %v3897
      %vm4019 = vweird.f32 %v4012
      %vm4020 = vmor %vm4018, %vm4019
      %v4021 = vsel %vm4020, %v4012, %v4017
      %v4022 = vrsqrt.pop %v3898
      %v4023 = vmul.f32 %v4022, %v3898
      %v4024 = vmul.f32 %v4023, %v4022
      %v4025 = vmul.f32 0.5, %v4024
      %v4026 = vsub.f32 1.5, %v4025
      %v4027 = vmul.f32 %v4022, %v4026
      %vm4028 = vweird.f32 %v3898
      %vm4029 = vweird.f32 %v4022
      %vm4030 = vmor %vm4028, %vm4029
      %v4031 = vsel %vm4030, %v4022, %v4027
      %v4032 = vrsqrt.pop %v3899
      %v4033 = vmul.f32 %v4032, %v3899
      %v4034 = vmul.f32 %v4033, %v4032
      %v4035 = vmul.f32 0.5, %v4034
      %v4036 = vsub.f32 1.5, %v4035
      %v4037 = vmul.f32 %v4032, %v4036
      %vm4038 = vweird.f32 %v3899
      %vm4039 = vweird.f32 %v4032
      %vm4040 = vmor %vm4038, %vm4039
      %v4041 = vsel %vm4040, %v4032, %v4037
      %v4042 = vrsqrt.pop %v3900
      %v4043 = vmul.f32 %v4042, %v3900
      %v4044 = vmul.f32 %v4043, %v4042
      %v4045 = vmul.f32 0.5, %v4044
      %v4046 = vsub.f32 1.5, %v4045
      %v4047 = vmul.f32 %v4042, %v4046
      %vm4048 = vweird.f32 %v3900
      %vm4049 = vweird.f32 %v4042
      %vm4050 = vmor %vm4048, %vm4049
      %v4051 = vsel %vm4050, %v4042, %v4047
      %v4052 = vrsqrt.pop %v3901
      %v4053 = vmul.f32 %v4052, %v3901
      %v4054 = vmul.f32 %v4053, %v4052
      %v4055 = vmul.f32 0.5, %v4054
      %v4056 = vsub.f32 1.5, %v4055
      %v4057 = vmul.f32 %v4052, %v4056
      %vm4058 = vweird.f32 %v3901
      %vm4059 = vweird.f32 %v4052
      %vm4060 = vmor %vm4058, %vm4059
      %v4061 = vsel %vm4060, %v4052, %v4057
      %v4062 = vmul.f32 %v3790, %v3911
      %v4063 = vmul.f32 %v3791, %v3921
      %v4064 = vmul.f32 %v3792, %v3931
      %v4065 = vmul.f32 %v3793, %v3941
      %v4066 = vmul.f32 %v3794, %v3951
      %v4067 = vmul.f32 %v3795, %v3961
      %v4068 = vmul.f32 %v3796, %v3971
      %v4069 = vmul.f32 %v3797, %v3981
      %v4070 = vmul.f32 %v3798, %v3991
      %v4071 = vmul.f32 %v3799, %v4001
      %v4072 = vmul.f32 %v3800, %v4011
      %v4073 = vmul.f32 %v3801, %v4021
      %v4074 = vmul.f32 %v3802, %v4031
      %v4075 = vmul.f32 %v3803, %v4041
      %v4076 = vmul.f32 %v3804, %v4051
      %v4077 = vmul.f32 %v3805, %v4061
      %v4078 = vperm.slane %v2565, 0
      %v4079 = vmul.f32 %v4062, %v4078
      %v4080 = vmul.f32 %v4063, %v4078
      %v4081 = vmul.f32 %v4064, %v4078
      %v4082 = vmul.f32 %v4065, %v4078
      %v4083 = vmul.f32 %v4066, %v4078
      %v4084 = vmul.f32 %v4067, %v4078
      %v4085 = vmul.f32 %v4068, %v4078
      %v4086 = vmul.f32 %v4069, %v4078
      %v4087 = vmul.f32 %v4070, %v4078
      %v4088 = vmul.f32 %v4071, %v4078
      %v4089 = vmul.f32 %v4072, %v4078
      %v4090 = vmul.f32 %v4073, %v4078
      %v4091 = vmul.f32 %v4074, %v4078
      %v4092 = vmul.f32 %v4075, %v4078
      %v4093 = vmul.f32 %v4076, %v4078
      %v4094 = vmul.f32 %v4077, %v4078
      %v4095 = vperm.slane %v2565, 1
      %v4096 = vadd.f32 %v4079, %v4095
      %v4097 = vadd.f32 %v4080, %v4095
      %v4098 = vadd.f32 %v4081, %v4095
      %v4099 = vadd.f32 %v4082, %v4095
      %v4100 = vadd.f32 %v4083, %v4095
      %v4101 = vadd.f32 %v4084, %v4095
      %v4102 = vadd.f32 %v4085, %v4095
      %v4103 = vadd.f32 %v4086, %v4095
      %v4104 = vadd.f32 %v4087, %v4095
      %v4105 = vadd.f32 %v4088, %v4095
      %v4106 = vadd.f32 %v4089, %v4095
      %v4107 = vadd.f32 %v4090, %v4095
      %v4108 = vadd.f32 %v4091, %v4095
      %v4109 = vadd.f32 %v4092, %v4095
      %v4110 = vadd.f32 %v4093, %v4095
      %v4111 = vadd.f32 %v4094, %v4095
      %v4112 = vmul.f32 %v4096, %v2462
      %v4113 = vmul.f32 %v4097, %v2462
      %v4114 = vmul.f32 %v4098, %v2462
      %v4115 = vmul.f32 %v4099, %v2462
      %v4116 = vmul.f32 %v4100, %v2462
      %v4117 = vmul.f32 %v4101, %v2462
      %v4118 = vmul.f32 %v4102, %v2462
      %v4119 = vmul.f32 %v4103, %v2462
      %v4120 = vmul.f32 %v4104, %v2462
      %v4121 = vmul.f32 %v4105, %v2462
      %v4122 = vmul.f32 %v4106, %v2462
      %v4123 = vmul.f32 %v4107, %v2462
      %v4124 = vmul.f32 %v4108, %v2462
      %v4125 = vmul.f32 %v4109, %v2462
      %v4126 = vmul.f32 %v4110, %v2462
      %v4127 = vmul.f32 %v4111, %v2462
      %v4128 = vsel %vm572, %v4112, 0.0
      %4129 = vadd.xlane.f32.xlu0 %v4128
      %v4130 = vpop.xlane.xlu0 %4129
      %v4131 = vsel %vm572, %v4113, 0.0
      %4132 = vadd.xlane.f32.xlu0 %v4131
      %v4133 = vpop.xlane.xlu0 %4132
      %v4134 = vsel %vm572, %v4114, 0.0
      %4135 = vadd.xlane.f32.xlu0 %v4134
      %v4136 = vpop.xlane.xlu0 %4135
      %v4137 = vsel %vm572, %v4115, 0.0
      %4138 = vadd.xlane.f32.xlu0 %v4137
      %v4139 = vpop.xlane.xlu0 %4138
      %v4140 = vsel %vm572, %v4116, 0.0
      %4141 = vadd.xlane.f32.xlu0 %v4140
      %v4142 = vpop.xlane.xlu0 %4141
      %v4143 = vsel %vm572, %v4117, 0.0
      %4144 = vadd.xlane.f32.xlu0 %v4143
      %v4145 = vpop.xlane.xlu0 %4144
      %v4146 = vsel %vm572, %v4118, 0.0
      %4147 = vadd.xlane.f32.xlu0 %v4146
      %v4148 = vpop.xlane.xlu0 %4147
      %v4149 = vsel %vm572, %v4119, 0.0
      %4150 = vadd.xlane.f32.xlu0 %v4149
      %v4151 = vpop.xlane.xlu0 %4150
      %v4152 = vsel %vm572, %v4120, 0.0
      %4153 = vadd.xlane.f32.xlu0 %v4152
      %v4154 = vpop.xlane.xlu0 %4153
      %v4155 = vsel %vm572, %v4121, 0.0
      %4156 = vadd.xlane.f32.xlu0 %v4155
      %v4157 = vpop.xlane.xlu0 %4156
      %v4158 = vsel %vm572, %v4122, 0.0
      %4159 = vadd.xlane.f32.xlu0 %v4158
      %v4160 = vpop.xlane.xlu0 %4159
      %v4161 = vsel %vm572, %v4123, 0.0
      %4162 = vadd.xlane.f32.xlu0 %v4161
      %v4163 = vpop.xlane.xlu0 %4162
      %v4164 = vsel %vm572, %v4124, 0.0
      %4165 = vadd.xlane.f32.xlu0 %v4164
      %v4166 = vpop.xlane.xlu0 %4165
      %v4167 = vsel %vm572, %v4125, 0.0
      %4168 = vadd.xlane.f32.xlu0 %v4167
      %v4169 = vpop.xlane.xlu0 %4168
      %v4170 = vsel %vm572, %v4126, 0.0
      %4171 = vadd.xlane.f32.xlu0 %v4170
      %v4172 = vpop.xlane.xlu0 %4171
      %v4173 = vsel %vm572, %v4127, 0.0
      %4174 = vadd.xlane.f32.xlu0 %v4173
      %v4175 = vpop.xlane.xlu0 %4174
      %v4176 = vadd.f32 %v4130, %v2543
      %v4177 = vadd.f32 %v4133, %v2543
      %v4178 = vadd.f32 %v4136, %v2543
      %v4179 = vadd.f32 %v4139, %v2543
      %v4180 = vadd.f32 %v4142, %v2543
      %v4181 = vadd.f32 %v4145, %v2543
      %v4182 = vadd.f32 %v4148, %v2543
      %v4183 = vadd.f32 %v4151, %v2543
      %v4184 = vadd.f32 %v4154, %v2543
      %v4185 = vadd.f32 %v4157, %v2543
      %v4186 = vadd.f32 %v4160, %v2543
      %v4187 = vadd.f32 %v4163, %v2543
      %v4188 = vadd.f32 %v4166, %v2543
      %v4189 = vadd.f32 %v4169, %v2543
      %v4190 = vadd.f32 %v4172, %v2543
      %v4191 = vadd.f32 %v4175, %v2543
      %vm4192 = vcmask 7168
      %4193 = vst.msk [vmem:[%s508] sm:$0xff] %vm4192, %v2560
      %4194 = vst.msk [vmem:[%s508 + $0x8] sm:$0xff] %vm4192, %v2561
      %4195 = vst.msk [vmem:[%s508 + $0x10] sm:$0xff] %vm4192, %v2562
      %4196 = vst.msk [vmem:[%s508 + $0x18] sm:$0xff] %vm4192, %v2563
      %v4197 = vsub.f32 %v2544, %v4176
      %v4198 = vsub.f32 %v2545, %v4177
      %v4199 = vsub.f32 %v2546, %v4178
      %v4200 = vsub.f32 %v2547, %v4179
      %v4201 = vsub.f32 %v2548, %v4180
      %v4202 = vsub.f32 %v2549, %v4181
      %v4203 = vsub.f32 %v2550, %v4182
      %v4204 = vsub.f32 %v2551, %v4183
      %v4205 = vsub.f32 %v2552, %v4184
      %v4206 = vsub.f32 %v2553, %v4185
      %v4207 = vsub.f32 %v2554, %v4186
      %v4208 = vsub.f32 %v2555, %v4187
      %v4209 = vsub.f32 %v2556, %v4188
      %v4210 = vsub.f32 %v2557, %v4189
      %v4211 = vsub.f32 %v2558, %v4190
      %v4212 = vsub.f32 %v2559, %v4191
      %v4213 = vadd.f32 %v4197, %v4201
      %v4214 = vadd.f32 %v4198, %v4202
      %v4215 = vadd.f32 %v4199, %v4203
      %v4216 = vadd.f32 %v4200, %v4204
      %v4217 = vadd.f32 %v4213, %v4205
      %v4218 = vadd.f32 %v4214, %v4206
      %v4219 = vadd.f32 %v4215, %v4207
      %v4220 = vadd.f32 %v4216, %v4208
      %v4221 = vadd.f32 %v4217, %v4209
      %v4222 = vadd.f32 %v4218, %v4210
      %v4223 = vadd.f32 %v4219, %v4211
      %v4224 = vadd.f32 %v4220, %v4212
      %v4225 = vmul.f32 %v4221, 0.25
      %v4226 = vmul.f32 %v4222, 0.25
      %v4227 = vmul.f32 %v4223, 0.25
      %v4228 = vmul.f32 %v4224, 0.25
      %4229 = vst.msk [vmem:[%s502] sm:$0xff] %vm4192, %v4225
      %4230 = vst.msk [vmem:[%s502 + $0x8] sm:$0xff] %vm4192, %v4226
      %4231 = vst.msk [vmem:[%s502 + $0x10] sm:$0xff] %vm4192, %v4227
      %4232 = vst.msk [vmem:[%s502 + $0x18] sm:$0xff] %vm4192, %v4228
      %s4233 = smul.u32 4, %s26
      %p4234 = scmp.lt.s32.totalorder %s4233, 7
      %s4235 = scalar_select %p4234, %s4233, 7
      %s4236 = smul.addr %s4235, 8
      %s4237 = scalar_lea.vmem %s13, %s4236
      %s4238 = smul.u32 4, %s26
      %p4239 = scmp.lt.s32.totalorder %s4238, 7
      %s4240 = scalar_select %p4239, %s4238, 7
      %s4241 = smul.addr %s4240, 8
      %s4242 = scalar_lea.vmem %s14, %s4241
      // Predicated region
      $region73: #{shapley_critic2_forward.3} parent=71 // pred_check
        %p4243 = pneg %p327
      $region74: #{shapley_critic2_forward.3} parent=71 // pred_check_branch
        %4245 = sbr.rel (%p4243) target = $region76
      $region75: #{shapley_critic2_forward.3} parent=71 // pred_region
        %s4246 = smul.u32 4, %s26
      $region76: #{shapley_critic2_forward.3} parent=71 // pred_fallthru
        _
      // Predicated region
      $region77: #{shapley_critic2_forward.3} parent=71 // pred_check
        %p4247 = pneg %p353
      $region78: #{shapley_critic2_forward.3} parent=71 // pred_check_branch
        %4249 = sbr.rel (%p4247) target = $region80
      $region79: #{shapley_critic2_forward.3} parent=71 // pred_region
        %s4250 = smul.u32 4, %s26
      $region80: #{shapley_critic2_forward.3} parent=71 // pred_fallthru
        _
    $region72: #{shapley_critic2_forward.3} parent=5 // pred_fallthru
      _
    %p4251 = scmp.le.s32.totalorder 2, %s21
    // Predicated region
    $region81: #{shapley_critic2_forward.3} parent=5 // pred_check
      %p4252 = pneg %p4251
    $region82: #{shapley_critic2_forward.3} parent=5 // pred_check_branch
      %4254 = sbr.rel (%p4252) target = $region84
    $region83: #{shapley_critic2_forward.3} parent=5 // pred_region
      %s4255 = ssub.s32 %s21, 2
      // Predicated region
      $region85: #{shapley_critic2_forward.3} parent=83 // pred_check
        %p4256 = pneg %p333
      $region86: #{shapley_critic2_forward.3} parent=83 // pred_check_branch
        %4258 = sbr.rel (%p4256) target = $region88
      $region87: #{shapley_critic2_forward.3} parent=83 // pred_region
        %s4259 = smul.u32 4, %s27
        %p4260 = scmp.lt.s32.totalorder %s4259, 7
        %s4261 = scalar_select %p4260, %s4259, 7
        %s4262 = smul.addr %s4261, 8
        %s4263 = scalar_lea.vmem %s13, %s4262
      $region88: #{shapley_critic2_forward.3} parent=83 // pred_fallthru
        _
      // Predicated region
      $region89: #{shapley_critic2_forward.3} parent=83 // pred_check
        %p4264 = pneg %p359
      $region90: #{shapley_critic2_forward.3} parent=83 // pred_check_branch
        %4266 = sbr.rel (%p4264) target = $region92
      $region91: #{shapley_critic2_forward.3} parent=83 // pred_region
        %s4267 = smul.u32 4, %s27
        %p4268 = scmp.lt.s32.totalorder %s4267, 7
        %s4269 = scalar_select %p4268, %s4267, 7
        %s4270 = smul.addr %s4269, 8
        %s4271 = scalar_lea.vmem %s14, %s4270
      $region92: #{shapley_critic2_forward.3} parent=83 // pred_fallthru
        _
    $region84: #{shapley_critic2_forward.3} parent=5 // pred_fallthru
      _
  $region6: #{shapley_critic2_forward.3} parent=0 // loop_footer
    %s25 = sadd.s32 1, %s21
  $region7: #{shapley_critic2_forward.3} parent=0 // loop_footer_branch
    %20 = sbr.rel target = $region3
  $region8: #{shapley_critic2_forward.3} parent=0 // loop_exit
    _

</llo_original>
